<compile_context>
chip_gen: v6e
topology: v6e:2x2x1
jax: 0.10.0
libtpu: 0.0.40
codegen_flags: <defaults>
</compile_context>

<pallas_src>
import math
import functools

import jax
import jax.numpy as jnp
from jax.experimental import pallas as pl
from jax.experimental.pallas import tpu as pltpu

_SQRT_HALF = 0.7071067811865476


def _round_up(x, m):
    return ((x + m - 1) // m) * m


# ----------------------------- in-kernel helpers -----------------------------

def _erf_approx(x):
    # Abramowitz & Stegun 7.1.26 rational approximation (|err| < 1.5e-7).
    # TODO(synk): lax.erf lowering is not guaranteed in Mosaic; exact-GELU's erf
    # is approximated in-kernel from exp + approx-reciprocal (both EUP ops).
    a1, a2, a3, a4, a5 = (0.254829592, -0.284496736, 1.421413741,
                          -1.453152027, 1.061405429)
    p = 0.3275911
    s = jnp.where(x >= 0.0, 1.0, -1.0)
    z = jnp.abs(x)
    t = pl.reciprocal(1.0 + p * z, approx=True)       # EUP, not a VALU divide
    poly = ((((a5 * t + a4) * t + a3) * t + a2) * t + a1) * t
    return s * (1.0 - poly * jnp.exp(-z * z))


def _gelu_exact(x):
    # torch.nn.functional.gelu default ('none') = exact erf GELU.
    return 0.5 * x * (1.0 + _erf_approx(x * _SQRT_HALF))


def _layernorm_cols(x, w, b, eps=1e-5):
    # x: (F, N) feature-major; normalize every column over F (sublane reduce).
    # Variance via E[x^2] - mu^2 -> one sweep over x instead of two.
    mu = jnp.mean(x, axis=0, keepdims=True)
    ms = jnp.mean(x * x, axis=0, keepdims=True)
    var = ms - mu * mu
    return (x - mu) * jax.lax.rsqrt(var + eps) * w + b


# --------------------------------- kernel ------------------------------------

def _encoder_kernel(x_ref,
                    wqkv_ref, wo_ref,
                    n1w_ref, n1b_ref, n2w_ref, n2b_ref,
                    w1_ref, b1_ref, w2_ref, b2_ref,
                    wf_ref, bf_ref,
                    out_ref, *, heads):
    T, P, B = x_ref.shape              # tokens, features, batch lanes (blk)
    L = wqkv_ref.shape[0]              # number of transformer blocks
    del heads                          # head_dim == 1 is validated in wrapper

    # Residual stream kept per token: T lane-dense (P, B) values, no concats.
    xs = [x_ref[t] for t in range(T)]

    for l in range(L):                 # L == 1 here; static unroll is fine.
        # ---- self-attention sub-block: x = x + Attn(LN1(x)) ----
        # TODO(synk): `SelfAttention` source was not provided; implemented as
        # standard pre-scaled multi-head self-attention (fused QKV + out proj,
        # no bias, attn_bias=False).
        n1w, n1b = n1w_ref[l], n1b_ref[l]
        wqkv = wqkv_ref[l]             # (3P, P); 1/sqrt(hd) folded into Q rows
        qs, ks, vs = [], [], []
        for t in range(T):
            xn = _layernorm_cols(xs[t], n1w, n1b)
            qkv = jnp.dot(wqkv, xn, preferred_element_type=jnp.float32)  # (3P,B)
            qs.append(qkv[0:P])
            ks.append(qkv[P:2 * P])
            vs.append(qkv[2 * P:3 * P])

        # Two-pass softmax over the S=T key axis; head_dim == 1 so the per-head
        # score is an elementwise product.  Nothing 4-D is ever materialized.
        wo = wo_ref[l]
        new_xs = []
        for t in range(T):
            q = qs[t]                                       # (H, B) == (P, B)
            m = q * ks[0]
            for s in range(1, T):
                m = jnp.maximum(m, q * ks[s])
            denom = jnp.zeros_like(m)
            acc = jnp.zeros_like(m)
            for s in range(T):
                e = jnp.exp(q * ks[s] - m)                  # recompute qk: VALU
                denom = denom + e
                acc = acc + e * vs[s]
            attn = acc * pl.reciprocal(denom, approx=True)  # EUP, not VALU
            new_xs.append(xs[t] +
                          jnp.dot(wo, attn, preferred_element_type=jnp.float32))
        xs = new_xs

        # ---- feed-forward sub-block: x = x + W2(GEGLU(W1(LN2(x)))) ----
        n2w, n2b = n2w_ref[l], n2b_ref[l]
        w1, b1 = w1_ref[l], b1_ref[l]
        w2, b2 = w2_ref[l], b2_ref[l]
        for t in range(T):
            xn = _layernorm_cols(xs[t], n2w, n2b)
            h = jnp.dot(w1, xn, preferred_element_type=jnp.float32) + b1  # (2P,B)
            val, gate = h[0:P], h[P:2 * P]                  # chunk(2, dim=feat)
            ff = _gelu_exact(gate) * val
            xs[t] = xs[t] + jnp.dot(w2, ff,
                                    preferred_element_type=jnp.float32) + b2

    # ---- final projection: out = bf + sum_t wf[t] @ x_t (no sublane concat) ----
    res = jnp.dot(wf_ref[0], xs[0], preferred_element_type=jnp.float32)
    for t in range(1, T):
        res = res + jnp.dot(wf_ref[t], xs[t], preferred_element_type=jnp.float32)
    out_ref[...] = res + bf_ref[...]


# ------------------------------ JAX glue / wrapper ----------------------------

def _embed(xyzt, params):
    """SpaceTimeEmbedding (SphericalEmbedding + AngleEmbedding) in plain JAX."""
    xyz, t = xyzt[:, :3], xyzt[:, 3:]                              # split [3, 1]
    xe = xyz[:, None, :] - params["centers"][None, :, :]           # (B, D-1, 3)
    rho = jnp.sqrt(jnp.sum(xe ** 2, axis=-1))                      # (B, D-1)
    phi = jnp.arctan2(xe[..., 1], xe[..., 0])
    # Guard rho == 0 and fp drift outside [-1, 1] before arccos.
    ratio = jnp.clip(xe[..., 2] / jnp.maximum(rho, 1e-12), -1.0, 1.0)
    theta = jnp.arccos(ratio)
    sph = jnp.stack([rho, phi, theta], axis=-1)                    # (B, D-1, 3)
    proj = jnp.einsum("bdi,dij->bdj", sph, params["rand_proj"])    # (B, D-1, P)

    aug = jnp.stack([jnp.sin(t), jnp.cos(t)], axis=-1)             # (B, 1, 2)
    p1 = aug @ params["ang_w1"].T                                  # (B, 1, 1)
    p1 = jnp.swapaxes(p1, 1, 2)                                    # 'b i d -> b d i'
    ang = p1 @ params["ang_w2"].T                                  # (B, 1, P)
    return jnp.concatenate([proj, ang], axis=1).astype(jnp.float32)  # (B, 8, P)


def spacetime_transformer_forward(xyzt, params, *, heads=8, batch_block=1024):
    assert batch_block % 128 == 0, "batch_block must be lane-aligned (x128)"
    x_emb = _embed(xyzt, params)                                   # (B, T, P)
    B, T, P = x_emb.shape
    assert P % heads == 0
    if P // heads != 1:
        # TODO(synk): vectorized attention assumes head_dim == 1 (the module's
        # config: projection_dim == heads == 8); head_dim > 1 is not implemented.
        raise NotImplementedError("head_dim != 1 not supported")
    O = params["bf"].shape[0]

    # Pad batch to a lane-aligned block; batch lives on the lane axis.
    blk = min(batch_block, _round_up(B, 128))
    B_pad = _round_up(B, blk)
    n_blocks = B_pad // blk

    # Build the per-token lane-dense layout ONCE in HBM (fuses with the
    # embedding transpose); the kernel never relayouts.
    x_p = jnp.pad(x_emb, ((0, B_pad - B), (0, 0), (0, 0)))         # (B_pad, T, P)
    x_wide = (x_p.reshape(n_blocks, blk, T, P)
              .transpose(0, 2, 3, 1)                               # (nb, T, P, blk)
              .reshape(n_blocks * T, P, blk))

    # Fused QKV weight with the attention scale folded into the Q rows.
    scale = 1.0 / math.sqrt(P // heads)
    wqkv = jnp.concatenate(
        [params["wq"] * scale, params["wk"], params["wv"]], axis=1)  # (L, 3P, P)
    # Final projection weight pre-split per token: wf_r[t] == wf[:, t*P:(t+1)*P].
    wf_r = params["wf"].reshape(O, T, P).transpose(1, 0, 2)          # (T, O, P)

    args = (
        x_wide,
        wqkv, params["wo"],
        params["n1w"][..., None], params["n1b"][..., None],
        params["n2w"][..., None], params["n2b"][..., None],
        params["w1"], params["b1"][..., None],
        params["w2"], params["b2"][..., None],
        wf_r, params["bf"][:, None],
    )

    def full_spec(a):
        return pl.BlockSpec(a.shape, lambda i, _nd=a.ndim: (0,) * _nd)

    in_specs = [pl.BlockSpec((T, P, blk), lambda i: (i, 0, 0))] + [
        full_spec(a) for a in args[1:]
    ]

    out = pl.pallas_call(
        functools.partial(_encoder_kernel, heads=heads),
        out_shape=jax.ShapeDtypeStruct((O, B_pad), jnp.float32),
        grid=(n_blocks,),
        in_specs=in_specs,
        out_specs=pl.BlockSpec((O, blk), lambda i: (0, i)),
        compiler_params=pltpu.CompilerParams(
            dimension_semantics=("parallel",),
            vmem_limit_bytes=32 * 1024 * 1024),   # safe on v5e/v6e/v7x; >= needs
    )(*args)
    return out[:, :B].T                                            # (B, O)


def init_params(key, *, projection_dim=8, embedding_dim=8,
                model_depth=1, output_dim=16):
    P, T, L = projection_dim, embedding_dim, model_depth
    sph_depth = T - 1
    ks = jax.random.split(key, 18)

    def nrm(k, shape, scale):
        return (scale * jax.random.normal(k, shape)).astype(jnp.float32)

    return {
        # ---- embedding params (plain JAX), torch layouts ----
        "centers":   nrm(ks[0], (sph_depth, 3), 1.0),
        "rand_proj": nrm(ks[1], (sph_depth, 3, P), 1.0),
        "ang_w1":    nrm(ks[2], (1, 2), 0.5),          # Linear(2 -> 1), no bias
        "ang_w2":    nrm(ks[3], (P, 1), 0.5),          # Linear(1 -> P), no bias
        # ---- transformer blocks, torch (out, in) weight layout, stacked over L ----
        "wq": nrm(ks[4], (L, P, P), 0.3),
        "wk": nrm(ks[5], (L, P, P), 0.3),
        "wv": nrm(ks[6], (L, P, P), 0.3),
        "wo": nrm(ks[7], (L, P, P), 0.3),
        "n1w": 1.0 + nrm(ks[8], (L, P), 0.1),
        "n1b": nrm(ks[9], (L, P), 0.1),
        "n2w": 1.0 + nrm(ks[10], (L, P), 0.1),
        "n2b": nrm(ks[11], (L, P), 0.1),
        "w1": nrm(ks[12], (L, 2 * P, P), 0.3),
        "b1": nrm(ks[13], (L, 2 * P), 0.1),
        "w2": nrm(ks[14], (L, P, P), 0.3),
        "b2": nrm(ks[15], (L, P), 0.1),
        # ---- final projection: Linear(T*P -> output_dim), torch layout ----
        "wf": nrm(ks[16], (output_dim, T * P), 0.2),
        "bf": nrm(ks[17], (output_dim,), 0.1),
    }


# --------------------------- pure-JAX reference check -------------------------

def _reference_forward(xyzt, params, *, heads=8):
    x = _embed(xyzt, params)
    B, T, P = x.shape
    L = params["wq"].shape[0]
    hd = P // heads
    scale = 1.0 / math.sqrt(hd)

    def ln(v, w, b):
        mu = v.mean(-1, keepdims=True)
        var = ((v - mu) ** 2).mean(-1, keepdims=True)
        return (v - mu) / jnp.sqrt(var + 1e-5) * w + b

    for l in range(L):
        xn = ln(x, params["n1w"][l], params["n1b"][l])
        q = (xn @ params["wq"][l].T).reshape(B, T, heads, hd).transpose(0, 2, 1, 3)
        k = (xn @ params["wk"][l].T).reshape(B, T, heads, hd).transpose(0, 2, 1, 3)
        v = (xn @ params["wv"][l].T).reshape(B, T, heads, hd).transpose(0, 2, 1, 3)
        s = jnp.einsum("bhid,bhjd->bhij", q, k) * scale
        a = jax.nn.softmax(s, axis=-1)
        o = jnp.einsum("bhij,bhjd->bhid", a, v).transpose(0, 2, 1, 3).reshape(B, T, P)
        x = x + o @ params["wo"][l].T

        xn = ln(x, params["n2w"][l], params["n2b"][l])
        h = xn @ params["w1"][l].T + params["b1"][l]
        val, gate = h[..., :P], h[..., P:]
        g = 0.5 * gate * (1.0 + jax.scipy.special.erf(gate * _SQRT_HALF))
        x = x + (g * val) @ params["w2"][l].T + params["b2"][l]

    flat = x.reshape(B, T * P)                        # 'b d p -> b (d p)'
    return flat @ params["wf"].T + params["bf"]


# ----------------------------------- main -------------------------------------

if __name__ == "__main__":
    B = 4
    output_dim = 16
    heads = 8

    key = jax.random.PRNGKey(0)
    k_x, k_p = jax.random.split(key)
    xyzt = jax.random.normal(k_x, (B, 4), jnp.float32)             # (x, y, z, t)
    params = init_params(k_p, projection_dim=8, embedding_dim=8,
                         model_depth=1, output_dim=output_dim)

    out = spacetime_transformer_forward(xyzt, params, heads=heads)
    out = jax.block_until_ready(out)

    ref = _reference_forward(xyzt, params, heads=heads)
    assert out.shape == (B, output_dim), out.shape
    max_err = float(jnp.max(jnp.abs(out - ref)))
    assert jnp.allclose(out, ref, atol=1e-2, rtol=1e-2), max_err

    print("KERNEL_OK")
</pallas_src>

<mosaic_0001>
module attributes {stable_mosaic.version = 11 : i64} {
  func.func @_encoder_kernel(%arg0: i32, %arg1: memref<8x8x128xf32, #tpu.memory_space<vmem>>, %arg2: memref<1x24x8xf32, #tpu.memory_space<vmem>>, %arg3: memref<1x8x8xf32, #tpu.memory_space<vmem>>, %arg4: memref<1x8x1xf32, #tpu.memory_space<vmem>>, %arg5: memref<1x8x1xf32, #tpu.memory_space<vmem>>, %arg6: memref<1x8x1xf32, #tpu.memory_space<vmem>>, %arg7: memref<1x8x1xf32, #tpu.memory_space<vmem>>, %arg8: memref<1x16x8xf32, #tpu.memory_space<vmem>>, %arg9: memref<1x16x1xf32, #tpu.memory_space<vmem>>, %arg10: memref<1x8x8xf32, #tpu.memory_space<vmem>>, %arg11: memref<1x8x1xf32, #tpu.memory_space<vmem>>, %arg12: memref<8x16x8xf32, #tpu.memory_space<vmem>>, %arg13: memref<16x1xf32, #tpu.memory_space<vmem>>, %arg14: memref<16x128xf32, #tpu.memory_space<vmem>>) attributes {dimension_semantics = [#tpu.dimension_semantics<parallel>], iteration_bounds = array<i64: 1>, scalar_prefetch = 0 : i64, scratch_operands = 0 : i64, tpu.core_type = #tpu.core_type<tc>, window_params = [{transform_indices = @transform_0, window_bounds = array<i64: 8, 8, 128>}, {pipeline_mode = #tpu.pipeline_mode<synchronous>, transform_indices = @transform_1, window_bounds = array<i64: 1, 24, 8>}, {pipeline_mode = #tpu.pipeline_mode<synchronous>, transform_indices = @transform_2, window_bounds = array<i64: 1, 8, 8>}, {pipeline_mode = #tpu.pipeline_mode<synchronous>, transform_indices = @transform_3, window_bounds = array<i64: 1, 8, 1>}, {pipeline_mode = #tpu.pipeline_mode<synchronous>, transform_indices = @transform_4, window_bounds = array<i64: 1, 8, 1>}, {pipeline_mode = #tpu.pipeline_mode<synchronous>, transform_indices = @transform_5, window_bounds = array<i64: 1, 8, 1>}, {pipeline_mode = #tpu.pipeline_mode<synchronous>, transform_indices = @transform_6, window_bounds = array<i64: 1, 8, 1>}, {pipeline_mode = #tpu.pipeline_mode<synchronous>, transform_indices = @transform_7, window_bounds = array<i64: 1, 16, 8>}, {pipeline_mode = #tpu.pipeline_mode<synchronous>, transform_indices = @transform_8, window_bounds = array<i64: 1, 16, 1>}, {pipeline_mode = #tpu.pipeline_mode<synchronous>, transform_indices = @transform_9, window_bounds = array<i64: 1, 8, 8>}, {pipeline_mode = #tpu.pipeline_mode<synchronous>, transform_indices = @transform_10, window_bounds = array<i64: 1, 8, 1>}, {pipeline_mode = #tpu.pipeline_mode<synchronous>, transform_indices = @transform_11, window_bounds = array<i64: 8, 16, 8>}, {pipeline_mode = #tpu.pipeline_mode<synchronous>, transform_indices = @transform_12, window_bounds = array<i64: 16, 1>}, {transform_indices = @transform_13, window_bounds = array<i64: 16, 128>}]} {
    %c0 = arith.constant 0 : index
    %c0_0 = arith.constant 0 : index
    %c0_1 = arith.constant 0 : index
    %0 = vector.load %arg1[%c0, %c0_0, %c0_1] : memref<8x8x128xf32, #tpu.memory_space<vmem>>, vector<1x8x128xf32>
    %1 = vector.shape_cast %0 : vector<1x8x128xf32> to vector<8x128xf32>
    %c1 = arith.constant 1 : index
    %c0_2 = arith.constant 0 : index
    %c0_3 = arith.constant 0 : index
    %2 = vector.load %arg1[%c1, %c0_2, %c0_3] : memref<8x8x128xf32, #tpu.memory_space<vmem>>, vector<1x8x128xf32>
    %3 = vector.shape_cast %2 : vector<1x8x128xf32> to vector<8x128xf32>
    %c2 = arith.constant 2 : index
    %c0_4 = arith.constant 0 : index
    %c0_5 = arith.constant 0 : index
    %4 = vector.load %arg1[%c2, %c0_4, %c0_5] : memref<8x8x128xf32, #tpu.memory_space<vmem>>, vector<1x8x128xf32>
    %5 = vector.shape_cast %4 : vector<1x8x128xf32> to vector<8x128xf32>
    %c3 = arith.constant 3 : index
    %c0_6 = arith.constant 0 : index
    %c0_7 = arith.constant 0 : index
    %6 = vector.load %arg1[%c3, %c0_6, %c0_7] : memref<8x8x128xf32, #tpu.memory_space<vmem>>, vector<1x8x128xf32>
    %7 = vector.shape_cast %6 : vector<1x8x128xf32> to vector<8x128xf32>
    %c4 = arith.constant 4 : index
    %c0_8 = arith.constant 0 : index
    %c0_9 = arith.constant 0 : index
    %8 = vector.load %arg1[%c4, %c0_8, %c0_9] : memref<8x8x128xf32, #tpu.memory_space<vmem>>, vector<1x8x128xf32>
    %9 = vector.shape_cast %8 : vector<1x8x128xf32> to vector<8x128xf32>
    %c5 = arith.constant 5 : index
    %c0_10 = arith.constant 0 : index
    %c0_11 = arith.constant 0 : index
    %10 = vector.load %arg1[%c5, %c0_10, %c0_11] : memref<8x8x128xf32, #tpu.memory_space<vmem>>, vector<1x8x128xf32>
    %11 = vector.shape_cast %10 : vector<1x8x128xf32> to vector<8x128xf32>
    %c6 = arith.constant 6 : index
    %c0_12 = arith.constant 0 : index
    %c0_13 = arith.constant 0 : index
    %12 = vector.load %arg1[%c6, %c0_12, %c0_13] : memref<8x8x128xf32, #tpu.memory_space<vmem>>, vector<1x8x128xf32>
    %13 = vector.shape_cast %12 : vector<1x8x128xf32> to vector<8x128xf32>
    %c7 = arith.constant 7 : index
    %c0_14 = arith.constant 0 : index
    %c0_15 = arith.constant 0 : index
    %14 = vector.load %arg1[%c7, %c0_14, %c0_15] : memref<8x8x128xf32, #tpu.memory_space<vmem>>, vector<1x8x128xf32>
    %15 = vector.shape_cast %14 : vector<1x8x128xf32> to vector<8x128xf32>
    %c0_16 = arith.constant 0 : index
    %c0_17 = arith.constant 0 : index
    %c0_18 = arith.constant 0 : index
    %16 = vector.load %arg4[%c0_16, %c0_17, %c0_18] : memref<1x8x1xf32, #tpu.memory_space<vmem>>, vector<1x8x1xf32>
    %17 = vector.shape_cast %16 : vector<1x8x1xf32> to vector<8x1xf32>
    %c0_19 = arith.constant 0 : index
    %c0_20 = arith.constant 0 : index
    %c0_21 = arith.constant 0 : index
    %18 = vector.load %arg5[%c0_19, %c0_20, %c0_21] : memref<1x8x1xf32, #tpu.memory_space<vmem>>, vector<1x8x1xf32>
    %19 = vector.shape_cast %18 : vector<1x8x1xf32> to vector<8x1xf32>
    %c0_22 = arith.constant 0 : index
    %c0_23 = arith.constant 0 : index
    %c0_24 = arith.constant 0 : index
    %20 = vector.load %arg2[%c0_22, %c0_23, %c0_24] : memref<1x24x8xf32, #tpu.memory_space<vmem>>, vector<1x24x8xf32>
    %21 = vector.shape_cast %20 : vector<1x24x8xf32> to vector<24x8xf32>
    %cst = arith.constant dense<0.000000e+00> : vector<128xf32>
    %22 = vector.multi_reduction <add>, %1, %cst [0] : vector<8x128xf32> to vector<128xf32>
    %23 = vector.shape_cast %22 : vector<128xf32> to vector<1x128xf32>
    %cst_25 = arith.constant 8.000000e+00 : f32
    %24 = vector.broadcast %cst_25 : f32 to vector<1x128xf32>
    %25 = arith.divf %23, %24 : vector<1x128xf32>
    %26 = arith.mulf %1, %1 : vector<8x128xf32>
    %cst_26 = arith.constant dense<0.000000e+00> : vector<128xf32>
    %27 = vector.multi_reduction <add>, %26, %cst_26 [0] : vector<8x128xf32> to vector<128xf32>
    %28 = vector.shape_cast %27 : vector<128xf32> to vector<1x128xf32>
    %cst_27 = arith.constant 8.000000e+00 : f32
    %29 = vector.broadcast %cst_27 : f32 to vector<1x128xf32>
    %30 = arith.divf %28, %29 : vector<1x128xf32>
    %31 = arith.mulf %25, %25 : vector<1x128xf32>
    %32 = arith.subf %30, %31 : vector<1x128xf32>
    %33 = vector.broadcast %25 : vector<1x128xf32> to vector<8x128xf32>
    %34 = arith.subf %1, %33 : vector<8x128xf32>
    %cst_28 = arith.constant 9.99999974E-6 : f32
    %35 = vector.broadcast %cst_28 : f32 to vector<1x128xf32>
    %36 = arith.addf %32, %35 : vector<1x128xf32>
    %37 = math.rsqrt %36 : vector<1x128xf32>
    %38 = vector.broadcast %37 : vector<1x128xf32> to vector<8x128xf32>
    %39 = arith.mulf %34, %38 : vector<8x128xf32>
    %40 = vector.broadcast %17 : vector<8x1xf32> to vector<8x128xf32>
    %41 = arith.mulf %39, %40 : vector<8x128xf32>
    %42 = vector.broadcast %19 : vector<8x1xf32> to vector<8x128xf32>
    %43 = arith.addf %41, %42 : vector<8x128xf32>
    %cst_29 = arith.constant dense<0.000000e+00> : vector<24x128xf32>
    %44 = tpu.matmul %21, %43, %cst_29 {dimension_numbers = #tpu.dot_dimension_numbers<[1], [0], [0], [1], [0, 0, 1, 1], [], []>} : vector<24x8xf32>, vector<8x128xf32>, vector<24x128xf32> -> vector<24x128xf32>
    %45 = vector.extract_strided_slice %44 {offsets = [0, 0], sizes = [8, 128], strides = [1, 1]} : vector<24x128xf32> to vector<8x128xf32>
    %46 = vector.extract_strided_slice %44 {offsets = [8, 0], sizes = [8, 128], strides = [1, 1]} : vector<24x128xf32> to vector<8x128xf32>
    %47 = vector.extract_strided_slice %44 {offsets = [16, 0], sizes = [8, 128], strides = [1, 1]} : vector<24x128xf32> to vector<8x128xf32>
    %cst_30 = arith.constant dense<0.000000e+00> : vector<128xf32>
    %48 = vector.multi_reduction <add>, %3, %cst_30 [0] : vector<8x128xf32> to vector<128xf32>
    %49 = vector.shape_cast %48 : vector<128xf32> to vector<1x128xf32>
    %cst_31 = arith.constant 8.000000e+00 : f32
    %50 = vector.broadcast %cst_31 : f32 to vector<1x128xf32>
    %51 = arith.divf %49, %50 : vector<1x128xf32>
    %52 = arith.mulf %3, %3 : vector<8x128xf32>
    %cst_32 = arith.constant dense<0.000000e+00> : vector<128xf32>
    %53 = vector.multi_reduction <add>, %52, %cst_32 [0] : vector<8x128xf32> to vector<128xf32>
    %54 = vector.shape_cast %53 : vector<128xf32> to vector<1x128xf32>
    %cst_33 = arith.constant 8.000000e+00 : f32
    %55 = vector.broadcast %cst_33 : f32 to vector<1x128xf32>
    %56 = arith.divf %54, %55 : vector<1x128xf32>
    %57 = arith.mulf %51, %51 : vector<1x128xf32>
    %58 = arith.subf %56, %57 : vector<1x128xf32>
    %59 = vector.broadcast %51 : vector<1x128xf32> to vector<8x128xf32>
    %60 = arith.subf %3, %59 : vector<8x128xf32>
    %cst_34 = arith.constant 9.99999974E-6 : f32
    %61 = vector.broadcast %cst_34 : f32 to vector<1x128xf32>
    %62 = arith.addf %58, %61 : vector<1x128xf32>
    %63 = math.rsqrt %62 : vector<1x128xf32>
    %64 = vector.broadcast %63 : vector<1x128xf32> to vector<8x128xf32>
    %65 = arith.mulf %60, %64 : vector<8x128xf32>
    %66 = vector.broadcast %17 : vector<8x1xf32> to vector<8x128xf32>
    %67 = arith.mulf %65, %66 : vector<8x128xf32>
    %68 = vector.broadcast %19 : vector<8x1xf32> to vector<8x128xf32>
    %69 = arith.addf %67, %68 : vector<8x128xf32>
    %cst_35 = arith.constant dense<0.000000e+00> : vector<24x128xf32>
    %70 = tpu.matmul %21, %69, %cst_35 {dimension_numbers = #tpu.dot_dimension_numbers<[1], [0], [0], [1], [0, 0, 1, 1], [], []>} : vector<24x8xf32>, vector<8x128xf32>, vector<24x128xf32> -> vector<24x128xf32>
    %71 = vector.extract_strided_slice %70 {offsets = [0, 0], sizes = [8, 128], strides = [1, 1]} : vector<24x128xf32> to vector<8x128xf32>
    %72 = vector.extract_strided_slice %70 {offsets = [8, 0], sizes = [8, 128], strides = [1, 1]} : vector<24x128xf32> to vector<8x128xf32>
    %73 = vector.extract_strided_slice %70 {offsets = [16, 0], sizes = [8, 128], strides = [1, 1]} : vector<24x128xf32> to vector<8x128xf32>
    %cst_36 = arith.constant dense<0.000000e+00> : vector<128xf32>
    %74 = vector.multi_reduction <add>, %5, %cst_36 [0] : vector<8x128xf32> to vector<128xf32>
    %75 = vector.shape_cast %74 : vector<128xf32> to vector<1x128xf32>
    %cst_37 = arith.constant 8.000000e+00 : f32
    %76 = vector.broadcast %cst_37 : f32 to vector<1x128xf32>
    %77 = arith.divf %75, %76 : vector<1x128xf32>
    %78 = arith.mulf %5, %5 : vector<8x128xf32>
    %cst_38 = arith.constant dense<0.000000e+00> : vector<128xf32>
    %79 = vector.multi_reduction <add>, %78, %cst_38 [0] : vector<8x128xf32> to vector<128xf32>
    %80 = vector.shape_cast %79 : vector<128xf32> to vector<1x128xf32>
    %cst_39 = arith.constant 8.000000e+00 : f32
    %81 = vector.broadcast %cst_39 : f32 to vector<1x128xf32>
    %82 = arith.divf %80, %81 : vector<1x128xf32>
    %83 = arith.mulf %77, %77 : vector<1x128xf32>
    %84 = arith.subf %82, %83 : vector<1x128xf32>
    %85 = vector.broadcast %77 : vector<1x128xf32> to vector<8x128xf32>
    %86 = arith.subf %5, %85 : vector<8x128xf32>
    %cst_40 = arith.constant 9.99999974E-6 : f32
    %87 = vector.broadcast %cst_40 : f32 to vector<1x128xf32>
    %88 = arith.addf %84, %87 : vector<1x128xf32>
    %89 = math.rsqrt %88 : vector<1x128xf32>
    %90 = vector.broadcast %89 : vector<1x128xf32> to vector<8x128xf32>
    %91 = arith.mulf %86, %90 : vector<8x128xf32>
    %92 = vector.broadcast %17 : vector<8x1xf32> to vector<8x128xf32>
    %93 = arith.mulf %91, %92 : vector<8x128xf32>
    %94 = vector.broadcast %19 : vector<8x1xf32> to vector<8x128xf32>
    %95 = arith.addf %93, %94 : vector<8x128xf32>
    %cst_41 = arith.constant dense<0.000000e+00> : vector<24x128xf32>
    %96 = tpu.matmul %21, %95, %cst_41 {dimension_numbers = #tpu.dot_dimension_numbers<[1], [0], [0], [1], [0, 0, 1, 1], [], []>} : vector<24x8xf32>, vector<8x128xf32>, vector<24x128xf32> -> vector<24x128xf32>
    %97 = vector.extract_strided_slice %96 {offsets = [0, 0], sizes = [8, 128], strides = [1, 1]} : vector<24x128xf32> to vector<8x128xf32>
    %98 = vector.extract_strided_slice %96 {offsets = [8, 0], sizes = [8, 128], strides = [1, 1]} : vector<24x128xf32> to vector<8x128xf32>
    %99 = vector.extract_strided_slice %96 {offsets = [16, 0], sizes = [8, 128], strides = [1, 1]} : vector<24x128xf32> to vector<8x128xf32>
    %cst_42 = arith.constant dense<0.000000e+00> : vector<128xf32>
    %100 = vector.multi_reduction <add>, %7, %cst_42 [0] : vector<8x128xf32> to vector<128xf32>
    %101 = vector.shape_cast %100 : vector<128xf32> to vector<1x128xf32>
    %cst_43 = arith.constant 8.000000e+00 : f32
    %102 = vector.broadcast %cst_43 : f32 to vector<1x128xf32>
    %103 = arith.divf %101, %102 : vector<1x128xf32>
    %104 = arith.mulf %7, %7 : vector<8x128xf32>
    %cst_44 = arith.constant dense<0.000000e+00> : vector<128xf32>
    %105 = vector.multi_reduction <add>, %104, %cst_44 [0] : vector<8x128xf32> to vector<128xf32>
    %106 = vector.shape_cast %105 : vector<128xf32> to vector<1x128xf32>
    %cst_45 = arith.constant 8.000000e+00 : f32
    %107 = vector.broadcast %cst_45 : f32 to vector<1x128xf32>
    %108 = arith.divf %106, %107 : vector<1x128xf32>
    %109 = arith.mulf %103, %103 : vector<1x128xf32>
    %110 = arith.subf %108, %109 : vector<1x128xf32>
    %111 = vector.broadcast %103 : vector<1x128xf32> to vector<8x128xf32>
    %112 = arith.subf %7, %111 : vector<8x128xf32>
    %cst_46 = arith.constant 9.99999974E-6 : f32
    %113 = vector.broadcast %cst_46 : f32 to vector<1x128xf32>
    %114 = arith.addf %110, %113 : vector<1x128xf32>
    %115 = math.rsqrt %114 : vector<1x128xf32>
    %116 = vector.broadcast %115 : vector<1x128xf32> to vector<8x128xf32>
    %117 = arith.mulf %112, %116 : vector<8x128xf32>
    %118 = vector.broadcast %17 : vector<8x1xf32> to vector<8x128xf32>
    %119 = arith.mulf %117, %118 : vector<8x128xf32>
    %120 = vector.broadcast %19 : vector<8x1xf32> to vector<8x128xf32>
    %121 = arith.addf %119, %120 : vector<8x128xf32>
    %cst_47 = arith.constant dense<0.000000e+00> : vector<24x128xf32>
    %122 = tpu.matmul %21, %121, %cst_47 {dimension_numbers = #tpu.dot_dimension_numbers<[1], [0], [0], [1], [0, 0, 1, 1], [], []>} : vector<24x8xf32>, vector<8x128xf32>, vector<24x128xf32> -> vector<24x128xf32>
    %123 = vector.extract_strided_slice %122 {offsets = [0, 0], sizes = [8, 128], strides = [1, 1]} : vector<24x128xf32> to vector<8x128xf32>
    %124 = vector.extract_strided_slice %122 {offsets = [8, 0], sizes = [8, 128], strides = [1, 1]} : vector<24x128xf32> to vector<8x128xf32>
    %125 = vector.extract_strided_slice %122 {offsets = [16, 0], sizes = [8, 128], strides = [1, 1]} : vector<24x128xf32> to vector<8x128xf32>
    %cst_48 = arith.constant dense<0.000000e+00> : vector<128xf32>
    %126 = vector.multi_reduction <add>, %9, %cst_48 [0] : vector<8x128xf32> to vector<128xf32>
    %127 = vector.shape_cast %126 : vector<128xf32> to vector<1x128xf32>
    %cst_49 = arith.constant 8.000000e+00 : f32
    %128 = vector.broadcast %cst_49 : f32 to vector<1x128xf32>
    %129 = arith.divf %127, %128 : vector<1x128xf32>
    %130 = arith.mulf %9, %9 : vector<8x128xf32>
    %cst_50 = arith.constant dense<0.000000e+00> : vector<128xf32>
    %131 = vector.multi_reduction <add>, %130, %cst_50 [0] : vector<8x128xf32> to vector<128xf32>
    %132 = vector.shape_cast %131 : vector<128xf32> to vector<1x128xf32>
    %cst_51 = arith.constant 8.000000e+00 : f32
    %133 = vector.broadcast %cst_51 : f32 to vector<1x128xf32>
    %134 = arith.divf %132, %133 : vector<1x128xf32>
    %135 = arith.mulf %129, %129 : vector<1x128xf32>
    %136 = arith.subf %134, %135 : vector<1x128xf32>
    %137 = vector.broadcast %129 : vector<1x128xf32> to vector<8x128xf32>
    %138 = arith.subf %9, %137 : vector<8x128xf32>
    %cst_52 = arith.constant 9.99999974E-6 : f32
    %139 = vector.broadcast %cst_52 : f32 to vector<1x128xf32>
    %140 = arith.addf %136, %139 : vector<1x128xf32>
    %141 = math.rsqrt %140 : vector<1x128xf32>
    %142 = vector.broadcast %141 : vector<1x128xf32> to vector<8x128xf32>
    %143 = arith.mulf %138, %142 : vector<8x128xf32>
    %144 = vector.broadcast %17 : vector<8x1xf32> to vector<8x128xf32>
    %145 = arith.mulf %143, %144 : vector<8x128xf32>
    %146 = vector.broadcast %19 : vector<8x1xf32> to vector<8x128xf32>
    %147 = arith.addf %145, %146 : vector<8x128xf32>
    %cst_53 = arith.constant dense<0.000000e+00> : vector<24x128xf32>
    %148 = tpu.matmul %21, %147, %cst_53 {dimension_numbers = #tpu.dot_dimension_numbers<[1], [0], [0], [1], [0, 0, 1, 1], [], []>} : vector<24x8xf32>, vector<8x128xf32>, vector<24x128xf32> -> vector<24x128xf32>
    %149 = vector.extract_strided_slice %148 {offsets = [0, 0], sizes = [8, 128], strides = [1, 1]} : vector<24x128xf32> to vector<8x128xf32>
    %150 = vector.extract_strided_slice %148 {offsets = [8, 0], sizes = [8, 128], strides = [1, 1]} : vector<24x128xf32> to vector<8x128xf32>
    %151 = vector.extract_strided_slice %148 {offsets = [16, 0], sizes = [8, 128], strides = [1, 1]} : vector<24x128xf32> to vector<8x128xf32>
    %cst_54 = arith.constant dense<0.000000e+00> : vector<128xf32>
    %152 = vector.multi_reduction <add>, %11, %cst_54 [0] : vector<8x128xf32> to vector<128xf32>
    %153 = vector.shape_cast %152 : vector<128xf32> to vector<1x128xf32>
    %cst_55 = arith.constant 8.000000e+00 : f32
    %154 = vector.broadcast %cst_55 : f32 to vector<1x128xf32>
    %155 = arith.divf %153, %154 : vector<1x128xf32>
    %156 = arith.mulf %11, %11 : vector<8x128xf32>
    %cst_56 = arith.constant dense<0.000000e+00> : vector<128xf32>
    %157 = vector.multi_reduction <add>, %156, %cst_56 [0] : vector<8x128xf32> to vector<128xf32>
    %158 = vector.shape_cast %157 : vector<128xf32> to vector<1x128xf32>
    %cst_57 = arith.constant 8.000000e+00 : f32
    %159 = vector.broadcast %cst_57 : f32 to vector<1x128xf32>
    %160 = arith.divf %158, %159 : vector<1x128xf32>
    %161 = arith.mulf %155, %155 : vector<1x128xf32>
    %162 = arith.subf %160, %161 : vector<1x128xf32>
    %163 = vector.broadcast %155 : vector<1x128xf32> to vector<8x128xf32>
    %164 = arith.subf %11, %163 : vector<8x128xf32>
    %cst_58 = arith.constant 9.99999974E-6 : f32
    %165 = vector.broadcast %cst_58 : f32 to vector<1x128xf32>
    %166 = arith.addf %162, %165 : vector<1x128xf32>
    %167 = math.rsqrt %166 : vector<1x128xf32>
    %168 = vector.broadcast %167 : vector<1x128xf32> to vector<8x128xf32>
    %169 = arith.mulf %164, %168 : vector<8x128xf32>
    %170 = vector.broadcast %17 : vector<8x1xf32> to vector<8x128xf32>
    %171 = arith.mulf %169, %170 : vector<8x128xf32>
    %172 = vector.broadcast %19 : vector<8x1xf32> to vector<8x128xf32>
    %173 = arith.addf %171, %172 : vector<8x128xf32>
    %cst_59 = arith.constant dense<0.000000e+00> : vector<24x128xf32>
    %174 = tpu.matmul %21, %173, %cst_59 {dimension_numbers = #tpu.dot_dimension_numbers<[1], [0], [0], [1], [0, 0, 1, 1], [], []>} : vector<24x8xf32>, vector<8x128xf32>, vector<24x128xf32> -> vector<24x128xf32>
    %175 = vector.extract_strided_slice %174 {offsets = [0, 0], sizes = [8, 128], strides = [1, 1]} : vector<24x128xf32> to vector<8x128xf32>
    %176 = vector.extract_strided_slice %174 {offsets = [8, 0], sizes = [8, 128], strides = [1, 1]} : vector<24x128xf32> to vector<8x128xf32>
    %177 = vector.extract_strided_slice %174 {offsets = [16, 0], sizes = [8, 128], strides = [1, 1]} : vector<24x128xf32> to vector<8x128xf32>
    %cst_60 = arith.constant dense<0.000000e+00> : vector<128xf32>
    %178 = vector.multi_reduction <add>, %13, %cst_60 [0] : vector<8x128xf32> to vector<128xf32>
    %179 = vector.shape_cast %178 : vector<128xf32> to vector<1x128xf32>
    %cst_61 = arith.constant 8.000000e+00 : f32
    %180 = vector.broadcast %cst_61 : f32 to vector<1x128xf32>
    %181 = arith.divf %179, %180 : vector<1x128xf32>
    %182 = arith.mulf %13, %13 : vector<8x128xf32>
    %cst_62 = arith.constant dense<0.000000e+00> : vector<128xf32>
    %183 = vector.multi_reduction <add>, %182, %cst_62 [0] : vector<8x128xf32> to vector<128xf32>
    %184 = vector.shape_cast %183 : vector<128xf32> to vector<1x128xf32>
    %cst_63 = arith.constant 8.000000e+00 : f32
    %185 = vector.broadcast %cst_63 : f32 to vector<1x128xf32>
    %186 = arith.divf %184, %185 : vector<1x128xf32>
    %187 = arith.mulf %181, %181 : vector<1x128xf32>
    %188 = arith.subf %186, %187 : vector<1x128xf32>
    %189 = vector.broadcast %181 : vector<1x128xf32> to vector<8x128xf32>
    %190 = arith.subf %13, %189 : vector<8x128xf32>
    %cst_64 = arith.constant 9.99999974E-6 : f32
    %191 = vector.broadcast %cst_64 : f32 to vector<1x128xf32>
    %192 = arith.addf %188, %191 : vector<1x128xf32>
    %193 = math.rsqrt %192 : vector<1x128xf32>
    %194 = vector.broadcast %193 : vector<1x128xf32> to vector<8x128xf32>
    %195 = arith.mulf %190, %194 : vector<8x128xf32>
    %196 = vector.broadcast %17 : vector<8x1xf32> to vector<8x128xf32>
    %197 = arith.mulf %195, %196 : vector<8x128xf32>
    %198 = vector.broadcast %19 : vector<8x1xf32> to vector<8x128xf32>
    %199 = arith.addf %197, %198 : vector<8x128xf32>
    %cst_65 = arith.constant dense<0.000000e+00> : vector<24x128xf32>
    %200 = tpu.matmul %21, %199, %cst_65 {dimension_numbers = #tpu.dot_dimension_numbers<[1], [0], [0], [1], [0, 0, 1, 1], [], []>} : vector<24x8xf32>, vector<8x128xf32>, vector<24x128xf32> -> vector<24x128xf32>
    %201 = vector.extract_strided_slice %200 {offsets = [0, 0], sizes = [8, 128], strides = [1, 1]} : vector<24x128xf32> to vector<8x128xf32>
    %202 = vector.extract_strided_slice %200 {offsets = [8, 0], sizes = [8, 128], strides = [1, 1]} : vector<24x128xf32> to vector<8x128xf32>
    %203 = vector.extract_strided_slice %200 {offsets = [16, 0], sizes = [8, 128], strides = [1, 1]} : vector<24x128xf32> to vector<8x128xf32>
    %cst_66 = arith.constant dense<0.000000e+00> : vector<128xf32>
    %204 = vector.multi_reduction <add>, %15, %cst_66 [0] : vector<8x128xf32> to vector<128xf32>
    %205 = vector.shape_cast %204 : vector<128xf32> to vector<1x128xf32>
    %cst_67 = arith.constant 8.000000e+00 : f32
    %206 = vector.broadcast %cst_67 : f32 to vector<1x128xf32>
    %207 = arith.divf %205, %206 : vector<1x128xf32>
    %208 = arith.mulf %15, %15 : vector<8x128xf32>
    %cst_68 = arith.constant dense<0.000000e+00> : vector<128xf32>
    %209 = vector.multi_reduction <add>, %208, %cst_68 [0] : vector<8x128xf32> to vector<128xf32>
    %210 = vector.shape_cast %209 : vector<128xf32> to vector<1x128xf32>
    %cst_69 = arith.constant 8.000000e+00 : f32
    %211 = vector.broadcast %cst_69 : f32 to vector<1x128xf32>
    %212 = arith.divf %210, %211 : vector<1x128xf32>
    %213 = arith.mulf %207, %207 : vector<1x128xf32>
    %214 = arith.subf %212, %213 : vector<1x128xf32>
    %215 = vector.broadcast %207 : vector<1x128xf32> to vector<8x128xf32>
    %216 = arith.subf %15, %215 : vector<8x128xf32>
    %cst_70 = arith.constant 9.99999974E-6 : f32
    %217 = vector.broadcast %cst_70 : f32 to vector<1x128xf32>
    %218 = arith.addf %214, %217 : vector<1x128xf32>
    %219 = math.rsqrt %218 : vector<1x128xf32>
    %220 = vector.broadcast %219 : vector<1x128xf32> to vector<8x128xf32>
    %221 = arith.mulf %216, %220 : vector<8x128xf32>
    %222 = vector.broadcast %17 : vector<8x1xf32> to vector<8x128xf32>
    %223 = arith.mulf %221, %222 : vector<8x128xf32>
    %224 = vector.broadcast %19 : vector<8x1xf32> to vector<8x128xf32>
    %225 = arith.addf %223, %224 : vector<8x128xf32>
    %cst_71 = arith.constant dense<0.000000e+00> : vector<24x128xf32>
    %226 = tpu.matmul %21, %225, %cst_71 {dimension_numbers = #tpu.dot_dimension_numbers<[1], [0], [0], [1], [0, 0, 1, 1], [], []>} : vector<24x8xf32>, vector<8x128xf32>, vector<24x128xf32> -> vector<24x128xf32>
    %227 = vector.extract_strided_slice %226 {offsets = [0, 0], sizes = [8, 128], strides = [1, 1]} : vector<24x128xf32> to vector<8x128xf32>
    %228 = vector.extract_strided_slice %226 {offsets = [8, 0], sizes = [8, 128], strides = [1, 1]} : vector<24x128xf32> to vector<8x128xf32>
    %229 = vector.extract_strided_slice %226 {offsets = [16, 0], sizes = [8, 128], strides = [1, 1]} : vector<24x128xf32> to vector<8x128xf32>
    %c0_72 = arith.constant 0 : index
    %c0_73 = arith.constant 0 : index
    %c0_74 = arith.constant 0 : index
    %230 = vector.load %arg3[%c0_72, %c0_73, %c0_74] : memref<1x8x8xf32, #tpu.memory_space<vmem>>, vector<1x8x8xf32>
    %231 = vector.shape_cast %230 : vector<1x8x8xf32> to vector<8x8xf32>
    %232 = arith.mulf %45, %46 : vector<8x128xf32>
    %233 = arith.mulf %45, %72 : vector<8x128xf32>
    %234 = arith.maximumf %232, %233 : vector<8x128xf32>
    %235 = arith.mulf %45, %98 : vector<8x128xf32>
    %236 = arith.maximumf %234, %235 : vector<8x128xf32>
    %237 = arith.mulf %45, %124 : vector<8x128xf32>
    %238 = arith.maximumf %236, %237 : vector<8x128xf32>
    %239 = arith.mulf %45, %150 : vector<8x128xf32>
    %240 = arith.maximumf %238, %239 : vector<8x128xf32>
    %241 = arith.mulf %45, %176 : vector<8x128xf32>
    %242 = arith.maximumf %240, %241 : vector<8x128xf32>
    %243 = arith.mulf %45, %202 : vector<8x128xf32>
    %244 = arith.maximumf %242, %243 : vector<8x128xf32>
    %245 = arith.mulf %45, %228 : vector<8x128xf32>
    %246 = arith.maximumf %244, %245 : vector<8x128xf32>
    %cst_75 = arith.constant 0.000000e+00 : f32
    %247 = vector.broadcast %cst_75 : f32 to vector<8x128xf32>
    %cst_76 = arith.constant 0.000000e+00 : f32
    %248 = vector.broadcast %cst_76 : f32 to vector<8x128xf32>
    %249 = arith.mulf %45, %46 : vector<8x128xf32>
    %250 = arith.subf %249, %246 : vector<8x128xf32>
    %251 = math.exp %250 : vector<8x128xf32>
    %252 = arith.addf %247, %251 : vector<8x128xf32>
    %253 = arith.mulf %251, %47 : vector<8x128xf32>
    %254 = arith.addf %248, %253 : vector<8x128xf32>
    %255 = arith.mulf %45, %72 : vector<8x128xf32>
    %256 = arith.subf %255, %246 : vector<8x128xf32>
    %257 = math.exp %256 : vector<8x128xf32>
    %258 = arith.addf %252, %257 : vector<8x128xf32>
    %259 = arith.mulf %257, %73 : vector<8x128xf32>
    %260 = arith.addf %254, %259 : vector<8x128xf32>
    %261 = arith.mulf %45, %98 : vector<8x128xf32>
    %262 = arith.subf %261, %246 : vector<8x128xf32>
    %263 = math.exp %262 : vector<8x128xf32>
    %264 = arith.addf %258, %263 : vector<8x128xf32>
    %265 = arith.mulf %263, %99 : vector<8x128xf32>
    %266 = arith.addf %260, %265 : vector<8x128xf32>
    %267 = arith.mulf %45, %124 : vector<8x128xf32>
    %268 = arith.subf %267, %246 : vector<8x128xf32>
    %269 = math.exp %268 : vector<8x128xf32>
    %270 = arith.addf %264, %269 : vector<8x128xf32>
    %271 = arith.mulf %269, %125 : vector<8x128xf32>
    %272 = arith.addf %266, %271 : vector<8x128xf32>
    %273 = arith.mulf %45, %150 : vector<8x128xf32>
    %274 = arith.subf %273, %246 : vector<8x128xf32>
    %275 = math.exp %274 : vector<8x128xf32>
    %276 = arith.addf %270, %275 : vector<8x128xf32>
    %277 = arith.mulf %275, %151 : vector<8x128xf32>
    %278 = arith.addf %272, %277 : vector<8x128xf32>
    %279 = arith.mulf %45, %176 : vector<8x128xf32>
    %280 = arith.subf %279, %246 : vector<8x128xf32>
    %281 = math.exp %280 : vector<8x128xf32>
    %282 = arith.addf %276, %281 : vector<8x128xf32>
    %283 = arith.mulf %281, %177 : vector<8x128xf32>
    %284 = arith.addf %278, %283 : vector<8x128xf32>
    %285 = arith.mulf %45, %202 : vector<8x128xf32>
    %286 = arith.subf %285, %246 : vector<8x128xf32>
    %287 = math.exp %286 : vector<8x128xf32>
    %288 = arith.addf %282, %287 : vector<8x128xf32>
    %289 = arith.mulf %287, %203 : vector<8x128xf32>
    %290 = arith.addf %284, %289 : vector<8x128xf32>
    %291 = arith.mulf %45, %228 : vector<8x128xf32>
    %292 = arith.subf %291, %246 : vector<8x128xf32>
    %293 = math.exp %292 : vector<8x128xf32>
    %294 = arith.addf %288, %293 : vector<8x128xf32>
    %295 = arith.mulf %293, %229 : vector<8x128xf32>
    %296 = arith.addf %290, %295 : vector<8x128xf32>
    %297 = tpu.reciprocal %294 {approx = true} : vector<8x128xf32> -> vector<8x128xf32>
    %298 = arith.mulf %296, %297 : vector<8x128xf32>
    %cst_77 = arith.constant dense<0.000000e+00> : vector<8x128xf32>
    %299 = tpu.matmul %231, %298, %cst_77 {dimension_numbers = #tpu.dot_dimension_numbers<[1], [0], [0], [1], [0, 0, 1, 1], [], []>} : vector<8x8xf32>, vector<8x128xf32>, vector<8x128xf32> -> vector<8x128xf32>
    %300 = arith.addf %1, %299 : vector<8x128xf32>
    %301 = arith.mulf %71, %46 : vector<8x128xf32>
    %302 = arith.mulf %71, %72 : vector<8x128xf32>
    %303 = arith.maximumf %301, %302 : vector<8x128xf32>
    %304 = arith.mulf %71, %98 : vector<8x128xf32>
    %305 = arith.maximumf %303, %304 : vector<8x128xf32>
    %306 = arith.mulf %71, %124 : vector<8x128xf32>
    %307 = arith.maximumf %305, %306 : vector<8x128xf32>
    %308 = arith.mulf %71, %150 : vector<8x128xf32>
    %309 = arith.maximumf %307, %308 : vector<8x128xf32>
    %310 = arith.mulf %71, %176 : vector<8x128xf32>
    %311 = arith.maximumf %309, %310 : vector<8x128xf32>
    %312 = arith.mulf %71, %202 : vector<8x128xf32>
    %313 = arith.maximumf %311, %312 : vector<8x128xf32>
    %314 = arith.mulf %71, %228 : vector<8x128xf32>
    %315 = arith.maximumf %313, %314 : vector<8x128xf32>
    %cst_78 = arith.constant 0.000000e+00 : f32
    %316 = vector.broadcast %cst_78 : f32 to vector<8x128xf32>
    %cst_79 = arith.constant 0.000000e+00 : f32
    %317 = vector.broadcast %cst_79 : f32 to vector<8x128xf32>
    %318 = arith.mulf %71, %46 : vector<8x128xf32>
    %319 = arith.subf %318, %315 : vector<8x128xf32>
    %320 = math.exp %319 : vector<8x128xf32>
    %321 = arith.addf %316, %320 : vector<8x128xf32>
    %322 = arith.mulf %320, %47 : vector<8x128xf32>
    %323 = arith.addf %317, %322 : vector<8x128xf32>
    %324 = arith.mulf %71, %72 : vector<8x128xf32>
    %325 = arith.subf %324, %315 : vector<8x128xf32>
    %326 = math.exp %325 : vector<8x128xf32>
    %327 = arith.addf %321, %326 : vector<8x128xf32>
    %328 = arith.mulf %326, %73 : vector<8x128xf32>
    %329 = arith.addf %323, %328 : vector<8x128xf32>
    %330 = arith.mulf %71, %98 : vector<8x128xf32>
    %331 = arith.subf %330, %315 : vector<8x128xf32>
    %332 = math.exp %331 : vector<8x128xf32>
    %333 = arith.addf %327, %332 : vector<8x128xf32>
    %334 = arith.mulf %332, %99 : vector<8x128xf32>
    %335 = arith.addf %329, %334 : vector<8x128xf32>
    %336 = arith.mulf %71, %124 : vector<8x128xf32>
    %337 = arith.subf %336, %315 : vector<8x128xf32>
    %338 = math.exp %337 : vector<8x128xf32>
    %339 = arith.addf %333, %338 : vector<8x128xf32>
    %340 = arith.mulf %338, %125 : vector<8x128xf32>
    %341 = arith.addf %335, %340 : vector<8x128xf32>
    %342 = arith.mulf %71, %150 : vector<8x128xf32>
    %343 = arith.subf %342, %315 : vector<8x128xf32>
    %344 = math.exp %343 : vector<8x128xf32>
    %345 = arith.addf %339, %344 : vector<8x128xf32>
    %346 = arith.mulf %344, %151 : vector<8x128xf32>
    %347 = arith.addf %341, %346 : vector<8x128xf32>
    %348 = arith.mulf %71, %176 : vector<8x128xf32>
    %349 = arith.subf %348, %315 : vector<8x128xf32>
    %350 = math.exp %349 : vector<8x128xf32>
    %351 = arith.addf %345, %350 : vector<8x128xf32>
    %352 = arith.mulf %350, %177 : vector<8x128xf32>
    %353 = arith.addf %347, %352 : vector<8x128xf32>
    %354 = arith.mulf %71, %202 : vector<8x128xf32>
    %355 = arith.subf %354, %315 : vector<8x128xf32>
    %356 = math.exp %355 : vector<8x128xf32>
    %357 = arith.addf %351, %356 : vector<8x128xf32>
    %358 = arith.mulf %356, %203 : vector<8x128xf32>
    %359 = arith.addf %353, %358 : vector<8x128xf32>
    %360 = arith.mulf %71, %228 : vector<8x128xf32>
    %361 = arith.subf %360, %315 : vector<8x128xf32>
    %362 = math.exp %361 : vector<8x128xf32>
    %363 = arith.addf %357, %362 : vector<8x128xf32>
    %364 = arith.mulf %362, %229 : vector<8x128xf32>
    %365 = arith.addf %359, %364 : vector<8x128xf32>
    %366 = tpu.reciprocal %363 {approx = true} : vector<8x128xf32> -> vector<8x128xf32>
    %367 = arith.mulf %365, %366 : vector<8x128xf32>
    %cst_80 = arith.constant dense<0.000000e+00> : vector<8x128xf32>
    %368 = tpu.matmul %231, %367, %cst_80 {dimension_numbers = #tpu.dot_dimension_numbers<[1], [0], [0], [1], [0, 0, 1, 1], [], []>} : vector<8x8xf32>, vector<8x128xf32>, vector<8x128xf32> -> vector<8x128xf32>
    %369 = arith.addf %3, %368 : vector<8x128xf32>
    %370 = arith.mulf %97, %46 : vector<8x128xf32>
    %371 = arith.mulf %97, %72 : vector<8x128xf32>
    %372 = arith.maximumf %370, %371 : vector<8x128xf32>
    %373 = arith.mulf %97, %98 : vector<8x128xf32>
    %374 = arith.maximumf %372, %373 : vector<8x128xf32>
    %375 = arith.mulf %97, %124 : vector<8x128xf32>
    %376 = arith.maximumf %374, %375 : vector<8x128xf32>
    %377 = arith.mulf %97, %150 : vector<8x128xf32>
    %378 = arith.maximumf %376, %377 : vector<8x128xf32>
    %379 = arith.mulf %97, %176 : vector<8x128xf32>
    %380 = arith.maximumf %378, %379 : vector<8x128xf32>
    %381 = arith.mulf %97, %202 : vector<8x128xf32>
    %382 = arith.maximumf %380, %381 : vector<8x128xf32>
    %383 = arith.mulf %97, %228 : vector<8x128xf32>
    %384 = arith.maximumf %382, %383 : vector<8x128xf32>
    %cst_81 = arith.constant 0.000000e+00 : f32
    %385 = vector.broadcast %cst_81 : f32 to vector<8x128xf32>
    %cst_82 = arith.constant 0.000000e+00 : f32
    %386 = vector.broadcast %cst_82 : f32 to vector<8x128xf32>
    %387 = arith.mulf %97, %46 : vector<8x128xf32>
    %388 = arith.subf %387, %384 : vector<8x128xf32>
    %389 = math.exp %388 : vector<8x128xf32>
    %390 = arith.addf %385, %389 : vector<8x128xf32>
    %391 = arith.mulf %389, %47 : vector<8x128xf32>
    %392 = arith.addf %386, %391 : vector<8x128xf32>
    %393 = arith.mulf %97, %72 : vector<8x128xf32>
    %394 = arith.subf %393, %384 : vector<8x128xf32>
    %395 = math.exp %394 : vector<8x128xf32>
    %396 = arith.addf %390, %395 : vector<8x128xf32>
    %397 = arith.mulf %395, %73 : vector<8x128xf32>
    %398 = arith.addf %392, %397 : vector<8x128xf32>
    %399 = arith.mulf %97, %98 : vector<8x128xf32>
    %400 = arith.subf %399, %384 : vector<8x128xf32>
    %401 = math.exp %400 : vector<8x128xf32>
    %402 = arith.addf %396, %401 : vector<8x128xf32>
    %403 = arith.mulf %401, %99 : vector<8x128xf32>
    %404 = arith.addf %398, %403 : vector<8x128xf32>
    %405 = arith.mulf %97, %124 : vector<8x128xf32>
    %406 = arith.subf %405, %384 : vector<8x128xf32>
    %407 = math.exp %406 : vector<8x128xf32>
    %408 = arith.addf %402, %407 : vector<8x128xf32>
    %409 = arith.mulf %407, %125 : vector<8x128xf32>
    %410 = arith.addf %404, %409 : vector<8x128xf32>
    %411 = arith.mulf %97, %150 : vector<8x128xf32>
    %412 = arith.subf %411, %384 : vector<8x128xf32>
    %413 = math.exp %412 : vector<8x128xf32>
    %414 = arith.addf %408, %413 : vector<8x128xf32>
    %415 = arith.mulf %413, %151 : vector<8x128xf32>
    %416 = arith.addf %410, %415 : vector<8x128xf32>
    %417 = arith.mulf %97, %176 : vector<8x128xf32>
    %418 = arith.subf %417, %384 : vector<8x128xf32>
    %419 = math.exp %418 : vector<8x128xf32>
    %420 = arith.addf %414, %419 : vector<8x128xf32>
    %421 = arith.mulf %419, %177 : vector<8x128xf32>
    %422 = arith.addf %416, %421 : vector<8x128xf32>
    %423 = arith.mulf %97, %202 : vector<8x128xf32>
    %424 = arith.subf %423, %384 : vector<8x128xf32>
    %425 = math.exp %424 : vector<8x128xf32>
    %426 = arith.addf %420, %425 : vector<8x128xf32>
    %427 = arith.mulf %425, %203 : vector<8x128xf32>
    %428 = arith.addf %422, %427 : vector<8x128xf32>
    %429 = arith.mulf %97, %228 : vector<8x128xf32>
    %430 = arith.subf %429, %384 : vector<8x128xf32>
    %431 = math.exp %430 : vector<8x128xf32>
    %432 = arith.addf %426, %431 : vector<8x128xf32>
    %433 = arith.mulf %431, %229 : vector<8x128xf32>
    %434 = arith.addf %428, %433 : vector<8x128xf32>
    %435 = tpu.reciprocal %432 {approx = true} : vector<8x128xf32> -> vector<8x128xf32>
    %436 = arith.mulf %434, %435 : vector<8x128xf32>
    %cst_83 = arith.constant dense<0.000000e+00> : vector<8x128xf32>
    %437 = tpu.matmul %231, %436, %cst_83 {dimension_numbers = #tpu.dot_dimension_numbers<[1], [0], [0], [1], [0, 0, 1, 1], [], []>} : vector<8x8xf32>, vector<8x128xf32>, vector<8x128xf32> -> vector<8x128xf32>
    %438 = arith.addf %5, %437 : vector<8x128xf32>
    %439 = arith.mulf %123, %46 : vector<8x128xf32>
    %440 = arith.mulf %123, %72 : vector<8x128xf32>
    %441 = arith.maximumf %439, %440 : vector<8x128xf32>
    %442 = arith.mulf %123, %98 : vector<8x128xf32>
    %443 = arith.maximumf %441, %442 : vector<8x128xf32>
    %444 = arith.mulf %123, %124 : vector<8x128xf32>
    %445 = arith.maximumf %443, %444 : vector<8x128xf32>
    %446 = arith.mulf %123, %150 : vector<8x128xf32>
    %447 = arith.maximumf %445, %446 : vector<8x128xf32>
    %448 = arith.mulf %123, %176 : vector<8x128xf32>
    %449 = arith.maximumf %447, %448 : vector<8x128xf32>
    %450 = arith.mulf %123, %202 : vector<8x128xf32>
    %451 = arith.maximumf %449, %450 : vector<8x128xf32>
    %452 = arith.mulf %123, %228 : vector<8x128xf32>
    %453 = arith.maximumf %451, %452 : vector<8x128xf32>
    %cst_84 = arith.constant 0.000000e+00 : f32
    %454 = vector.broadcast %cst_84 : f32 to vector<8x128xf32>
    %cst_85 = arith.constant 0.000000e+00 : f32
    %455 = vector.broadcast %cst_85 : f32 to vector<8x128xf32>
    %456 = arith.mulf %123, %46 : vector<8x128xf32>
    %457 = arith.subf %456, %453 : vector<8x128xf32>
    %458 = math.exp %457 : vector<8x128xf32>
    %459 = arith.addf %454, %458 : vector<8x128xf32>
    %460 = arith.mulf %458, %47 : vector<8x128xf32>
    %461 = arith.addf %455, %460 : vector<8x128xf32>
    %462 = arith.mulf %123, %72 : vector<8x128xf32>
    %463 = arith.subf %462, %453 : vector<8x128xf32>
    %464 = math.exp %463 : vector<8x128xf32>
    %465 = arith.addf %459, %464 : vector<8x128xf32>
    %466 = arith.mulf %464, %73 : vector<8x128xf32>
    %467 = arith.addf %461, %466 : vector<8x128xf32>
    %468 = arith.mulf %123, %98 : vector<8x128xf32>
    %469 = arith.subf %468, %453 : vector<8x128xf32>
    %470 = math.exp %469 : vector<8x128xf32>
    %471 = arith.addf %465, %470 : vector<8x128xf32>
    %472 = arith.mulf %470, %99 : vector<8x128xf32>
    %473 = arith.addf %467, %472 : vector<8x128xf32>
    %474 = arith.mulf %123, %124 : vector<8x128xf32>
    %475 = arith.subf %474, %453 : vector<8x128xf32>
    %476 = math.exp %475 : vector<8x128xf32>
    %477 = arith.addf %471, %476 : vector<8x128xf32>
    %478 = arith.mulf %476, %125 : vector<8x128xf32>
    %479 = arith.addf %473, %478 : vector<8x128xf32>
    %480 = arith.mulf %123, %150 : vector<8x128xf32>
    %481 = arith.subf %480, %453 : vector<8x128xf32>
    %482 = math.exp %481 : vector<8x128xf32>
    %483 = arith.addf %477, %482 : vector<8x128xf32>
    %484 = arith.mulf %482, %151 : vector<8x128xf32>
    %485 = arith.addf %479, %484 : vector<8x128xf32>
    %486 = arith.mulf %123, %176 : vector<8x128xf32>
    %487 = arith.subf %486, %453 : vector<8x128xf32>
    %488 = math.exp %487 : vector<8x128xf32>
    %489 = arith.addf %483, %488 : vector<8x128xf32>
    %490 = arith.mulf %488, %177 : vector<8x128xf32>
    %491 = arith.addf %485, %490 : vector<8x128xf32>
    %492 = arith.mulf %123, %202 : vector<8x128xf32>
    %493 = arith.subf %492, %453 : vector<8x128xf32>
    %494 = math.exp %493 : vector<8x128xf32>
    %495 = arith.addf %489, %494 : vector<8x128xf32>
    %496 = arith.mulf %494, %203 : vector<8x128xf32>
    %497 = arith.addf %491, %496 : vector<8x128xf32>
    %498 = arith.mulf %123, %228 : vector<8x128xf32>
    %499 = arith.subf %498, %453 : vector<8x128xf32>
    %500 = math.exp %499 : vector<8x128xf32>
    %501 = arith.addf %495, %500 : vector<8x128xf32>
    %502 = arith.mulf %500, %229 : vector<8x128xf32>
    %503 = arith.addf %497, %502 : vector<8x128xf32>
    %504 = tpu.reciprocal %501 {approx = true} : vector<8x128xf32> -> vector<8x128xf32>
    %505 = arith.mulf %503, %504 : vector<8x128xf32>
    %cst_86 = arith.constant dense<0.000000e+00> : vector<8x128xf32>
    %506 = tpu.matmul %231, %505, %cst_86 {dimension_numbers = #tpu.dot_dimension_numbers<[1], [0], [0], [1], [0, 0, 1, 1], [], []>} : vector<8x8xf32>, vector<8x128xf32>, vector<8x128xf32> -> vector<8x128xf32>
    %507 = arith.addf %7, %506 : vector<8x128xf32>
    %508 = arith.mulf %149, %46 : vector<8x128xf32>
    %509 = arith.mulf %149, %72 : vector<8x128xf32>
    %510 = arith.maximumf %508, %509 : vector<8x128xf32>
    %511 = arith.mulf %149, %98 : vector<8x128xf32>
    %512 = arith.maximumf %510, %511 : vector<8x128xf32>
    %513 = arith.mulf %149, %124 : vector<8x128xf32>
    %514 = arith.maximumf %512, %513 : vector<8x128xf32>
    %515 = arith.mulf %149, %150 : vector<8x128xf32>
    %516 = arith.maximumf %514, %515 : vector<8x128xf32>
    %517 = arith.mulf %149, %176 : vector<8x128xf32>
    %518 = arith.maximumf %516, %517 : vector<8x128xf32>
    %519 = arith.mulf %149, %202 : vector<8x128xf32>
    %520 = arith.maximumf %518, %519 : vector<8x128xf32>
    %521 = arith.mulf %149, %228 : vector<8x128xf32>
    %522 = arith.maximumf %520, %521 : vector<8x128xf32>
    %cst_87 = arith.constant 0.000000e+00 : f32
    %523 = vector.broadcast %cst_87 : f32 to vector<8x128xf32>
    %cst_88 = arith.constant 0.000000e+00 : f32
    %524 = vector.broadcast %cst_88 : f32 to vector<8x128xf32>
    %525 = arith.mulf %149, %46 : vector<8x128xf32>
    %526 = arith.subf %525, %522 : vector<8x128xf32>
    %527 = math.exp %526 : vector<8x128xf32>
    %528 = arith.addf %523, %527 : vector<8x128xf32>
    %529 = arith.mulf %527, %47 : vector<8x128xf32>
    %530 = arith.addf %524, %529 : vector<8x128xf32>
    %531 = arith.mulf %149, %72 : vector<8x128xf32>
    %532 = arith.subf %531, %522 : vector<8x128xf32>
    %533 = math.exp %532 : vector<8x128xf32>
    %534 = arith.addf %528, %533 : vector<8x128xf32>
    %535 = arith.mulf %533, %73 : vector<8x128xf32>
    %536 = arith.addf %530, %535 : vector<8x128xf32>
    %537 = arith.mulf %149, %98 : vector<8x128xf32>
    %538 = arith.subf %537, %522 : vector<8x128xf32>
    %539 = math.exp %538 : vector<8x128xf32>
    %540 = arith.addf %534, %539 : vector<8x128xf32>
    %541 = arith.mulf %539, %99 : vector<8x128xf32>
    %542 = arith.addf %536, %541 : vector<8x128xf32>
    %543 = arith.mulf %149, %124 : vector<8x128xf32>
    %544 = arith.subf %543, %522 : vector<8x128xf32>
    %545 = math.exp %544 : vector<8x128xf32>
    %546 = arith.addf %540, %545 : vector<8x128xf32>
    %547 = arith.mulf %545, %125 : vector<8x128xf32>
    %548 = arith.addf %542, %547 : vector<8x128xf32>
    %549 = arith.mulf %149, %150 : vector<8x128xf32>
    %550 = arith.subf %549, %522 : vector<8x128xf32>
    %551 = math.exp %550 : vector<8x128xf32>
    %552 = arith.addf %546, %551 : vector<8x128xf32>
    %553 = arith.mulf %551, %151 : vector<8x128xf32>
    %554 = arith.addf %548, %553 : vector<8x128xf32>
    %555 = arith.mulf %149, %176 : vector<8x128xf32>
    %556 = arith.subf %555, %522 : vector<8x128xf32>
    %557 = math.exp %556 : vector<8x128xf32>
    %558 = arith.addf %552, %557 : vector<8x128xf32>
    %559 = arith.mulf %557, %177 : vector<8x128xf32>
    %560 = arith.addf %554, %559 : vector<8x128xf32>
    %561 = arith.mulf %149, %202 : vector<8x128xf32>
    %562 = arith.subf %561, %522 : vector<8x128xf32>
    %563 = math.exp %562 : vector<8x128xf32>
    %564 = arith.addf %558, %563 : vector<8x128xf32>
    %565 = arith.mulf %563, %203 : vector<8x128xf32>
    %566 = arith.addf %560, %565 : vector<8x128xf32>
    %567 = arith.mulf %149, %228 : vector<8x128xf32>
    %568 = arith.subf %567, %522 : vector<8x128xf32>
    %569 = math.exp %568 : vector<8x128xf32>
    %570 = arith.addf %564, %569 : vector<8x128xf32>
    %571 = arith.mulf %569, %229 : vector<8x128xf32>
    %572 = arith.addf %566, %571 : vector<8x128xf32>
    %573 = tpu.reciprocal %570 {approx = true} : vector<8x128xf32> -> vector<8x128xf32>
    %574 = arith.mulf %572, %573 : vector<8x128xf32>
    %cst_89 = arith.constant dense<0.000000e+00> : vector<8x128xf32>
    %575 = tpu.matmul %231, %574, %cst_89 {dimension_numbers = #tpu.dot_dimension_numbers<[1], [0], [0], [1], [0, 0, 1, 1], [], []>} : vector<8x8xf32>, vector<8x128xf32>, vector<8x128xf32> -> vector<8x128xf32>
    %576 = arith.addf %9, %575 : vector<8x128xf32>
    %577 = arith.mulf %175, %46 : vector<8x128xf32>
    %578 = arith.mulf %175, %72 : vector<8x128xf32>
    %579 = arith.maximumf %577, %578 : vector<8x128xf32>
    %580 = arith.mulf %175, %98 : vector<8x128xf32>
    %581 = arith.maximumf %579, %580 : vector<8x128xf32>
    %582 = arith.mulf %175, %124 : vector<8x128xf32>
    %583 = arith.maximumf %581, %582 : vector<8x128xf32>
    %584 = arith.mulf %175, %150 : vector<8x128xf32>
    %585 = arith.maximumf %583, %584 : vector<8x128xf32>
    %586 = arith.mulf %175, %176 : vector<8x128xf32>
    %587 = arith.maximumf %585, %586 : vector<8x128xf32>
    %588 = arith.mulf %175, %202 : vector<8x128xf32>
    %589 = arith.maximumf %587, %588 : vector<8x128xf32>
    %590 = arith.mulf %175, %228 : vector<8x128xf32>
    %591 = arith.maximumf %589, %590 : vector<8x128xf32>
    %cst_90 = arith.constant 0.000000e+00 : f32
    %592 = vector.broadcast %cst_90 : f32 to vector<8x128xf32>
    %cst_91 = arith.constant 0.000000e+00 : f32
    %593 = vector.broadcast %cst_91 : f32 to vector<8x128xf32>
    %594 = arith.mulf %175, %46 : vector<8x128xf32>
    %595 = arith.subf %594, %591 : vector<8x128xf32>
    %596 = math.exp %595 : vector<8x128xf32>
    %597 = arith.addf %592, %596 : vector<8x128xf32>
    %598 = arith.mulf %596, %47 : vector<8x128xf32>
    %599 = arith.addf %593, %598 : vector<8x128xf32>
    %600 = arith.mulf %175, %72 : vector<8x128xf32>
    %601 = arith.subf %600, %591 : vector<8x128xf32>
    %602 = math.exp %601 : vector<8x128xf32>
    %603 = arith.addf %597, %602 : vector<8x128xf32>
    %604 = arith.mulf %602, %73 : vector<8x128xf32>
    %605 = arith.addf %599, %604 : vector<8x128xf32>
    %606 = arith.mulf %175, %98 : vector<8x128xf32>
    %607 = arith.subf %606, %591 : vector<8x128xf32>
    %608 = math.exp %607 : vector<8x128xf32>
    %609 = arith.addf %603, %608 : vector<8x128xf32>
    %610 = arith.mulf %608, %99 : vector<8x128xf32>
    %611 = arith.addf %605, %610 : vector<8x128xf32>
    %612 = arith.mulf %175, %124 : vector<8x128xf32>
    %613 = arith.subf %612, %591 : vector<8x128xf32>
    %614 = math.exp %613 : vector<8x128xf32>
    %615 = arith.addf %609, %614 : vector<8x128xf32>
    %616 = arith.mulf %614, %125 : vector<8x128xf32>
    %617 = arith.addf %611, %616 : vector<8x128xf32>
    %618 = arith.mulf %175, %150 : vector<8x128xf32>
    %619 = arith.subf %618, %591 : vector<8x128xf32>
    %620 = math.exp %619 : vector<8x128xf32>
    %621 = arith.addf %615, %620 : vector<8x128xf32>
    %622 = arith.mulf %620, %151 : vector<8x128xf32>
    %623 = arith.addf %617, %622 : vector<8x128xf32>
    %624 = arith.mulf %175, %176 : vector<8x128xf32>
    %625 = arith.subf %624, %591 : vector<8x128xf32>
    %626 = math.exp %625 : vector<8x128xf32>
    %627 = arith.addf %621, %626 : vector<8x128xf32>
    %628 = arith.mulf %626, %177 : vector<8x128xf32>
    %629 = arith.addf %623, %628 : vector<8x128xf32>
    %630 = arith.mulf %175, %202 : vector<8x128xf32>
    %631 = arith.subf %630, %591 : vector<8x128xf32>
    %632 = math.exp %631 : vector<8x128xf32>
    %633 = arith.addf %627, %632 : vector<8x128xf32>
    %634 = arith.mulf %632, %203 : vector<8x128xf32>
    %635 = arith.addf %629, %634 : vector<8x128xf32>
    %636 = arith.mulf %175, %228 : vector<8x128xf32>
    %637 = arith.subf %636, %591 : vector<8x128xf32>
    %638 = math.exp %637 : vector<8x128xf32>
    %639 = arith.addf %633, %638 : vector<8x128xf32>
    %640 = arith.mulf %638, %229 : vector<8x128xf32>
    %641 = arith.addf %635, %640 : vector<8x128xf32>
    %642 = tpu.reciprocal %639 {approx = true} : vector<8x128xf32> -> vector<8x128xf32>
    %643 = arith.mulf %641, %642 : vector<8x128xf32>
    %cst_92 = arith.constant dense<0.000000e+00> : vector<8x128xf32>
    %644 = tpu.matmul %231, %643, %cst_92 {dimension_numbers = #tpu.dot_dimension_numbers<[1], [0], [0], [1], [0, 0, 1, 1], [], []>} : vector<8x8xf32>, vector<8x128xf32>, vector<8x128xf32> -> vector<8x128xf32>
    %645 = arith.addf %11, %644 : vector<8x128xf32>
    %646 = arith.mulf %201, %46 : vector<8x128xf32>
    %647 = arith.mulf %201, %72 : vector<8x128xf32>
    %648 = arith.maximumf %646, %647 : vector<8x128xf32>
    %649 = arith.mulf %201, %98 : vector<8x128xf32>
    %650 = arith.maximumf %648, %649 : vector<8x128xf32>
    %651 = arith.mulf %201, %124 : vector<8x128xf32>
    %652 = arith.maximumf %650, %651 : vector<8x128xf32>
    %653 = arith.mulf %201, %150 : vector<8x128xf32>
    %654 = arith.maximumf %652, %653 : vector<8x128xf32>
    %655 = arith.mulf %201, %176 : vector<8x128xf32>
    %656 = arith.maximumf %654, %655 : vector<8x128xf32>
    %657 = arith.mulf %201, %202 : vector<8x128xf32>
    %658 = arith.maximumf %656, %657 : vector<8x128xf32>
    %659 = arith.mulf %201, %228 : vector<8x128xf32>
    %660 = arith.maximumf %658, %659 : vector<8x128xf32>
    %cst_93 = arith.constant 0.000000e+00 : f32
    %661 = vector.broadcast %cst_93 : f32 to vector<8x128xf32>
    %cst_94 = arith.constant 0.000000e+00 : f32
    %662 = vector.broadcast %cst_94 : f32 to vector<8x128xf32>
    %663 = arith.mulf %201, %46 : vector<8x128xf32>
    %664 = arith.subf %663, %660 : vector<8x128xf32>
    %665 = math.exp %664 : vector<8x128xf32>
    %666 = arith.addf %661, %665 : vector<8x128xf32>
    %667 = arith.mulf %665, %47 : vector<8x128xf32>
    %668 = arith.addf %662, %667 : vector<8x128xf32>
    %669 = arith.mulf %201, %72 : vector<8x128xf32>
    %670 = arith.subf %669, %660 : vector<8x128xf32>
    %671 = math.exp %670 : vector<8x128xf32>
    %672 = arith.addf %666, %671 : vector<8x128xf32>
    %673 = arith.mulf %671, %73 : vector<8x128xf32>
    %674 = arith.addf %668, %673 : vector<8x128xf32>
    %675 = arith.mulf %201, %98 : vector<8x128xf32>
    %676 = arith.subf %675, %660 : vector<8x128xf32>
    %677 = math.exp %676 : vector<8x128xf32>
    %678 = arith.addf %672, %677 : vector<8x128xf32>
    %679 = arith.mulf %677, %99 : vector<8x128xf32>
    %680 = arith.addf %674, %679 : vector<8x128xf32>
    %681 = arith.mulf %201, %124 : vector<8x128xf32>
    %682 = arith.subf %681, %660 : vector<8x128xf32>
    %683 = math.exp %682 : vector<8x128xf32>
    %684 = arith.addf %678, %683 : vector<8x128xf32>
    %685 = arith.mulf %683, %125 : vector<8x128xf32>
    %686 = arith.addf %680, %685 : vector<8x128xf32>
    %687 = arith.mulf %201, %150 : vector<8x128xf32>
    %688 = arith.subf %687, %660 : vector<8x128xf32>
    %689 = math.exp %688 : vector<8x128xf32>
    %690 = arith.addf %684, %689 : vector<8x128xf32>
    %691 = arith.mulf %689, %151 : vector<8x128xf32>
    %692 = arith.addf %686, %691 : vector<8x128xf32>
    %693 = arith.mulf %201, %176 : vector<8x128xf32>
    %694 = arith.subf %693, %660 : vector<8x128xf32>
    %695 = math.exp %694 : vector<8x128xf32>
    %696 = arith.addf %690, %695 : vector<8x128xf32>
    %697 = arith.mulf %695, %177 : vector<8x128xf32>
    %698 = arith.addf %692, %697 : vector<8x128xf32>
    %699 = arith.mulf %201, %202 : vector<8x128xf32>
    %700 = arith.subf %699, %660 : vector<8x128xf32>
    %701 = math.exp %700 : vector<8x128xf32>
    %702 = arith.addf %696, %701 : vector<8x128xf32>
    %703 = arith.mulf %701, %203 : vector<8x128xf32>
    %704 = arith.addf %698, %703 : vector<8x128xf32>
    %705 = arith.mulf %201, %228 : vector<8x128xf32>
    %706 = arith.subf %705, %660 : vector<8x128xf32>
    %707 = math.exp %706 : vector<8x128xf32>
    %708 = arith.addf %702, %707 : vector<8x128xf32>
    %709 = arith.mulf %707, %229 : vector<8x128xf32>
    %710 = arith.addf %704, %709 : vector<8x128xf32>
    %711 = tpu.reciprocal %708 {approx = true} : vector<8x128xf32> -> vector<8x128xf32>
    %712 = arith.mulf %710, %711 : vector<8x128xf32>
    %cst_95 = arith.constant dense<0.000000e+00> : vector<8x128xf32>
    %713 = tpu.matmul %231, %712, %cst_95 {dimension_numbers = #tpu.dot_dimension_numbers<[1], [0], [0], [1], [0, 0, 1, 1], [], []>} : vector<8x8xf32>, vector<8x128xf32>, vector<8x128xf32> -> vector<8x128xf32>
    %714 = arith.addf %13, %713 : vector<8x128xf32>
    %715 = arith.mulf %227, %46 : vector<8x128xf32>
    %716 = arith.mulf %227, %72 : vector<8x128xf32>
    %717 = arith.maximumf %715, %716 : vector<8x128xf32>
    %718 = arith.mulf %227, %98 : vector<8x128xf32>
    %719 = arith.maximumf %717, %718 : vector<8x128xf32>
    %720 = arith.mulf %227, %124 : vector<8x128xf32>
    %721 = arith.maximumf %719, %720 : vector<8x128xf32>
    %722 = arith.mulf %227, %150 : vector<8x128xf32>
    %723 = arith.maximumf %721, %722 : vector<8x128xf32>
    %724 = arith.mulf %227, %176 : vector<8x128xf32>
    %725 = arith.maximumf %723, %724 : vector<8x128xf32>
    %726 = arith.mulf %227, %202 : vector<8x128xf32>
    %727 = arith.maximumf %725, %726 : vector<8x128xf32>
    %728 = arith.mulf %227, %228 : vector<8x128xf32>
    %729 = arith.maximumf %727, %728 : vector<8x128xf32>
    %cst_96 = arith.constant 0.000000e+00 : f32
    %730 = vector.broadcast %cst_96 : f32 to vector<8x128xf32>
    %cst_97 = arith.constant 0.000000e+00 : f32
    %731 = vector.broadcast %cst_97 : f32 to vector<8x128xf32>
    %732 = arith.mulf %227, %46 : vector<8x128xf32>
    %733 = arith.subf %732, %729 : vector<8x128xf32>
    %734 = math.exp %733 : vector<8x128xf32>
    %735 = arith.addf %730, %734 : vector<8x128xf32>
    %736 = arith.mulf %734, %47 : vector<8x128xf32>
    %737 = arith.addf %731, %736 : vector<8x128xf32>
    %738 = arith.mulf %227, %72 : vector<8x128xf32>
    %739 = arith.subf %738, %729 : vector<8x128xf32>
    %740 = math.exp %739 : vector<8x128xf32>
    %741 = arith.addf %735, %740 : vector<8x128xf32>
    %742 = arith.mulf %740, %73 : vector<8x128xf32>
    %743 = arith.addf %737, %742 : vector<8x128xf32>
    %744 = arith.mulf %227, %98 : vector<8x128xf32>
    %745 = arith.subf %744, %729 : vector<8x128xf32>
    %746 = math.exp %745 : vector<8x128xf32>
    %747 = arith.addf %741, %746 : vector<8x128xf32>
    %748 = arith.mulf %746, %99 : vector<8x128xf32>
    %749 = arith.addf %743, %748 : vector<8x128xf32>
    %750 = arith.mulf %227, %124 : vector<8x128xf32>
    %751 = arith.subf %750, %729 : vector<8x128xf32>
    %752 = math.exp %751 : vector<8x128xf32>
    %753 = arith.addf %747, %752 : vector<8x128xf32>
    %754 = arith.mulf %752, %125 : vector<8x128xf32>
    %755 = arith.addf %749, %754 : vector<8x128xf32>
    %756 = arith.mulf %227, %150 : vector<8x128xf32>
    %757 = arith.subf %756, %729 : vector<8x128xf32>
    %758 = math.exp %757 : vector<8x128xf32>
    %759 = arith.addf %753, %758 : vector<8x128xf32>
    %760 = arith.mulf %758, %151 : vector<8x128xf32>
    %761 = arith.addf %755, %760 : vector<8x128xf32>
    %762 = arith.mulf %227, %176 : vector<8x128xf32>
    %763 = arith.subf %762, %729 : vector<8x128xf32>
    %764 = math.exp %763 : vector<8x128xf32>
    %765 = arith.addf %759, %764 : vector<8x128xf32>
    %766 = arith.mulf %764, %177 : vector<8x128xf32>
    %767 = arith.addf %761, %766 : vector<8x128xf32>
    %768 = arith.mulf %227, %202 : vector<8x128xf32>
    %769 = arith.subf %768, %729 : vector<8x128xf32>
    %770 = math.exp %769 : vector<8x128xf32>
    %771 = arith.addf %765, %770 : vector<8x128xf32>
    %772 = arith.mulf %770, %203 : vector<8x128xf32>
    %773 = arith.addf %767, %772 : vector<8x128xf32>
    %774 = arith.mulf %227, %228 : vector<8x128xf32>
    %775 = arith.subf %774, %729 : vector<8x128xf32>
    %776 = math.exp %775 : vector<8x128xf32>
    %777 = arith.addf %771, %776 : vector<8x128xf32>
    %778 = arith.mulf %776, %229 : vector<8x128xf32>
    %779 = arith.addf %773, %778 : vector<8x128xf32>
    %780 = tpu.reciprocal %777 {approx = true} : vector<8x128xf32> -> vector<8x128xf32>
    %781 = arith.mulf %779, %780 : vector<8x128xf32>
    %cst_98 = arith.constant dense<0.000000e+00> : vector<8x128xf32>
    %782 = tpu.matmul %231, %781, %cst_98 {dimension_numbers = #tpu.dot_dimension_numbers<[1], [0], [0], [1], [0, 0, 1, 1], [], []>} : vector<8x8xf32>, vector<8x128xf32>, vector<8x128xf32> -> vector<8x128xf32>
    %783 = arith.addf %15, %782 : vector<8x128xf32>
    %c0_99 = arith.constant 0 : index
    %c0_100 = arith.constant 0 : index
    %c0_101 = arith.constant 0 : index
    %784 = vector.load %arg6[%c0_99, %c0_100, %c0_101] : memref<1x8x1xf32, #tpu.memory_space<vmem>>, vector<1x8x1xf32>
    %785 = vector.shape_cast %784 : vector<1x8x1xf32> to vector<8x1xf32>
    %c0_102 = arith.constant 0 : index
    %c0_103 = arith.constant 0 : index
    %c0_104 = arith.constant 0 : index
    %786 = vector.load %arg7[%c0_102, %c0_103, %c0_104] : memref<1x8x1xf32, #tpu.memory_space<vmem>>, vector<1x8x1xf32>
    %787 = vector.shape_cast %786 : vector<1x8x1xf32> to vector<8x1xf32>
    %c0_105 = arith.constant 0 : index
    %c0_106 = arith.constant 0 : index
    %c0_107 = arith.constant 0 : index
    %788 = vector.load %arg8[%c0_105, %c0_106, %c0_107] : memref<1x16x8xf32, #tpu.memory_space<vmem>>, vector<1x16x8xf32>
    %789 = vector.shape_cast %788 : vector<1x16x8xf32> to vector<16x8xf32>
    %c0_108 = arith.constant 0 : index
    %c0_109 = arith.constant 0 : index
    %c0_110 = arith.constant 0 : index
    %790 = vector.load %arg9[%c0_108, %c0_109, %c0_110] : memref<1x16x1xf32, #tpu.memory_space<vmem>>, vector<1x16x1xf32>
    %791 = vector.shape_cast %790 : vector<1x16x1xf32> to vector<16x1xf32>
    %c0_111 = arith.constant 0 : index
    %c0_112 = arith.constant 0 : index
    %c0_113 = arith.constant 0 : index
    %792 = vector.load %arg10[%c0_111, %c0_112, %c0_113] : memref<1x8x8xf32, #tpu.memory_space<vmem>>, vector<1x8x8xf32>
    %793 = vector.shape_cast %792 : vector<1x8x8xf32> to vector<8x8xf32>
    %c0_114 = arith.constant 0 : index
    %c0_115 = arith.constant 0 : index
    %c0_116 = arith.constant 0 : index
    %794 = vector.load %arg11[%c0_114, %c0_115, %c0_116] : memref<1x8x1xf32, #tpu.memory_space<vmem>>, vector<1x8x1xf32>
    %795 = vector.shape_cast %794 : vector<1x8x1xf32> to vector<8x1xf32>
    %cst_117 = arith.constant dense<0.000000e+00> : vector<128xf32>
    %796 = vector.multi_reduction <add>, %300, %cst_117 [0] : vector<8x128xf32> to vector<128xf32>
    %797 = vector.shape_cast %796 : vector<128xf32> to vector<1x128xf32>
    %cst_118 = arith.constant 8.000000e+00 : f32
    %798 = vector.broadcast %cst_118 : f32 to vector<1x128xf32>
    %799 = arith.divf %797, %798 : vector<1x128xf32>
    %800 = arith.mulf %300, %300 : vector<8x128xf32>
    %cst_119 = arith.constant dense<0.000000e+00> : vector<128xf32>
    %801 = vector.multi_reduction <add>, %800, %cst_119 [0] : vector<8x128xf32> to vector<128xf32>
    %802 = vector.shape_cast %801 : vector<128xf32> to vector<1x128xf32>
    %cst_120 = arith.constant 8.000000e+00 : f32
    %803 = vector.broadcast %cst_120 : f32 to vector<1x128xf32>
    %804 = arith.divf %802, %803 : vector<1x128xf32>
    %805 = arith.mulf %799, %799 : vector<1x128xf32>
    %806 = arith.subf %804, %805 : vector<1x128xf32>
    %807 = vector.broadcast %799 : vector<1x128xf32> to vector<8x128xf32>
    %808 = arith.subf %300, %807 : vector<8x128xf32>
    %cst_121 = arith.constant 9.99999974E-6 : f32
    %809 = vector.broadcast %cst_121 : f32 to vector<1x128xf32>
    %810 = arith.addf %806, %809 : vector<1x128xf32>
    %811 = math.rsqrt %810 : vector<1x128xf32>
    %812 = vector.broadcast %811 : vector<1x128xf32> to vector<8x128xf32>
    %813 = arith.mulf %808, %812 : vector<8x128xf32>
    %814 = vector.broadcast %785 : vector<8x1xf32> to vector<8x128xf32>
    %815 = arith.mulf %813, %814 : vector<8x128xf32>
    %816 = vector.broadcast %787 : vector<8x1xf32> to vector<8x128xf32>
    %817 = arith.addf %815, %816 : vector<8x128xf32>
    %cst_122 = arith.constant dense<0.000000e+00> : vector<16x128xf32>
    %818 = tpu.matmul %789, %817, %cst_122 {dimension_numbers = #tpu.dot_dimension_numbers<[1], [0], [0], [1], [0, 0, 1, 1], [], []>} : vector<16x8xf32>, vector<8x128xf32>, vector<16x128xf32> -> vector<16x128xf32>
    %819 = vector.broadcast %791 : vector<16x1xf32> to vector<16x128xf32>
    %820 = arith.addf %818, %819 : vector<16x128xf32>
    %821 = vector.extract_strided_slice %820 {offsets = [0, 0], sizes = [8, 128], strides = [1, 1]} : vector<16x128xf32> to vector<8x128xf32>
    %822 = vector.extract_strided_slice %820 {offsets = [8, 0], sizes = [8, 128], strides = [1, 1]} : vector<16x128xf32> to vector<8x128xf32>
    %cst_123 = arith.constant 5.000000e-01 : f32
    %823 = vector.broadcast %cst_123 : f32 to vector<8x128xf32>
    %824 = arith.mulf %823, %822 : vector<8x128xf32>
    %cst_124 = arith.constant 0.707106769 : f32
    %825 = vector.broadcast %cst_124 : f32 to vector<8x128xf32>
    %826 = arith.mulf %822, %825 : vector<8x128xf32>
    %cst_125 = arith.constant 0.000000e+00 : f32
    %827 = vector.broadcast %cst_125 : f32 to vector<8x128xf32>
    %828 = arith.cmpf oge, %826, %827 : vector<8x128xf32>
    %cst_126 = arith.constant 1.000000e+00 : f32
    %cst_127 = arith.constant -1.000000e+00 : f32
    %829 = vector.broadcast %cst_126 : f32 to vector<8x128xf32>
    %830 = vector.broadcast %cst_127 : f32 to vector<8x128xf32>
    %831 = arith.select %828, %829, %830 : vector<8x128xi1>, vector<8x128xf32>
    %832 = math.absf %826 : vector<8x128xf32>
    %cst_128 = arith.constant 0.327591091 : f32
    %833 = vector.broadcast %cst_128 : f32 to vector<8x128xf32>
    %834 = arith.mulf %833, %832 : vector<8x128xf32>
    %cst_129 = arith.constant 1.000000e+00 : f32
    %835 = vector.broadcast %cst_129 : f32 to vector<8x128xf32>
    %836 = arith.addf %835, %834 : vector<8x128xf32>
    %837 = tpu.reciprocal %836 {approx = true} : vector<8x128xf32> -> vector<8x128xf32>
    %cst_130 = arith.constant 1.06140542 : f32
    %838 = vector.broadcast %cst_130 : f32 to vector<8x128xf32>
    %839 = arith.mulf %838, %837 : vector<8x128xf32>
    %cst_131 = arith.constant -1.45315206 : f32
    %840 = vector.broadcast %cst_131 : f32 to vector<8x128xf32>
    %841 = arith.addf %839, %840 : vector<8x128xf32>
    %842 = arith.mulf %841, %837 : vector<8x128xf32>
    %cst_132 = arith.constant 1.42141378 : f32
    %843 = vector.broadcast %cst_132 : f32 to vector<8x128xf32>
    %844 = arith.addf %842, %843 : vector<8x128xf32>
    %845 = arith.mulf %844, %837 : vector<8x128xf32>
    %cst_133 = arith.constant -0.284496725 : f32
    %846 = vector.broadcast %cst_133 : f32 to vector<8x128xf32>
    %847 = arith.addf %845, %846 : vector<8x128xf32>
    %848 = arith.mulf %847, %837 : vector<8x128xf32>
    %cst_134 = arith.constant 0.254829586 : f32
    %849 = vector.broadcast %cst_134 : f32 to vector<8x128xf32>
    %850 = arith.addf %848, %849 : vector<8x128xf32>
    %851 = arith.mulf %850, %837 : vector<8x128xf32>
    %cst_135 = arith.constant 0.000000e+00 : f32
    %852 = vector.broadcast %cst_135 : f32 to vector<8x128xf32>
    %853 = arith.subf %852, %832 : vector<8x128xf32>
    %854 = arith.mulf %853, %832 : vector<8x128xf32>
    %855 = math.exp %854 : vector<8x128xf32>
    %856 = arith.mulf %851, %855 : vector<8x128xf32>
    %cst_136 = arith.constant 1.000000e+00 : f32
    %857 = vector.broadcast %cst_136 : f32 to vector<8x128xf32>
    %858 = arith.subf %857, %856 : vector<8x128xf32>
    %859 = arith.mulf %831, %858 : vector<8x128xf32>
    %cst_137 = arith.constant 1.000000e+00 : f32
    %860 = vector.broadcast %cst_137 : f32 to vector<8x128xf32>
    %861 = arith.addf %860, %859 : vector<8x128xf32>
    %862 = arith.mulf %824, %861 : vector<8x128xf32>
    %863 = arith.mulf %862, %821 : vector<8x128xf32>
    %cst_138 = arith.constant dense<0.000000e+00> : vector<8x128xf32>
    %864 = tpu.matmul %793, %863, %cst_138 {dimension_numbers = #tpu.dot_dimension_numbers<[1], [0], [0], [1], [0, 0, 1, 1], [], []>} : vector<8x8xf32>, vector<8x128xf32>, vector<8x128xf32> -> vector<8x128xf32>
    %865 = arith.addf %300, %864 : vector<8x128xf32>
    %866 = vector.broadcast %795 : vector<8x1xf32> to vector<8x128xf32>
    %867 = arith.addf %865, %866 : vector<8x128xf32>
    %cst_139 = arith.constant dense<0.000000e+00> : vector<128xf32>
    %868 = vector.multi_reduction <add>, %369, %cst_139 [0] : vector<8x128xf32> to vector<128xf32>
    %869 = vector.shape_cast %868 : vector<128xf32> to vector<1x128xf32>
    %cst_140 = arith.constant 8.000000e+00 : f32
    %870 = vector.broadcast %cst_140 : f32 to vector<1x128xf32>
    %871 = arith.divf %869, %870 : vector<1x128xf32>
    %872 = arith.mulf %369, %369 : vector<8x128xf32>
    %cst_141 = arith.constant dense<0.000000e+00> : vector<128xf32>
    %873 = vector.multi_reduction <add>, %872, %cst_141 [0] : vector<8x128xf32> to vector<128xf32>
    %874 = vector.shape_cast %873 : vector<128xf32> to vector<1x128xf32>
    %cst_142 = arith.constant 8.000000e+00 : f32
    %875 = vector.broadcast %cst_142 : f32 to vector<1x128xf32>
    %876 = arith.divf %874, %875 : vector<1x128xf32>
    %877 = arith.mulf %871, %871 : vector<1x128xf32>
    %878 = arith.subf %876, %877 : vector<1x128xf32>
    %879 = vector.broadcast %871 : vector<1x128xf32> to vector<8x128xf32>
    %880 = arith.subf %369, %879 : vector<8x128xf32>
    %cst_143 = arith.constant 9.99999974E-6 : f32
    %881 = vector.broadcast %cst_143 : f32 to vector<1x128xf32>
    %882 = arith.addf %878, %881 : vector<1x128xf32>
    %883 = math.rsqrt %882 : vector<1x128xf32>
    %884 = vector.broadcast %883 : vector<1x128xf32> to vector<8x128xf32>
    %885 = arith.mulf %880, %884 : vector<8x128xf32>
    %886 = vector.broadcast %785 : vector<8x1xf32> to vector<8x128xf32>
    %887 = arith.mulf %885, %886 : vector<8x128xf32>
    %888 = vector.broadcast %787 : vector<8x1xf32> to vector<8x128xf32>
    %889 = arith.addf %887, %888 : vector<8x128xf32>
    %cst_144 = arith.constant dense<0.000000e+00> : vector<16x128xf32>
    %890 = tpu.matmul %789, %889, %cst_144 {dimension_numbers = #tpu.dot_dimension_numbers<[1], [0], [0], [1], [0, 0, 1, 1], [], []>} : vector<16x8xf32>, vector<8x128xf32>, vector<16x128xf32> -> vector<16x128xf32>
    %891 = vector.broadcast %791 : vector<16x1xf32> to vector<16x128xf32>
    %892 = arith.addf %890, %891 : vector<16x128xf32>
    %893 = vector.extract_strided_slice %892 {offsets = [0, 0], sizes = [8, 128], strides = [1, 1]} : vector<16x128xf32> to vector<8x128xf32>
    %894 = vector.extract_strided_slice %892 {offsets = [8, 0], sizes = [8, 128], strides = [1, 1]} : vector<16x128xf32> to vector<8x128xf32>
    %cst_145 = arith.constant 5.000000e-01 : f32
    %895 = vector.broadcast %cst_145 : f32 to vector<8x128xf32>
    %896 = arith.mulf %895, %894 : vector<8x128xf32>
    %cst_146 = arith.constant 0.707106769 : f32
    %897 = vector.broadcast %cst_146 : f32 to vector<8x128xf32>
    %898 = arith.mulf %894, %897 : vector<8x128xf32>
    %cst_147 = arith.constant 0.000000e+00 : f32
    %899 = vector.broadcast %cst_147 : f32 to vector<8x128xf32>
    %900 = arith.cmpf oge, %898, %899 : vector<8x128xf32>
    %cst_148 = arith.constant 1.000000e+00 : f32
    %cst_149 = arith.constant -1.000000e+00 : f32
    %901 = vector.broadcast %cst_148 : f32 to vector<8x128xf32>
    %902 = vector.broadcast %cst_149 : f32 to vector<8x128xf32>
    %903 = arith.select %900, %901, %902 : vector<8x128xi1>, vector<8x128xf32>
    %904 = math.absf %898 : vector<8x128xf32>
    %cst_150 = arith.constant 0.327591091 : f32
    %905 = vector.broadcast %cst_150 : f32 to vector<8x128xf32>
    %906 = arith.mulf %905, %904 : vector<8x128xf32>
    %cst_151 = arith.constant 1.000000e+00 : f32
    %907 = vector.broadcast %cst_151 : f32 to vector<8x128xf32>
    %908 = arith.addf %907, %906 : vector<8x128xf32>
    %909 = tpu.reciprocal %908 {approx = true} : vector<8x128xf32> -> vector<8x128xf32>
    %cst_152 = arith.constant 1.06140542 : f32
    %910 = vector.broadcast %cst_152 : f32 to vector<8x128xf32>
    %911 = arith.mulf %910, %909 : vector<8x128xf32>
    %cst_153 = arith.constant -1.45315206 : f32
    %912 = vector.broadcast %cst_153 : f32 to vector<8x128xf32>
    %913 = arith.addf %911, %912 : vector<8x128xf32>
    %914 = arith.mulf %913, %909 : vector<8x128xf32>
    %cst_154 = arith.constant 1.42141378 : f32
    %915 = vector.broadcast %cst_154 : f32 to vector<8x128xf32>
    %916 = arith.addf %914, %915 : vector<8x128xf32>
    %917 = arith.mulf %916, %909 : vector<8x128xf32>
    %cst_155 = arith.constant -0.284496725 : f32
    %918 = vector.broadcast %cst_155 : f32 to vector<8x128xf32>
    %919 = arith.addf %917, %918 : vector<8x128xf32>
    %920 = arith.mulf %919, %909 : vector<8x128xf32>
    %cst_156 = arith.constant 0.254829586 : f32
    %921 = vector.broadcast %cst_156 : f32 to vector<8x128xf32>
    %922 = arith.addf %920, %921 : vector<8x128xf32>
    %923 = arith.mulf %922, %909 : vector<8x128xf32>
    %cst_157 = arith.constant 0.000000e+00 : f32
    %924 = vector.broadcast %cst_157 : f32 to vector<8x128xf32>
    %925 = arith.subf %924, %904 : vector<8x128xf32>
    %926 = arith.mulf %925, %904 : vector<8x128xf32>
    %927 = math.exp %926 : vector<8x128xf32>
    %928 = arith.mulf %923, %927 : vector<8x128xf32>
    %cst_158 = arith.constant 1.000000e+00 : f32
    %929 = vector.broadcast %cst_158 : f32 to vector<8x128xf32>
    %930 = arith.subf %929, %928 : vector<8x128xf32>
    %931 = arith.mulf %903, %930 : vector<8x128xf32>
    %cst_159 = arith.constant 1.000000e+00 : f32
    %932 = vector.broadcast %cst_159 : f32 to vector<8x128xf32>
    %933 = arith.addf %932, %931 : vector<8x128xf32>
    %934 = arith.mulf %896, %933 : vector<8x128xf32>
    %935 = arith.mulf %934, %893 : vector<8x128xf32>
    %cst_160 = arith.constant dense<0.000000e+00> : vector<8x128xf32>
    %936 = tpu.matmul %793, %935, %cst_160 {dimension_numbers = #tpu.dot_dimension_numbers<[1], [0], [0], [1], [0, 0, 1, 1], [], []>} : vector<8x8xf32>, vector<8x128xf32>, vector<8x128xf32> -> vector<8x128xf32>
    %937 = arith.addf %369, %936 : vector<8x128xf32>
    %938 = vector.broadcast %795 : vector<8x1xf32> to vector<8x128xf32>
    %939 = arith.addf %937, %938 : vector<8x128xf32>
    %cst_161 = arith.constant dense<0.000000e+00> : vector<128xf32>
    %940 = vector.multi_reduction <add>, %438, %cst_161 [0] : vector<8x128xf32> to vector<128xf32>
    %941 = vector.shape_cast %940 : vector<128xf32> to vector<1x128xf32>
    %cst_162 = arith.constant 8.000000e+00 : f32
    %942 = vector.broadcast %cst_162 : f32 to vector<1x128xf32>
    %943 = arith.divf %941, %942 : vector<1x128xf32>
    %944 = arith.mulf %438, %438 : vector<8x128xf32>
    %cst_163 = arith.constant dense<0.000000e+00> : vector<128xf32>
    %945 = vector.multi_reduction <add>, %944, %cst_163 [0] : vector<8x128xf32> to vector<128xf32>
    %946 = vector.shape_cast %945 : vector<128xf32> to vector<1x128xf32>
    %cst_164 = arith.constant 8.000000e+00 : f32
    %947 = vector.broadcast %cst_164 : f32 to vector<1x128xf32>
    %948 = arith.divf %946, %947 : vector<1x128xf32>
    %949 = arith.mulf %943, %943 : vector<1x128xf32>
    %950 = arith.subf %948, %949 : vector<1x128xf32>
    %951 = vector.broadcast %943 : vector<1x128xf32> to vector<8x128xf32>
    %952 = arith.subf %438, %951 : vector<8x128xf32>
    %cst_165 = arith.constant 9.99999974E-6 : f32
    %953 = vector.broadcast %cst_165 : f32 to vector<1x128xf32>
    %954 = arith.addf %950, %953 : vector<1x128xf32>
    %955 = math.rsqrt %954 : vector<1x128xf32>
    %956 = vector.broadcast %955 : vector<1x128xf32> to vector<8x128xf32>
    %957 = arith.mulf %952, %956 : vector<8x128xf32>
    %958 = vector.broadcast %785 : vector<8x1xf32> to vector<8x128xf32>
    %959 = arith.mulf %957, %958 : vector<8x128xf32>
    %960 = vector.broadcast %787 : vector<8x1xf32> to vector<8x128xf32>
    %961 = arith.addf %959, %960 : vector<8x128xf32>
    %cst_166 = arith.constant dense<0.000000e+00> : vector<16x128xf32>
    %962 = tpu.matmul %789, %961, %cst_166 {dimension_numbers = #tpu.dot_dimension_numbers<[1], [0], [0], [1], [0, 0, 1, 1], [], []>} : vector<16x8xf32>, vector<8x128xf32>, vector<16x128xf32> -> vector<16x128xf32>
    %963 = vector.broadcast %791 : vector<16x1xf32> to vector<16x128xf32>
    %964 = arith.addf %962, %963 : vector<16x128xf32>
    %965 = vector.extract_strided_slice %964 {offsets = [0, 0], sizes = [8, 128], strides = [1, 1]} : vector<16x128xf32> to vector<8x128xf32>
    %966 = vector.extract_strided_slice %964 {offsets = [8, 0], sizes = [8, 128], strides = [1, 1]} : vector<16x128xf32> to vector<8x128xf32>
    %cst_167 = arith.constant 5.000000e-01 : f32
    %967 = vector.broadcast %cst_167 : f32 to vector<8x128xf32>
    %968 = arith.mulf %967, %966 : vector<8x128xf32>
    %cst_168 = arith.constant 0.707106769 : f32
    %969 = vector.broadcast %cst_168 : f32 to vector<8x128xf32>
    %970 = arith.mulf %966, %969 : vector<8x128xf32>
    %cst_169 = arith.constant 0.000000e+00 : f32
    %971 = vector.broadcast %cst_169 : f32 to vector<8x128xf32>
    %972 = arith.cmpf oge, %970, %971 : vector<8x128xf32>
    %cst_170 = arith.constant 1.000000e+00 : f32
    %cst_171 = arith.constant -1.000000e+00 : f32
    %973 = vector.broadcast %cst_170 : f32 to vector<8x128xf32>
    %974 = vector.broadcast %cst_171 : f32 to vector<8x128xf32>
    %975 = arith.select %972, %973, %974 : vector<8x128xi1>, vector<8x128xf32>
    %976 = math.absf %970 : vector<8x128xf32>
    %cst_172 = arith.constant 0.327591091 : f32
    %977 = vector.broadcast %cst_172 : f32 to vector<8x128xf32>
    %978 = arith.mulf %977, %976 : vector<8x128xf32>
    %cst_173 = arith.constant 1.000000e+00 : f32
    %979 = vector.broadcast %cst_173 : f32 to vector<8x128xf32>
    %980 = arith.addf %979, %978 : vector<8x128xf32>
    %981 = tpu.reciprocal %980 {approx = true} : vector<8x128xf32> -> vector<8x128xf32>
    %cst_174 = arith.constant 1.06140542 : f32
    %982 = vector.broadcast %cst_174 : f32 to vector<8x128xf32>
    %983 = arith.mulf %982, %981 : vector<8x128xf32>
    %cst_175 = arith.constant -1.45315206 : f32
    %984 = vector.broadcast %cst_175 : f32 to vector<8x128xf32>
    %985 = arith.addf %983, %984 : vector<8x128xf32>
    %986 = arith.mulf %985, %981 : vector<8x128xf32>
    %cst_176 = arith.constant 1.42141378 : f32
    %987 = vector.broadcast %cst_176 : f32 to vector<8x128xf32>
    %988 = arith.addf %986, %987 : vector<8x128xf32>
    %989 = arith.mulf %988, %981 : vector<8x128xf32>
    %cst_177 = arith.constant -0.284496725 : f32
    %990 = vector.broadcast %cst_177 : f32 to vector<8x128xf32>
    %991 = arith.addf %989, %990 : vector<8x128xf32>
    %992 = arith.mulf %991, %981 : vector<8x128xf32>
    %cst_178 = arith.constant 0.254829586 : f32
    %993 = vector.broadcast %cst_178 : f32 to vector<8x128xf32>
    %994 = arith.addf %992, %993 : vector<8x128xf32>
    %995 = arith.mulf %994, %981 : vector<8x128xf32>
    %cst_179 = arith.constant 0.000000e+00 : f32
    %996 = vector.broadcast %cst_179 : f32 to vector<8x128xf32>
    %997 = arith.subf %996, %976 : vector<8x128xf32>
    %998 = arith.mulf %997, %976 : vector<8x128xf32>
    %999 = math.exp %998 : vector<8x128xf32>
    %1000 = arith.mulf %995, %999 : vector<8x128xf32>
    %cst_180 = arith.constant 1.000000e+00 : f32
    %1001 = vector.broadcast %cst_180 : f32 to vector<8x128xf32>
    %1002 = arith.subf %1001, %1000 : vector<8x128xf32>
    %1003 = arith.mulf %975, %1002 : vector<8x128xf32>
    %cst_181 = arith.constant 1.000000e+00 : f32
    %1004 = vector.broadcast %cst_181 : f32 to vector<8x128xf32>
    %1005 = arith.addf %1004, %1003 : vector<8x128xf32>
    %1006 = arith.mulf %968, %1005 : vector<8x128xf32>
    %1007 = arith.mulf %1006, %965 : vector<8x128xf32>
    %cst_182 = arith.constant dense<0.000000e+00> : vector<8x128xf32>
    %1008 = tpu.matmul %793, %1007, %cst_182 {dimension_numbers = #tpu.dot_dimension_numbers<[1], [0], [0], [1], [0, 0, 1, 1], [], []>} : vector<8x8xf32>, vector<8x128xf32>, vector<8x128xf32> -> vector<8x128xf32>
    %1009 = arith.addf %438, %1008 : vector<8x128xf32>
    %1010 = vector.broadcast %795 : vector<8x1xf32> to vector<8x128xf32>
    %1011 = arith.addf %1009, %1010 : vector<8x128xf32>
    %cst_183 = arith.constant dense<0.000000e+00> : vector<128xf32>
    %1012 = vector.multi_reduction <add>, %507, %cst_183 [0] : vector<8x128xf32> to vector<128xf32>
    %1013 = vector.shape_cast %1012 : vector<128xf32> to vector<1x128xf32>
    %cst_184 = arith.constant 8.000000e+00 : f32
    %1014 = vector.broadcast %cst_184 : f32 to vector<1x128xf32>
    %1015 = arith.divf %1013, %1014 : vector<1x128xf32>
    %1016 = arith.mulf %507, %507 : vector<8x128xf32>
    %cst_185 = arith.constant dense<0.000000e+00> : vector<128xf32>
    %1017 = vector.multi_reduction <add>, %1016, %cst_185 [0] : vector<8x128xf32> to vector<128xf32>
    %1018 = vector.shape_cast %1017 : vector<128xf32> to vector<1x128xf32>
    %cst_186 = arith.constant 8.000000e+00 : f32
    %1019 = vector.broadcast %cst_186 : f32 to vector<1x128xf32>
    %1020 = arith.divf %1018, %1019 : vector<1x128xf32>
    %1021 = arith.mulf %1015, %1015 : vector<1x128xf32>
    %1022 = arith.subf %1020, %1021 : vector<1x128xf32>
    %1023 = vector.broadcast %1015 : vector<1x128xf32> to vector<8x128xf32>
    %1024 = arith.subf %507, %1023 : vector<8x128xf32>
    %cst_187 = arith.constant 9.99999974E-6 : f32
    %1025 = vector.broadcast %cst_187 : f32 to vector<1x128xf32>
    %1026 = arith.addf %1022, %1025 : vector<1x128xf32>
    %1027 = math.rsqrt %1026 : vector<1x128xf32>
    %1028 = vector.broadcast %1027 : vector<1x128xf32> to vector<8x128xf32>
    %1029 = arith.mulf %1024, %1028 : vector<8x128xf32>
    %1030 = vector.broadcast %785 : vector<8x1xf32> to vector<8x128xf32>
    %1031 = arith.mulf %1029, %1030 : vector<8x128xf32>
    %1032 = vector.broadcast %787 : vector<8x1xf32> to vector<8x128xf32>
    %1033 = arith.addf %1031, %1032 : vector<8x128xf32>
    %cst_188 = arith.constant dense<0.000000e+00> : vector<16x128xf32>
    %1034 = tpu.matmul %789, %1033, %cst_188 {dimension_numbers = #tpu.dot_dimension_numbers<[1], [0], [0], [1], [0, 0, 1, 1], [], []>} : vector<16x8xf32>, vector<8x128xf32>, vector<16x128xf32> -> vector<16x128xf32>
    %1035 = vector.broadcast %791 : vector<16x1xf32> to vector<16x128xf32>
    %1036 = arith.addf %1034, %1035 : vector<16x128xf32>
    %1037 = vector.extract_strided_slice %1036 {offsets = [0, 0], sizes = [8, 128], strides = [1, 1]} : vector<16x128xf32> to vector<8x128xf32>
    %1038 = vector.extract_strided_slice %1036 {offsets = [8, 0], sizes = [8, 128], strides = [1, 1]} : vector<16x128xf32> to vector<8x128xf32>
    %cst_189 = arith.constant 5.000000e-01 : f32
    %1039 = vector.broadcast %cst_189 : f32 to vector<8x128xf32>
    %1040 = arith.mulf %1039, %1038 : vector<8x128xf32>
    %cst_190 = arith.constant 0.707106769 : f32
    %1041 = vector.broadcast %cst_190 : f32 to vector<8x128xf32>
    %1042 = arith.mulf %1038, %1041 : vector<8x128xf32>
    %cst_191 = arith.constant 0.000000e+00 : f32
    %1043 = vector.broadcast %cst_191 : f32 to vector<8x128xf32>
    %1044 = arith.cmpf oge, %1042, %1043 : vector<8x128xf32>
    %cst_192 = arith.constant 1.000000e+00 : f32
    %cst_193 = arith.constant -1.000000e+00 : f32
    %1045 = vector.broadcast %cst_192 : f32 to vector<8x128xf32>
    %1046 = vector.broadcast %cst_193 : f32 to vector<8x128xf32>
    %1047 = arith.select %1044, %1045, %1046 : vector<8x128xi1>, vector<8x128xf32>
    %1048 = math.absf %1042 : vector<8x128xf32>
    %cst_194 = arith.constant 0.327591091 : f32
    %1049 = vector.broadcast %cst_194 : f32 to vector<8x128xf32>
    %1050 = arith.mulf %1049, %1048 : vector<8x128xf32>
    %cst_195 = arith.constant 1.000000e+00 : f32
    %1051 = vector.broadcast %cst_195 : f32 to vector<8x128xf32>
    %1052 = arith.addf %1051, %1050 : vector<8x128xf32>
    %1053 = tpu.reciprocal %1052 {approx = true} : vector<8x128xf32> -> vector<8x128xf32>
    %cst_196 = arith.constant 1.06140542 : f32
    %1054 = vector.broadcast %cst_196 : f32 to vector<8x128xf32>
    %1055 = arith.mulf %1054, %1053 : vector<8x128xf32>
    %cst_197 = arith.constant -1.45315206 : f32
    %1056 = vector.broadcast %cst_197 : f32 to vector<8x128xf32>
    %1057 = arith.addf %1055, %1056 : vector<8x128xf32>
    %1058 = arith.mulf %1057, %1053 : vector<8x128xf32>
    %cst_198 = arith.constant 1.42141378 : f32
    %1059 = vector.broadcast %cst_198 : f32 to vector<8x128xf32>
    %1060 = arith.addf %1058, %1059 : vector<8x128xf32>
    %1061 = arith.mulf %1060, %1053 : vector<8x128xf32>
    %cst_199 = arith.constant -0.284496725 : f32
    %1062 = vector.broadcast %cst_199 : f32 to vector<8x128xf32>
    %1063 = arith.addf %1061, %1062 : vector<8x128xf32>
    %1064 = arith.mulf %1063, %1053 : vector<8x128xf32>
    %cst_200 = arith.constant 0.254829586 : f32
    %1065 = vector.broadcast %cst_200 : f32 to vector<8x128xf32>
    %1066 = arith.addf %1064, %1065 : vector<8x128xf32>
    %1067 = arith.mulf %1066, %1053 : vector<8x128xf32>
    %cst_201 = arith.constant 0.000000e+00 : f32
    %1068 = vector.broadcast %cst_201 : f32 to vector<8x128xf32>
    %1069 = arith.subf %1068, %1048 : vector<8x128xf32>
    %1070 = arith.mulf %1069, %1048 : vector<8x128xf32>
    %1071 = math.exp %1070 : vector<8x128xf32>
    %1072 = arith.mulf %1067, %1071 : vector<8x128xf32>
    %cst_202 = arith.constant 1.000000e+00 : f32
    %1073 = vector.broadcast %cst_202 : f32 to vector<8x128xf32>
    %1074 = arith.subf %1073, %1072 : vector<8x128xf32>
    %1075 = arith.mulf %1047, %1074 : vector<8x128xf32>
    %cst_203 = arith.constant 1.000000e+00 : f32
    %1076 = vector.broadcast %cst_203 : f32 to vector<8x128xf32>
    %1077 = arith.addf %1076, %1075 : vector<8x128xf32>
    %1078 = arith.mulf %1040, %1077 : vector<8x128xf32>
    %1079 = arith.mulf %1078, %1037 : vector<8x128xf32>
    %cst_204 = arith.constant dense<0.000000e+00> : vector<8x128xf32>
    %1080 = tpu.matmul %793, %1079, %cst_204 {dimension_numbers = #tpu.dot_dimension_numbers<[1], [0], [0], [1], [0, 0, 1, 1], [], []>} : vector<8x8xf32>, vector<8x128xf32>, vector<8x128xf32> -> vector<8x128xf32>
    %1081 = arith.addf %507, %1080 : vector<8x128xf32>
    %1082 = vector.broadcast %795 : vector<8x1xf32> to vector<8x128xf32>
    %1083 = arith.addf %1081, %1082 : vector<8x128xf32>
    %cst_205 = arith.constant dense<0.000000e+00> : vector<128xf32>
    %1084 = vector.multi_reduction <add>, %576, %cst_205 [0] : vector<8x128xf32> to vector<128xf32>
    %1085 = vector.shape_cast %1084 : vector<128xf32> to vector<1x128xf32>
    %cst_206 = arith.constant 8.000000e+00 : f32
    %1086 = vector.broadcast %cst_206 : f32 to vector<1x128xf32>
    %1087 = arith.divf %1085, %1086 : vector<1x128xf32>
    %1088 = arith.mulf %576, %576 : vector<8x128xf32>
    %cst_207 = arith.constant dense<0.000000e+00> : vector<128xf32>
    %1089 = vector.multi_reduction <add>, %1088, %cst_207 [0] : vector<8x128xf32> to vector<128xf32>
    %1090 = vector.shape_cast %1089 : vector<128xf32> to vector<1x128xf32>
    %cst_208 = arith.constant 8.000000e+00 : f32
    %1091 = vector.broadcast %cst_208 : f32 to vector<1x128xf32>
    %1092 = arith.divf %1090, %1091 : vector<1x128xf32>
    %1093 = arith.mulf %1087, %1087 : vector<1x128xf32>
    %1094 = arith.subf %1092, %1093 : vector<1x128xf32>
    %1095 = vector.broadcast %1087 : vector<1x128xf32> to vector<8x128xf32>
    %1096 = arith.subf %576, %1095 : vector<8x128xf32>
    %cst_209 = arith.constant 9.99999974E-6 : f32
    %1097 = vector.broadcast %cst_209 : f32 to vector<1x128xf32>
    %1098 = arith.addf %1094, %1097 : vector<1x128xf32>
    %1099 = math.rsqrt %1098 : vector<1x128xf32>
    %1100 = vector.broadcast %1099 : vector<1x128xf32> to vector<8x128xf32>
    %1101 = arith.mulf %1096, %1100 : vector<8x128xf32>
    %1102 = vector.broadcast %785 : vector<8x1xf32> to vector<8x128xf32>
    %1103 = arith.mulf %1101, %1102 : vector<8x128xf32>
    %1104 = vector.broadcast %787 : vector<8x1xf32> to vector<8x128xf32>
    %1105 = arith.addf %1103, %1104 : vector<8x128xf32>
    %cst_210 = arith.constant dense<0.000000e+00> : vector<16x128xf32>
    %1106 = tpu.matmul %789, %1105, %cst_210 {dimension_numbers = #tpu.dot_dimension_numbers<[1], [0], [0], [1], [0, 0, 1, 1], [], []>} : vector<16x8xf32>, vector<8x128xf32>, vector<16x128xf32> -> vector<16x128xf32>
    %1107 = vector.broadcast %791 : vector<16x1xf32> to vector<16x128xf32>
    %1108 = arith.addf %1106, %1107 : vector<16x128xf32>
    %1109 = vector.extract_strided_slice %1108 {offsets = [0, 0], sizes = [8, 128], strides = [1, 1]} : vector<16x128xf32> to vector<8x128xf32>
    %1110 = vector.extract_strided_slice %1108 {offsets = [8, 0], sizes = [8, 128], strides = [1, 1]} : vector<16x128xf32> to vector<8x128xf32>
    %cst_211 = arith.constant 5.000000e-01 : f32
    %1111 = vector.broadcast %cst_211 : f32 to vector<8x128xf32>
    %1112 = arith.mulf %1111, %1110 : vector<8x128xf32>
    %cst_212 = arith.constant 0.707106769 : f32
    %1113 = vector.broadcast %cst_212 : f32 to vector<8x128xf32>
    %1114 = arith.mulf %1110, %1113 : vector<8x128xf32>
    %cst_213 = arith.constant 0.000000e+00 : f32
    %1115 = vector.broadcast %cst_213 : f32 to vector<8x128xf32>
    %1116 = arith.cmpf oge, %1114, %1115 : vector<8x128xf32>
    %cst_214 = arith.constant 1.000000e+00 : f32
    %cst_215 = arith.constant -1.000000e+00 : f32
    %1117 = vector.broadcast %cst_214 : f32 to vector<8x128xf32>
    %1118 = vector.broadcast %cst_215 : f32 to vector<8x128xf32>
    %1119 = arith.select %1116, %1117, %1118 : vector<8x128xi1>, vector<8x128xf32>
    %1120 = math.absf %1114 : vector<8x128xf32>
    %cst_216 = arith.constant 0.327591091 : f32
    %1121 = vector.broadcast %cst_216 : f32 to vector<8x128xf32>
    %1122 = arith.mulf %1121, %1120 : vector<8x128xf32>
    %cst_217 = arith.constant 1.000000e+00 : f32
    %1123 = vector.broadcast %cst_217 : f32 to vector<8x128xf32>
    %1124 = arith.addf %1123, %1122 : vector<8x128xf32>
    %1125 = tpu.reciprocal %1124 {approx = true} : vector<8x128xf32> -> vector<8x128xf32>
    %cst_218 = arith.constant 1.06140542 : f32
    %1126 = vector.broadcast %cst_218 : f32 to vector<8x128xf32>
    %1127 = arith.mulf %1126, %1125 : vector<8x128xf32>
    %cst_219 = arith.constant -1.45315206 : f32
    %1128 = vector.broadcast %cst_219 : f32 to vector<8x128xf32>
    %1129 = arith.addf %1127, %1128 : vector<8x128xf32>
    %1130 = arith.mulf %1129, %1125 : vector<8x128xf32>
    %cst_220 = arith.constant 1.42141378 : f32
    %1131 = vector.broadcast %cst_220 : f32 to vector<8x128xf32>
    %1132 = arith.addf %1130, %1131 : vector<8x128xf32>
    %1133 = arith.mulf %1132, %1125 : vector<8x128xf32>
    %cst_221 = arith.constant -0.284496725 : f32
    %1134 = vector.broadcast %cst_221 : f32 to vector<8x128xf32>
    %1135 = arith.addf %1133, %1134 : vector<8x128xf32>
    %1136 = arith.mulf %1135, %1125 : vector<8x128xf32>
    %cst_222 = arith.constant 0.254829586 : f32
    %1137 = vector.broadcast %cst_222 : f32 to vector<8x128xf32>
    %1138 = arith.addf %1136, %1137 : vector<8x128xf32>
    %1139 = arith.mulf %1138, %1125 : vector<8x128xf32>
    %cst_223 = arith.constant 0.000000e+00 : f32
    %1140 = vector.broadcast %cst_223 : f32 to vector<8x128xf32>
    %1141 = arith.subf %1140, %1120 : vector<8x128xf32>
    %1142 = arith.mulf %1141, %1120 : vector<8x128xf32>
    %1143 = math.exp %1142 : vector<8x128xf32>
    %1144 = arith.mulf %1139, %1143 : vector<8x128xf32>
    %cst_224 = arith.constant 1.000000e+00 : f32
    %1145 = vector.broadcast %cst_224 : f32 to vector<8x128xf32>
    %1146 = arith.subf %1145, %1144 : vector<8x128xf32>
    %1147 = arith.mulf %1119, %1146 : vector<8x128xf32>
    %cst_225 = arith.constant 1.000000e+00 : f32
    %1148 = vector.broadcast %cst_225 : f32 to vector<8x128xf32>
    %1149 = arith.addf %1148, %1147 : vector<8x128xf32>
    %1150 = arith.mulf %1112, %1149 : vector<8x128xf32>
    %1151 = arith.mulf %1150, %1109 : vector<8x128xf32>
    %cst_226 = arith.constant dense<0.000000e+00> : vector<8x128xf32>
    %1152 = tpu.matmul %793, %1151, %cst_226 {dimension_numbers = #tpu.dot_dimension_numbers<[1], [0], [0], [1], [0, 0, 1, 1], [], []>} : vector<8x8xf32>, vector<8x128xf32>, vector<8x128xf32> -> vector<8x128xf32>
    %1153 = arith.addf %576, %1152 : vector<8x128xf32>
    %1154 = vector.broadcast %795 : vector<8x1xf32> to vector<8x128xf32>
    %1155 = arith.addf %1153, %1154 : vector<8x128xf32>
    %cst_227 = arith.constant dense<0.000000e+00> : vector<128xf32>
    %1156 = vector.multi_reduction <add>, %645, %cst_227 [0] : vector<8x128xf32> to vector<128xf32>
    %1157 = vector.shape_cast %1156 : vector<128xf32> to vector<1x128xf32>
    %cst_228 = arith.constant 8.000000e+00 : f32
    %1158 = vector.broadcast %cst_228 : f32 to vector<1x128xf32>
    %1159 = arith.divf %1157, %1158 : vector<1x128xf32>
    %1160 = arith.mulf %645, %645 : vector<8x128xf32>
    %cst_229 = arith.constant dense<0.000000e+00> : vector<128xf32>
    %1161 = vector.multi_reduction <add>, %1160, %cst_229 [0] : vector<8x128xf32> to vector<128xf32>
    %1162 = vector.shape_cast %1161 : vector<128xf32> to vector<1x128xf32>
    %cst_230 = arith.constant 8.000000e+00 : f32
    %1163 = vector.broadcast %cst_230 : f32 to vector<1x128xf32>
    %1164 = arith.divf %1162, %1163 : vector<1x128xf32>
    %1165 = arith.mulf %1159, %1159 : vector<1x128xf32>
    %1166 = arith.subf %1164, %1165 : vector<1x128xf32>
    %1167 = vector.broadcast %1159 : vector<1x128xf32> to vector<8x128xf32>
    %1168 = arith.subf %645, %1167 : vector<8x128xf32>
    %cst_231 = arith.constant 9.99999974E-6 : f32
    %1169 = vector.broadcast %cst_231 : f32 to vector<1x128xf32>
    %1170 = arith.addf %1166, %1169 : vector<1x128xf32>
    %1171 = math.rsqrt %1170 : vector<1x128xf32>
    %1172 = vector.broadcast %1171 : vector<1x128xf32> to vector<8x128xf32>
    %1173 = arith.mulf %1168, %1172 : vector<8x128xf32>
    %1174 = vector.broadcast %785 : vector<8x1xf32> to vector<8x128xf32>
    %1175 = arith.mulf %1173, %1174 : vector<8x128xf32>
    %1176 = vector.broadcast %787 : vector<8x1xf32> to vector<8x128xf32>
    %1177 = arith.addf %1175, %1176 : vector<8x128xf32>
    %cst_232 = arith.constant dense<0.000000e+00> : vector<16x128xf32>
    %1178 = tpu.matmul %789, %1177, %cst_232 {dimension_numbers = #tpu.dot_dimension_numbers<[1], [0], [0], [1], [0, 0, 1, 1], [], []>} : vector<16x8xf32>, vector<8x128xf32>, vector<16x128xf32> -> vector<16x128xf32>
    %1179 = vector.broadcast %791 : vector<16x1xf32> to vector<16x128xf32>
    %1180 = arith.addf %1178, %1179 : vector<16x128xf32>
    %1181 = vector.extract_strided_slice %1180 {offsets = [0, 0], sizes = [8, 128], strides = [1, 1]} : vector<16x128xf32> to vector<8x128xf32>
    %1182 = vector.extract_strided_slice %1180 {offsets = [8, 0], sizes = [8, 128], strides = [1, 1]} : vector<16x128xf32> to vector<8x128xf32>
    %cst_233 = arith.constant 5.000000e-01 : f32
    %1183 = vector.broadcast %cst_233 : f32 to vector<8x128xf32>
    %1184 = arith.mulf %1183, %1182 : vector<8x128xf32>
    %cst_234 = arith.constant 0.707106769 : f32
    %1185 = vector.broadcast %cst_234 : f32 to vector<8x128xf32>
    %1186 = arith.mulf %1182, %1185 : vector<8x128xf32>
    %cst_235 = arith.constant 0.000000e+00 : f32
    %1187 = vector.broadcast %cst_235 : f32 to vector<8x128xf32>
    %1188 = arith.cmpf oge, %1186, %1187 : vector<8x128xf32>
    %cst_236 = arith.constant 1.000000e+00 : f32
    %cst_237 = arith.constant -1.000000e+00 : f32
    %1189 = vector.broadcast %cst_236 : f32 to vector<8x128xf32>
    %1190 = vector.broadcast %cst_237 : f32 to vector<8x128xf32>
    %1191 = arith.select %1188, %1189, %1190 : vector<8x128xi1>, vector<8x128xf32>
    %1192 = math.absf %1186 : vector<8x128xf32>
    %cst_238 = arith.constant 0.327591091 : f32
    %1193 = vector.broadcast %cst_238 : f32 to vector<8x128xf32>
    %1194 = arith.mulf %1193, %1192 : vector<8x128xf32>
    %cst_239 = arith.constant 1.000000e+00 : f32
    %1195 = vector.broadcast %cst_239 : f32 to vector<8x128xf32>
    %1196 = arith.addf %1195, %1194 : vector<8x128xf32>
    %1197 = tpu.reciprocal %1196 {approx = true} : vector<8x128xf32> -> vector<8x128xf32>
    %cst_240 = arith.constant 1.06140542 : f32
    %1198 = vector.broadcast %cst_240 : f32 to vector<8x128xf32>
    %1199 = arith.mulf %1198, %1197 : vector<8x128xf32>
    %cst_241 = arith.constant -1.45315206 : f32
    %1200 = vector.broadcast %cst_241 : f32 to vector<8x128xf32>
    %1201 = arith.addf %1199, %1200 : vector<8x128xf32>
    %1202 = arith.mulf %1201, %1197 : vector<8x128xf32>
    %cst_242 = arith.constant 1.42141378 : f32
    %1203 = vector.broadcast %cst_242 : f32 to vector<8x128xf32>
    %1204 = arith.addf %1202, %1203 : vector<8x128xf32>
    %1205 = arith.mulf %1204, %1197 : vector<8x128xf32>
    %cst_243 = arith.constant -0.284496725 : f32
    %1206 = vector.broadcast %cst_243 : f32 to vector<8x128xf32>
    %1207 = arith.addf %1205, %1206 : vector<8x128xf32>
    %1208 = arith.mulf %1207, %1197 : vector<8x128xf32>
    %cst_244 = arith.constant 0.254829586 : f32
    %1209 = vector.broadcast %cst_244 : f32 to vector<8x128xf32>
    %1210 = arith.addf %1208, %1209 : vector<8x128xf32>
    %1211 = arith.mulf %1210, %1197 : vector<8x128xf32>
    %cst_245 = arith.constant 0.000000e+00 : f32
    %1212 = vector.broadcast %cst_245 : f32 to vector<8x128xf32>
    %1213 = arith.subf %1212, %1192 : vector<8x128xf32>
    %1214 = arith.mulf %1213, %1192 : vector<8x128xf32>
    %1215 = math.exp %1214 : vector<8x128xf32>
    %1216 = arith.mulf %1211, %1215 : vector<8x128xf32>
    %cst_246 = arith.constant 1.000000e+00 : f32
    %1217 = vector.broadcast %cst_246 : f32 to vector<8x128xf32>
    %1218 = arith.subf %1217, %1216 : vector<8x128xf32>
    %1219 = arith.mulf %1191, %1218 : vector<8x128xf32>
    %cst_247 = arith.constant 1.000000e+00 : f32
    %1220 = vector.broadcast %cst_247 : f32 to vector<8x128xf32>
    %1221 = arith.addf %1220, %1219 : vector<8x128xf32>
    %1222 = arith.mulf %1184, %1221 : vector<8x128xf32>
    %1223 = arith.mulf %1222, %1181 : vector<8x128xf32>
    %cst_248 = arith.constant dense<0.000000e+00> : vector<8x128xf32>
    %1224 = tpu.matmul %793, %1223, %cst_248 {dimension_numbers = #tpu.dot_dimension_numbers<[1], [0], [0], [1], [0, 0, 1, 1], [], []>} : vector<8x8xf32>, vector<8x128xf32>, vector<8x128xf32> -> vector<8x128xf32>
    %1225 = arith.addf %645, %1224 : vector<8x128xf32>
    %1226 = vector.broadcast %795 : vector<8x1xf32> to vector<8x128xf32>
    %1227 = arith.addf %1225, %1226 : vector<8x128xf32>
    %cst_249 = arith.constant dense<0.000000e+00> : vector<128xf32>
    %1228 = vector.multi_reduction <add>, %714, %cst_249 [0] : vector<8x128xf32> to vector<128xf32>
    %1229 = vector.shape_cast %1228 : vector<128xf32> to vector<1x128xf32>
    %cst_250 = arith.constant 8.000000e+00 : f32
    %1230 = vector.broadcast %cst_250 : f32 to vector<1x128xf32>
    %1231 = arith.divf %1229, %1230 : vector<1x128xf32>
    %1232 = arith.mulf %714, %714 : vector<8x128xf32>
    %cst_251 = arith.constant dense<0.000000e+00> : vector<128xf32>
    %1233 = vector.multi_reduction <add>, %1232, %cst_251 [0] : vector<8x128xf32> to vector<128xf32>
    %1234 = vector.shape_cast %1233 : vector<128xf32> to vector<1x128xf32>
    %cst_252 = arith.constant 8.000000e+00 : f32
    %1235 = vector.broadcast %cst_252 : f32 to vector<1x128xf32>
    %1236 = arith.divf %1234, %1235 : vector<1x128xf32>
    %1237 = arith.mulf %1231, %1231 : vector<1x128xf32>
    %1238 = arith.subf %1236, %1237 : vector<1x128xf32>
    %1239 = vector.broadcast %1231 : vector<1x128xf32> to vector<8x128xf32>
    %1240 = arith.subf %714, %1239 : vector<8x128xf32>
    %cst_253 = arith.constant 9.99999974E-6 : f32
    %1241 = vector.broadcast %cst_253 : f32 to vector<1x128xf32>
    %1242 = arith.addf %1238, %1241 : vector<1x128xf32>
    %1243 = math.rsqrt %1242 : vector<1x128xf32>
    %1244 = vector.broadcast %1243 : vector<1x128xf32> to vector<8x128xf32>
    %1245 = arith.mulf %1240, %1244 : vector<8x128xf32>
    %1246 = vector.broadcast %785 : vector<8x1xf32> to vector<8x128xf32>
    %1247 = arith.mulf %1245, %1246 : vector<8x128xf32>
    %1248 = vector.broadcast %787 : vector<8x1xf32> to vector<8x128xf32>
    %1249 = arith.addf %1247, %1248 : vector<8x128xf32>
    %cst_254 = arith.constant dense<0.000000e+00> : vector<16x128xf32>
    %1250 = tpu.matmul %789, %1249, %cst_254 {dimension_numbers = #tpu.dot_dimension_numbers<[1], [0], [0], [1], [0, 0, 1, 1], [], []>} : vector<16x8xf32>, vector<8x128xf32>, vector<16x128xf32> -> vector<16x128xf32>
    %1251 = vector.broadcast %791 : vector<16x1xf32> to vector<16x128xf32>
    %1252 = arith.addf %1250, %1251 : vector<16x128xf32>
    %1253 = vector.extract_strided_slice %1252 {offsets = [0, 0], sizes = [8, 128], strides = [1, 1]} : vector<16x128xf32> to vector<8x128xf32>
    %1254 = vector.extract_strided_slice %1252 {offsets = [8, 0], sizes = [8, 128], strides = [1, 1]} : vector<16x128xf32> to vector<8x128xf32>
    %cst_255 = arith.constant 5.000000e-01 : f32
    %1255 = vector.broadcast %cst_255 : f32 to vector<8x128xf32>
    %1256 = arith.mulf %1255, %1254 : vector<8x128xf32>
    %cst_256 = arith.constant 0.707106769 : f32
    %1257 = vector.broadcast %cst_256 : f32 to vector<8x128xf32>
    %1258 = arith.mulf %1254, %1257 : vector<8x128xf32>
    %cst_257 = arith.constant 0.000000e+00 : f32
    %1259 = vector.broadcast %cst_257 : f32 to vector<8x128xf32>
    %1260 = arith.cmpf oge, %1258, %1259 : vector<8x128xf32>
    %cst_258 = arith.constant 1.000000e+00 : f32
    %cst_259 = arith.constant -1.000000e+00 : f32
    %1261 = vector.broadcast %cst_258 : f32 to vector<8x128xf32>
    %1262 = vector.broadcast %cst_259 : f32 to vector<8x128xf32>
    %1263 = arith.select %1260, %1261, %1262 : vector<8x128xi1>, vector<8x128xf32>
    %1264 = math.absf %1258 : vector<8x128xf32>
    %cst_260 = arith.constant 0.327591091 : f32
    %1265 = vector.broadcast %cst_260 : f32 to vector<8x128xf32>
    %1266 = arith.mulf %1265, %1264 : vector<8x128xf32>
    %cst_261 = arith.constant 1.000000e+00 : f32
    %1267 = vector.broadcast %cst_261 : f32 to vector<8x128xf32>
    %1268 = arith.addf %1267, %1266 : vector<8x128xf32>
    %1269 = tpu.reciprocal %1268 {approx = true} : vector<8x128xf32> -> vector<8x128xf32>
    %cst_262 = arith.constant 1.06140542 : f32
    %1270 = vector.broadcast %cst_262 : f32 to vector<8x128xf32>
    %1271 = arith.mulf %1270, %1269 : vector<8x128xf32>
    %cst_263 = arith.constant -1.45315206 : f32
    %1272 = vector.broadcast %cst_263 : f32 to vector<8x128xf32>
    %1273 = arith.addf %1271, %1272 : vector<8x128xf32>
    %1274 = arith.mulf %1273, %1269 : vector<8x128xf32>
    %cst_264 = arith.constant 1.42141378 : f32
    %1275 = vector.broadcast %cst_264 : f32 to vector<8x128xf32>
    %1276 = arith.addf %1274, %1275 : vector<8x128xf32>
    %1277 = arith.mulf %1276, %1269 : vector<8x128xf32>
    %cst_265 = arith.constant -0.284496725 : f32
    %1278 = vector.broadcast %cst_265 : f32 to vector<8x128xf32>
    %1279 = arith.addf %1277, %1278 : vector<8x128xf32>
    %1280 = arith.mulf %1279, %1269 : vector<8x128xf32>
    %cst_266 = arith.constant 0.254829586 : f32
    %1281 = vector.broadcast %cst_266 : f32 to vector<8x128xf32>
    %1282 = arith.addf %1280, %1281 : vector<8x128xf32>
    %1283 = arith.mulf %1282, %1269 : vector<8x128xf32>
    %cst_267 = arith.constant 0.000000e+00 : f32
    %1284 = vector.broadcast %cst_267 : f32 to vector<8x128xf32>
    %1285 = arith.subf %1284, %1264 : vector<8x128xf32>
    %1286 = arith.mulf %1285, %1264 : vector<8x128xf32>
    %1287 = math.exp %1286 : vector<8x128xf32>
    %1288 = arith.mulf %1283, %1287 : vector<8x128xf32>
    %cst_268 = arith.constant 1.000000e+00 : f32
    %1289 = vector.broadcast %cst_268 : f32 to vector<8x128xf32>
    %1290 = arith.subf %1289, %1288 : vector<8x128xf32>
    %1291 = arith.mulf %1263, %1290 : vector<8x128xf32>
    %cst_269 = arith.constant 1.000000e+00 : f32
    %1292 = vector.broadcast %cst_269 : f32 to vector<8x128xf32>
    %1293 = arith.addf %1292, %1291 : vector<8x128xf32>
    %1294 = arith.mulf %1256, %1293 : vector<8x128xf32>
    %1295 = arith.mulf %1294, %1253 : vector<8x128xf32>
    %cst_270 = arith.constant dense<0.000000e+00> : vector<8x128xf32>
    %1296 = tpu.matmul %793, %1295, %cst_270 {dimension_numbers = #tpu.dot_dimension_numbers<[1], [0], [0], [1], [0, 0, 1, 1], [], []>} : vector<8x8xf32>, vector<8x128xf32>, vector<8x128xf32> -> vector<8x128xf32>
    %1297 = arith.addf %714, %1296 : vector<8x128xf32>
    %1298 = vector.broadcast %795 : vector<8x1xf32> to vector<8x128xf32>
    %1299 = arith.addf %1297, %1298 : vector<8x128xf32>
    %cst_271 = arith.constant dense<0.000000e+00> : vector<128xf32>
    %1300 = vector.multi_reduction <add>, %783, %cst_271 [0] : vector<8x128xf32> to vector<128xf32>
    %1301 = vector.shape_cast %1300 : vector<128xf32> to vector<1x128xf32>
    %cst_272 = arith.constant 8.000000e+00 : f32
    %1302 = vector.broadcast %cst_272 : f32 to vector<1x128xf32>
    %1303 = arith.divf %1301, %1302 : vector<1x128xf32>
    %1304 = arith.mulf %783, %783 : vector<8x128xf32>
    %cst_273 = arith.constant dense<0.000000e+00> : vector<128xf32>
    %1305 = vector.multi_reduction <add>, %1304, %cst_273 [0] : vector<8x128xf32> to vector<128xf32>
    %1306 = vector.shape_cast %1305 : vector<128xf32> to vector<1x128xf32>
    %cst_274 = arith.constant 8.000000e+00 : f32
    %1307 = vector.broadcast %cst_274 : f32 to vector<1x128xf32>
    %1308 = arith.divf %1306, %1307 : vector<1x128xf32>
    %1309 = arith.mulf %1303, %1303 : vector<1x128xf32>
    %1310 = arith.subf %1308, %1309 : vector<1x128xf32>
    %1311 = vector.broadcast %1303 : vector<1x128xf32> to vector<8x128xf32>
    %1312 = arith.subf %783, %1311 : vector<8x128xf32>
    %cst_275 = arith.constant 9.99999974E-6 : f32
    %1313 = vector.broadcast %cst_275 : f32 to vector<1x128xf32>
    %1314 = arith.addf %1310, %1313 : vector<1x128xf32>
    %1315 = math.rsqrt %1314 : vector<1x128xf32>
    %1316 = vector.broadcast %1315 : vector<1x128xf32> to vector<8x128xf32>
    %1317 = arith.mulf %1312, %1316 : vector<8x128xf32>
    %1318 = vector.broadcast %785 : vector<8x1xf32> to vector<8x128xf32>
    %1319 = arith.mulf %1317, %1318 : vector<8x128xf32>
    %1320 = vector.broadcast %787 : vector<8x1xf32> to vector<8x128xf32>
    %1321 = arith.addf %1319, %1320 : vector<8x128xf32>
    %cst_276 = arith.constant dense<0.000000e+00> : vector<16x128xf32>
    %1322 = tpu.matmul %789, %1321, %cst_276 {dimension_numbers = #tpu.dot_dimension_numbers<[1], [0], [0], [1], [0, 0, 1, 1], [], []>} : vector<16x8xf32>, vector<8x128xf32>, vector<16x128xf32> -> vector<16x128xf32>
    %1323 = vector.broadcast %791 : vector<16x1xf32> to vector<16x128xf32>
    %1324 = arith.addf %1322, %1323 : vector<16x128xf32>
    %1325 = vector.extract_strided_slice %1324 {offsets = [0, 0], sizes = [8, 128], strides = [1, 1]} : vector<16x128xf32> to vector<8x128xf32>
    %1326 = vector.extract_strided_slice %1324 {offsets = [8, 0], sizes = [8, 128], strides = [1, 1]} : vector<16x128xf32> to vector<8x128xf32>
    %cst_277 = arith.constant 5.000000e-01 : f32
    %1327 = vector.broadcast %cst_277 : f32 to vector<8x128xf32>
    %1328 = arith.mulf %1327, %1326 : vector<8x128xf32>
    %cst_278 = arith.constant 0.707106769 : f32
    %1329 = vector.broadcast %cst_278 : f32 to vector<8x128xf32>
    %1330 = arith.mulf %1326, %1329 : vector<8x128xf32>
    %cst_279 = arith.constant 0.000000e+00 : f32
    %1331 = vector.broadcast %cst_279 : f32 to vector<8x128xf32>
    %1332 = arith.cmpf oge, %1330, %1331 : vector<8x128xf32>
    %cst_280 = arith.constant 1.000000e+00 : f32
    %cst_281 = arith.constant -1.000000e+00 : f32
    %1333 = vector.broadcast %cst_280 : f32 to vector<8x128xf32>
    %1334 = vector.broadcast %cst_281 : f32 to vector<8x128xf32>
    %1335 = arith.select %1332, %1333, %1334 : vector<8x128xi1>, vector<8x128xf32>
    %1336 = math.absf %1330 : vector<8x128xf32>
    %cst_282 = arith.constant 0.327591091 : f32
    %1337 = vector.broadcast %cst_282 : f32 to vector<8x128xf32>
    %1338 = arith.mulf %1337, %1336 : vector<8x128xf32>
    %cst_283 = arith.constant 1.000000e+00 : f32
    %1339 = vector.broadcast %cst_283 : f32 to vector<8x128xf32>
    %1340 = arith.addf %1339, %1338 : vector<8x128xf32>
    %1341 = tpu.reciprocal %1340 {approx = true} : vector<8x128xf32> -> vector<8x128xf32>
    %cst_284 = arith.constant 1.06140542 : f32
    %1342 = vector.broadcast %cst_284 : f32 to vector<8x128xf32>
    %1343 = arith.mulf %1342, %1341 : vector<8x128xf32>
    %cst_285 = arith.constant -1.45315206 : f32
    %1344 = vector.broadcast %cst_285 : f32 to vector<8x128xf32>
    %1345 = arith.addf %1343, %1344 : vector<8x128xf32>
    %1346 = arith.mulf %1345, %1341 : vector<8x128xf32>
    %cst_286 = arith.constant 1.42141378 : f32
    %1347 = vector.broadcast %cst_286 : f32 to vector<8x128xf32>
    %1348 = arith.addf %1346, %1347 : vector<8x128xf32>
    %1349 = arith.mulf %1348, %1341 : vector<8x128xf32>
    %cst_287 = arith.constant -0.284496725 : f32
    %1350 = vector.broadcast %cst_287 : f32 to vector<8x128xf32>
    %1351 = arith.addf %1349, %1350 : vector<8x128xf32>
    %1352 = arith.mulf %1351, %1341 : vector<8x128xf32>
    %cst_288 = arith.constant 0.254829586 : f32
    %1353 = vector.broadcast %cst_288 : f32 to vector<8x128xf32>
    %1354 = arith.addf %1352, %1353 : vector<8x128xf32>
    %1355 = arith.mulf %1354, %1341 : vector<8x128xf32>
    %cst_289 = arith.constant 0.000000e+00 : f32
    %1356 = vector.broadcast %cst_289 : f32 to vector<8x128xf32>
    %1357 = arith.subf %1356, %1336 : vector<8x128xf32>
    %1358 = arith.mulf %1357, %1336 : vector<8x128xf32>
    %1359 = math.exp %1358 : vector<8x128xf32>
    %1360 = arith.mulf %1355, %1359 : vector<8x128xf32>
    %cst_290 = arith.constant 1.000000e+00 : f32
    %1361 = vector.broadcast %cst_290 : f32 to vector<8x128xf32>
    %1362 = arith.subf %1361, %1360 : vector<8x128xf32>
    %1363 = arith.mulf %1335, %1362 : vector<8x128xf32>
    %cst_291 = arith.constant 1.000000e+00 : f32
    %1364 = vector.broadcast %cst_291 : f32 to vector<8x128xf32>
    %1365 = arith.addf %1364, %1363 : vector<8x128xf32>
    %1366 = arith.mulf %1328, %1365 : vector<8x128xf32>
    %1367 = arith.mulf %1366, %1325 : vector<8x128xf32>
    %cst_292 = arith.constant dense<0.000000e+00> : vector<8x128xf32>
    %1368 = tpu.matmul %793, %1367, %cst_292 {dimension_numbers = #tpu.dot_dimension_numbers<[1], [0], [0], [1], [0, 0, 1, 1], [], []>} : vector<8x8xf32>, vector<8x128xf32>, vector<8x128xf32> -> vector<8x128xf32>
    %1369 = arith.addf %783, %1368 : vector<8x128xf32>
    %1370 = vector.broadcast %795 : vector<8x1xf32> to vector<8x128xf32>
    %1371 = arith.addf %1369, %1370 : vector<8x128xf32>
    %c0_293 = arith.constant 0 : index
    %c0_294 = arith.constant 0 : index
    %c0_295 = arith.constant 0 : index
    %1372 = vector.load %arg12[%c0_293, %c0_294, %c0_295] : memref<8x16x8xf32, #tpu.memory_space<vmem>>, vector<1x16x8xf32>
    %1373 = vector.shape_cast %1372 : vector<1x16x8xf32> to vector<16x8xf32>
    %cst_296 = arith.constant dense<0.000000e+00> : vector<16x128xf32>
    %1374 = tpu.matmul %1373, %867, %cst_296 {dimension_numbers = #tpu.dot_dimension_numbers<[1], [0], [0], [1], [0, 0, 1, 1], [], []>} : vector<16x8xf32>, vector<8x128xf32>, vector<16x128xf32> -> vector<16x128xf32>
    %c1_297 = arith.constant 1 : index
    %c0_298 = arith.constant 0 : index
    %c0_299 = arith.constant 0 : index
    %1375 = vector.load %arg12[%c1_297, %c0_298, %c0_299] : memref<8x16x8xf32, #tpu.memory_space<vmem>>, vector<1x16x8xf32>
    %1376 = vector.shape_cast %1375 : vector<1x16x8xf32> to vector<16x8xf32>
    %cst_300 = arith.constant dense<0.000000e+00> : vector<16x128xf32>
    %1377 = tpu.matmul %1376, %939, %cst_300 {dimension_numbers = #tpu.dot_dimension_numbers<[1], [0], [0], [1], [0, 0, 1, 1], [], []>} : vector<16x8xf32>, vector<8x128xf32>, vector<16x128xf32> -> vector<16x128xf32>
    %1378 = arith.addf %1374, %1377 : vector<16x128xf32>
    %c2_301 = arith.constant 2 : index
    %c0_302 = arith.constant 0 : index
    %c0_303 = arith.constant 0 : index
    %1379 = vector.load %arg12[%c2_301, %c0_302, %c0_303] : memref<8x16x8xf32, #tpu.memory_space<vmem>>, vector<1x16x8xf32>
    %1380 = vector.shape_cast %1379 : vector<1x16x8xf32> to vector<16x8xf32>
    %cst_304 = arith.constant dense<0.000000e+00> : vector<16x128xf32>
    %1381 = tpu.matmul %1380, %1011, %cst_304 {dimension_numbers = #tpu.dot_dimension_numbers<[1], [0], [0], [1], [0, 0, 1, 1], [], []>} : vector<16x8xf32>, vector<8x128xf32>, vector<16x128xf32> -> vector<16x128xf32>
    %1382 = arith.addf %1378, %1381 : vector<16x128xf32>
    %c3_305 = arith.constant 3 : index
    %c0_306 = arith.constant 0 : index
    %c0_307 = arith.constant 0 : index
    %1383 = vector.load %arg12[%c3_305, %c0_306, %c0_307] : memref<8x16x8xf32, #tpu.memory_space<vmem>>, vector<1x16x8xf32>
    %1384 = vector.shape_cast %1383 : vector<1x16x8xf32> to vector<16x8xf32>
    %cst_308 = arith.constant dense<0.000000e+00> : vector<16x128xf32>
    %1385 = tpu.matmul %1384, %1083, %cst_308 {dimension_numbers = #tpu.dot_dimension_numbers<[1], [0], [0], [1], [0, 0, 1, 1], [], []>} : vector<16x8xf32>, vector<8x128xf32>, vector<16x128xf32> -> vector<16x128xf32>
    %1386 = arith.addf %1382, %1385 : vector<16x128xf32>
    %c4_309 = arith.constant 4 : index
    %c0_310 = arith.constant 0 : index
    %c0_311 = arith.constant 0 : index
    %1387 = vector.load %arg12[%c4_309, %c0_310, %c0_311] : memref<8x16x8xf32, #tpu.memory_space<vmem>>, vector<1x16x8xf32>
    %1388 = vector.shape_cast %1387 : vector<1x16x8xf32> to vector<16x8xf32>
    %cst_312 = arith.constant dense<0.000000e+00> : vector<16x128xf32>
    %1389 = tpu.matmul %1388, %1155, %cst_312 {dimension_numbers = #tpu.dot_dimension_numbers<[1], [0], [0], [1], [0, 0, 1, 1], [], []>} : vector<16x8xf32>, vector<8x128xf32>, vector<16x128xf32> -> vector<16x128xf32>
    %1390 = arith.addf %1386, %1389 : vector<16x128xf32>
    %c5_313 = arith.constant 5 : index
    %c0_314 = arith.constant 0 : index
    %c0_315 = arith.constant 0 : index
    %1391 = vector.load %arg12[%c5_313, %c0_314, %c0_315] : memref<8x16x8xf32, #tpu.memory_space<vmem>>, vector<1x16x8xf32>
    %1392 = vector.shape_cast %1391 : vector<1x16x8xf32> to vector<16x8xf32>
    %cst_316 = arith.constant dense<0.000000e+00> : vector<16x128xf32>
    %1393 = tpu.matmul %1392, %1227, %cst_316 {dimension_numbers = #tpu.dot_dimension_numbers<[1], [0], [0], [1], [0, 0, 1, 1], [], []>} : vector<16x8xf32>, vector<8x128xf32>, vector<16x128xf32> -> vector<16x128xf32>
    %1394 = arith.addf %1390, %1393 : vector<16x128xf32>
    %c6_317 = arith.constant 6 : index
    %c0_318 = arith.constant 0 : index
    %c0_319 = arith.constant 0 : index
    %1395 = vector.load %arg12[%c6_317, %c0_318, %c0_319] : memref<8x16x8xf32, #tpu.memory_space<vmem>>, vector<1x16x8xf32>
    %1396 = vector.shape_cast %1395 : vector<1x16x8xf32> to vector<16x8xf32>
    %cst_320 = arith.constant dense<0.000000e+00> : vector<16x128xf32>
    %1397 = tpu.matmul %1396, %1299, %cst_320 {dimension_numbers = #tpu.dot_dimension_numbers<[1], [0], [0], [1], [0, 0, 1, 1], [], []>} : vector<16x8xf32>, vector<8x128xf32>, vector<16x128xf32> -> vector<16x128xf32>
    %1398 = arith.addf %1394, %1397 : vector<16x128xf32>
    %c7_321 = arith.constant 7 : index
    %c0_322 = arith.constant 0 : index
    %c0_323 = arith.constant 0 : index
    %1399 = vector.load %arg12[%c7_321, %c0_322, %c0_323] : memref<8x16x8xf32, #tpu.memory_space<vmem>>, vector<1x16x8xf32>
    %1400 = vector.shape_cast %1399 : vector<1x16x8xf32> to vector<16x8xf32>
    %cst_324 = arith.constant dense<0.000000e+00> : vector<16x128xf32>
    %1401 = tpu.matmul %1400, %1371, %cst_324 {dimension_numbers = #tpu.dot_dimension_numbers<[1], [0], [0], [1], [0, 0, 1, 1], [], []>} : vector<16x8xf32>, vector<8x128xf32>, vector<16x128xf32> -> vector<16x128xf32>
    %1402 = arith.addf %1398, %1401 : vector<16x128xf32>
    %c0_325 = arith.constant 0 : index
    %c0_326 = arith.constant 0 : index
    %1403 = vector.load %arg13[%c0_325, %c0_326] : memref<16x1xf32, #tpu.memory_space<vmem>>, vector<16x1xf32>
    %1404 = vector.broadcast %1403 : vector<16x1xf32> to vector<16x128xf32>
    %1405 = arith.addf %1402, %1404 : vector<16x128xf32>
    %c0_327 = arith.constant 0 : index
    %c0_328 = arith.constant 0 : index
    %1406 = vector.load %arg14[%c0_327, %c0_328] : memref<16x128xf32, #tpu.memory_space<vmem>>, vector<16x128xf32>
    tpu.vector_store %arg14[%c0_327, %c0_328], %1405 {strides = array<i32>} : memref<16x128xf32, #tpu.memory_space<vmem>>, vector<16x128xf32>,
    return
  }
  func.func @transform_0(%arg0: i32) -> (i32, i32, i32) {
    %c0_i32 = arith.constant 0 : i32
    %c0_i32_0 = arith.constant 0 : i32
    %c0_i32_1 = arith.constant 0 : i32
    return %arg0, %c0_i32, %c0_i32_0 : i32, i32, i32
  }
  func.func @transform_1(%arg0: i32) -> (i32, i32, i32) {
    %c0_i32 = arith.constant 0 : i32
    %c0_i32_0 = arith.constant 0 : i32
    %c0_i32_1 = arith.constant 0 : i32
    %c0_i32_2 = arith.constant 0 : i32
    return %c0_i32, %c0_i32_0, %c0_i32_1 : i32, i32, i32
  }
  func.func @transform_2(%arg0: i32) -> (i32, i32, i32) {
    %c0_i32 = arith.constant 0 : i32
    %c0_i32_0 = arith.constant 0 : i32
    %c0_i32_1 = arith.constant 0 : i32
    %c0_i32_2 = arith.constant 0 : i32
    return %c0_i32, %c0_i32_0, %c0_i32_1 : i32, i32, i32
  }
  func.func @transform_3(%arg0: i32) -> (i32, i32, i32) {
    %c0_i32 = arith.constant 0 : i32
    %c0_i32_0 = arith.constant 0 : i32
    %c0_i32_1 = arith.constant 0 : i32
    %c0_i32_2 = arith.constant 0 : i32
    return %c0_i32, %c0_i32_0, %c0_i32_1 : i32, i32, i32
  }
  func.func @transform_4(%arg0: i32) -> (i32, i32, i32) {
    %c0_i32 = arith.constant 0 : i32
    %c0_i32_0 = arith.constant 0 : i32
    %c0_i32_1 = arith.constant 0 : i32
    %c0_i32_2 = arith.constant 0 : i32
    return %c0_i32, %c0_i32_0, %c0_i32_1 : i32, i32, i32
  }
  func.func @transform_5(%arg0: i32) -> (i32, i32, i32) {
    %c0_i32 = arith.constant 0 : i32
    %c0_i32_0 = arith.constant 0 : i32
    %c0_i32_1 = arith.constant 0 : i32
    %c0_i32_2 = arith.constant 0 : i32
    return %c0_i32, %c0_i32_0, %c0_i32_1 : i32, i32, i32
  }
  func.func @transform_6(%arg0: i32) -> (i32, i32, i32) {
    %c0_i32 = arith.constant 0 : i32
    %c0_i32_0 = arith.constant 0 : i32
    %c0_i32_1 = arith.constant 0 : i32
    %c0_i32_2 = arith.constant 0 : i32
    return %c0_i32, %c0_i32_0, %c0_i32_1 : i32, i32, i32
  }
  func.func @transform_7(%arg0: i32) -> (i32, i32, i32) {
    %c0_i32 = arith.constant 0 : i32
    %c0_i32_0 = arith.constant 0 : i32
    %c0_i32_1 = arith.constant 0 : i32
    %c0_i32_2 = arith.constant 0 : i32
    return %c0_i32, %c0_i32_0, %c0_i32_1 : i32, i32, i32
  }
  func.func @transform_8(%arg0: i32) -> (i32, i32, i32) {
    %c0_i32 = arith.constant 0 : i32
    %c0_i32_0 = arith.constant 0 : i32
    %c0_i32_1 = arith.constant 0 : i32
    %c0_i32_2 = arith.constant 0 : i32
    return %c0_i32, %c0_i32_0, %c0_i32_1 : i32, i32, i32
  }
  func.func @transform_9(%arg0: i32) -> (i32, i32, i32) {
    %c0_i32 = arith.constant 0 : i32
    %c0_i32_0 = arith.constant 0 : i32
    %c0_i32_1 = arith.constant 0 : i32
    %c0_i32_2 = arith.constant 0 : i32
    return %c0_i32, %c0_i32_0, %c0_i32_1 : i32, i32, i32
  }
  func.func @transform_10(%arg0: i32) -> (i32, i32, i32) {
    %c0_i32 = arith.constant 0 : i32
    %c0_i32_0 = arith.constant 0 : i32
    %c0_i32_1 = arith.constant 0 : i32
    %c0_i32_2 = arith.constant 0 : i32
    return %c0_i32, %c0_i32_0, %c0_i32_1 : i32, i32, i32
  }
  func.func @transform_11(%arg0: i32) -> (i32, i32, i32) {
    %c0_i32 = arith.constant 0 : i32
    %c0_i32_0 = arith.constant 0 : i32
    %c0_i32_1 = arith.constant 0 : i32
    %c0_i32_2 = arith.constant 0 : i32
    return %c0_i32, %c0_i32_0, %c0_i32_1 : i32, i32, i32
  }
  func.func @transform_12(%arg0: i32) -> (i32, i32) {
    %c0_i32 = arith.constant 0 : i32
    %c0_i32_0 = arith.constant 0 : i32
    %c0_i32_1 = arith.constant 0 : i32
    return %c0_i32, %c0_i32_0 : i32, i32
  }
  func.func @transform_13(%arg0: i32) -> (i32, i32) {
    %c0_i32 = arith.constant 0 : i32
    %c0_i32_0 = arith.constant 0 : i32
    return %c0_i32, %arg0 : i32, i32
  }
}

</mosaic_0001>

<llo_original>
// kernel: tpu_custom_call.1
$region0: #{tpu_custom_call.1}
  #allocation0 [shape = 'u32[]', space=smem, size = 0x4, offset = 0x4, fixed_abs, tag = 'smem constant byte address 0x4 - core index']
  #allocation1 [shape = 'u32[144,128]{1,0:T(1,128)}', space=vmem, size = 0x12000, scoped, tag = 'internal scratch']
  %s0 = inlined_call_operand.vmem [shape: f32[8,8,128], index: 0, kind: input, shape index: {}]
  %s1 = inlined_call_operand.vmem [shape: f32[1,24,8], index: 1, kind: input, shape index: {}]
  %s2 = inlined_call_operand.vmem [shape: f32[1,8,8], index: 2, kind: input, shape index: {}]
  %s3 = inlined_call_operand.vmem [shape: f32[1,8,1], index: 3, kind: input, shape index: {}]
  %s4 = inlined_call_operand.vmem [shape: f32[1,8,1], index: 4, kind: input, shape index: {}]
  %s5 = inlined_call_operand.vmem [shape: f32[1,8,1], index: 5, kind: input, shape index: {}]
  %s6 = inlined_call_operand.vmem [shape: f32[1,8,1], index: 6, kind: input, shape index: {}]
  %s7 = inlined_call_operand.vmem [shape: f32[1,16,8], index: 7, kind: input, shape index: {}]
  %s8 = inlined_call_operand.vmem [shape: f32[1,16,1], index: 8, kind: input, shape index: {}]
  %s9 = inlined_call_operand.vmem [shape: f32[1,8,8], index: 9, kind: input, shape index: {}]
  %s10 = inlined_call_operand.vmem [shape: f32[1,8,1], index: 10, kind: input, shape index: {}]
  %s11 = inlined_call_operand.vmem [shape: f32[8,16,8], index: 11, kind: input, shape index: {}]
  %s12 = inlined_call_operand.vmem [shape: f32[16,1], index: 12, kind: input, shape index: {}]
  %s13 = inlined_call_operand.hbm [shape: f32[16,128], index: 13, kind: output, shape index: {}]
  %s14 = sld [smem:[#allocation0]]
  $region62: #{tpu_custom_call.1} parent=0
    _
  %s16 = ssub.s32 1, %s14
  %s17 = scalar_select 0, %s16, %s14
  $region1: #{tpu_custom_call.1} parent=0
    #allocation2 [shape = 'u8[8192]{0}', space=vmem, size = 0x2000, scoped, tag = 'output window, operand 0, single buffered']
    #allocation3 [shape = 's32[1]{0}', space=sflag, size = 0x4, scoped, tag = 'scoped memory for tpu_custom_call.1']
    %18 = vsyncpa [#allocation3], 0
    // Predicated region
    $region2: #{tpu_custom_call.1} parent=1 // pred_check
      _
    $region3: #{tpu_custom_call.1} parent=1 // pred_check_branch
      %20 = sbr.rel (0) target = $region5
    $region4: #{tpu_custom_call.1} parent=1 // pred_region
      _
    $region5: #{tpu_custom_call.1} parent=1 // pred_fallthru
      _
    // Predicated region
    $region6: #{tpu_custom_call.1} parent=1 // pred_check
      _
    $region7: #{tpu_custom_call.1} parent=1 // pred_check_branch
      %22 = sbr.rel (0) target = $region9
    $region8: #{tpu_custom_call.1} parent=1 // pred_region
      _
    $region9: #{tpu_custom_call.1} parent=1 // pred_fallthru
      _
    // Predicated region
    $region10: #{tpu_custom_call.1} parent=1 // pred_check
      _
    $region11: #{tpu_custom_call.1} parent=1 // pred_check_branch
      %24 = sbr.rel (0) target = $region13
    $region12: #{tpu_custom_call.1} parent=1 // pred_region
      _
    $region13: #{tpu_custom_call.1} parent=1 // pred_fallthru
      _
    // Predicated region
    $region14: #{tpu_custom_call.1} parent=1 // pred_check
      _
    $region15: #{tpu_custom_call.1} parent=1 // pred_check_branch
      %26 = sbr.rel (0) target = $region17
    $region16: #{tpu_custom_call.1} parent=1 // pred_region
      _
    $region17: #{tpu_custom_call.1} parent=1 // pred_fallthru
      _
    // Predicated region
    $region18: #{tpu_custom_call.1} parent=1 // pred_check
      _
    $region19: #{tpu_custom_call.1} parent=1 // pred_check_branch
      %28 = sbr.rel (0) target = $region21
    $region20: #{tpu_custom_call.1} parent=1 // pred_region
      _
    $region21: #{tpu_custom_call.1} parent=1 // pred_fallthru
      _
    // Predicated region
    $region22: #{tpu_custom_call.1} parent=1 // pred_check
      _
    $region23: #{tpu_custom_call.1} parent=1 // pred_check_branch
      %30 = sbr.rel (0) target = $region25
    $region24: #{tpu_custom_call.1} parent=1 // pred_region
      _
    $region25: #{tpu_custom_call.1} parent=1 // pred_fallthru
      _
    // Predicated region
    $region26: #{tpu_custom_call.1} parent=1 // pred_check
      _
    $region27: #{tpu_custom_call.1} parent=1 // pred_check_branch
      %32 = sbr.rel (0) target = $region29
    $region28: #{tpu_custom_call.1} parent=1 // pred_region
      _
    $region29: #{tpu_custom_call.1} parent=1 // pred_fallthru
      _
    // Predicated region
    $region30: #{tpu_custom_call.1} parent=1 // pred_check
      _
    $region31: #{tpu_custom_call.1} parent=1 // pred_check_branch
      %34 = sbr.rel (0) target = $region33
    $region32: #{tpu_custom_call.1} parent=1 // pred_region
      _
    $region33: #{tpu_custom_call.1} parent=1 // pred_fallthru
      _
    // Predicated region
    $region34: #{tpu_custom_call.1} parent=1 // pred_check
      _
    $region35: #{tpu_custom_call.1} parent=1 // pred_check_branch
      %36 = sbr.rel (0) target = $region37
    $region36: #{tpu_custom_call.1} parent=1 // pred_region
      _
    $region37: #{tpu_custom_call.1} parent=1 // pred_fallthru
      _
    // Predicated region
    $region38: #{tpu_custom_call.1} parent=1 // pred_check
      _
    $region39: #{tpu_custom_call.1} parent=1 // pred_check_branch
      %38 = sbr.rel (0) target = $region41
    $region40: #{tpu_custom_call.1} parent=1 // pred_region
      _
    $region41: #{tpu_custom_call.1} parent=1 // pred_fallthru
      _
    // Predicated region
    $region42: #{tpu_custom_call.1} parent=1 // pred_check
      _
    $region43: #{tpu_custom_call.1} parent=1 // pred_check_branch
      %40 = sbr.rel (0) target = $region45
    $region44: #{tpu_custom_call.1} parent=1 // pred_region
      _
    $region45: #{tpu_custom_call.1} parent=1 // pred_fallthru
      _
    // Predicated region
    $region46: #{tpu_custom_call.1} parent=1 // pred_check
      _
    $region47: #{tpu_custom_call.1} parent=1 // pred_check_branch
      %42 = sbr.rel (0) target = $region49
    $region48: #{tpu_custom_call.1} parent=1 // pred_region
      _
    $region49: #{tpu_custom_call.1} parent=1 // pred_fallthru
      _
    // Predicated region
    $region50: #{tpu_custom_call.1} parent=1 // pred_check
      _
    $region51: #{tpu_custom_call.1} parent=1 // pred_check_branch
      %44 = sbr.rel (0) target = $region53
    $region52: #{tpu_custom_call.1} parent=1 // pred_region
      _
    $region53: #{tpu_custom_call.1} parent=1 // pred_fallthru
      _
    %v45 = vld [vmem:[%s0] sm:$0xff]
    %s46 = scalar_lea.vmem %s0, 8
    %v47 = vld [vmem:[%s46] sm:$0xff]
    %s48 = scalar_lea.vmem %s0, 16
    %v49 = vld [vmem:[%s48] sm:$0xff]
    %s50 = scalar_lea.vmem %s0, 24
    %v51 = vld [vmem:[%s50] sm:$0xff]
    %s52 = scalar_lea.vmem %s0, 32
    %v53 = vld [vmem:[%s52] sm:$0xff]
    %s54 = scalar_lea.vmem %s0, 40
    %v55 = vld [vmem:[%s54] sm:$0xff]
    %s56 = scalar_lea.vmem %s0, 48
    %v57 = vld [vmem:[%s56] sm:$0xff]
    %s58 = scalar_lea.vmem %s0, 56
    %v59 = vld [vmem:[%s58] sm:$0xff]
    %v60 = vld [vmem:[%s3] sm:$0xff]
    %v61 = vld [vmem:[%s4] sm:$0xff]
    %v62 = vld [vmem:[%s1] sm:$0xff]
    %v63 = vld [vmem:[%s1 + $0x8] sm:$0xff]
    %v64 = vld [vmem:[%s1 + $0x10] sm:$0xff]
    %v65 = vrot.slane %v45, 4
    %v66 = vadd.f32 %v45, %v65
    %v67 = vrot.slane %v66, 2
    %v68 = vadd.f32 %v66, %v67
    %v69 = vrot.slane %v68, 1
    %v70 = vadd.f32 %v68, %v69
    %v71 = vrcp.pop 8.0
    %v72 = vmul.f32 %v70, %v71
    %v73 = vmul.f32 %v45, %v45
    %v74 = vrot.slane %v73, 4
    %v75 = vadd.f32 %v73, %v74
    %v76 = vrot.slane %v75, 2
    %v77 = vadd.f32 %v75, %v76
    %v78 = vrot.slane %v77, 1
    %v79 = vadd.f32 %v77, %v78
    %v80 = vmul.f32 %v79, %v71
    %v81 = vmul.f32 %v72, %v72
    %v82 = vsub.f32 %v80, %v81
    %v83 = vsub.f32 %v45, %v72
    %v84 = vadd.f32 %v82, 1e-05
    %v85 = vrsqrt.pop %v84
    %v86 = vmul.f32 %v83, %v85
    %88 = vset.pattern.permute.xlu0 0
    %89 = vperm.xlu0 %88, %v60
    %v90 = vpop.permute.xlu0 %89
    %v92 = vmul.f32 %v86, %v90
    %94 = vset.pattern.permute.xlu0 0
    %95 = vperm.xlu0 %94, %v61
    %v96 = vpop.permute.xlu0 %95
    %v98 = vadd.f32 %v92, %v96
    %vm99 = vcmask 64512
    %v101 = vsel %vm99, %v62, 0
    %v104 = vsel %vm99, %v63, 0
    %v107 = vsel %vm99, %v64, 0
    %109 = vmatprep.subr.mxu0 0.0
    %110 = vmatpush1.msra.mxu0 0.0
    %111 = vmatprep.subr.mxu0 0.0
    %112 = vmatpush1.msra.mxu0 0.0
    %113 = vmatprep.subr.mxu0 0.0
    %114 = vmatpush1.msra.mxu0 0.0
    %115 = vmatprep.subr.mxu0 0.0
    %116 = vmatpush1.msra.mxu0 0.0
    %117 = vmatprep.subr.mxu0 0.0
    %118 = vmatpush1.msra.mxu0 0.0
    %119 = vmatprep.subr.mxu0 0.0
    %120 = vmatpush1.msra.mxu0 0.0
    %121 = vmatprep.subr.mxu0 0.0
    %122 = vmatpush1.msra.mxu0 0.0
    %123 = vmatprep.subr.mxu0 0.0
    %124 = vmatpush1.msra.mxu0 0.0
    %125 = vmatprep.subr.mxu0 0.0
    %126 = vmatpush1.msra.mxu0 0.0
    %127 = vmatprep.subr.mxu0 0.0
    %128 = vmatpush1.msra.mxu0 0.0
    %129 = vmatprep.subr.mxu0 0.0
    %130 = vmatpush1.msra.mxu0 0.0
    %131 = vmatprep.subr.mxu0 0.0
    %132 = vmatpush1.msra.mxu0 0.0
    %133 = vmatprep.subr.mxu0 0.0
    %134 = vmatpush1.msra.mxu0 0.0
    %135 = vmatprep.subr.mxu0 0.0
    %136 = vmatpush1.msra.mxu0 0.0
    %137 = vmatprep.subr.mxu0 0.0
    %138 = vmatpush1.msra.mxu0 0.0
    %139 = vmatprep.subr.mxu0 0.0
    %140 = vmatpush1.msra.mxu0 %v98
    %141 = vmatprep.subr.mxu0 0.0
    %142 = vmatpush2.msra.mxu0 0.0
    %143 = vmatprep.subr.mxu0 0.0
    %144 = vmatpush2.msra.mxu0 0.0
    %145 = vmatprep.subr.mxu0 0.0
    %146 = vmatpush2.msra.mxu0 0.0
    %147 = vmatprep.subr.mxu0 0.0
    %148 = vmatpush2.msra.mxu0 0.0
    %149 = vmatprep.subr.mxu0 0.0
    %150 = vmatpush2.msra.mxu0 0.0
    %151 = vmatprep.subr.mxu0 0.0
    %152 = vmatpush2.msra.mxu0 0.0
    %153 = vmatprep.subr.mxu0 0.0
    %154 = vmatpush2.msra.mxu0 0.0
    %155 = vmatprep.subr.mxu0 0.0
    %156 = vmatpush2.msra.mxu0 0.0
    %157 = vmatprep.subr.mxu0 0.0
    %158 = vmatpush2.msra.mxu0 0.0
    %159 = vmatprep.subr.mxu0 0.0
    %160 = vmatpush2.msra.mxu0 0.0
    %161 = vmatprep.subr.mxu0 0.0
    %162 = vmatpush2.msra.mxu0 0.0
    %163 = vmatprep.subr.mxu0 0.0
    %164 = vmatpush2.msra.mxu0 0.0
    %165 = vmatprep.subr.mxu0 0.0
    %166 = vmatpush2.msra.mxu0 0.0
    %167 = vmatprep.subr.mxu0 0.0
    %168 = vmatpush2.msra.mxu0 0.0
    %169 = vmatprep.subr.mxu0 0.0
    %170 = vmatpush2.msra.mxu0 0.0
    %171 = vmatprep.subr.mxu0 0.0
    %172 = vmatpush2.msra.mxu0 0.0
    %173 = vmatprep.mubr.f32.mxu0 0.0
    %174 = vmatmul.mubr.f32.gmra.mxu0 %v101
    %v175 = vpop.f32.mrf.mxu0
    %v176 = vadd.f32 0.0, %v175
    %v177 = vpop.f32.mrf.mxu0
    %178 = vmatprep.mubr.f32.mxu0 0.0
    %179 = vmatmul.mubr.f32.gmra.mxu0 %v104
    %v180 = vpop.f32.mrf.mxu0
    %v181 = vadd.f32 0.0, %v180
    %v182 = vpop.f32.mrf.mxu0
    %183 = vmatprep.mubr.f32.mxu0 0.0
    %184 = vmatmul.mubr.f32.gmra.mxu0 %v107
    %v185 = vpop.f32.mrf.mxu0
    %v186 = vadd.f32 0.0, %v185
    %v187 = vpop.f32.mrf.mxu0
    %188 = vdwg.mxu0
    %v189 = vrot.slane %v47, 4
    %v190 = vadd.f32 %v47, %v189
    %v191 = vrot.slane %v190, 2
    %v192 = vadd.f32 %v190, %v191
    %v193 = vrot.slane %v192, 1
    %v194 = vadd.f32 %v192, %v193
    %v195 = vmul.f32 %v194, %v71
    %v196 = vmul.f32 %v47, %v47
    %v197 = vrot.slane %v196, 4
    %v198 = vadd.f32 %v196, %v197
    %v199 = vrot.slane %v198, 2
    %v200 = vadd.f32 %v198, %v199
    %v201 = vrot.slane %v200, 1
    %v202 = vadd.f32 %v200, %v201
    %v203 = vmul.f32 %v202, %v71
    %v204 = vmul.f32 %v195, %v195
    %v205 = vsub.f32 %v203, %v204
    %v206 = vsub.f32 %v47, %v195
    %v207 = vadd.f32 %v205, 1e-05
    %v208 = vrsqrt.pop %v207
    %v209 = vmul.f32 %v206, %v208
    %v210 = vmul.f32 %v209, %v90
    %v211 = vadd.f32 %v210, %v96
    %212 = vmatprep.subr.mxu0 0.0
    %213 = vmatpush1.msra.mxu0 0.0
    %214 = vmatprep.subr.mxu0 0.0
    %215 = vmatpush1.msra.mxu0 0.0
    %216 = vmatprep.subr.mxu0 0.0
    %217 = vmatpush1.msra.mxu0 0.0
    %218 = vmatprep.subr.mxu0 0.0
    %219 = vmatpush1.msra.mxu0 0.0
    %220 = vmatprep.subr.mxu0 0.0
    %221 = vmatpush1.msra.mxu0 0.0
    %222 = vmatprep.subr.mxu0 0.0
    %223 = vmatpush1.msra.mxu0 0.0
    %224 = vmatprep.subr.mxu0 0.0
    %225 = vmatpush1.msra.mxu0 0.0
    %226 = vmatprep.subr.mxu0 0.0
    %227 = vmatpush1.msra.mxu0 0.0
    %228 = vmatprep.subr.mxu0 0.0
    %229 = vmatpush1.msra.mxu0 0.0
    %230 = vmatprep.subr.mxu0 0.0
    %231 = vmatpush1.msra.mxu0 0.0
    %232 = vmatprep.subr.mxu0 0.0
    %233 = vmatpush1.msra.mxu0 0.0
    %234 = vmatprep.subr.mxu0 0.0
    %235 = vmatpush1.msra.mxu0 0.0
    %236 = vmatprep.subr.mxu0 0.0
    %237 = vmatpush1.msra.mxu0 0.0
    %238 = vmatprep.subr.mxu0 0.0
    %239 = vmatpush1.msra.mxu0 0.0
    %240 = vmatprep.subr.mxu0 0.0
    %241 = vmatpush1.msra.mxu0 0.0
    %242 = vmatprep.subr.mxu0 0.0
    %243 = vmatpush1.msra.mxu0 %v211
    %244 = vmatprep.subr.mxu0 0.0
    %245 = vmatpush2.msra.mxu0 0.0
    %246 = vmatprep.subr.mxu0 0.0
    %247 = vmatpush2.msra.mxu0 0.0
    %248 = vmatprep.subr.mxu0 0.0
    %249 = vmatpush2.msra.mxu0 0.0
    %250 = vmatprep.subr.mxu0 0.0
    %251 = vmatpush2.msra.mxu0 0.0
    %252 = vmatprep.subr.mxu0 0.0
    %253 = vmatpush2.msra.mxu0 0.0
    %254 = vmatprep.subr.mxu0 0.0
    %255 = vmatpush2.msra.mxu0 0.0
    %256 = vmatprep.subr.mxu0 0.0
    %257 = vmatpush2.msra.mxu0 0.0
    %258 = vmatprep.subr.mxu0 0.0
    %259 = vmatpush2.msra.mxu0 0.0
    %260 = vmatprep.subr.mxu0 0.0
    %261 = vmatpush2.msra.mxu0 0.0
    %262 = vmatprep.subr.mxu0 0.0
    %263 = vmatpush2.msra.mxu0 0.0
    %264 = vmatprep.subr.mxu0 0.0
    %265 = vmatpush2.msra.mxu0 0.0
    %266 = vmatprep.subr.mxu0 0.0
    %267 = vmatpush2.msra.mxu0 0.0
    %268 = vmatprep.subr.mxu0 0.0
    %269 = vmatpush2.msra.mxu0 0.0
    %270 = vmatprep.subr.mxu0 0.0
    %271 = vmatpush2.msra.mxu0 0.0
    %272 = vmatprep.subr.mxu0 0.0
    %273 = vmatpush2.msra.mxu0 0.0
    %274 = vmatprep.subr.mxu0 0.0
    %275 = vmatpush2.msra.mxu0 0.0
    %276 = vmatprep.mubr.f32.mxu0 0.0
    %277 = vmatmul.mubr.f32.gmra.mxu0 %v101
    %v278 = vpop.f32.mrf.mxu0
    %v279 = vadd.f32 0.0, %v278
    %v280 = vpop.f32.mrf.mxu0
    %281 = vmatprep.mubr.f32.mxu0 0.0
    %282 = vmatmul.mubr.f32.gmra.mxu0 %v104
    %v283 = vpop.f32.mrf.mxu0
    %v284 = vadd.f32 0.0, %v283
    %v285 = vpop.f32.mrf.mxu0
    %286 = vmatprep.mubr.f32.mxu0 0.0
    %287 = vmatmul.mubr.f32.gmra.mxu0 %v107
    %v288 = vpop.f32.mrf.mxu0
    %v289 = vadd.f32 0.0, %v288
    %v290 = vpop.f32.mrf.mxu0
    %291 = vdwg.mxu0
    %v292 = vrot.slane %v49, 4
    %v293 = vadd.f32 %v49, %v292
    %v294 = vrot.slane %v293, 2
    %v295 = vadd.f32 %v293, %v294
    %v296 = vrot.slane %v295, 1
    %v297 = vadd.f32 %v295, %v296
    %v298 = vmul.f32 %v297, %v71
    %v299 = vmul.f32 %v49, %v49
    %v300 = vrot.slane %v299, 4
    %v301 = vadd.f32 %v299, %v300
    %v302 = vrot.slane %v301, 2
    %v303 = vadd.f32 %v301, %v302
    %v304 = vrot.slane %v303, 1
    %v305 = vadd.f32 %v303, %v304
    %v306 = vmul.f32 %v305, %v71
    %v307 = vmul.f32 %v298, %v298
    %v308 = vsub.f32 %v306, %v307
    %v309 = vsub.f32 %v49, %v298
    %v310 = vadd.f32 %v308, 1e-05
    %v311 = vrsqrt.pop %v310
    %v312 = vmul.f32 %v309, %v311
    %v313 = vmul.f32 %v312, %v90
    %v314 = vadd.f32 %v313, %v96
    %315 = vmatprep.subr.mxu0 0.0
    %316 = vmatpush1.msra.mxu0 0.0
    %317 = vmatprep.subr.mxu0 0.0
    %318 = vmatpush1.msra.mxu0 0.0
    %319 = vmatprep.subr.mxu0 0.0
    %320 = vmatpush1.msra.mxu0 0.0
    %321 = vmatprep.subr.mxu0 0.0
    %322 = vmatpush1.msra.mxu0 0.0
    %323 = vmatprep.subr.mxu0 0.0
    %324 = vmatpush1.msra.mxu0 0.0
    %325 = vmatprep.subr.mxu0 0.0
    %326 = vmatpush1.msra.mxu0 0.0
    %327 = vmatprep.subr.mxu0 0.0
    %328 = vmatpush1.msra.mxu0 0.0
    %329 = vmatprep.subr.mxu0 0.0
    %330 = vmatpush1.msra.mxu0 0.0
    %331 = vmatprep.subr.mxu0 0.0
    %332 = vmatpush1.msra.mxu0 0.0
    %333 = vmatprep.subr.mxu0 0.0
    %334 = vmatpush1.msra.mxu0 0.0
    %335 = vmatprep.subr.mxu0 0.0
    %336 = vmatpush1.msra.mxu0 0.0
    %337 = vmatprep.subr.mxu0 0.0
    %338 = vmatpush1.msra.mxu0 0.0
    %339 = vmatprep.subr.mxu0 0.0
    %340 = vmatpush1.msra.mxu0 0.0
    %341 = vmatprep.subr.mxu0 0.0
    %342 = vmatpush1.msra.mxu0 0.0
    %343 = vmatprep.subr.mxu0 0.0
    %344 = vmatpush1.msra.mxu0 0.0
    %345 = vmatprep.subr.mxu0 0.0
    %346 = vmatpush1.msra.mxu0 %v314
    %347 = vmatprep.subr.mxu0 0.0
    %348 = vmatpush2.msra.mxu0 0.0
    %349 = vmatprep.subr.mxu0 0.0
    %350 = vmatpush2.msra.mxu0 0.0
    %351 = vmatprep.subr.mxu0 0.0
    %352 = vmatpush2.msra.mxu0 0.0
    %353 = vmatprep.subr.mxu0 0.0
    %354 = vmatpush2.msra.mxu0 0.0
    %355 = vmatprep.subr.mxu0 0.0
    %356 = vmatpush2.msra.mxu0 0.0
    %357 = vmatprep.subr.mxu0 0.0
    %358 = vmatpush2.msra.mxu0 0.0
    %359 = vmatprep.subr.mxu0 0.0
    %360 = vmatpush2.msra.mxu0 0.0
    %361 = vmatprep.subr.mxu0 0.0
    %362 = vmatpush2.msra.mxu0 0.0
    %363 = vmatprep.subr.mxu0 0.0
    %364 = vmatpush2.msra.mxu0 0.0
    %365 = vmatprep.subr.mxu0 0.0
    %366 = vmatpush2.msra.mxu0 0.0
    %367 = vmatprep.subr.mxu0 0.0
    %368 = vmatpush2.msra.mxu0 0.0
    %369 = vmatprep.subr.mxu0 0.0
    %370 = vmatpush2.msra.mxu0 0.0
    %371 = vmatprep.subr.mxu0 0.0
    %372 = vmatpush2.msra.mxu0 0.0
    %373 = vmatprep.subr.mxu0 0.0
    %374 = vmatpush2.msra.mxu0 0.0
    %375 = vmatprep.subr.mxu0 0.0
    %376 = vmatpush2.msra.mxu0 0.0
    %377 = vmatprep.subr.mxu0 0.0
    %378 = vmatpush2.msra.mxu0 0.0
    %379 = vmatprep.mubr.f32.mxu0 0.0
    %380 = vmatmul.mubr.f32.gmra.mxu0 %v101
    %v381 = vpop.f32.mrf.mxu0
    %v382 = vadd.f32 0.0, %v381
    %v383 = vpop.f32.mrf.mxu0
    %384 = vmatprep.mubr.f32.mxu0 0.0
    %385 = vmatmul.mubr.f32.gmra.mxu0 %v104
    %v386 = vpop.f32.mrf.mxu0
    %v387 = vadd.f32 0.0, %v386
    %v388 = vpop.f32.mrf.mxu0
    %389 = vmatprep.mubr.f32.mxu0 0.0
    %390 = vmatmul.mubr.f32.gmra.mxu0 %v107
    %v391 = vpop.f32.mrf.mxu0
    %v392 = vadd.f32 0.0, %v391
    %v393 = vpop.f32.mrf.mxu0
    %394 = vdwg.mxu0
    %v395 = vrot.slane %v51, 4
    %v396 = vadd.f32 %v51, %v395
    %v397 = vrot.slane %v396, 2
    %v398 = vadd.f32 %v396, %v397
    %v399 = vrot.slane %v398, 1
    %v400 = vadd.f32 %v398, %v399
    %v401 = vmul.f32 %v400, %v71
    %v402 = vmul.f32 %v51, %v51
    %v403 = vrot.slane %v402, 4
    %v404 = vadd.f32 %v402, %v403
    %v405 = vrot.slane %v404, 2
    %v406 = vadd.f32 %v404, %v405
    %v407 = vrot.slane %v406, 1
    %v408 = vadd.f32 %v406, %v407
    %v409 = vmul.f32 %v408, %v71
    %v410 = vmul.f32 %v401, %v401
    %v411 = vsub.f32 %v409, %v410
    %v412 = vsub.f32 %v51, %v401
    %v413 = vadd.f32 %v411, 1e-05
    %v414 = vrsqrt.pop %v413
    %v415 = vmul.f32 %v412, %v414
    %v416 = vmul.f32 %v415, %v90
    %v417 = vadd.f32 %v416, %v96
    %418 = vmatprep.subr.mxu0 0.0
    %419 = vmatpush1.msra.mxu0 0.0
    %420 = vmatprep.subr.mxu0 0.0
    %421 = vmatpush1.msra.mxu0 0.0
    %422 = vmatprep.subr.mxu0 0.0
    %423 = vmatpush1.msra.mxu0 0.0
    %424 = vmatprep.subr.mxu0 0.0
    %425 = vmatpush1.msra.mxu0 0.0
    %426 = vmatprep.subr.mxu0 0.0
    %427 = vmatpush1.msra.mxu0 0.0
    %428 = vmatprep.subr.mxu0 0.0
    %429 = vmatpush1.msra.mxu0 0.0
    %430 = vmatprep.subr.mxu0 0.0
    %431 = vmatpush1.msra.mxu0 0.0
    %432 = vmatprep.subr.mxu0 0.0
    %433 = vmatpush1.msra.mxu0 0.0
    %434 = vmatprep.subr.mxu0 0.0
    %435 = vmatpush1.msra.mxu0 0.0
    %436 = vmatprep.subr.mxu0 0.0
    %437 = vmatpush1.msra.mxu0 0.0
    %438 = vmatprep.subr.mxu0 0.0
    %439 = vmatpush1.msra.mxu0 0.0
    %440 = vmatprep.subr.mxu0 0.0
    %441 = vmatpush1.msra.mxu0 0.0
    %442 = vmatprep.subr.mxu0 0.0
    %443 = vmatpush1.msra.mxu0 0.0
    %444 = vmatprep.subr.mxu0 0.0
    %445 = vmatpush1.msra.mxu0 0.0
    %446 = vmatprep.subr.mxu0 0.0
    %447 = vmatpush1.msra.mxu0 0.0
    %448 = vmatprep.subr.mxu0 0.0
    %449 = vmatpush1.msra.mxu0 %v417
    %450 = vmatprep.subr.mxu0 0.0
    %451 = vmatpush2.msra.mxu0 0.0
    %452 = vmatprep.subr.mxu0 0.0
    %453 = vmatpush2.msra.mxu0 0.0
    %454 = vmatprep.subr.mxu0 0.0
    %455 = vmatpush2.msra.mxu0 0.0
    %456 = vmatprep.subr.mxu0 0.0
    %457 = vmatpush2.msra.mxu0 0.0
    %458 = vmatprep.subr.mxu0 0.0
    %459 = vmatpush2.msra.mxu0 0.0
    %460 = vmatprep.subr.mxu0 0.0
    %461 = vmatpush2.msra.mxu0 0.0
    %462 = vmatprep.subr.mxu0 0.0
    %463 = vmatpush2.msra.mxu0 0.0
    %464 = vmatprep.subr.mxu0 0.0
    %465 = vmatpush2.msra.mxu0 0.0
    %466 = vmatprep.subr.mxu0 0.0
    %467 = vmatpush2.msra.mxu0 0.0
    %468 = vmatprep.subr.mxu0 0.0
    %469 = vmatpush2.msra.mxu0 0.0
    %470 = vmatprep.subr.mxu0 0.0
    %471 = vmatpush2.msra.mxu0 0.0
    %472 = vmatprep.subr.mxu0 0.0
    %473 = vmatpush2.msra.mxu0 0.0
    %474 = vmatprep.subr.mxu0 0.0
    %475 = vmatpush2.msra.mxu0 0.0
    %476 = vmatprep.subr.mxu0 0.0
    %477 = vmatpush2.msra.mxu0 0.0
    %478 = vmatprep.subr.mxu0 0.0
    %479 = vmatpush2.msra.mxu0 0.0
    %480 = vmatprep.subr.mxu0 0.0
    %481 = vmatpush2.msra.mxu0 0.0
    %482 = vmatprep.mubr.f32.mxu0 0.0
    %483 = vmatmul.mubr.f32.gmra.mxu0 %v101
    %v484 = vpop.f32.mrf.mxu0
    %v485 = vadd.f32 0.0, %v484
    %v486 = vpop.f32.mrf.mxu0
    %487 = vmatprep.mubr.f32.mxu0 0.0
    %488 = vmatmul.mubr.f32.gmra.mxu0 %v104
    %v489 = vpop.f32.mrf.mxu0
    %v490 = vadd.f32 0.0, %v489
    %v491 = vpop.f32.mrf.mxu0
    %492 = vmatprep.mubr.f32.mxu0 0.0
    %493 = vmatmul.mubr.f32.gmra.mxu0 %v107
    %v494 = vpop.f32.mrf.mxu0
    %v495 = vadd.f32 0.0, %v494
    %v496 = vpop.f32.mrf.mxu0
    %497 = vdwg.mxu0
    %v498 = vrot.slane %v53, 4
    %v499 = vadd.f32 %v53, %v498
    %v500 = vrot.slane %v499, 2
    %v501 = vadd.f32 %v499, %v500
    %v502 = vrot.slane %v501, 1
    %v503 = vadd.f32 %v501, %v502
    %v504 = vmul.f32 %v503, %v71
    %v505 = vmul.f32 %v53, %v53
    %v506 = vrot.slane %v505, 4
    %v507 = vadd.f32 %v505, %v506
    %v508 = vrot.slane %v507, 2
    %v509 = vadd.f32 %v507, %v508
    %v510 = vrot.slane %v509, 1
    %v511 = vadd.f32 %v509, %v510
    %v512 = vmul.f32 %v511, %v71
    %v513 = vmul.f32 %v504, %v504
    %v514 = vsub.f32 %v512, %v513
    %v515 = vsub.f32 %v53, %v504
    %v516 = vadd.f32 %v514, 1e-05
    %v517 = vrsqrt.pop %v516
    %v518 = vmul.f32 %v515, %v517
    %v519 = vmul.f32 %v518, %v90
    %v520 = vadd.f32 %v519, %v96
    %521 = vmatprep.subr.mxu0 0.0
    %522 = vmatpush1.msra.mxu0 0.0
    %523 = vmatprep.subr.mxu0 0.0
    %524 = vmatpush1.msra.mxu0 0.0
    %525 = vmatprep.subr.mxu0 0.0
    %526 = vmatpush1.msra.mxu0 0.0
    %527 = vmatprep.subr.mxu0 0.0
    %528 = vmatpush1.msra.mxu0 0.0
    %529 = vmatprep.subr.mxu0 0.0
    %530 = vmatpush1.msra.mxu0 0.0
    %531 = vmatprep.subr.mxu0 0.0
    %532 = vmatpush1.msra.mxu0 0.0
    %533 = vmatprep.subr.mxu0 0.0
    %534 = vmatpush1.msra.mxu0 0.0
    %535 = vmatprep.subr.mxu0 0.0
    %536 = vmatpush1.msra.mxu0 0.0
    %537 = vmatprep.subr.mxu0 0.0
    %538 = vmatpush1.msra.mxu0 0.0
    %539 = vmatprep.subr.mxu0 0.0
    %540 = vmatpush1.msra.mxu0 0.0
    %541 = vmatprep.subr.mxu0 0.0
    %542 = vmatpush1.msra.mxu0 0.0
    %543 = vmatprep.subr.mxu0 0.0
    %544 = vmatpush1.msra.mxu0 0.0
    %545 = vmatprep.subr.mxu0 0.0
    %546 = vmatpush1.msra.mxu0 0.0
    %547 = vmatprep.subr.mxu0 0.0
    %548 = vmatpush1.msra.mxu0 0.0
    %549 = vmatprep.subr.mxu0 0.0
    %550 = vmatpush1.msra.mxu0 0.0
    %551 = vmatprep.subr.mxu0 0.0
    %552 = vmatpush1.msra.mxu0 %v520
    %553 = vmatprep.subr.mxu0 0.0
    %554 = vmatpush2.msra.mxu0 0.0
    %555 = vmatprep.subr.mxu0 0.0
    %556 = vmatpush2.msra.mxu0 0.0
    %557 = vmatprep.subr.mxu0 0.0
    %558 = vmatpush2.msra.mxu0 0.0
    %559 = vmatprep.subr.mxu0 0.0
    %560 = vmatpush2.msra.mxu0 0.0
    %561 = vmatprep.subr.mxu0 0.0
    %562 = vmatpush2.msra.mxu0 0.0
    %563 = vmatprep.subr.mxu0 0.0
    %564 = vmatpush2.msra.mxu0 0.0
    %565 = vmatprep.subr.mxu0 0.0
    %566 = vmatpush2.msra.mxu0 0.0
    %567 = vmatprep.subr.mxu0 0.0
    %568 = vmatpush2.msra.mxu0 0.0
    %569 = vmatprep.subr.mxu0 0.0
    %570 = vmatpush2.msra.mxu0 0.0
    %571 = vmatprep.subr.mxu0 0.0
    %572 = vmatpush2.msra.mxu0 0.0
    %573 = vmatprep.subr.mxu0 0.0
    %574 = vmatpush2.msra.mxu0 0.0
    %575 = vmatprep.subr.mxu0 0.0
    %576 = vmatpush2.msra.mxu0 0.0
    %577 = vmatprep.subr.mxu0 0.0
    %578 = vmatpush2.msra.mxu0 0.0
    %579 = vmatprep.subr.mxu0 0.0
    %580 = vmatpush2.msra.mxu0 0.0
    %581 = vmatprep.subr.mxu0 0.0
    %582 = vmatpush2.msra.mxu0 0.0
    %583 = vmatprep.subr.mxu0 0.0
    %584 = vmatpush2.msra.mxu0 0.0
    %585 = vmatprep.mubr.f32.mxu0 0.0
    %586 = vmatmul.mubr.f32.gmra.mxu0 %v101
    %v587 = vpop.f32.mrf.mxu0
    %v588 = vadd.f32 0.0, %v587
    %v589 = vpop.f32.mrf.mxu0
    %590 = vmatprep.mubr.f32.mxu0 0.0
    %591 = vmatmul.mubr.f32.gmra.mxu0 %v104
    %v592 = vpop.f32.mrf.mxu0
    %v593 = vadd.f32 0.0, %v592
    %v594 = vpop.f32.mrf.mxu0
    %595 = vmatprep.mubr.f32.mxu0 0.0
    %596 = vmatmul.mubr.f32.gmra.mxu0 %v107
    %v597 = vpop.f32.mrf.mxu0
    %v598 = vadd.f32 0.0, %v597
    %v599 = vpop.f32.mrf.mxu0
    %600 = vdwg.mxu0
    %v601 = vrot.slane %v55, 4
    %v602 = vadd.f32 %v55, %v601
    %v603 = vrot.slane %v602, 2
    %v604 = vadd.f32 %v602, %v603
    %v605 = vrot.slane %v604, 1
    %v606 = vadd.f32 %v604, %v605
    %v607 = vmul.f32 %v606, %v71
    %v608 = vmul.f32 %v55, %v55
    %v609 = vrot.slane %v608, 4
    %v610 = vadd.f32 %v608, %v609
    %v611 = vrot.slane %v610, 2
    %v612 = vadd.f32 %v610, %v611
    %v613 = vrot.slane %v612, 1
    %v614 = vadd.f32 %v612, %v613
    %v615 = vmul.f32 %v614, %v71
    %v616 = vmul.f32 %v607, %v607
    %v617 = vsub.f32 %v615, %v616
    %v618 = vsub.f32 %v55, %v607
    %v619 = vadd.f32 %v617, 1e-05
    %v620 = vrsqrt.pop %v619
    %v621 = vmul.f32 %v618, %v620
    %v622 = vmul.f32 %v621, %v90
    %v623 = vadd.f32 %v622, %v96
    %624 = vmatprep.subr.mxu0 0.0
    %625 = vmatpush1.msra.mxu0 0.0
    %626 = vmatprep.subr.mxu0 0.0
    %627 = vmatpush1.msra.mxu0 0.0
    %628 = vmatprep.subr.mxu0 0.0
    %629 = vmatpush1.msra.mxu0 0.0
    %630 = vmatprep.subr.mxu0 0.0
    %631 = vmatpush1.msra.mxu0 0.0
    %632 = vmatprep.subr.mxu0 0.0
    %633 = vmatpush1.msra.mxu0 0.0
    %634 = vmatprep.subr.mxu0 0.0
    %635 = vmatpush1.msra.mxu0 0.0
    %636 = vmatprep.subr.mxu0 0.0
    %637 = vmatpush1.msra.mxu0 0.0
    %638 = vmatprep.subr.mxu0 0.0
    %639 = vmatpush1.msra.mxu0 0.0
    %640 = vmatprep.subr.mxu0 0.0
    %641 = vmatpush1.msra.mxu0 0.0
    %642 = vmatprep.subr.mxu0 0.0
    %643 = vmatpush1.msra.mxu0 0.0
    %644 = vmatprep.subr.mxu0 0.0
    %645 = vmatpush1.msra.mxu0 0.0
    %646 = vmatprep.subr.mxu0 0.0
    %647 = vmatpush1.msra.mxu0 0.0
    %648 = vmatprep.subr.mxu0 0.0
    %649 = vmatpush1.msra.mxu0 0.0
    %650 = vmatprep.subr.mxu0 0.0
    %651 = vmatpush1.msra.mxu0 0.0
    %652 = vmatprep.subr.mxu0 0.0
    %653 = vmatpush1.msra.mxu0 0.0
    %654 = vmatprep.subr.mxu0 0.0
    %655 = vmatpush1.msra.mxu0 %v623
    %656 = vmatprep.subr.mxu0 0.0
    %657 = vmatpush2.msra.mxu0 0.0
    %658 = vmatprep.subr.mxu0 0.0
    %659 = vmatpush2.msra.mxu0 0.0
    %660 = vmatprep.subr.mxu0 0.0
    %661 = vmatpush2.msra.mxu0 0.0
    %662 = vmatprep.subr.mxu0 0.0
    %663 = vmatpush2.msra.mxu0 0.0
    %664 = vmatprep.subr.mxu0 0.0
    %665 = vmatpush2.msra.mxu0 0.0
    %666 = vmatprep.subr.mxu0 0.0
    %667 = vmatpush2.msra.mxu0 0.0
    %668 = vmatprep.subr.mxu0 0.0
    %669 = vmatpush2.msra.mxu0 0.0
    %670 = vmatprep.subr.mxu0 0.0
    %671 = vmatpush2.msra.mxu0 0.0
    %672 = vmatprep.subr.mxu0 0.0
    %673 = vmatpush2.msra.mxu0 0.0
    %674 = vmatprep.subr.mxu0 0.0
    %675 = vmatpush2.msra.mxu0 0.0
    %676 = vmatprep.subr.mxu0 0.0
    %677 = vmatpush2.msra.mxu0 0.0
    %678 = vmatprep.subr.mxu0 0.0
    %679 = vmatpush2.msra.mxu0 0.0
    %680 = vmatprep.subr.mxu0 0.0
    %681 = vmatpush2.msra.mxu0 0.0
    %682 = vmatprep.subr.mxu0 0.0
    %683 = vmatpush2.msra.mxu0 0.0
    %684 = vmatprep.subr.mxu0 0.0
    %685 = vmatpush2.msra.mxu0 0.0
    %686 = vmatprep.subr.mxu0 0.0
    %687 = vmatpush2.msra.mxu0 0.0
    %688 = vmatprep.mubr.f32.mxu0 0.0
    %689 = vmatmul.mubr.f32.gmra.mxu0 %v101
    %v690 = vpop.f32.mrf.mxu0
    %v691 = vadd.f32 0.0, %v690
    %v692 = vpop.f32.mrf.mxu0
    %693 = vmatprep.mubr.f32.mxu0 0.0
    %694 = vmatmul.mubr.f32.gmra.mxu0 %v104
    %v695 = vpop.f32.mrf.mxu0
    %v696 = vadd.f32 0.0, %v695
    %v697 = vpop.f32.mrf.mxu0
    %698 = vmatprep.mubr.f32.mxu0 0.0
    %699 = vmatmul.mubr.f32.gmra.mxu0 %v107
    %v700 = vpop.f32.mrf.mxu0
    %v701 = vadd.f32 0.0, %v700
    %v702 = vpop.f32.mrf.mxu0
    %703 = vdwg.mxu0
    %v704 = vrot.slane %v57, 4
    %v705 = vadd.f32 %v57, %v704
    %v706 = vrot.slane %v705, 2
    %v707 = vadd.f32 %v705, %v706
    %v708 = vrot.slane %v707, 1
    %v709 = vadd.f32 %v707, %v708
    %v710 = vmul.f32 %v709, %v71
    %v711 = vmul.f32 %v57, %v57
    %v712 = vrot.slane %v711, 4
    %v713 = vadd.f32 %v711, %v712
    %v714 = vrot.slane %v713, 2
    %v715 = vadd.f32 %v713, %v714
    %v716 = vrot.slane %v715, 1
    %v717 = vadd.f32 %v715, %v716
    %v718 = vmul.f32 %v717, %v71
    %v719 = vmul.f32 %v710, %v710
    %v720 = vsub.f32 %v718, %v719
    %v721 = vsub.f32 %v57, %v710
    %v722 = vadd.f32 %v720, 1e-05
    %v723 = vrsqrt.pop %v722
    %v724 = vmul.f32 %v721, %v723
    %v725 = vmul.f32 %v724, %v90
    %v726 = vadd.f32 %v725, %v96
    %727 = vmatprep.subr.mxu0 0.0
    %728 = vmatpush1.msra.mxu0 0.0
    %729 = vmatprep.subr.mxu0 0.0
    %730 = vmatpush1.msra.mxu0 0.0
    %731 = vmatprep.subr.mxu0 0.0
    %732 = vmatpush1.msra.mxu0 0.0
    %733 = vmatprep.subr.mxu0 0.0
    %734 = vmatpush1.msra.mxu0 0.0
    %735 = vmatprep.subr.mxu0 0.0
    %736 = vmatpush1.msra.mxu0 0.0
    %737 = vmatprep.subr.mxu0 0.0
    %738 = vmatpush1.msra.mxu0 0.0
    %739 = vmatprep.subr.mxu0 0.0
    %740 = vmatpush1.msra.mxu0 0.0
    %741 = vmatprep.subr.mxu0 0.0
    %742 = vmatpush1.msra.mxu0 0.0
    %743 = vmatprep.subr.mxu0 0.0
    %744 = vmatpush1.msra.mxu0 0.0
    %745 = vmatprep.subr.mxu0 0.0
    %746 = vmatpush1.msra.mxu0 0.0
    %747 = vmatprep.subr.mxu0 0.0
    %748 = vmatpush1.msra.mxu0 0.0
    %749 = vmatprep.subr.mxu0 0.0
    %750 = vmatpush1.msra.mxu0 0.0
    %751 = vmatprep.subr.mxu0 0.0
    %752 = vmatpush1.msra.mxu0 0.0
    %753 = vmatprep.subr.mxu0 0.0
    %754 = vmatpush1.msra.mxu0 0.0
    %755 = vmatprep.subr.mxu0 0.0
    %756 = vmatpush1.msra.mxu0 0.0
    %757 = vmatprep.subr.mxu0 0.0
    %758 = vmatpush1.msra.mxu0 %v726
    %759 = vmatprep.subr.mxu0 0.0
    %760 = vmatpush2.msra.mxu0 0.0
    %761 = vmatprep.subr.mxu0 0.0
    %762 = vmatpush2.msra.mxu0 0.0
    %763 = vmatprep.subr.mxu0 0.0
    %764 = vmatpush2.msra.mxu0 0.0
    %765 = vmatprep.subr.mxu0 0.0
    %766 = vmatpush2.msra.mxu0 0.0
    %767 = vmatprep.subr.mxu0 0.0
    %768 = vmatpush2.msra.mxu0 0.0
    %769 = vmatprep.subr.mxu0 0.0
    %770 = vmatpush2.msra.mxu0 0.0
    %771 = vmatprep.subr.mxu0 0.0
    %772 = vmatpush2.msra.mxu0 0.0
    %773 = vmatprep.subr.mxu0 0.0
    %774 = vmatpush2.msra.mxu0 0.0
    %775 = vmatprep.subr.mxu0 0.0
    %776 = vmatpush2.msra.mxu0 0.0
    %777 = vmatprep.subr.mxu0 0.0
    %778 = vmatpush2.msra.mxu0 0.0
    %779 = vmatprep.subr.mxu0 0.0
    %780 = vmatpush2.msra.mxu0 0.0
    %781 = vmatprep.subr.mxu0 0.0
    %782 = vmatpush2.msra.mxu0 0.0
    %783 = vmatprep.subr.mxu0 0.0
    %784 = vmatpush2.msra.mxu0 0.0
    %785 = vmatprep.subr.mxu0 0.0
    %786 = vmatpush2.msra.mxu0 0.0
    %787 = vmatprep.subr.mxu0 0.0
    %788 = vmatpush2.msra.mxu0 0.0
    %789 = vmatprep.subr.mxu0 0.0
    %790 = vmatpush2.msra.mxu0 0.0
    %791 = vmatprep.mubr.f32.mxu0 0.0
    %792 = vmatmul.mubr.f32.gmra.mxu0 %v101
    %v793 = vpop.f32.mrf.mxu0
    %v794 = vadd.f32 0.0, %v793
    %v795 = vpop.f32.mrf.mxu0
    %796 = vmatprep.mubr.f32.mxu0 0.0
    %797 = vmatmul.mubr.f32.gmra.mxu0 %v104
    %v798 = vpop.f32.mrf.mxu0
    %v799 = vadd.f32 0.0, %v798
    %v800 = vpop.f32.mrf.mxu0
    %801 = vmatprep.mubr.f32.mxu0 0.0
    %802 = vmatmul.mubr.f32.gmra.mxu0 %v107
    %v803 = vpop.f32.mrf.mxu0
    %v804 = vadd.f32 0.0, %v803
    %v805 = vpop.f32.mrf.mxu0
    %806 = vdwg.mxu0
    %v807 = vrot.slane %v59, 4
    %v808 = vadd.f32 %v59, %v807
    %v809 = vrot.slane %v808, 2
    %v810 = vadd.f32 %v808, %v809
    %v811 = vrot.slane %v810, 1
    %v812 = vadd.f32 %v810, %v811
    %v813 = vmul.f32 %v812, %v71
    %v814 = vmul.f32 %v59, %v59
    %v815 = vrot.slane %v814, 4
    %v816 = vadd.f32 %v814, %v815
    %v817 = vrot.slane %v816, 2
    %v818 = vadd.f32 %v816, %v817
    %v819 = vrot.slane %v818, 1
    %v820 = vadd.f32 %v818, %v819
    %v821 = vmul.f32 %v820, %v71
    %v822 = vmul.f32 %v813, %v813
    %v823 = vsub.f32 %v821, %v822
    %v824 = vsub.f32 %v59, %v813
    %v825 = vadd.f32 %v823, 1e-05
    %v826 = vrsqrt.pop %v825
    %v827 = vmul.f32 %v824, %v826
    %v828 = vmul.f32 %v827, %v90
    %v829 = vadd.f32 %v828, %v96
    %830 = vmatprep.subr.mxu0 0.0
    %831 = vmatpush1.msra.mxu0 0.0
    %832 = vmatprep.subr.mxu0 0.0
    %833 = vmatpush1.msra.mxu0 0.0
    %834 = vmatprep.subr.mxu0 0.0
    %835 = vmatpush1.msra.mxu0 0.0
    %836 = vmatprep.subr.mxu0 0.0
    %837 = vmatpush1.msra.mxu0 0.0
    %838 = vmatprep.subr.mxu0 0.0
    %839 = vmatpush1.msra.mxu0 0.0
    %840 = vmatprep.subr.mxu0 0.0
    %841 = vmatpush1.msra.mxu0 0.0
    %842 = vmatprep.subr.mxu0 0.0
    %843 = vmatpush1.msra.mxu0 0.0
    %844 = vmatprep.subr.mxu0 0.0
    %845 = vmatpush1.msra.mxu0 0.0
    %846 = vmatprep.subr.mxu0 0.0
    %847 = vmatpush1.msra.mxu0 0.0
    %848 = vmatprep.subr.mxu0 0.0
    %849 = vmatpush1.msra.mxu0 0.0
    %850 = vmatprep.subr.mxu0 0.0
    %851 = vmatpush1.msra.mxu0 0.0
    %852 = vmatprep.subr.mxu0 0.0
    %853 = vmatpush1.msra.mxu0 0.0
    %854 = vmatprep.subr.mxu0 0.0
    %855 = vmatpush1.msra.mxu0 0.0
    %856 = vmatprep.subr.mxu0 0.0
    %857 = vmatpush1.msra.mxu0 0.0
    %858 = vmatprep.subr.mxu0 0.0
    %859 = vmatpush1.msra.mxu0 0.0
    %860 = vmatprep.subr.mxu0 0.0
    %861 = vmatpush1.msra.mxu0 %v829
    %862 = vmatprep.subr.mxu0 0.0
    %863 = vmatpush2.msra.mxu0 0.0
    %864 = vmatprep.subr.mxu0 0.0
    %865 = vmatpush2.msra.mxu0 0.0
    %866 = vmatprep.subr.mxu0 0.0
    %867 = vmatpush2.msra.mxu0 0.0
    %868 = vmatprep.subr.mxu0 0.0
    %869 = vmatpush2.msra.mxu0 0.0
    %870 = vmatprep.subr.mxu0 0.0
    %871 = vmatpush2.msra.mxu0 0.0
    %872 = vmatprep.subr.mxu0 0.0
    %873 = vmatpush2.msra.mxu0 0.0
    %874 = vmatprep.subr.mxu0 0.0
    %875 = vmatpush2.msra.mxu0 0.0
    %876 = vmatprep.subr.mxu0 0.0
    %877 = vmatpush2.msra.mxu0 0.0
    %878 = vmatprep.subr.mxu0 0.0
    %879 = vmatpush2.msra.mxu0 0.0
    %880 = vmatprep.subr.mxu0 0.0
    %881 = vmatpush2.msra.mxu0 0.0
    %882 = vmatprep.subr.mxu0 0.0
    %883 = vmatpush2.msra.mxu0 0.0
    %884 = vmatprep.subr.mxu0 0.0
    %885 = vmatpush2.msra.mxu0 0.0
    %886 = vmatprep.subr.mxu0 0.0
    %887 = vmatpush2.msra.mxu0 0.0
    %888 = vmatprep.subr.mxu0 0.0
    %889 = vmatpush2.msra.mxu0 0.0
    %890 = vmatprep.subr.mxu0 0.0
    %891 = vmatpush2.msra.mxu0 0.0
    %892 = vmatprep.subr.mxu0 0.0
    %893 = vmatpush2.msra.mxu0 0.0
    %894 = vmatprep.mubr.f32.mxu0 0.0
    %895 = vmatmul.mubr.f32.gmra.mxu0 %v101
    %v896 = vpop.f32.mrf.mxu0
    %v897 = vadd.f32 0.0, %v896
    %v898 = vpop.f32.mrf.mxu0
    %899 = vmatprep.mubr.f32.mxu0 0.0
    %900 = vmatmul.mubr.f32.gmra.mxu0 %v104
    %v901 = vpop.f32.mrf.mxu0
    %v902 = vadd.f32 0.0, %v901
    %v903 = vpop.f32.mrf.mxu0
    %904 = vmatprep.mubr.f32.mxu0 0.0
    %905 = vmatmul.mubr.f32.gmra.mxu0 %v107
    %v906 = vpop.f32.mrf.mxu0
    %v907 = vadd.f32 0.0, %v906
    %v908 = vpop.f32.mrf.mxu0
    %909 = vdwg.mxu0
    %v910 = vld [vmem:[%s2] sm:$0xff]
    %v911 = vmul.f32 %v176, %v181
    %v912 = vmul.f32 %v176, %v284
    %v913 = vmax.f32 %v911, %v912
    %v914 = vmul.f32 %v176, %v387
    %v915 = vmax.f32 %v913, %v914
    %v916 = vmul.f32 %v176, %v490
    %v917 = vmax.f32 %v915, %v916
    %v918 = vmul.f32 %v176, %v593
    %v919 = vmax.f32 %v917, %v918
    %v920 = vmul.f32 %v176, %v696
    %v921 = vmax.f32 %v919, %v920
    %v922 = vmul.f32 %v176, %v799
    %v923 = vmax.f32 %v921, %v922
    %v924 = vmul.f32 %v176, %v902
    %v925 = vmax.f32 %v923, %v924
    %v926 = vsub.f32 %v911, %v925
    %v927 = vmul.f32 %v926, 1.442695
    %v928 = vpow.pop %v927
    %v929 = vadd.f32 %v928, 0.0
    %v930 = vmul.f32 %v928, %v186
    %v931 = vadd.f32 %v930, 0.0
    %v932 = vsub.f32 %v912, %v925
    %v933 = vmul.f32 %v932, 1.442695
    %v934 = vpow.pop %v933
    %v935 = vadd.f32 %v929, %v934
    %v936 = vmul.f32 %v934, %v289
    %v937 = vadd.f32 %v931, %v936
    %v938 = vsub.f32 %v914, %v925
    %v939 = vmul.f32 %v938, 1.442695
    %v940 = vpow.pop %v939
    %v941 = vadd.f32 %v935, %v940
    %v942 = vmul.f32 %v940, %v392
    %v943 = vadd.f32 %v937, %v942
    %v944 = vsub.f32 %v916, %v925
    %v945 = vmul.f32 %v944, 1.442695
    %v946 = vpow.pop %v945
    %v947 = vadd.f32 %v941, %v946
    %v948 = vmul.f32 %v946, %v495
    %v949 = vadd.f32 %v943, %v948
    %v950 = vsub.f32 %v918, %v925
    %v951 = vmul.f32 %v950, 1.442695
    %v952 = vpow.pop %v951
    %v953 = vadd.f32 %v947, %v952
    %v954 = vmul.f32 %v952, %v598
    %v955 = vadd.f32 %v949, %v954
    %v956 = vsub.f32 %v920, %v925
    %v957 = vmul.f32 %v956, 1.442695
    %v958 = vpow.pop %v957
    %v959 = vadd.f32 %v953, %v958
    %v960 = vmul.f32 %v958, %v701
    %v961 = vadd.f32 %v955, %v960
    %v962 = vsub.f32 %v922, %v925
    %v963 = vmul.f32 %v962, 1.442695
    %v964 = vpow.pop %v963
    %v965 = vadd.f32 %v959, %v964
    %v966 = vmul.f32 %v964, %v804
    %v967 = vadd.f32 %v961, %v966
    %v968 = vsub.f32 %v924, %v925
    %v969 = vmul.f32 %v968, 1.442695
    %v970 = vpow.pop %v969
    %v971 = vadd.f32 %v965, %v970
    %v972 = vmul.f32 %v970, %v907
    %v973 = vadd.f32 %v967, %v972
    %v974 = vrcp.pop %v971
    %v975 = vmul.f32 %v973, %v974
    %v977 = vsel %vm99, %v910, 0
    %979 = vmatprep.subr.mxu0 0.0
    %980 = vmatpush1.msra.mxu0 0.0
    %981 = vmatprep.subr.mxu0 0.0
    %982 = vmatpush1.msra.mxu0 0.0
    %983 = vmatprep.subr.mxu0 0.0
    %984 = vmatpush1.msra.mxu0 0.0
    %985 = vmatprep.subr.mxu0 0.0
    %986 = vmatpush1.msra.mxu0 0.0
    %987 = vmatprep.subr.mxu0 0.0
    %988 = vmatpush1.msra.mxu0 0.0
    %989 = vmatprep.subr.mxu0 0.0
    %990 = vmatpush1.msra.mxu0 0.0
    %991 = vmatprep.subr.mxu0 0.0
    %992 = vmatpush1.msra.mxu0 0.0
    %993 = vmatprep.subr.mxu0 0.0
    %994 = vmatpush1.msra.mxu0 0.0
    %995 = vmatprep.subr.mxu0 0.0
    %996 = vmatpush1.msra.mxu0 0.0
    %997 = vmatprep.subr.mxu0 0.0
    %998 = vmatpush1.msra.mxu0 0.0
    %999 = vmatprep.subr.mxu0 0.0
    %1000 = vmatpush1.msra.mxu0 0.0
    %1001 = vmatprep.subr.mxu0 0.0
    %1002 = vmatpush1.msra.mxu0 0.0
    %1003 = vmatprep.subr.mxu0 0.0
    %1004 = vmatpush1.msra.mxu0 0.0
    %1005 = vmatprep.subr.mxu0 0.0
    %1006 = vmatpush1.msra.mxu0 0.0
    %1007 = vmatprep.subr.mxu0 0.0
    %1008 = vmatpush1.msra.mxu0 0.0
    %1009 = vmatprep.subr.mxu0 0.0
    %1010 = vmatpush1.msra.mxu0 %v975
    %1011 = vmatprep.subr.mxu0 0.0
    %1012 = vmatpush2.msra.mxu0 0.0
    %1013 = vmatprep.subr.mxu0 0.0
    %1014 = vmatpush2.msra.mxu0 0.0
    %1015 = vmatprep.subr.mxu0 0.0
    %1016 = vmatpush2.msra.mxu0 0.0
    %1017 = vmatprep.subr.mxu0 0.0
    %1018 = vmatpush2.msra.mxu0 0.0
    %1019 = vmatprep.subr.mxu0 0.0
    %1020 = vmatpush2.msra.mxu0 0.0
    %1021 = vmatprep.subr.mxu0 0.0
    %1022 = vmatpush2.msra.mxu0 0.0
    %1023 = vmatprep.subr.mxu0 0.0
    %1024 = vmatpush2.msra.mxu0 0.0
    %1025 = vmatprep.subr.mxu0 0.0
    %1026 = vmatpush2.msra.mxu0 0.0
    %1027 = vmatprep.subr.mxu0 0.0
    %1028 = vmatpush2.msra.mxu0 0.0
    %1029 = vmatprep.subr.mxu0 0.0
    %1030 = vmatpush2.msra.mxu0 0.0
    %1031 = vmatprep.subr.mxu0 0.0
    %1032 = vmatpush2.msra.mxu0 0.0
    %1033 = vmatprep.subr.mxu0 0.0
    %1034 = vmatpush2.msra.mxu0 0.0
    %1035 = vmatprep.subr.mxu0 0.0
    %1036 = vmatpush2.msra.mxu0 0.0
    %1037 = vmatprep.subr.mxu0 0.0
    %1038 = vmatpush2.msra.mxu0 0.0
    %1039 = vmatprep.subr.mxu0 0.0
    %1040 = vmatpush2.msra.mxu0 0.0
    %1041 = vmatprep.subr.mxu0 0.0
    %1042 = vmatpush2.msra.mxu0 0.0
    %1043 = vmatprep.mubr.f32.mxu0 0.0
    %1044 = vmatmul.mubr.f32.gmra.mxu0 %v977
    %v1045 = vpop.f32.mrf.mxu0
    %v1046 = vadd.f32 0.0, %v1045
    %v1047 = vpop.f32.mrf.mxu0
    %1048 = vdwg.mxu0
    %v1049 = vadd.f32 %v45, %v1046
    %v1050 = vmul.f32 %v279, %v181
    %v1051 = vmul.f32 %v279, %v284
    %v1052 = vmax.f32 %v1050, %v1051
    %v1053 = vmul.f32 %v279, %v387
    %v1054 = vmax.f32 %v1052, %v1053
    %v1055 = vmul.f32 %v279, %v490
    %v1056 = vmax.f32 %v1054, %v1055
    %v1057 = vmul.f32 %v279, %v593
    %v1058 = vmax.f32 %v1056, %v1057
    %v1059 = vmul.f32 %v279, %v696
    %v1060 = vmax.f32 %v1058, %v1059
    %v1061 = vmul.f32 %v279, %v799
    %v1062 = vmax.f32 %v1060, %v1061
    %v1063 = vmul.f32 %v279, %v902
    %v1064 = vmax.f32 %v1062, %v1063
    %v1065 = vsub.f32 %v1050, %v1064
    %v1066 = vmul.f32 %v1065, 1.442695
    %v1067 = vpow.pop %v1066
    %v1068 = vadd.f32 %v1067, 0.0
    %v1069 = vmul.f32 %v1067, %v186
    %v1070 = vadd.f32 %v1069, 0.0
    %v1071 = vsub.f32 %v1051, %v1064
    %v1072 = vmul.f32 %v1071, 1.442695
    %v1073 = vpow.pop %v1072
    %v1074 = vadd.f32 %v1068, %v1073
    %v1075 = vmul.f32 %v1073, %v289
    %v1076 = vadd.f32 %v1070, %v1075
    %v1077 = vsub.f32 %v1053, %v1064
    %v1078 = vmul.f32 %v1077, 1.442695
    %v1079 = vpow.pop %v1078
    %v1080 = vadd.f32 %v1074, %v1079
    %v1081 = vmul.f32 %v1079, %v392
    %v1082 = vadd.f32 %v1076, %v1081
    %v1083 = vsub.f32 %v1055, %v1064
    %v1084 = vmul.f32 %v1083, 1.442695
    %v1085 = vpow.pop %v1084
    %v1086 = vadd.f32 %v1080, %v1085
    %v1087 = vmul.f32 %v1085, %v495
    %v1088 = vadd.f32 %v1082, %v1087
    %v1089 = vsub.f32 %v1057, %v1064
    %v1090 = vmul.f32 %v1089, 1.442695
    %v1091 = vpow.pop %v1090
    %v1092 = vadd.f32 %v1086, %v1091
    %v1093 = vmul.f32 %v1091, %v598
    %v1094 = vadd.f32 %v1088, %v1093
    %v1095 = vsub.f32 %v1059, %v1064
    %v1096 = vmul.f32 %v1095, 1.442695
    %v1097 = vpow.pop %v1096
    %v1098 = vadd.f32 %v1092, %v1097
    %v1099 = vmul.f32 %v1097, %v701
    %v1100 = vadd.f32 %v1094, %v1099
    %v1101 = vsub.f32 %v1061, %v1064
    %v1102 = vmul.f32 %v1101, 1.442695
    %v1103 = vpow.pop %v1102
    %v1104 = vadd.f32 %v1098, %v1103
    %v1105 = vmul.f32 %v1103, %v804
    %v1106 = vadd.f32 %v1100, %v1105
    %v1107 = vsub.f32 %v1063, %v1064
    %v1108 = vmul.f32 %v1107, 1.442695
    %v1109 = vpow.pop %v1108
    %v1110 = vadd.f32 %v1104, %v1109
    %v1111 = vmul.f32 %v1109, %v907
    %v1112 = vadd.f32 %v1106, %v1111
    %v1113 = vrcp.pop %v1110
    %v1114 = vmul.f32 %v1112, %v1113
    %1115 = vmatprep.subr.mxu0 0.0
    %1116 = vmatpush1.msra.mxu0 0.0
    %1117 = vmatprep.subr.mxu0 0.0
    %1118 = vmatpush1.msra.mxu0 0.0
    %1119 = vmatprep.subr.mxu0 0.0
    %1120 = vmatpush1.msra.mxu0 0.0
    %1121 = vmatprep.subr.mxu0 0.0
    %1122 = vmatpush1.msra.mxu0 0.0
    %1123 = vmatprep.subr.mxu0 0.0
    %1124 = vmatpush1.msra.mxu0 0.0
    %1125 = vmatprep.subr.mxu0 0.0
    %1126 = vmatpush1.msra.mxu0 0.0
    %1127 = vmatprep.subr.mxu0 0.0
    %1128 = vmatpush1.msra.mxu0 0.0
    %1129 = vmatprep.subr.mxu0 0.0
    %1130 = vmatpush1.msra.mxu0 0.0
    %1131 = vmatprep.subr.mxu0 0.0
    %1132 = vmatpush1.msra.mxu0 0.0
    %1133 = vmatprep.subr.mxu0 0.0
    %1134 = vmatpush1.msra.mxu0 0.0
    %1135 = vmatprep.subr.mxu0 0.0
    %1136 = vmatpush1.msra.mxu0 0.0
    %1137 = vmatprep.subr.mxu0 0.0
    %1138 = vmatpush1.msra.mxu0 0.0
    %1139 = vmatprep.subr.mxu0 0.0
    %1140 = vmatpush1.msra.mxu0 0.0
    %1141 = vmatprep.subr.mxu0 0.0
    %1142 = vmatpush1.msra.mxu0 0.0
    %1143 = vmatprep.subr.mxu0 0.0
    %1144 = vmatpush1.msra.mxu0 0.0
    %1145 = vmatprep.subr.mxu0 0.0
    %1146 = vmatpush1.msra.mxu0 %v1114
    %1147 = vmatprep.subr.mxu0 0.0
    %1148 = vmatpush2.msra.mxu0 0.0
    %1149 = vmatprep.subr.mxu0 0.0
    %1150 = vmatpush2.msra.mxu0 0.0
    %1151 = vmatprep.subr.mxu0 0.0
    %1152 = vmatpush2.msra.mxu0 0.0
    %1153 = vmatprep.subr.mxu0 0.0
    %1154 = vmatpush2.msra.mxu0 0.0
    %1155 = vmatprep.subr.mxu0 0.0
    %1156 = vmatpush2.msra.mxu0 0.0
    %1157 = vmatprep.subr.mxu0 0.0
    %1158 = vmatpush2.msra.mxu0 0.0
    %1159 = vmatprep.subr.mxu0 0.0
    %1160 = vmatpush2.msra.mxu0 0.0
    %1161 = vmatprep.subr.mxu0 0.0
    %1162 = vmatpush2.msra.mxu0 0.0
    %1163 = vmatprep.subr.mxu0 0.0
    %1164 = vmatpush2.msra.mxu0 0.0
    %1165 = vmatprep.subr.mxu0 0.0
    %1166 = vmatpush2.msra.mxu0 0.0
    %1167 = vmatprep.subr.mxu0 0.0
    %1168 = vmatpush2.msra.mxu0 0.0
    %1169 = vmatprep.subr.mxu0 0.0
    %1170 = vmatpush2.msra.mxu0 0.0
    %1171 = vmatprep.subr.mxu0 0.0
    %1172 = vmatpush2.msra.mxu0 0.0
    %1173 = vmatprep.subr.mxu0 0.0
    %1174 = vmatpush2.msra.mxu0 0.0
    %1175 = vmatprep.subr.mxu0 0.0
    %1176 = vmatpush2.msra.mxu0 0.0
    %1177 = vmatprep.subr.mxu0 0.0
    %1178 = vmatpush2.msra.mxu0 0.0
    %1179 = vmatprep.mubr.f32.mxu0 0.0
    %1180 = vmatmul.mubr.f32.gmra.mxu0 %v977
    %v1181 = vpop.f32.mrf.mxu0
    %v1182 = vadd.f32 0.0, %v1181
    %v1183 = vpop.f32.mrf.mxu0
    %1184 = vdwg.mxu0
    %v1185 = vadd.f32 %v47, %v1182
    %v1186 = vmul.f32 %v382, %v181
    %v1187 = vmul.f32 %v382, %v284
    %v1188 = vmax.f32 %v1186, %v1187
    %v1189 = vmul.f32 %v382, %v387
    %v1190 = vmax.f32 %v1188, %v1189
    %v1191 = vmul.f32 %v382, %v490
    %v1192 = vmax.f32 %v1190, %v1191
    %v1193 = vmul.f32 %v382, %v593
    %v1194 = vmax.f32 %v1192, %v1193
    %v1195 = vmul.f32 %v382, %v696
    %v1196 = vmax.f32 %v1194, %v1195
    %v1197 = vmul.f32 %v382, %v799
    %v1198 = vmax.f32 %v1196, %v1197
    %v1199 = vmul.f32 %v382, %v902
    %v1200 = vmax.f32 %v1198, %v1199
    %v1201 = vsub.f32 %v1186, %v1200
    %v1202 = vmul.f32 %v1201, 1.442695
    %v1203 = vpow.pop %v1202
    %v1204 = vadd.f32 %v1203, 0.0
    %v1205 = vmul.f32 %v1203, %v186
    %v1206 = vadd.f32 %v1205, 0.0
    %v1207 = vsub.f32 %v1187, %v1200
    %v1208 = vmul.f32 %v1207, 1.442695
    %v1209 = vpow.pop %v1208
    %v1210 = vadd.f32 %v1204, %v1209
    %v1211 = vmul.f32 %v1209, %v289
    %v1212 = vadd.f32 %v1206, %v1211
    %v1213 = vsub.f32 %v1189, %v1200
    %v1214 = vmul.f32 %v1213, 1.442695
    %v1215 = vpow.pop %v1214
    %v1216 = vadd.f32 %v1210, %v1215
    %v1217 = vmul.f32 %v1215, %v392
    %v1218 = vadd.f32 %v1212, %v1217
    %v1219 = vsub.f32 %v1191, %v1200
    %v1220 = vmul.f32 %v1219, 1.442695
    %v1221 = vpow.pop %v1220
    %v1222 = vadd.f32 %v1216, %v1221
    %v1223 = vmul.f32 %v1221, %v495
    %v1224 = vadd.f32 %v1218, %v1223
    %v1225 = vsub.f32 %v1193, %v1200
    %v1226 = vmul.f32 %v1225, 1.442695
    %v1227 = vpow.pop %v1226
    %v1228 = vadd.f32 %v1222, %v1227
    %v1229 = vmul.f32 %v1227, %v598
    %v1230 = vadd.f32 %v1224, %v1229
    %v1231 = vsub.f32 %v1195, %v1200
    %v1232 = vmul.f32 %v1231, 1.442695
    %v1233 = vpow.pop %v1232
    %v1234 = vadd.f32 %v1228, %v1233
    %v1235 = vmul.f32 %v1233, %v701
    %v1236 = vadd.f32 %v1230, %v1235
    %v1237 = vsub.f32 %v1197, %v1200
    %v1238 = vmul.f32 %v1237, 1.442695
    %v1239 = vpow.pop %v1238
    %v1240 = vadd.f32 %v1234, %v1239
    %v1241 = vmul.f32 %v1239, %v804
    %v1242 = vadd.f32 %v1236, %v1241
    %v1243 = vsub.f32 %v1199, %v1200
    %v1244 = vmul.f32 %v1243, 1.442695
    %v1245 = vpow.pop %v1244
    %v1246 = vadd.f32 %v1240, %v1245
    %v1247 = vmul.f32 %v1245, %v907
    %v1248 = vadd.f32 %v1242, %v1247
    %v1249 = vrcp.pop %v1246
    %v1250 = vmul.f32 %v1248, %v1249
    %1251 = vmatprep.subr.mxu0 0.0
    %1252 = vmatpush1.msra.mxu0 0.0
    %1253 = vmatprep.subr.mxu0 0.0
    %1254 = vmatpush1.msra.mxu0 0.0
    %1255 = vmatprep.subr.mxu0 0.0
    %1256 = vmatpush1.msra.mxu0 0.0
    %1257 = vmatprep.subr.mxu0 0.0
    %1258 = vmatpush1.msra.mxu0 0.0
    %1259 = vmatprep.subr.mxu0 0.0
    %1260 = vmatpush1.msra.mxu0 0.0
    %1261 = vmatprep.subr.mxu0 0.0
    %1262 = vmatpush1.msra.mxu0 0.0
    %1263 = vmatprep.subr.mxu0 0.0
    %1264 = vmatpush1.msra.mxu0 0.0
    %1265 = vmatprep.subr.mxu0 0.0
    %1266 = vmatpush1.msra.mxu0 0.0
    %1267 = vmatprep.subr.mxu0 0.0
    %1268 = vmatpush1.msra.mxu0 0.0
    %1269 = vmatprep.subr.mxu0 0.0
    %1270 = vmatpush1.msra.mxu0 0.0
    %1271 = vmatprep.subr.mxu0 0.0
    %1272 = vmatpush1.msra.mxu0 0.0
    %1273 = vmatprep.subr.mxu0 0.0
    %1274 = vmatpush1.msra.mxu0 0.0
    %1275 = vmatprep.subr.mxu0 0.0
    %1276 = vmatpush1.msra.mxu0 0.0
    %1277 = vmatprep.subr.mxu0 0.0
    %1278 = vmatpush1.msra.mxu0 0.0
    %1279 = vmatprep.subr.mxu0 0.0
    %1280 = vmatpush1.msra.mxu0 0.0
    %1281 = vmatprep.subr.mxu0 0.0
    %1282 = vmatpush1.msra.mxu0 %v1250
    %1283 = vmatprep.subr.mxu0 0.0
    %1284 = vmatpush2.msra.mxu0 0.0
    %1285 = vmatprep.subr.mxu0 0.0
    %1286 = vmatpush2.msra.mxu0 0.0
    %1287 = vmatprep.subr.mxu0 0.0
    %1288 = vmatpush2.msra.mxu0 0.0
    %1289 = vmatprep.subr.mxu0 0.0
    %1290 = vmatpush2.msra.mxu0 0.0
    %1291 = vmatprep.subr.mxu0 0.0
    %1292 = vmatpush2.msra.mxu0 0.0
    %1293 = vmatprep.subr.mxu0 0.0
    %1294 = vmatpush2.msra.mxu0 0.0
    %1295 = vmatprep.subr.mxu0 0.0
    %1296 = vmatpush2.msra.mxu0 0.0
    %1297 = vmatprep.subr.mxu0 0.0
    %1298 = vmatpush2.msra.mxu0 0.0
    %1299 = vmatprep.subr.mxu0 0.0
    %1300 = vmatpush2.msra.mxu0 0.0
    %1301 = vmatprep.subr.mxu0 0.0
    %1302 = vmatpush2.msra.mxu0 0.0
    %1303 = vmatprep.subr.mxu0 0.0
    %1304 = vmatpush2.msra.mxu0 0.0
    %1305 = vmatprep.subr.mxu0 0.0
    %1306 = vmatpush2.msra.mxu0 0.0
    %1307 = vmatprep.subr.mxu0 0.0
    %1308 = vmatpush2.msra.mxu0 0.0
    %1309 = vmatprep.subr.mxu0 0.0
    %1310 = vmatpush2.msra.mxu0 0.0
    %1311 = vmatprep.subr.mxu0 0.0
    %1312 = vmatpush2.msra.mxu0 0.0
    %1313 = vmatprep.subr.mxu0 0.0
    %1314 = vmatpush2.msra.mxu0 0.0
    %1315 = vmatprep.mubr.f32.mxu0 0.0
    %1316 = vmatmul.mubr.f32.gmra.mxu0 %v977
    %v1317 = vpop.f32.mrf.mxu0
    %v1318 = vadd.f32 0.0, %v1317
    %v1319 = vpop.f32.mrf.mxu0
    %1320 = vdwg.mxu0
    %v1321 = vadd.f32 %v49, %v1318
    %v1322 = vmul.f32 %v485, %v181
    %v1323 = vmul.f32 %v485, %v284
    %v1324 = vmax.f32 %v1322, %v1323
    %v1325 = vmul.f32 %v485, %v387
    %v1326 = vmax.f32 %v1324, %v1325
    %v1327 = vmul.f32 %v485, %v490
    %v1328 = vmax.f32 %v1326, %v1327
    %v1329 = vmul.f32 %v485, %v593
    %v1330 = vmax.f32 %v1328, %v1329
    %v1331 = vmul.f32 %v485, %v696
    %v1332 = vmax.f32 %v1330, %v1331
    %v1333 = vmul.f32 %v485, %v799
    %v1334 = vmax.f32 %v1332, %v1333
    %v1335 = vmul.f32 %v485, %v902
    %v1336 = vmax.f32 %v1334, %v1335
    %v1337 = vsub.f32 %v1322, %v1336
    %v1338 = vmul.f32 %v1337, 1.442695
    %v1339 = vpow.pop %v1338
    %v1340 = vadd.f32 %v1339, 0.0
    %v1341 = vmul.f32 %v1339, %v186
    %v1342 = vadd.f32 %v1341, 0.0
    %v1343 = vsub.f32 %v1323, %v1336
    %v1344 = vmul.f32 %v1343, 1.442695
    %v1345 = vpow.pop %v1344
    %v1346 = vadd.f32 %v1340, %v1345
    %v1347 = vmul.f32 %v1345, %v289
    %v1348 = vadd.f32 %v1342, %v1347
    %v1349 = vsub.f32 %v1325, %v1336
    %v1350 = vmul.f32 %v1349, 1.442695
    %v1351 = vpow.pop %v1350
    %v1352 = vadd.f32 %v1346, %v1351
    %v1353 = vmul.f32 %v1351, %v392
    %v1354 = vadd.f32 %v1348, %v1353
    %v1355 = vsub.f32 %v1327, %v1336
    %v1356 = vmul.f32 %v1355, 1.442695
    %v1357 = vpow.pop %v1356
    %v1358 = vadd.f32 %v1352, %v1357
    %v1359 = vmul.f32 %v1357, %v495
    %v1360 = vadd.f32 %v1354, %v1359
    %v1361 = vsub.f32 %v1329, %v1336
    %v1362 = vmul.f32 %v1361, 1.442695
    %v1363 = vpow.pop %v1362
    %v1364 = vadd.f32 %v1358, %v1363
    %v1365 = vmul.f32 %v1363, %v598
    %v1366 = vadd.f32 %v1360, %v1365
    %v1367 = vsub.f32 %v1331, %v1336
    %v1368 = vmul.f32 %v1367, 1.442695
    %v1369 = vpow.pop %v1368
    %v1370 = vadd.f32 %v1364, %v1369
    %v1371 = vmul.f32 %v1369, %v701
    %v1372 = vadd.f32 %v1366, %v1371
    %v1373 = vsub.f32 %v1333, %v1336
    %v1374 = vmul.f32 %v1373, 1.442695
    %v1375 = vpow.pop %v1374
    %v1376 = vadd.f32 %v1370, %v1375
    %v1377 = vmul.f32 %v1375, %v804
    %v1378 = vadd.f32 %v1372, %v1377
    %v1379 = vsub.f32 %v1335, %v1336
    %v1380 = vmul.f32 %v1379, 1.442695
    %v1381 = vpow.pop %v1380
    %v1382 = vadd.f32 %v1376, %v1381
    %v1383 = vmul.f32 %v1381, %v907
    %v1384 = vadd.f32 %v1378, %v1383
    %v1385 = vrcp.pop %v1382
    %v1386 = vmul.f32 %v1384, %v1385
    %1387 = vmatprep.subr.mxu0 0.0
    %1388 = vmatpush1.msra.mxu0 0.0
    %1389 = vmatprep.subr.mxu0 0.0
    %1390 = vmatpush1.msra.mxu0 0.0
    %1391 = vmatprep.subr.mxu0 0.0
    %1392 = vmatpush1.msra.mxu0 0.0
    %1393 = vmatprep.subr.mxu0 0.0
    %1394 = vmatpush1.msra.mxu0 0.0
    %1395 = vmatprep.subr.mxu0 0.0
    %1396 = vmatpush1.msra.mxu0 0.0
    %1397 = vmatprep.subr.mxu0 0.0
    %1398 = vmatpush1.msra.mxu0 0.0
    %1399 = vmatprep.subr.mxu0 0.0
    %1400 = vmatpush1.msra.mxu0 0.0
    %1401 = vmatprep.subr.mxu0 0.0
    %1402 = vmatpush1.msra.mxu0 0.0
    %1403 = vmatprep.subr.mxu0 0.0
    %1404 = vmatpush1.msra.mxu0 0.0
    %1405 = vmatprep.subr.mxu0 0.0
    %1406 = vmatpush1.msra.mxu0 0.0
    %1407 = vmatprep.subr.mxu0 0.0
    %1408 = vmatpush1.msra.mxu0 0.0
    %1409 = vmatprep.subr.mxu0 0.0
    %1410 = vmatpush1.msra.mxu0 0.0
    %1411 = vmatprep.subr.mxu0 0.0
    %1412 = vmatpush1.msra.mxu0 0.0
    %1413 = vmatprep.subr.mxu0 0.0
    %1414 = vmatpush1.msra.mxu0 0.0
    %1415 = vmatprep.subr.mxu0 0.0
    %1416 = vmatpush1.msra.mxu0 0.0
    %1417 = vmatprep.subr.mxu0 0.0
    %1418 = vmatpush1.msra.mxu0 %v1386
    %1419 = vmatprep.subr.mxu0 0.0
    %1420 = vmatpush2.msra.mxu0 0.0
    %1421 = vmatprep.subr.mxu0 0.0
    %1422 = vmatpush2.msra.mxu0 0.0
    %1423 = vmatprep.subr.mxu0 0.0
    %1424 = vmatpush2.msra.mxu0 0.0
    %1425 = vmatprep.subr.mxu0 0.0
    %1426 = vmatpush2.msra.mxu0 0.0
    %1427 = vmatprep.subr.mxu0 0.0
    %1428 = vmatpush2.msra.mxu0 0.0
    %1429 = vmatprep.subr.mxu0 0.0
    %1430 = vmatpush2.msra.mxu0 0.0
    %1431 = vmatprep.subr.mxu0 0.0
    %1432 = vmatpush2.msra.mxu0 0.0
    %1433 = vmatprep.subr.mxu0 0.0
    %1434 = vmatpush2.msra.mxu0 0.0
    %1435 = vmatprep.subr.mxu0 0.0
    %1436 = vmatpush2.msra.mxu0 0.0
    %1437 = vmatprep.subr.mxu0 0.0
    %1438 = vmatpush2.msra.mxu0 0.0
    %1439 = vmatprep.subr.mxu0 0.0
    %1440 = vmatpush2.msra.mxu0 0.0
    %1441 = vmatprep.subr.mxu0 0.0
    %1442 = vmatpush2.msra.mxu0 0.0
    %1443 = vmatprep.subr.mxu0 0.0
    %1444 = vmatpush2.msra.mxu0 0.0
    %1445 = vmatprep.subr.mxu0 0.0
    %1446 = vmatpush2.msra.mxu0 0.0
    %1447 = vmatprep.subr.mxu0 0.0
    %1448 = vmatpush2.msra.mxu0 0.0
    %1449 = vmatprep.subr.mxu0 0.0
    %1450 = vmatpush2.msra.mxu0 0.0
    %1451 = vmatprep.mubr.f32.mxu0 0.0
    %1452 = vmatmul.mubr.f32.gmra.mxu0 %v977
    %v1453 = vpop.f32.mrf.mxu0
    %v1454 = vadd.f32 0.0, %v1453
    %v1455 = vpop.f32.mrf.mxu0
    %1456 = vdwg.mxu0
    %v1457 = vadd.f32 %v51, %v1454
    %v1458 = vmul.f32 %v588, %v181
    %v1459 = vmul.f32 %v588, %v284
    %v1460 = vmax.f32 %v1458, %v1459
    %v1461 = vmul.f32 %v588, %v387
    %v1462 = vmax.f32 %v1460, %v1461
    %v1463 = vmul.f32 %v588, %v490
    %v1464 = vmax.f32 %v1462, %v1463
    %v1465 = vmul.f32 %v588, %v593
    %v1466 = vmax.f32 %v1464, %v1465
    %v1467 = vmul.f32 %v588, %v696
    %v1468 = vmax.f32 %v1466, %v1467
    %v1469 = vmul.f32 %v588, %v799
    %v1470 = vmax.f32 %v1468, %v1469
    %v1471 = vmul.f32 %v588, %v902
    %v1472 = vmax.f32 %v1470, %v1471
    %v1473 = vsub.f32 %v1458, %v1472
    %v1474 = vmul.f32 %v1473, 1.442695
    %v1475 = vpow.pop %v1474
    %v1476 = vadd.f32 %v1475, 0.0
    %v1477 = vmul.f32 %v1475, %v186
    %v1478 = vadd.f32 %v1477, 0.0
    %v1479 = vsub.f32 %v1459, %v1472
    %v1480 = vmul.f32 %v1479, 1.442695
    %v1481 = vpow.pop %v1480
    %v1482 = vadd.f32 %v1476, %v1481
    %v1483 = vmul.f32 %v1481, %v289
    %v1484 = vadd.f32 %v1478, %v1483
    %v1485 = vsub.f32 %v1461, %v1472
    %v1486 = vmul.f32 %v1485, 1.442695
    %v1487 = vpow.pop %v1486
    %v1488 = vadd.f32 %v1482, %v1487
    %v1489 = vmul.f32 %v1487, %v392
    %v1490 = vadd.f32 %v1484, %v1489
    %v1491 = vsub.f32 %v1463, %v1472
    %v1492 = vmul.f32 %v1491, 1.442695
    %v1493 = vpow.pop %v1492
    %v1494 = vadd.f32 %v1488, %v1493
    %v1495 = vmul.f32 %v1493, %v495
    %v1496 = vadd.f32 %v1490, %v1495
    %v1497 = vsub.f32 %v1465, %v1472
    %v1498 = vmul.f32 %v1497, 1.442695
    %v1499 = vpow.pop %v1498
    %v1500 = vadd.f32 %v1494, %v1499
    %v1501 = vmul.f32 %v1499, %v598
    %v1502 = vadd.f32 %v1496, %v1501
    %v1503 = vsub.f32 %v1467, %v1472
    %v1504 = vmul.f32 %v1503, 1.442695
    %v1505 = vpow.pop %v1504
    %v1506 = vadd.f32 %v1500, %v1505
    %v1507 = vmul.f32 %v1505, %v701
    %v1508 = vadd.f32 %v1502, %v1507
    %v1509 = vsub.f32 %v1469, %v1472
    %v1510 = vmul.f32 %v1509, 1.442695
    %v1511 = vpow.pop %v1510
    %v1512 = vadd.f32 %v1506, %v1511
    %v1513 = vmul.f32 %v1511, %v804
    %v1514 = vadd.f32 %v1508, %v1513
    %v1515 = vsub.f32 %v1471, %v1472
    %v1516 = vmul.f32 %v1515, 1.442695
    %v1517 = vpow.pop %v1516
    %v1518 = vadd.f32 %v1512, %v1517
    %v1519 = vmul.f32 %v1517, %v907
    %v1520 = vadd.f32 %v1514, %v1519
    %v1521 = vrcp.pop %v1518
    %v1522 = vmul.f32 %v1520, %v1521
    %1523 = vmatprep.subr.mxu0 0.0
    %1524 = vmatpush1.msra.mxu0 0.0
    %1525 = vmatprep.subr.mxu0 0.0
    %1526 = vmatpush1.msra.mxu0 0.0
    %1527 = vmatprep.subr.mxu0 0.0
    %1528 = vmatpush1.msra.mxu0 0.0
    %1529 = vmatprep.subr.mxu0 0.0
    %1530 = vmatpush1.msra.mxu0 0.0
    %1531 = vmatprep.subr.mxu0 0.0
    %1532 = vmatpush1.msra.mxu0 0.0
    %1533 = vmatprep.subr.mxu0 0.0
    %1534 = vmatpush1.msra.mxu0 0.0
    %1535 = vmatprep.subr.mxu0 0.0
    %1536 = vmatpush1.msra.mxu0 0.0
    %1537 = vmatprep.subr.mxu0 0.0
    %1538 = vmatpush1.msra.mxu0 0.0
    %1539 = vmatprep.subr.mxu0 0.0
    %1540 = vmatpush1.msra.mxu0 0.0
    %1541 = vmatprep.subr.mxu0 0.0
    %1542 = vmatpush1.msra.mxu0 0.0
    %1543 = vmatprep.subr.mxu0 0.0
    %1544 = vmatpush1.msra.mxu0 0.0
    %1545 = vmatprep.subr.mxu0 0.0
    %1546 = vmatpush1.msra.mxu0 0.0
    %1547 = vmatprep.subr.mxu0 0.0
    %1548 = vmatpush1.msra.mxu0 0.0
    %1549 = vmatprep.subr.mxu0 0.0
    %1550 = vmatpush1.msra.mxu0 0.0
    %1551 = vmatprep.subr.mxu0 0.0
    %1552 = vmatpush1.msra.mxu0 0.0
    %1553 = vmatprep.subr.mxu0 0.0
    %1554 = vmatpush1.msra.mxu0 %v1522
    %1555 = vmatprep.subr.mxu0 0.0
    %1556 = vmatpush2.msra.mxu0 0.0
    %1557 = vmatprep.subr.mxu0 0.0
    %1558 = vmatpush2.msra.mxu0 0.0
    %1559 = vmatprep.subr.mxu0 0.0
    %1560 = vmatpush2.msra.mxu0 0.0
    %1561 = vmatprep.subr.mxu0 0.0
    %1562 = vmatpush2.msra.mxu0 0.0
    %1563 = vmatprep.subr.mxu0 0.0
    %1564 = vmatpush2.msra.mxu0 0.0
    %1565 = vmatprep.subr.mxu0 0.0
    %1566 = vmatpush2.msra.mxu0 0.0
    %1567 = vmatprep.subr.mxu0 0.0
    %1568 = vmatpush2.msra.mxu0 0.0
    %1569 = vmatprep.subr.mxu0 0.0
    %1570 = vmatpush2.msra.mxu0 0.0
    %1571 = vmatprep.subr.mxu0 0.0
    %1572 = vmatpush2.msra.mxu0 0.0
    %1573 = vmatprep.subr.mxu0 0.0
    %1574 = vmatpush2.msra.mxu0 0.0
    %1575 = vmatprep.subr.mxu0 0.0
    %1576 = vmatpush2.msra.mxu0 0.0
    %1577 = vmatprep.subr.mxu0 0.0
    %1578 = vmatpush2.msra.mxu0 0.0
    %1579 = vmatprep.subr.mxu0 0.0
    %1580 = vmatpush2.msra.mxu0 0.0
    %1581 = vmatprep.subr.mxu0 0.0
    %1582 = vmatpush2.msra.mxu0 0.0
    %1583 = vmatprep.subr.mxu0 0.0
    %1584 = vmatpush2.msra.mxu0 0.0
    %1585 = vmatprep.subr.mxu0 0.0
    %1586 = vmatpush2.msra.mxu0 0.0
    %1587 = vmatprep.mubr.f32.mxu0 0.0
    %1588 = vmatmul.mubr.f32.gmra.mxu0 %v977
    %v1589 = vpop.f32.mrf.mxu0
    %v1590 = vadd.f32 0.0, %v1589
    %v1591 = vpop.f32.mrf.mxu0
    %1592 = vdwg.mxu0
    %v1593 = vadd.f32 %v53, %v1590
    %v1594 = vmul.f32 %v691, %v181
    %v1595 = vmul.f32 %v691, %v284
    %v1596 = vmax.f32 %v1594, %v1595
    %v1597 = vmul.f32 %v691, %v387
    %v1598 = vmax.f32 %v1596, %v1597
    %v1599 = vmul.f32 %v691, %v490
    %v1600 = vmax.f32 %v1598, %v1599
    %v1601 = vmul.f32 %v691, %v593
    %v1602 = vmax.f32 %v1600, %v1601
    %v1603 = vmul.f32 %v691, %v696
    %v1604 = vmax.f32 %v1602, %v1603
    %v1605 = vmul.f32 %v691, %v799
    %v1606 = vmax.f32 %v1604, %v1605
    %v1607 = vmul.f32 %v691, %v902
    %v1608 = vmax.f32 %v1606, %v1607
    %v1609 = vsub.f32 %v1594, %v1608
    %v1610 = vmul.f32 %v1609, 1.442695
    %v1611 = vpow.pop %v1610
    %v1612 = vadd.f32 %v1611, 0.0
    %v1613 = vmul.f32 %v1611, %v186
    %v1614 = vadd.f32 %v1613, 0.0
    %v1615 = vsub.f32 %v1595, %v1608
    %v1616 = vmul.f32 %v1615, 1.442695
    %v1617 = vpow.pop %v1616
    %v1618 = vadd.f32 %v1612, %v1617
    %v1619 = vmul.f32 %v1617, %v289
    %v1620 = vadd.f32 %v1614, %v1619
    %v1621 = vsub.f32 %v1597, %v1608
    %v1622 = vmul.f32 %v1621, 1.442695
    %v1623 = vpow.pop %v1622
    %v1624 = vadd.f32 %v1618, %v1623
    %v1625 = vmul.f32 %v1623, %v392
    %v1626 = vadd.f32 %v1620, %v1625
    %v1627 = vsub.f32 %v1599, %v1608
    %v1628 = vmul.f32 %v1627, 1.442695
    %v1629 = vpow.pop %v1628
    %v1630 = vadd.f32 %v1624, %v1629
    %v1631 = vmul.f32 %v1629, %v495
    %v1632 = vadd.f32 %v1626, %v1631
    %v1633 = vsub.f32 %v1601, %v1608
    %v1634 = vmul.f32 %v1633, 1.442695
    %v1635 = vpow.pop %v1634
    %v1636 = vadd.f32 %v1630, %v1635
    %v1637 = vmul.f32 %v1635, %v598
    %v1638 = vadd.f32 %v1632, %v1637
    %v1639 = vsub.f32 %v1603, %v1608
    %v1640 = vmul.f32 %v1639, 1.442695
    %v1641 = vpow.pop %v1640
    %v1642 = vadd.f32 %v1636, %v1641
    %v1643 = vmul.f32 %v1641, %v701
    %v1644 = vadd.f32 %v1638, %v1643
    %v1645 = vsub.f32 %v1605, %v1608
    %v1646 = vmul.f32 %v1645, 1.442695
    %v1647 = vpow.pop %v1646
    %v1648 = vadd.f32 %v1642, %v1647
    %v1649 = vmul.f32 %v1647, %v804
    %v1650 = vadd.f32 %v1644, %v1649
    %v1651 = vsub.f32 %v1607, %v1608
    %v1652 = vmul.f32 %v1651, 1.442695
    %v1653 = vpow.pop %v1652
    %v1654 = vadd.f32 %v1648, %v1653
    %v1655 = vmul.f32 %v1653, %v907
    %v1656 = vadd.f32 %v1650, %v1655
    %v1657 = vrcp.pop %v1654
    %v1658 = vmul.f32 %v1656, %v1657
    %1659 = vmatprep.subr.mxu0 0.0
    %1660 = vmatpush1.msra.mxu0 0.0
    %1661 = vmatprep.subr.mxu0 0.0
    %1662 = vmatpush1.msra.mxu0 0.0
    %1663 = vmatprep.subr.mxu0 0.0
    %1664 = vmatpush1.msra.mxu0 0.0
    %1665 = vmatprep.subr.mxu0 0.0
    %1666 = vmatpush1.msra.mxu0 0.0
    %1667 = vmatprep.subr.mxu0 0.0
    %1668 = vmatpush1.msra.mxu0 0.0
    %1669 = vmatprep.subr.mxu0 0.0
    %1670 = vmatpush1.msra.mxu0 0.0
    %1671 = vmatprep.subr.mxu0 0.0
    %1672 = vmatpush1.msra.mxu0 0.0
    %1673 = vmatprep.subr.mxu0 0.0
    %1674 = vmatpush1.msra.mxu0 0.0
    %1675 = vmatprep.subr.mxu0 0.0
    %1676 = vmatpush1.msra.mxu0 0.0
    %1677 = vmatprep.subr.mxu0 0.0
    %1678 = vmatpush1.msra.mxu0 0.0
    %1679 = vmatprep.subr.mxu0 0.0
    %1680 = vmatpush1.msra.mxu0 0.0
    %1681 = vmatprep.subr.mxu0 0.0
    %1682 = vmatpush1.msra.mxu0 0.0
    %1683 = vmatprep.subr.mxu0 0.0
    %1684 = vmatpush1.msra.mxu0 0.0
    %1685 = vmatprep.subr.mxu0 0.0
    %1686 = vmatpush1.msra.mxu0 0.0
    %1687 = vmatprep.subr.mxu0 0.0
    %1688 = vmatpush1.msra.mxu0 0.0
    %1689 = vmatprep.subr.mxu0 0.0
    %1690 = vmatpush1.msra.mxu0 %v1658
    %1691 = vmatprep.subr.mxu0 0.0
    %1692 = vmatpush2.msra.mxu0 0.0
    %1693 = vmatprep.subr.mxu0 0.0
    %1694 = vmatpush2.msra.mxu0 0.0
    %1695 = vmatprep.subr.mxu0 0.0
    %1696 = vmatpush2.msra.mxu0 0.0
    %1697 = vmatprep.subr.mxu0 0.0
    %1698 = vmatpush2.msra.mxu0 0.0
    %1699 = vmatprep.subr.mxu0 0.0
    %1700 = vmatpush2.msra.mxu0 0.0
    %1701 = vmatprep.subr.mxu0 0.0
    %1702 = vmatpush2.msra.mxu0 0.0
    %1703 = vmatprep.subr.mxu0 0.0
    %1704 = vmatpush2.msra.mxu0 0.0
    %1705 = vmatprep.subr.mxu0 0.0
    %1706 = vmatpush2.msra.mxu0 0.0
    %1707 = vmatprep.subr.mxu0 0.0
    %1708 = vmatpush2.msra.mxu0 0.0
    %1709 = vmatprep.subr.mxu0 0.0
    %1710 = vmatpush2.msra.mxu0 0.0
    %1711 = vmatprep.subr.mxu0 0.0
    %1712 = vmatpush2.msra.mxu0 0.0
    %1713 = vmatprep.subr.mxu0 0.0
    %1714 = vmatpush2.msra.mxu0 0.0
    %1715 = vmatprep.subr.mxu0 0.0
    %1716 = vmatpush2.msra.mxu0 0.0
    %1717 = vmatprep.subr.mxu0 0.0
    %1718 = vmatpush2.msra.mxu0 0.0
    %1719 = vmatprep.subr.mxu0 0.0
    %1720 = vmatpush2.msra.mxu0 0.0
    %1721 = vmatprep.subr.mxu0 0.0
    %1722 = vmatpush2.msra.mxu0 0.0
    %1723 = vmatprep.mubr.f32.mxu0 0.0
    %1724 = vmatmul.mubr.f32.gmra.mxu0 %v977
    %v1725 = vpop.f32.mrf.mxu0
    %v1726 = vadd.f32 0.0, %v1725
    %v1727 = vpop.f32.mrf.mxu0
    %1728 = vdwg.mxu0
    %v1729 = vadd.f32 %v55, %v1726
    %v1730 = vmul.f32 %v794, %v181
    %v1731 = vmul.f32 %v794, %v284
    %v1732 = vmax.f32 %v1730, %v1731
    %v1733 = vmul.f32 %v794, %v387
    %v1734 = vmax.f32 %v1732, %v1733
    %v1735 = vmul.f32 %v794, %v490
    %v1736 = vmax.f32 %v1734, %v1735
    %v1737 = vmul.f32 %v794, %v593
    %v1738 = vmax.f32 %v1736, %v1737
    %v1739 = vmul.f32 %v794, %v696
    %v1740 = vmax.f32 %v1738, %v1739
    %v1741 = vmul.f32 %v794, %v799
    %v1742 = vmax.f32 %v1740, %v1741
    %v1743 = vmul.f32 %v794, %v902
    %v1744 = vmax.f32 %v1742, %v1743
    %v1745 = vsub.f32 %v1730, %v1744
    %v1746 = vmul.f32 %v1745, 1.442695
    %v1747 = vpow.pop %v1746
    %v1748 = vadd.f32 %v1747, 0.0
    %v1749 = vmul.f32 %v1747, %v186
    %v1750 = vadd.f32 %v1749, 0.0
    %v1751 = vsub.f32 %v1731, %v1744
    %v1752 = vmul.f32 %v1751, 1.442695
    %v1753 = vpow.pop %v1752
    %v1754 = vadd.f32 %v1748, %v1753
    %v1755 = vmul.f32 %v1753, %v289
    %v1756 = vadd.f32 %v1750, %v1755
    %v1757 = vsub.f32 %v1733, %v1744
    %v1758 = vmul.f32 %v1757, 1.442695
    %v1759 = vpow.pop %v1758
    %v1760 = vadd.f32 %v1754, %v1759
    %v1761 = vmul.f32 %v1759, %v392
    %v1762 = vadd.f32 %v1756, %v1761
    %v1763 = vsub.f32 %v1735, %v1744
    %v1764 = vmul.f32 %v1763, 1.442695
    %v1765 = vpow.pop %v1764
    %v1766 = vadd.f32 %v1760, %v1765
    %v1767 = vmul.f32 %v1765, %v495
    %v1768 = vadd.f32 %v1762, %v1767
    %v1769 = vsub.f32 %v1737, %v1744
    %v1770 = vmul.f32 %v1769, 1.442695
    %v1771 = vpow.pop %v1770
    %v1772 = vadd.f32 %v1766, %v1771
    %v1773 = vmul.f32 %v1771, %v598
    %v1774 = vadd.f32 %v1768, %v1773
    %v1775 = vsub.f32 %v1739, %v1744
    %v1776 = vmul.f32 %v1775, 1.442695
    %v1777 = vpow.pop %v1776
    %v1778 = vadd.f32 %v1772, %v1777
    %v1779 = vmul.f32 %v1777, %v701
    %v1780 = vadd.f32 %v1774, %v1779
    %v1781 = vsub.f32 %v1741, %v1744
    %v1782 = vmul.f32 %v1781, 1.442695
    %v1783 = vpow.pop %v1782
    %v1784 = vadd.f32 %v1778, %v1783
    %v1785 = vmul.f32 %v1783, %v804
    %v1786 = vadd.f32 %v1780, %v1785
    %v1787 = vsub.f32 %v1743, %v1744
    %v1788 = vmul.f32 %v1787, 1.442695
    %v1789 = vpow.pop %v1788
    %v1790 = vadd.f32 %v1784, %v1789
    %v1791 = vmul.f32 %v1789, %v907
    %v1792 = vadd.f32 %v1786, %v1791
    %v1793 = vrcp.pop %v1790
    %v1794 = vmul.f32 %v1792, %v1793
    %1795 = vmatprep.subr.mxu0 0.0
    %1796 = vmatpush1.msra.mxu0 0.0
    %1797 = vmatprep.subr.mxu0 0.0
    %1798 = vmatpush1.msra.mxu0 0.0
    %1799 = vmatprep.subr.mxu0 0.0
    %1800 = vmatpush1.msra.mxu0 0.0
    %1801 = vmatprep.subr.mxu0 0.0
    %1802 = vmatpush1.msra.mxu0 0.0
    %1803 = vmatprep.subr.mxu0 0.0
    %1804 = vmatpush1.msra.mxu0 0.0
    %1805 = vmatprep.subr.mxu0 0.0
    %1806 = vmatpush1.msra.mxu0 0.0
    %1807 = vmatprep.subr.mxu0 0.0
    %1808 = vmatpush1.msra.mxu0 0.0
    %1809 = vmatprep.subr.mxu0 0.0
    %1810 = vmatpush1.msra.mxu0 0.0
    %1811 = vmatprep.subr.mxu0 0.0
    %1812 = vmatpush1.msra.mxu0 0.0
    %1813 = vmatprep.subr.mxu0 0.0
    %1814 = vmatpush1.msra.mxu0 0.0
    %1815 = vmatprep.subr.mxu0 0.0
    %1816 = vmatpush1.msra.mxu0 0.0
    %1817 = vmatprep.subr.mxu0 0.0
    %1818 = vmatpush1.msra.mxu0 0.0
    %1819 = vmatprep.subr.mxu0 0.0
    %1820 = vmatpush1.msra.mxu0 0.0
    %1821 = vmatprep.subr.mxu0 0.0
    %1822 = vmatpush1.msra.mxu0 0.0
    %1823 = vmatprep.subr.mxu0 0.0
    %1824 = vmatpush1.msra.mxu0 0.0
    %1825 = vmatprep.subr.mxu0 0.0
    %1826 = vmatpush1.msra.mxu0 %v1794
    %1827 = vmatprep.subr.mxu0 0.0
    %1828 = vmatpush2.msra.mxu0 0.0
    %1829 = vmatprep.subr.mxu0 0.0
    %1830 = vmatpush2.msra.mxu0 0.0
    %1831 = vmatprep.subr.mxu0 0.0
    %1832 = vmatpush2.msra.mxu0 0.0
    %1833 = vmatprep.subr.mxu0 0.0
    %1834 = vmatpush2.msra.mxu0 0.0
    %1835 = vmatprep.subr.mxu0 0.0
    %1836 = vmatpush2.msra.mxu0 0.0
    %1837 = vmatprep.subr.mxu0 0.0
    %1838 = vmatpush2.msra.mxu0 0.0
    %1839 = vmatprep.subr.mxu0 0.0
    %1840 = vmatpush2.msra.mxu0 0.0
    %1841 = vmatprep.subr.mxu0 0.0
    %1842 = vmatpush2.msra.mxu0 0.0
    %1843 = vmatprep.subr.mxu0 0.0
    %1844 = vmatpush2.msra.mxu0 0.0
    %1845 = vmatprep.subr.mxu0 0.0
    %1846 = vmatpush2.msra.mxu0 0.0
    %1847 = vmatprep.subr.mxu0 0.0
    %1848 = vmatpush2.msra.mxu0 0.0
    %1849 = vmatprep.subr.mxu0 0.0
    %1850 = vmatpush2.msra.mxu0 0.0
    %1851 = vmatprep.subr.mxu0 0.0
    %1852 = vmatpush2.msra.mxu0 0.0
    %1853 = vmatprep.subr.mxu0 0.0
    %1854 = vmatpush2.msra.mxu0 0.0
    %1855 = vmatprep.subr.mxu0 0.0
    %1856 = vmatpush2.msra.mxu0 0.0
    %1857 = vmatprep.subr.mxu0 0.0
    %1858 = vmatpush2.msra.mxu0 0.0
    %1859 = vmatprep.mubr.f32.mxu0 0.0
    %1860 = vmatmul.mubr.f32.gmra.mxu0 %v977
    %v1861 = vpop.f32.mrf.mxu0
    %v1862 = vadd.f32 0.0, %v1861
    %v1863 = vpop.f32.mrf.mxu0
    %1864 = vdwg.mxu0
    %v1865 = vadd.f32 %v57, %v1862
    %v1866 = vmul.f32 %v897, %v181
    %v1867 = vmul.f32 %v897, %v284
    %v1868 = vmax.f32 %v1866, %v1867
    %v1869 = vmul.f32 %v897, %v387
    %v1870 = vmax.f32 %v1868, %v1869
    %v1871 = vmul.f32 %v897, %v490
    %v1872 = vmax.f32 %v1870, %v1871
    %v1873 = vmul.f32 %v897, %v593
    %v1874 = vmax.f32 %v1872, %v1873
    %v1875 = vmul.f32 %v897, %v696
    %v1876 = vmax.f32 %v1874, %v1875
    %v1877 = vmul.f32 %v897, %v799
    %v1878 = vmax.f32 %v1876, %v1877
    %v1879 = vmul.f32 %v897, %v902
    %v1880 = vmax.f32 %v1878, %v1879
    %v1881 = vsub.f32 %v1866, %v1880
    %v1882 = vmul.f32 %v1881, 1.442695
    %v1883 = vpow.pop %v1882
    %v1884 = vadd.f32 %v1883, 0.0
    %v1885 = vmul.f32 %v1883, %v186
    %v1886 = vadd.f32 %v1885, 0.0
    %v1887 = vsub.f32 %v1867, %v1880
    %v1888 = vmul.f32 %v1887, 1.442695
    %v1889 = vpow.pop %v1888
    %v1890 = vadd.f32 %v1884, %v1889
    %v1891 = vmul.f32 %v1889, %v289
    %v1892 = vadd.f32 %v1886, %v1891
    %v1893 = vsub.f32 %v1869, %v1880
    %v1894 = vmul.f32 %v1893, 1.442695
    %v1895 = vpow.pop %v1894
    %v1896 = vadd.f32 %v1890, %v1895
    %v1897 = vmul.f32 %v1895, %v392
    %v1898 = vadd.f32 %v1892, %v1897
    %v1899 = vsub.f32 %v1871, %v1880
    %v1900 = vmul.f32 %v1899, 1.442695
    %v1901 = vpow.pop %v1900
    %v1902 = vadd.f32 %v1896, %v1901
    %v1903 = vmul.f32 %v1901, %v495
    %v1904 = vadd.f32 %v1898, %v1903
    %v1905 = vsub.f32 %v1873, %v1880
    %v1906 = vmul.f32 %v1905, 1.442695
    %v1907 = vpow.pop %v1906
    %v1908 = vadd.f32 %v1902, %v1907
    %v1909 = vmul.f32 %v1907, %v598
    %v1910 = vadd.f32 %v1904, %v1909
    %v1911 = vsub.f32 %v1875, %v1880
    %v1912 = vmul.f32 %v1911, 1.442695
    %v1913 = vpow.pop %v1912
    %v1914 = vadd.f32 %v1908, %v1913
    %v1915 = vmul.f32 %v1913, %v701
    %v1916 = vadd.f32 %v1910, %v1915
    %v1917 = vsub.f32 %v1877, %v1880
    %v1918 = vmul.f32 %v1917, 1.442695
    %v1919 = vpow.pop %v1918
    %v1920 = vadd.f32 %v1914, %v1919
    %v1921 = vmul.f32 %v1919, %v804
    %v1922 = vadd.f32 %v1916, %v1921
    %v1923 = vsub.f32 %v1879, %v1880
    %v1924 = vmul.f32 %v1923, 1.442695
    %v1925 = vpow.pop %v1924
    %v1926 = vadd.f32 %v1920, %v1925
    %v1927 = vmul.f32 %v1925, %v907
    %v1928 = vadd.f32 %v1922, %v1927
    %v1929 = vrcp.pop %v1926
    %v1930 = vmul.f32 %v1928, %v1929
    %1931 = vmatprep.subr.mxu0 0.0
    %1932 = vmatpush1.msra.mxu0 0.0
    %1933 = vmatprep.subr.mxu0 0.0
    %1934 = vmatpush1.msra.mxu0 0.0
    %1935 = vmatprep.subr.mxu0 0.0
    %1936 = vmatpush1.msra.mxu0 0.0
    %1937 = vmatprep.subr.mxu0 0.0
    %1938 = vmatpush1.msra.mxu0 0.0
    %1939 = vmatprep.subr.mxu0 0.0
    %1940 = vmatpush1.msra.mxu0 0.0
    %1941 = vmatprep.subr.mxu0 0.0
    %1942 = vmatpush1.msra.mxu0 0.0
    %1943 = vmatprep.subr.mxu0 0.0
    %1944 = vmatpush1.msra.mxu0 0.0
    %1945 = vmatprep.subr.mxu0 0.0
    %1946 = vmatpush1.msra.mxu0 0.0
    %1947 = vmatprep.subr.mxu0 0.0
    %1948 = vmatpush1.msra.mxu0 0.0
    %1949 = vmatprep.subr.mxu0 0.0
    %1950 = vmatpush1.msra.mxu0 0.0
    %1951 = vmatprep.subr.mxu0 0.0
    %1952 = vmatpush1.msra.mxu0 0.0
    %1953 = vmatprep.subr.mxu0 0.0
    %1954 = vmatpush1.msra.mxu0 0.0
    %1955 = vmatprep.subr.mxu0 0.0
    %1956 = vmatpush1.msra.mxu0 0.0
    %1957 = vmatprep.subr.mxu0 0.0
    %1958 = vmatpush1.msra.mxu0 0.0
    %1959 = vmatprep.subr.mxu0 0.0
    %1960 = vmatpush1.msra.mxu0 0.0
    %1961 = vmatprep.subr.mxu0 0.0
    %1962 = vmatpush1.msra.mxu0 %v1930
    %1963 = vmatprep.subr.mxu0 0.0
    %1964 = vmatpush2.msra.mxu0 0.0
    %1965 = vmatprep.subr.mxu0 0.0
    %1966 = vmatpush2.msra.mxu0 0.0
    %1967 = vmatprep.subr.mxu0 0.0
    %1968 = vmatpush2.msra.mxu0 0.0
    %1969 = vmatprep.subr.mxu0 0.0
    %1970 = vmatpush2.msra.mxu0 0.0
    %1971 = vmatprep.subr.mxu0 0.0
    %1972 = vmatpush2.msra.mxu0 0.0
    %1973 = vmatprep.subr.mxu0 0.0
    %1974 = vmatpush2.msra.mxu0 0.0
    %1975 = vmatprep.subr.mxu0 0.0
    %1976 = vmatpush2.msra.mxu0 0.0
    %1977 = vmatprep.subr.mxu0 0.0
    %1978 = vmatpush2.msra.mxu0 0.0
    %1979 = vmatprep.subr.mxu0 0.0
    %1980 = vmatpush2.msra.mxu0 0.0
    %1981 = vmatprep.subr.mxu0 0.0
    %1982 = vmatpush2.msra.mxu0 0.0
    %1983 = vmatprep.subr.mxu0 0.0
    %1984 = vmatpush2.msra.mxu0 0.0
    %1985 = vmatprep.subr.mxu0 0.0
    %1986 = vmatpush2.msra.mxu0 0.0
    %1987 = vmatprep.subr.mxu0 0.0
    %1988 = vmatpush2.msra.mxu0 0.0
    %1989 = vmatprep.subr.mxu0 0.0
    %1990 = vmatpush2.msra.mxu0 0.0
    %1991 = vmatprep.subr.mxu0 0.0
    %1992 = vmatpush2.msra.mxu0 0.0
    %1993 = vmatprep.subr.mxu0 0.0
    %1994 = vmatpush2.msra.mxu0 0.0
    %1995 = vmatprep.mubr.f32.mxu0 0.0
    %1996 = vmatmul.mubr.f32.gmra.mxu0 %v977
    %v1997 = vpop.f32.mrf.mxu0
    %v1998 = vadd.f32 0.0, %v1997
    %v1999 = vpop.f32.mrf.mxu0
    %2000 = vdwg.mxu0
    %v2001 = vadd.f32 %v59, %v1998
    %v2002 = vld [vmem:[%s5] sm:$0xff]
    %v2003 = vld [vmem:[%s6] sm:$0xff]
    %v2004 = vld [vmem:[%s7] sm:$0xff]
    %v2005 = vld [vmem:[%s7 + $0x8] sm:$0xff]
    %v2006 = vld [vmem:[%s8] sm:$0xff]
    %v2007 = vld [vmem:[%s8 + $0x8] sm:$0xff]
    %v2008 = vld [vmem:[%s9] sm:$0xff]
    %v2009 = vld [vmem:[%s10] sm:$0xff]
    %v2010 = vrot.slane %v1049, 4
    %v2011 = vadd.f32 %v1049, %v2010
    %v2012 = vrot.slane %v2011, 2
    %v2013 = vadd.f32 %v2011, %v2012
    %v2014 = vrot.slane %v2013, 1
    %v2015 = vadd.f32 %v2013, %v2014
    %v2016 = vmul.f32 %v2015, %v71
    %v2017 = vmul.f32 %v1049, %v1049
    %v2018 = vrot.slane %v2017, 4
    %v2019 = vadd.f32 %v2017, %v2018
    %v2020 = vrot.slane %v2019, 2
    %v2021 = vadd.f32 %v2019, %v2020
    %v2022 = vrot.slane %v2021, 1
    %v2023 = vadd.f32 %v2021, %v2022
    %v2024 = vmul.f32 %v2023, %v71
    %v2025 = vmul.f32 %v2016, %v2016
    %v2026 = vsub.f32 %v2024, %v2025
    %v2027 = vsub.f32 %v1049, %v2016
    %v2028 = vadd.f32 %v2026, 1e-05
    %v2029 = vrsqrt.pop %v2028
    %v2030 = vmul.f32 %v2027, %v2029
    %2032 = vset.pattern.permute.xlu0 0
    %2033 = vperm.xlu0 %2032, %v2002
    %v2034 = vpop.permute.xlu0 %2033
    %v2036 = vmul.f32 %v2030, %v2034
    %2038 = vset.pattern.permute.xlu0 0
    %2039 = vperm.xlu0 %2038, %v2003
    %v2040 = vpop.permute.xlu0 %2039
    %v2042 = vadd.f32 %v2036, %v2040
    %2044 = vset.pattern.permute.xlu0 0
    %2045 = vperm.xlu0 %2044, %v2006
    %v2046 = vpop.permute.xlu0 %2045
    %2049 = vset.pattern.permute.xlu0 0
    %2050 = vperm.xlu0 %2049, %v2007
    %v2051 = vpop.permute.xlu0 %2050
    %v2054 = vsel %vm99, %v2004, 0
    %v2057 = vsel %vm99, %v2005, 0
    %2059 = vmatprep.subr.mxu0 0.0
    %2060 = vmatpush1.msra.mxu0 0.0
    %2061 = vmatprep.subr.mxu0 0.0
    %2062 = vmatpush1.msra.mxu0 0.0
    %2063 = vmatprep.subr.mxu0 0.0
    %2064 = vmatpush1.msra.mxu0 0.0
    %2065 = vmatprep.subr.mxu0 0.0
    %2066 = vmatpush1.msra.mxu0 0.0
    %2067 = vmatprep.subr.mxu0 0.0
    %2068 = vmatpush1.msra.mxu0 0.0
    %2069 = vmatprep.subr.mxu0 0.0
    %2070 = vmatpush1.msra.mxu0 0.0
    %2071 = vmatprep.subr.mxu0 0.0
    %2072 = vmatpush1.msra.mxu0 0.0
    %2073 = vmatprep.subr.mxu0 0.0
    %2074 = vmatpush1.msra.mxu0 0.0
    %2075 = vmatprep.subr.mxu0 0.0
    %2076 = vmatpush1.msra.mxu0 0.0
    %2077 = vmatprep.subr.mxu0 0.0
    %2078 = vmatpush1.msra.mxu0 0.0
    %2079 = vmatprep.subr.mxu0 0.0
    %2080 = vmatpush1.msra.mxu0 0.0
    %2081 = vmatprep.subr.mxu0 0.0
    %2082 = vmatpush1.msra.mxu0 0.0
    %2083 = vmatprep.subr.mxu0 0.0
    %2084 = vmatpush1.msra.mxu0 0.0
    %2085 = vmatprep.subr.mxu0 0.0
    %2086 = vmatpush1.msra.mxu0 0.0
    %2087 = vmatprep.subr.mxu0 0.0
    %2088 = vmatpush1.msra.mxu0 0.0
    %2089 = vmatprep.subr.mxu0 0.0
    %2090 = vmatpush1.msra.mxu0 %v2042
    %2091 = vmatprep.subr.mxu0 0.0
    %2092 = vmatpush2.msra.mxu0 0.0
    %2093 = vmatprep.subr.mxu0 0.0
    %2094 = vmatpush2.msra.mxu0 0.0
    %2095 = vmatprep.subr.mxu0 0.0
    %2096 = vmatpush2.msra.mxu0 0.0
    %2097 = vmatprep.subr.mxu0 0.0
    %2098 = vmatpush2.msra.mxu0 0.0
    %2099 = vmatprep.subr.mxu0 0.0
    %2100 = vmatpush2.msra.mxu0 0.0
    %2101 = vmatprep.subr.mxu0 0.0
    %2102 = vmatpush2.msra.mxu0 0.0
    %2103 = vmatprep.subr.mxu0 0.0
    %2104 = vmatpush2.msra.mxu0 0.0
    %2105 = vmatprep.subr.mxu0 0.0
    %2106 = vmatpush2.msra.mxu0 0.0
    %2107 = vmatprep.subr.mxu0 0.0
    %2108 = vmatpush2.msra.mxu0 0.0
    %2109 = vmatprep.subr.mxu0 0.0
    %2110 = vmatpush2.msra.mxu0 0.0
    %2111 = vmatprep.subr.mxu0 0.0
    %2112 = vmatpush2.msra.mxu0 0.0
    %2113 = vmatprep.subr.mxu0 0.0
    %2114 = vmatpush2.msra.mxu0 0.0
    %2115 = vmatprep.subr.mxu0 0.0
    %2116 = vmatpush2.msra.mxu0 0.0
    %2117 = vmatprep.subr.mxu0 0.0
    %2118 = vmatpush2.msra.mxu0 0.0
    %2119 = vmatprep.subr.mxu0 0.0
    %2120 = vmatpush2.msra.mxu0 0.0
    %2121 = vmatprep.subr.mxu0 0.0
    %2122 = vmatpush2.msra.mxu0 0.0
    %2123 = vmatprep.mubr.f32.mxu0 0.0
    %2124 = vmatmul.mubr.f32.gmra.mxu0 %v2054
    %v2125 = vpop.f32.mrf.mxu0
    %v2126 = vadd.f32 %v2046, %v2125
    %v2127 = vpop.f32.mrf.mxu0
    %2128 = vmatprep.mubr.f32.mxu0 0.0
    %2129 = vmatmul.mubr.f32.gmra.mxu0 %v2057
    %v2130 = vpop.f32.mrf.mxu0
    %v2131 = vadd.f32 %v2051, %v2130
    %v2132 = vpop.f32.mrf.mxu0
    %2133 = vdwg.mxu0
    %v2134 = vmul.f32 %v2131, 0.5
    %v2135 = vmul.f32 %v2131, 0.70710677
    %vm2136 = vcmp.ge.f32.partialorder %v2135, 0.0
    %v2137 = vsel %vm2136, 1.0, -1.0
    %v2138 = vand.u32 2147483647, %v2135
    %v2139 = vmul.f32 %v2138, 0.3275911
    %v2140 = vadd.f32 %v2139, 1.0
    %v2141 = vrcp.pop %v2140
    %v2142 = vmul.f32 %v2141, 1.0614054
    %v2143 = vadd.f32 %v2142, -1.4531521
    %v2144 = vmul.f32 %v2143, %v2141
    %v2145 = vadd.f32 %v2144, 1.4214138
    %v2146 = vmul.f32 %v2145, %v2141
    %v2147 = vadd.f32 %v2146, -0.28449672
    %v2148 = vmul.f32 %v2147, %v2141
    %v2149 = vadd.f32 %v2148, 0.2548296
    %v2150 = vmul.f32 %v2149, %v2141
    %v2151 = vsub.f32 0.0, %v2138
    %v2152 = vmul.f32 %v2151, %v2138
    %v2153 = vmul.f32 %v2152, 1.442695
    %v2154 = vpow.pop %v2153
    %v2155 = vmul.f32 %v2150, %v2154
    %v2156 = vsub.f32 1.0, %v2155
    %v2157 = vmul.f32 %v2137, %v2156
    %v2158 = vadd.f32 %v2157, 1.0
    %v2159 = vmul.f32 %v2134, %v2158
    %v2160 = vmul.f32 %v2159, %v2126
    %v2162 = vsel %vm99, %v2008, 0
    %2164 = vmatprep.subr.mxu0 0.0
    %2165 = vmatpush1.msra.mxu0 0.0
    %2166 = vmatprep.subr.mxu0 0.0
    %2167 = vmatpush1.msra.mxu0 0.0
    %2168 = vmatprep.subr.mxu0 0.0
    %2169 = vmatpush1.msra.mxu0 0.0
    %2170 = vmatprep.subr.mxu0 0.0
    %2171 = vmatpush1.msra.mxu0 0.0
    %2172 = vmatprep.subr.mxu0 0.0
    %2173 = vmatpush1.msra.mxu0 0.0
    %2174 = vmatprep.subr.mxu0 0.0
    %2175 = vmatpush1.msra.mxu0 0.0
    %2176 = vmatprep.subr.mxu0 0.0
    %2177 = vmatpush1.msra.mxu0 0.0
    %2178 = vmatprep.subr.mxu0 0.0
    %2179 = vmatpush1.msra.mxu0 0.0
    %2180 = vmatprep.subr.mxu0 0.0
    %2181 = vmatpush1.msra.mxu0 0.0
    %2182 = vmatprep.subr.mxu0 0.0
    %2183 = vmatpush1.msra.mxu0 0.0
    %2184 = vmatprep.subr.mxu0 0.0
    %2185 = vmatpush1.msra.mxu0 0.0
    %2186 = vmatprep.subr.mxu0 0.0
    %2187 = vmatpush1.msra.mxu0 0.0
    %2188 = vmatprep.subr.mxu0 0.0
    %2189 = vmatpush1.msra.mxu0 0.0
    %2190 = vmatprep.subr.mxu0 0.0
    %2191 = vmatpush1.msra.mxu0 0.0
    %2192 = vmatprep.subr.mxu0 0.0
    %2193 = vmatpush1.msra.mxu0 0.0
    %2194 = vmatprep.subr.mxu0 0.0
    %2195 = vmatpush1.msra.mxu0 %v2160
    %2196 = vmatprep.subr.mxu0 0.0
    %2197 = vmatpush2.msra.mxu0 0.0
    %2198 = vmatprep.subr.mxu0 0.0
    %2199 = vmatpush2.msra.mxu0 0.0
    %2200 = vmatprep.subr.mxu0 0.0
    %2201 = vmatpush2.msra.mxu0 0.0
    %2202 = vmatprep.subr.mxu0 0.0
    %2203 = vmatpush2.msra.mxu0 0.0
    %2204 = vmatprep.subr.mxu0 0.0
    %2205 = vmatpush2.msra.mxu0 0.0
    %2206 = vmatprep.subr.mxu0 0.0
    %2207 = vmatpush2.msra.mxu0 0.0
    %2208 = vmatprep.subr.mxu0 0.0
    %2209 = vmatpush2.msra.mxu0 0.0
    %2210 = vmatprep.subr.mxu0 0.0
    %2211 = vmatpush2.msra.mxu0 0.0
    %2212 = vmatprep.subr.mxu0 0.0
    %2213 = vmatpush2.msra.mxu0 0.0
    %2214 = vmatprep.subr.mxu0 0.0
    %2215 = vmatpush2.msra.mxu0 0.0
    %2216 = vmatprep.subr.mxu0 0.0
    %2217 = vmatpush2.msra.mxu0 0.0
    %2218 = vmatprep.subr.mxu0 0.0
    %2219 = vmatpush2.msra.mxu0 0.0
    %2220 = vmatprep.subr.mxu0 0.0
    %2221 = vmatpush2.msra.mxu0 0.0
    %2222 = vmatprep.subr.mxu0 0.0
    %2223 = vmatpush2.msra.mxu0 0.0
    %2224 = vmatprep.subr.mxu0 0.0
    %2225 = vmatpush2.msra.mxu0 0.0
    %2226 = vmatprep.subr.mxu0 0.0
    %2227 = vmatpush2.msra.mxu0 0.0
    %2228 = vmatprep.mubr.f32.mxu0 0.0
    %2229 = vmatmul.mubr.f32.gmra.mxu0 %v2162
    %v2230 = vpop.f32.mrf.mxu0
    %v2231 = vadd.f32 0.0, %v2230
    %v2232 = vpop.f32.mrf.mxu0
    %2233 = vdwg.mxu0
    %v2234 = vadd.f32 %v1049, %v2231
    %2236 = vset.pattern.permute.xlu0 0
    %2237 = vperm.xlu0 %2236, %v2009
    %v2238 = vpop.permute.xlu0 %2237
    %v2240 = vadd.f32 %v2234, %v2238
    %v2241 = vrot.slane %v1185, 4
    %v2242 = vadd.f32 %v1185, %v2241
    %v2243 = vrot.slane %v2242, 2
    %v2244 = vadd.f32 %v2242, %v2243
    %v2245 = vrot.slane %v2244, 1
    %v2246 = vadd.f32 %v2244, %v2245
    %v2247 = vmul.f32 %v2246, %v71
    %v2248 = vmul.f32 %v1185, %v1185
    %v2249 = vrot.slane %v2248, 4
    %v2250 = vadd.f32 %v2248, %v2249
    %v2251 = vrot.slane %v2250, 2
    %v2252 = vadd.f32 %v2250, %v2251
    %v2253 = vrot.slane %v2252, 1
    %v2254 = vadd.f32 %v2252, %v2253
    %v2255 = vmul.f32 %v2254, %v71
    %v2256 = vmul.f32 %v2247, %v2247
    %v2257 = vsub.f32 %v2255, %v2256
    %v2258 = vsub.f32 %v1185, %v2247
    %v2259 = vadd.f32 %v2257, 1e-05
    %v2260 = vrsqrt.pop %v2259
    %v2261 = vmul.f32 %v2258, %v2260
    %v2262 = vmul.f32 %v2261, %v2034
    %v2263 = vadd.f32 %v2262, %v2040
    %2264 = vmatprep.subr.mxu0 0.0
    %2265 = vmatpush1.msra.mxu0 0.0
    %2266 = vmatprep.subr.mxu0 0.0
    %2267 = vmatpush1.msra.mxu0 0.0
    %2268 = vmatprep.subr.mxu0 0.0
    %2269 = vmatpush1.msra.mxu0 0.0
    %2270 = vmatprep.subr.mxu0 0.0
    %2271 = vmatpush1.msra.mxu0 0.0
    %2272 = vmatprep.subr.mxu0 0.0
    %2273 = vmatpush1.msra.mxu0 0.0
    %2274 = vmatprep.subr.mxu0 0.0
    %2275 = vmatpush1.msra.mxu0 0.0
    %2276 = vmatprep.subr.mxu0 0.0
    %2277 = vmatpush1.msra.mxu0 0.0
    %2278 = vmatprep.subr.mxu0 0.0
    %2279 = vmatpush1.msra.mxu0 0.0
    %2280 = vmatprep.subr.mxu0 0.0
    %2281 = vmatpush1.msra.mxu0 0.0
    %2282 = vmatprep.subr.mxu0 0.0
    %2283 = vmatpush1.msra.mxu0 0.0
    %2284 = vmatprep.subr.mxu0 0.0
    %2285 = vmatpush1.msra.mxu0 0.0
    %2286 = vmatprep.subr.mxu0 0.0
    %2287 = vmatpush1.msra.mxu0 0.0
    %2288 = vmatprep.subr.mxu0 0.0
    %2289 = vmatpush1.msra.mxu0 0.0
    %2290 = vmatprep.subr.mxu0 0.0
    %2291 = vmatpush1.msra.mxu0 0.0
    %2292 = vmatprep.subr.mxu0 0.0
    %2293 = vmatpush1.msra.mxu0 0.0
    %2294 = vmatprep.subr.mxu0 0.0
    %2295 = vmatpush1.msra.mxu0 %v2263
    %2296 = vmatprep.subr.mxu0 0.0
    %2297 = vmatpush2.msra.mxu0 0.0
    %2298 = vmatprep.subr.mxu0 0.0
    %2299 = vmatpush2.msra.mxu0 0.0
    %2300 = vmatprep.subr.mxu0 0.0
    %2301 = vmatpush2.msra.mxu0 0.0
    %2302 = vmatprep.subr.mxu0 0.0
    %2303 = vmatpush2.msra.mxu0 0.0
    %2304 = vmatprep.subr.mxu0 0.0
    %2305 = vmatpush2.msra.mxu0 0.0
    %2306 = vmatprep.subr.mxu0 0.0
    %2307 = vmatpush2.msra.mxu0 0.0
    %2308 = vmatprep.subr.mxu0 0.0
    %2309 = vmatpush2.msra.mxu0 0.0
    %2310 = vmatprep.subr.mxu0 0.0
    %2311 = vmatpush2.msra.mxu0 0.0
    %2312 = vmatprep.subr.mxu0 0.0
    %2313 = vmatpush2.msra.mxu0 0.0
    %2314 = vmatprep.subr.mxu0 0.0
    %2315 = vmatpush2.msra.mxu0 0.0
    %2316 = vmatprep.subr.mxu0 0.0
    %2317 = vmatpush2.msra.mxu0 0.0
    %2318 = vmatprep.subr.mxu0 0.0
    %2319 = vmatpush2.msra.mxu0 0.0
    %2320 = vmatprep.subr.mxu0 0.0
    %2321 = vmatpush2.msra.mxu0 0.0
    %2322 = vmatprep.subr.mxu0 0.0
    %2323 = vmatpush2.msra.mxu0 0.0
    %2324 = vmatprep.subr.mxu0 0.0
    %2325 = vmatpush2.msra.mxu0 0.0
    %2326 = vmatprep.subr.mxu0 0.0
    %2327 = vmatpush2.msra.mxu0 0.0
    %2328 = vmatprep.mubr.f32.mxu0 0.0
    %2329 = vmatmul.mubr.f32.gmra.mxu0 %v2054
    %v2330 = vpop.f32.mrf.mxu0
    %v2331 = vadd.f32 %v2046, %v2330
    %v2332 = vpop.f32.mrf.mxu0
    %2333 = vmatprep.mubr.f32.mxu0 0.0
    %2334 = vmatmul.mubr.f32.gmra.mxu0 %v2057
    %v2335 = vpop.f32.mrf.mxu0
    %v2336 = vadd.f32 %v2051, %v2335
    %v2337 = vpop.f32.mrf.mxu0
    %2338 = vdwg.mxu0
    %v2339 = vmul.f32 %v2336, 0.5
    %v2340 = vmul.f32 %v2336, 0.70710677
    %vm2341 = vcmp.ge.f32.partialorder %v2340, 0.0
    %v2342 = vsel %vm2341, 1.0, -1.0
    %v2343 = vand.u32 2147483647, %v2340
    %v2344 = vmul.f32 %v2343, 0.3275911
    %v2345 = vadd.f32 %v2344, 1.0
    %v2346 = vrcp.pop %v2345
    %v2347 = vmul.f32 %v2346, 1.0614054
    %v2348 = vadd.f32 %v2347, -1.4531521
    %v2349 = vmul.f32 %v2348, %v2346
    %v2350 = vadd.f32 %v2349, 1.4214138
    %v2351 = vmul.f32 %v2350, %v2346
    %v2352 = vadd.f32 %v2351, -0.28449672
    %v2353 = vmul.f32 %v2352, %v2346
    %v2354 = vadd.f32 %v2353, 0.2548296
    %v2355 = vmul.f32 %v2354, %v2346
    %v2356 = vsub.f32 0.0, %v2343
    %v2357 = vmul.f32 %v2356, %v2343
    %v2358 = vmul.f32 %v2357, 1.442695
    %v2359 = vpow.pop %v2358
    %v2360 = vmul.f32 %v2355, %v2359
    %v2361 = vsub.f32 1.0, %v2360
    %v2362 = vmul.f32 %v2342, %v2361
    %v2363 = vadd.f32 %v2362, 1.0
    %v2364 = vmul.f32 %v2339, %v2363
    %v2365 = vmul.f32 %v2364, %v2331
    %2366 = vmatprep.subr.mxu0 0.0
    %2367 = vmatpush1.msra.mxu0 0.0
    %2368 = vmatprep.subr.mxu0 0.0
    %2369 = vmatpush1.msra.mxu0 0.0
    %2370 = vmatprep.subr.mxu0 0.0
    %2371 = vmatpush1.msra.mxu0 0.0
    %2372 = vmatprep.subr.mxu0 0.0
    %2373 = vmatpush1.msra.mxu0 0.0
    %2374 = vmatprep.subr.mxu0 0.0
    %2375 = vmatpush1.msra.mxu0 0.0
    %2376 = vmatprep.subr.mxu0 0.0
    %2377 = vmatpush1.msra.mxu0 0.0
    %2378 = vmatprep.subr.mxu0 0.0
    %2379 = vmatpush1.msra.mxu0 0.0
    %2380 = vmatprep.subr.mxu0 0.0
    %2381 = vmatpush1.msra.mxu0 0.0
    %2382 = vmatprep.subr.mxu0 0.0
    %2383 = vmatpush1.msra.mxu0 0.0
    %2384 = vmatprep.subr.mxu0 0.0
    %2385 = vmatpush1.msra.mxu0 0.0
    %2386 = vmatprep.subr.mxu0 0.0
    %2387 = vmatpush1.msra.mxu0 0.0
    %2388 = vmatprep.subr.mxu0 0.0
    %2389 = vmatpush1.msra.mxu0 0.0
    %2390 = vmatprep.subr.mxu0 0.0
    %2391 = vmatpush1.msra.mxu0 0.0
    %2392 = vmatprep.subr.mxu0 0.0
    %2393 = vmatpush1.msra.mxu0 0.0
    %2394 = vmatprep.subr.mxu0 0.0
    %2395 = vmatpush1.msra.mxu0 0.0
    %2396 = vmatprep.subr.mxu0 0.0
    %2397 = vmatpush1.msra.mxu0 %v2365
    %2398 = vmatprep.subr.mxu0 0.0
    %2399 = vmatpush2.msra.mxu0 0.0
    %2400 = vmatprep.subr.mxu0 0.0
    %2401 = vmatpush2.msra.mxu0 0.0
    %2402 = vmatprep.subr.mxu0 0.0
    %2403 = vmatpush2.msra.mxu0 0.0
    %2404 = vmatprep.subr.mxu0 0.0
    %2405 = vmatpush2.msra.mxu0 0.0
    %2406 = vmatprep.subr.mxu0 0.0
    %2407 = vmatpush2.msra.mxu0 0.0
    %2408 = vmatprep.subr.mxu0 0.0
    %2409 = vmatpush2.msra.mxu0 0.0
    %2410 = vmatprep.subr.mxu0 0.0
    %2411 = vmatpush2.msra.mxu0 0.0
    %2412 = vmatprep.subr.mxu0 0.0
    %2413 = vmatpush2.msra.mxu0 0.0
    %2414 = vmatprep.subr.mxu0 0.0
    %2415 = vmatpush2.msra.mxu0 0.0
    %2416 = vmatprep.subr.mxu0 0.0
    %2417 = vmatpush2.msra.mxu0 0.0
    %2418 = vmatprep.subr.mxu0 0.0
    %2419 = vmatpush2.msra.mxu0 0.0
    %2420 = vmatprep.subr.mxu0 0.0
    %2421 = vmatpush2.msra.mxu0 0.0
    %2422 = vmatprep.subr.mxu0 0.0
    %2423 = vmatpush2.msra.mxu0 0.0
    %2424 = vmatprep.subr.mxu0 0.0
    %2425 = vmatpush2.msra.mxu0 0.0
    %2426 = vmatprep.subr.mxu0 0.0
    %2427 = vmatpush2.msra.mxu0 0.0
    %2428 = vmatprep.subr.mxu0 0.0
    %2429 = vmatpush2.msra.mxu0 0.0
    %2430 = vmatprep.mubr.f32.mxu0 0.0
    %2431 = vmatmul.mubr.f32.gmra.mxu0 %v2162
    %v2432 = vpop.f32.mrf.mxu0
    %v2433 = vadd.f32 0.0, %v2432
    %v2434 = vpop.f32.mrf.mxu0
    %2435 = vdwg.mxu0
    %v2436 = vadd.f32 %v1185, %v2433
    %v2437 = vadd.f32 %v2436, %v2238
    %v2438 = vrot.slane %v1321, 4
    %v2439 = vadd.f32 %v1321, %v2438
    %v2440 = vrot.slane %v2439, 2
    %v2441 = vadd.f32 %v2439, %v2440
    %v2442 = vrot.slane %v2441, 1
    %v2443 = vadd.f32 %v2441, %v2442
    %v2444 = vmul.f32 %v2443, %v71
    %v2445 = vmul.f32 %v1321, %v1321
    %v2446 = vrot.slane %v2445, 4
    %v2447 = vadd.f32 %v2445, %v2446
    %v2448 = vrot.slane %v2447, 2
    %v2449 = vadd.f32 %v2447, %v2448
    %v2450 = vrot.slane %v2449, 1
    %v2451 = vadd.f32 %v2449, %v2450
    %v2452 = vmul.f32 %v2451, %v71
    %v2453 = vmul.f32 %v2444, %v2444
    %v2454 = vsub.f32 %v2452, %v2453
    %v2455 = vsub.f32 %v1321, %v2444
    %v2456 = vadd.f32 %v2454, 1e-05
    %v2457 = vrsqrt.pop %v2456
    %v2458 = vmul.f32 %v2455, %v2457
    %v2459 = vmul.f32 %v2458, %v2034
    %v2460 = vadd.f32 %v2459, %v2040
    %2461 = vmatprep.subr.mxu0 0.0
    %2462 = vmatpush1.msra.mxu0 0.0
    %2463 = vmatprep.subr.mxu0 0.0
    %2464 = vmatpush1.msra.mxu0 0.0
    %2465 = vmatprep.subr.mxu0 0.0
    %2466 = vmatpush1.msra.mxu0 0.0
    %2467 = vmatprep.subr.mxu0 0.0
    %2468 = vmatpush1.msra.mxu0 0.0
    %2469 = vmatprep.subr.mxu0 0.0
    %2470 = vmatpush1.msra.mxu0 0.0
    %2471 = vmatprep.subr.mxu0 0.0
    %2472 = vmatpush1.msra.mxu0 0.0
    %2473 = vmatprep.subr.mxu0 0.0
    %2474 = vmatpush1.msra.mxu0 0.0
    %2475 = vmatprep.subr.mxu0 0.0
    %2476 = vmatpush1.msra.mxu0 0.0
    %2477 = vmatprep.subr.mxu0 0.0
    %2478 = vmatpush1.msra.mxu0 0.0
    %2479 = vmatprep.subr.mxu0 0.0
    %2480 = vmatpush1.msra.mxu0 0.0
    %2481 = vmatprep.subr.mxu0 0.0
    %2482 = vmatpush1.msra.mxu0 0.0
    %2483 = vmatprep.subr.mxu0 0.0
    %2484 = vmatpush1.msra.mxu0 0.0
    %2485 = vmatprep.subr.mxu0 0.0
    %2486 = vmatpush1.msra.mxu0 0.0
    %2487 = vmatprep.subr.mxu0 0.0
    %2488 = vmatpush1.msra.mxu0 0.0
    %2489 = vmatprep.subr.mxu0 0.0
    %2490 = vmatpush1.msra.mxu0 0.0
    %2491 = vmatprep.subr.mxu0 0.0
    %2492 = vmatpush1.msra.mxu0 %v2460
    %2493 = vmatprep.subr.mxu0 0.0
    %2494 = vmatpush2.msra.mxu0 0.0
    %2495 = vmatprep.subr.mxu0 0.0
    %2496 = vmatpush2.msra.mxu0 0.0
    %2497 = vmatprep.subr.mxu0 0.0
    %2498 = vmatpush2.msra.mxu0 0.0
    %2499 = vmatprep.subr.mxu0 0.0
    %2500 = vmatpush2.msra.mxu0 0.0
    %2501 = vmatprep.subr.mxu0 0.0
    %2502 = vmatpush2.msra.mxu0 0.0
    %2503 = vmatprep.subr.mxu0 0.0
    %2504 = vmatpush2.msra.mxu0 0.0
    %2505 = vmatprep.subr.mxu0 0.0
    %2506 = vmatpush2.msra.mxu0 0.0
    %2507 = vmatprep.subr.mxu0 0.0
    %2508 = vmatpush2.msra.mxu0 0.0
    %2509 = vmatprep.subr.mxu0 0.0
    %2510 = vmatpush2.msra.mxu0 0.0
    %2511 = vmatprep.subr.mxu0 0.0
    %2512 = vmatpush2.msra.mxu0 0.0
    %2513 = vmatprep.subr.mxu0 0.0
    %2514 = vmatpush2.msra.mxu0 0.0
    %2515 = vmatprep.subr.mxu0 0.0
    %2516 = vmatpush2.msra.mxu0 0.0
    %2517 = vmatprep.subr.mxu0 0.0
    %2518 = vmatpush2.msra.mxu0 0.0
    %2519 = vmatprep.subr.mxu0 0.0
    %2520 = vmatpush2.msra.mxu0 0.0
    %2521 = vmatprep.subr.mxu0 0.0
    %2522 = vmatpush2.msra.mxu0 0.0
    %2523 = vmatprep.subr.mxu0 0.0
    %2524 = vmatpush2.msra.mxu0 0.0
    %2525 = vmatprep.mubr.f32.mxu0 0.0
    %2526 = vmatmul.mubr.f32.gmra.mxu0 %v2054
    %v2527 = vpop.f32.mrf.mxu0
    %v2528 = vadd.f32 %v2046, %v2527
    %v2529 = vpop.f32.mrf.mxu0
    %2530 = vmatprep.mubr.f32.mxu0 0.0
    %2531 = vmatmul.mubr.f32.gmra.mxu0 %v2057
    %v2532 = vpop.f32.mrf.mxu0
    %v2533 = vadd.f32 %v2051, %v2532
    %v2534 = vpop.f32.mrf.mxu0
    %2535 = vdwg.mxu0
    %v2536 = vmul.f32 %v2533, 0.5
    %v2537 = vmul.f32 %v2533, 0.70710677
    %vm2538 = vcmp.ge.f32.partialorder %v2537, 0.0
    %v2539 = vsel %vm2538, 1.0, -1.0
    %v2540 = vand.u32 2147483647, %v2537
    %v2541 = vmul.f32 %v2540, 0.3275911
    %v2542 = vadd.f32 %v2541, 1.0
    %v2543 = vrcp.pop %v2542
    %v2544 = vmul.f32 %v2543, 1.0614054
    %v2545 = vadd.f32 %v2544, -1.4531521
    %v2546 = vmul.f32 %v2545, %v2543
    %v2547 = vadd.f32 %v2546, 1.4214138
    %v2548 = vmul.f32 %v2547, %v2543
    %v2549 = vadd.f32 %v2548, -0.28449672
    %v2550 = vmul.f32 %v2549, %v2543
    %v2551 = vadd.f32 %v2550, 0.2548296
    %v2552 = vmul.f32 %v2551, %v2543
    %v2553 = vsub.f32 0.0, %v2540
    %v2554 = vmul.f32 %v2553, %v2540
    %v2555 = vmul.f32 %v2554, 1.442695
    %v2556 = vpow.pop %v2555
    %v2557 = vmul.f32 %v2552, %v2556
    %v2558 = vsub.f32 1.0, %v2557
    %v2559 = vmul.f32 %v2539, %v2558
    %v2560 = vadd.f32 %v2559, 1.0
    %v2561 = vmul.f32 %v2536, %v2560
    %v2562 = vmul.f32 %v2561, %v2528
    %2563 = vmatprep.subr.mxu0 0.0
    %2564 = vmatpush1.msra.mxu0 0.0
    %2565 = vmatprep.subr.mxu0 0.0
    %2566 = vmatpush1.msra.mxu0 0.0
    %2567 = vmatprep.subr.mxu0 0.0
    %2568 = vmatpush1.msra.mxu0 0.0
    %2569 = vmatprep.subr.mxu0 0.0
    %2570 = vmatpush1.msra.mxu0 0.0
    %2571 = vmatprep.subr.mxu0 0.0
    %2572 = vmatpush1.msra.mxu0 0.0
    %2573 = vmatprep.subr.mxu0 0.0
    %2574 = vmatpush1.msra.mxu0 0.0
    %2575 = vmatprep.subr.mxu0 0.0
    %2576 = vmatpush1.msra.mxu0 0.0
    %2577 = vmatprep.subr.mxu0 0.0
    %2578 = vmatpush1.msra.mxu0 0.0
    %2579 = vmatprep.subr.mxu0 0.0
    %2580 = vmatpush1.msra.mxu0 0.0
    %2581 = vmatprep.subr.mxu0 0.0
    %2582 = vmatpush1.msra.mxu0 0.0
    %2583 = vmatprep.subr.mxu0 0.0
    %2584 = vmatpush1.msra.mxu0 0.0
    %2585 = vmatprep.subr.mxu0 0.0
    %2586 = vmatpush1.msra.mxu0 0.0
    %2587 = vmatprep.subr.mxu0 0.0
    %2588 = vmatpush1.msra.mxu0 0.0
    %2589 = vmatprep.subr.mxu0 0.0
    %2590 = vmatpush1.msra.mxu0 0.0
    %2591 = vmatprep.subr.mxu0 0.0
    %2592 = vmatpush1.msra.mxu0 0.0
    %2593 = vmatprep.subr.mxu0 0.0
    %2594 = vmatpush1.msra.mxu0 %v2562
    %2595 = vmatprep.subr.mxu0 0.0
    %2596 = vmatpush2.msra.mxu0 0.0
    %2597 = vmatprep.subr.mxu0 0.0
    %2598 = vmatpush2.msra.mxu0 0.0
    %2599 = vmatprep.subr.mxu0 0.0
    %2600 = vmatpush2.msra.mxu0 0.0
    %2601 = vmatprep.subr.mxu0 0.0
    %2602 = vmatpush2.msra.mxu0 0.0
    %2603 = vmatprep.subr.mxu0 0.0
    %2604 = vmatpush2.msra.mxu0 0.0
    %2605 = vmatprep.subr.mxu0 0.0
    %2606 = vmatpush2.msra.mxu0 0.0
    %2607 = vmatprep.subr.mxu0 0.0
    %2608 = vmatpush2.msra.mxu0 0.0
    %2609 = vmatprep.subr.mxu0 0.0
    %2610 = vmatpush2.msra.mxu0 0.0
    %2611 = vmatprep.subr.mxu0 0.0
    %2612 = vmatpush2.msra.mxu0 0.0
    %2613 = vmatprep.subr.mxu0 0.0
    %2614 = vmatpush2.msra.mxu0 0.0
    %2615 = vmatprep.subr.mxu0 0.0
    %2616 = vmatpush2.msra.mxu0 0.0
    %2617 = vmatprep.subr.mxu0 0.0
    %2618 = vmatpush2.msra.mxu0 0.0
    %2619 = vmatprep.subr.mxu0 0.0
    %2620 = vmatpush2.msra.mxu0 0.0
    %2621 = vmatprep.subr.mxu0 0.0
    %2622 = vmatpush2.msra.mxu0 0.0
    %2623 = vmatprep.subr.mxu0 0.0
    %2624 = vmatpush2.msra.mxu0 0.0
    %2625 = vmatprep.subr.mxu0 0.0
    %2626 = vmatpush2.msra.mxu0 0.0
    %2627 = vmatprep.mubr.f32.mxu0 0.0
    %2628 = vmatmul.mubr.f32.gmra.mxu0 %v2162
    %v2629 = vpop.f32.mrf.mxu0
    %v2630 = vadd.f32 0.0, %v2629
    %v2631 = vpop.f32.mrf.mxu0
    %2632 = vdwg.mxu0
    %v2633 = vadd.f32 %v1321, %v2630
    %v2634 = vadd.f32 %v2633, %v2238
    %v2635 = vrot.slane %v1457, 4
    %v2636 = vadd.f32 %v1457, %v2635
    %v2637 = vrot.slane %v2636, 2
    %v2638 = vadd.f32 %v2636, %v2637
    %v2639 = vrot.slane %v2638, 1
    %v2640 = vadd.f32 %v2638, %v2639
    %v2641 = vmul.f32 %v2640, %v71
    %v2642 = vmul.f32 %v1457, %v1457
    %v2643 = vrot.slane %v2642, 4
    %v2644 = vadd.f32 %v2642, %v2643
    %v2645 = vrot.slane %v2644, 2
    %v2646 = vadd.f32 %v2644, %v2645
    %v2647 = vrot.slane %v2646, 1
    %v2648 = vadd.f32 %v2646, %v2647
    %v2649 = vmul.f32 %v2648, %v71
    %v2650 = vmul.f32 %v2641, %v2641
    %v2651 = vsub.f32 %v2649, %v2650
    %v2652 = vsub.f32 %v1457, %v2641
    %v2653 = vadd.f32 %v2651, 1e-05
    %v2654 = vrsqrt.pop %v2653
    %v2655 = vmul.f32 %v2652, %v2654
    %v2656 = vmul.f32 %v2655, %v2034
    %v2657 = vadd.f32 %v2656, %v2040
    %2658 = vmatprep.subr.mxu0 0.0
    %2659 = vmatpush1.msra.mxu0 0.0
    %2660 = vmatprep.subr.mxu0 0.0
    %2661 = vmatpush1.msra.mxu0 0.0
    %2662 = vmatprep.subr.mxu0 0.0
    %2663 = vmatpush1.msra.mxu0 0.0
    %2664 = vmatprep.subr.mxu0 0.0
    %2665 = vmatpush1.msra.mxu0 0.0
    %2666 = vmatprep.subr.mxu0 0.0
    %2667 = vmatpush1.msra.mxu0 0.0
    %2668 = vmatprep.subr.mxu0 0.0
    %2669 = vmatpush1.msra.mxu0 0.0
    %2670 = vmatprep.subr.mxu0 0.0
    %2671 = vmatpush1.msra.mxu0 0.0
    %2672 = vmatprep.subr.mxu0 0.0
    %2673 = vmatpush1.msra.mxu0 0.0
    %2674 = vmatprep.subr.mxu0 0.0
    %2675 = vmatpush1.msra.mxu0 0.0
    %2676 = vmatprep.subr.mxu0 0.0
    %2677 = vmatpush1.msra.mxu0 0.0
    %2678 = vmatprep.subr.mxu0 0.0
    %2679 = vmatpush1.msra.mxu0 0.0
    %2680 = vmatprep.subr.mxu0 0.0
    %2681 = vmatpush1.msra.mxu0 0.0
    %2682 = vmatprep.subr.mxu0 0.0
    %2683 = vmatpush1.msra.mxu0 0.0
    %2684 = vmatprep.subr.mxu0 0.0
    %2685 = vmatpush1.msra.mxu0 0.0
    %2686 = vmatprep.subr.mxu0 0.0
    %2687 = vmatpush1.msra.mxu0 0.0
    %2688 = vmatprep.subr.mxu0 0.0
    %2689 = vmatpush1.msra.mxu0 %v2657
    %2690 = vmatprep.subr.mxu0 0.0
    %2691 = vmatpush2.msra.mxu0 0.0
    %2692 = vmatprep.subr.mxu0 0.0
    %2693 = vmatpush2.msra.mxu0 0.0
    %2694 = vmatprep.subr.mxu0 0.0
    %2695 = vmatpush2.msra.mxu0 0.0
    %2696 = vmatprep.subr.mxu0 0.0
    %2697 = vmatpush2.msra.mxu0 0.0
    %2698 = vmatprep.subr.mxu0 0.0
    %2699 = vmatpush2.msra.mxu0 0.0
    %2700 = vmatprep.subr.mxu0 0.0
    %2701 = vmatpush2.msra.mxu0 0.0
    %2702 = vmatprep.subr.mxu0 0.0
    %2703 = vmatpush2.msra.mxu0 0.0
    %2704 = vmatprep.subr.mxu0 0.0
    %2705 = vmatpush2.msra.mxu0 0.0
    %2706 = vmatprep.subr.mxu0 0.0
    %2707 = vmatpush2.msra.mxu0 0.0
    %2708 = vmatprep.subr.mxu0 0.0
    %2709 = vmatpush2.msra.mxu0 0.0
    %2710 = vmatprep.subr.mxu0 0.0
    %2711 = vmatpush2.msra.mxu0 0.0
    %2712 = vmatprep.subr.mxu0 0.0
    %2713 = vmatpush2.msra.mxu0 0.0
    %2714 = vmatprep.subr.mxu0 0.0
    %2715 = vmatpush2.msra.mxu0 0.0
    %2716 = vmatprep.subr.mxu0 0.0
    %2717 = vmatpush2.msra.mxu0 0.0
    %2718 = vmatprep.subr.mxu0 0.0
    %2719 = vmatpush2.msra.mxu0 0.0
    %2720 = vmatprep.subr.mxu0 0.0
    %2721 = vmatpush2.msra.mxu0 0.0
    %2722 = vmatprep.mubr.f32.mxu0 0.0
    %2723 = vmatmul.mubr.f32.gmra.mxu0 %v2054
    %v2724 = vpop.f32.mrf.mxu0
    %v2725 = vadd.f32 %v2046, %v2724
    %v2726 = vpop.f32.mrf.mxu0
    %2727 = vmatprep.mubr.f32.mxu0 0.0
    %2728 = vmatmul.mubr.f32.gmra.mxu0 %v2057
    %v2729 = vpop.f32.mrf.mxu0
    %v2730 = vadd.f32 %v2051, %v2729
    %v2731 = vpop.f32.mrf.mxu0
    %2732 = vdwg.mxu0
    %v2733 = vmul.f32 %v2730, 0.5
    %v2734 = vmul.f32 %v2730, 0.70710677
    %vm2735 = vcmp.ge.f32.partialorder %v2734, 0.0
    %v2736 = vsel %vm2735, 1.0, -1.0
    %v2737 = vand.u32 2147483647, %v2734
    %v2738 = vmul.f32 %v2737, 0.3275911
    %v2739 = vadd.f32 %v2738, 1.0
    %v2740 = vrcp.pop %v2739
    %v2741 = vmul.f32 %v2740, 1.0614054
    %v2742 = vadd.f32 %v2741, -1.4531521
    %v2743 = vmul.f32 %v2742, %v2740
    %v2744 = vadd.f32 %v2743, 1.4214138
    %v2745 = vmul.f32 %v2744, %v2740
    %v2746 = vadd.f32 %v2745, -0.28449672
    %v2747 = vmul.f32 %v2746, %v2740
    %v2748 = vadd.f32 %v2747, 0.2548296
    %v2749 = vmul.f32 %v2748, %v2740
    %v2750 = vsub.f32 0.0, %v2737
    %v2751 = vmul.f32 %v2750, %v2737
    %v2752 = vmul.f32 %v2751, 1.442695
    %v2753 = vpow.pop %v2752
    %v2754 = vmul.f32 %v2749, %v2753
    %v2755 = vsub.f32 1.0, %v2754
    %v2756 = vmul.f32 %v2736, %v2755
    %v2757 = vadd.f32 %v2756, 1.0
    %v2758 = vmul.f32 %v2733, %v2757
    %v2759 = vmul.f32 %v2758, %v2725
    %2760 = vmatprep.subr.mxu0 0.0
    %2761 = vmatpush1.msra.mxu0 0.0
    %2762 = vmatprep.subr.mxu0 0.0
    %2763 = vmatpush1.msra.mxu0 0.0
    %2764 = vmatprep.subr.mxu0 0.0
    %2765 = vmatpush1.msra.mxu0 0.0
    %2766 = vmatprep.subr.mxu0 0.0
    %2767 = vmatpush1.msra.mxu0 0.0
    %2768 = vmatprep.subr.mxu0 0.0
    %2769 = vmatpush1.msra.mxu0 0.0
    %2770 = vmatprep.subr.mxu0 0.0
    %2771 = vmatpush1.msra.mxu0 0.0
    %2772 = vmatprep.subr.mxu0 0.0
    %2773 = vmatpush1.msra.mxu0 0.0
    %2774 = vmatprep.subr.mxu0 0.0
    %2775 = vmatpush1.msra.mxu0 0.0
    %2776 = vmatprep.subr.mxu0 0.0
    %2777 = vmatpush1.msra.mxu0 0.0
    %2778 = vmatprep.subr.mxu0 0.0
    %2779 = vmatpush1.msra.mxu0 0.0
    %2780 = vmatprep.subr.mxu0 0.0
    %2781 = vmatpush1.msra.mxu0 0.0
    %2782 = vmatprep.subr.mxu0 0.0
    %2783 = vmatpush1.msra.mxu0 0.0
    %2784 = vmatprep.subr.mxu0 0.0
    %2785 = vmatpush1.msra.mxu0 0.0
    %2786 = vmatprep.subr.mxu0 0.0
    %2787 = vmatpush1.msra.mxu0 0.0
    %2788 = vmatprep.subr.mxu0 0.0
    %2789 = vmatpush1.msra.mxu0 0.0
    %2790 = vmatprep.subr.mxu0 0.0
    %2791 = vmatpush1.msra.mxu0 %v2759
    %2792 = vmatprep.subr.mxu0 0.0
    %2793 = vmatpush2.msra.mxu0 0.0
    %2794 = vmatprep.subr.mxu0 0.0
    %2795 = vmatpush2.msra.mxu0 0.0
    %2796 = vmatprep.subr.mxu0 0.0
    %2797 = vmatpush2.msra.mxu0 0.0
    %2798 = vmatprep.subr.mxu0 0.0
    %2799 = vmatpush2.msra.mxu0 0.0
    %2800 = vmatprep.subr.mxu0 0.0
    %2801 = vmatpush2.msra.mxu0 0.0
    %2802 = vmatprep.subr.mxu0 0.0
    %2803 = vmatpush2.msra.mxu0 0.0
    %2804 = vmatprep.subr.mxu0 0.0
    %2805 = vmatpush2.msra.mxu0 0.0
    %2806 = vmatprep.subr.mxu0 0.0
    %2807 = vmatpush2.msra.mxu0 0.0
    %2808 = vmatprep.subr.mxu0 0.0
    %2809 = vmatpush2.msra.mxu0 0.0
    %2810 = vmatprep.subr.mxu0 0.0
    %2811 = vmatpush2.msra.mxu0 0.0
    %2812 = vmatprep.subr.mxu0 0.0
    %2813 = vmatpush2.msra.mxu0 0.0
    %2814 = vmatprep.subr.mxu0 0.0
    %2815 = vmatpush2.msra.mxu0 0.0
    %2816 = vmatprep.subr.mxu0 0.0
    %2817 = vmatpush2.msra.mxu0 0.0
    %2818 = vmatprep.subr.mxu0 0.0
    %2819 = vmatpush2.msra.mxu0 0.0
    %2820 = vmatprep.subr.mxu0 0.0
    %2821 = vmatpush2.msra.mxu0 0.0
    %2822 = vmatprep.subr.mxu0 0.0
    %2823 = vmatpush2.msra.mxu0 0.0
    %2824 = vmatprep.mubr.f32.mxu0 0.0
    %2825 = vmatmul.mubr.f32.gmra.mxu0 %v2162
    %v2826 = vpop.f32.mrf.mxu0
    %v2827 = vadd.f32 0.0, %v2826
    %v2828 = vpop.f32.mrf.mxu0
    %2829 = vdwg.mxu0
    %v2830 = vadd.f32 %v1457, %v2827
    %v2831 = vadd.f32 %v2830, %v2238
    %v2832 = vrot.slane %v1593, 4
    %v2833 = vadd.f32 %v1593, %v2832
    %v2834 = vrot.slane %v2833, 2
    %v2835 = vadd.f32 %v2833, %v2834
    %v2836 = vrot.slane %v2835, 1
    %v2837 = vadd.f32 %v2835, %v2836
    %v2838 = vmul.f32 %v2837, %v71
    %v2839 = vmul.f32 %v1593, %v1593
    %v2840 = vrot.slane %v2839, 4
    %v2841 = vadd.f32 %v2839, %v2840
    %v2842 = vrot.slane %v2841, 2
    %v2843 = vadd.f32 %v2841, %v2842
    %v2844 = vrot.slane %v2843, 1
    %v2845 = vadd.f32 %v2843, %v2844
    %v2846 = vmul.f32 %v2845, %v71
    %v2847 = vmul.f32 %v2838, %v2838
    %v2848 = vsub.f32 %v2846, %v2847
    %v2849 = vsub.f32 %v1593, %v2838
    %v2850 = vadd.f32 %v2848, 1e-05
    %v2851 = vrsqrt.pop %v2850
    %v2852 = vmul.f32 %v2849, %v2851
    %v2853 = vmul.f32 %v2852, %v2034
    %v2854 = vadd.f32 %v2853, %v2040
    %2855 = vmatprep.subr.mxu0 0.0
    %2856 = vmatpush1.msra.mxu0 0.0
    %2857 = vmatprep.subr.mxu0 0.0
    %2858 = vmatpush1.msra.mxu0 0.0
    %2859 = vmatprep.subr.mxu0 0.0
    %2860 = vmatpush1.msra.mxu0 0.0
    %2861 = vmatprep.subr.mxu0 0.0
    %2862 = vmatpush1.msra.mxu0 0.0
    %2863 = vmatprep.subr.mxu0 0.0
    %2864 = vmatpush1.msra.mxu0 0.0
    %2865 = vmatprep.subr.mxu0 0.0
    %2866 = vmatpush1.msra.mxu0 0.0
    %2867 = vmatprep.subr.mxu0 0.0
    %2868 = vmatpush1.msra.mxu0 0.0
    %2869 = vmatprep.subr.mxu0 0.0
    %2870 = vmatpush1.msra.mxu0 0.0
    %2871 = vmatprep.subr.mxu0 0.0
    %2872 = vmatpush1.msra.mxu0 0.0
    %2873 = vmatprep.subr.mxu0 0.0
    %2874 = vmatpush1.msra.mxu0 0.0
    %2875 = vmatprep.subr.mxu0 0.0
    %2876 = vmatpush1.msra.mxu0 0.0
    %2877 = vmatprep.subr.mxu0 0.0
    %2878 = vmatpush1.msra.mxu0 0.0
    %2879 = vmatprep.subr.mxu0 0.0
    %2880 = vmatpush1.msra.mxu0 0.0
    %2881 = vmatprep.subr.mxu0 0.0
    %2882 = vmatpush1.msra.mxu0 0.0
    %2883 = vmatprep.subr.mxu0 0.0
    %2884 = vmatpush1.msra.mxu0 0.0
    %2885 = vmatprep.subr.mxu0 0.0
    %2886 = vmatpush1.msra.mxu0 %v2854
    %2887 = vmatprep.subr.mxu0 0.0
    %2888 = vmatpush2.msra.mxu0 0.0
    %2889 = vmatprep.subr.mxu0 0.0
    %2890 = vmatpush2.msra.mxu0 0.0
    %2891 = vmatprep.subr.mxu0 0.0
    %2892 = vmatpush2.msra.mxu0 0.0
    %2893 = vmatprep.subr.mxu0 0.0
    %2894 = vmatpush2.msra.mxu0 0.0
    %2895 = vmatprep.subr.mxu0 0.0
    %2896 = vmatpush2.msra.mxu0 0.0
    %2897 = vmatprep.subr.mxu0 0.0
    %2898 = vmatpush2.msra.mxu0 0.0
    %2899 = vmatprep.subr.mxu0 0.0
    %2900 = vmatpush2.msra.mxu0 0.0
    %2901 = vmatprep.subr.mxu0 0.0
    %2902 = vmatpush2.msra.mxu0 0.0
    %2903 = vmatprep.subr.mxu0 0.0
    %2904 = vmatpush2.msra.mxu0 0.0
    %2905 = vmatprep.subr.mxu0 0.0
    %2906 = vmatpush2.msra.mxu0 0.0
    %2907 = vmatprep.subr.mxu0 0.0
    %2908 = vmatpush2.msra.mxu0 0.0
    %2909 = vmatprep.subr.mxu0 0.0
    %2910 = vmatpush2.msra.mxu0 0.0
    %2911 = vmatprep.subr.mxu0 0.0
    %2912 = vmatpush2.msra.mxu0 0.0
    %2913 = vmatprep.subr.mxu0 0.0
    %2914 = vmatpush2.msra.mxu0 0.0
    %2915 = vmatprep.subr.mxu0 0.0
    %2916 = vmatpush2.msra.mxu0 0.0
    %2917 = vmatprep.subr.mxu0 0.0
    %2918 = vmatpush2.msra.mxu0 0.0
    %2919 = vmatprep.mubr.f32.mxu0 0.0
    %2920 = vmatmul.mubr.f32.gmra.mxu0 %v2054
    %v2921 = vpop.f32.mrf.mxu0
    %v2922 = vadd.f32 %v2046, %v2921
    %v2923 = vpop.f32.mrf.mxu0
    %2924 = vmatprep.mubr.f32.mxu0 0.0
    %2925 = vmatmul.mubr.f32.gmra.mxu0 %v2057
    %v2926 = vpop.f32.mrf.mxu0
    %v2927 = vadd.f32 %v2051, %v2926
    %v2928 = vpop.f32.mrf.mxu0
    %2929 = vdwg.mxu0
    %v2930 = vmul.f32 %v2927, 0.5
    %v2931 = vmul.f32 %v2927, 0.70710677
    %vm2932 = vcmp.ge.f32.partialorder %v2931, 0.0
    %v2933 = vsel %vm2932, 1.0, -1.0
    %v2934 = vand.u32 2147483647, %v2931
    %v2935 = vmul.f32 %v2934, 0.3275911
    %v2936 = vadd.f32 %v2935, 1.0
    %v2937 = vrcp.pop %v2936
    %v2938 = vmul.f32 %v2937, 1.0614054
    %v2939 = vadd.f32 %v2938, -1.4531521
    %v2940 = vmul.f32 %v2939, %v2937
    %v2941 = vadd.f32 %v2940, 1.4214138
    %v2942 = vmul.f32 %v2941, %v2937
    %v2943 = vadd.f32 %v2942, -0.28449672
    %v2944 = vmul.f32 %v2943, %v2937
    %v2945 = vadd.f32 %v2944, 0.2548296
    %v2946 = vmul.f32 %v2945, %v2937
    %v2947 = vsub.f32 0.0, %v2934
    %v2948 = vmul.f32 %v2947, %v2934
    %v2949 = vmul.f32 %v2948, 1.442695
    %v2950 = vpow.pop %v2949
    %v2951 = vmul.f32 %v2946, %v2950
    %v2952 = vsub.f32 1.0, %v2951
    %v2953 = vmul.f32 %v2933, %v2952
    %v2954 = vadd.f32 %v2953, 1.0
    %v2955 = vmul.f32 %v2930, %v2954
    %v2956 = vmul.f32 %v2955, %v2922
    %2957 = vmatprep.subr.mxu0 0.0
    %2958 = vmatpush1.msra.mxu0 0.0
    %2959 = vmatprep.subr.mxu0 0.0
    %2960 = vmatpush1.msra.mxu0 0.0
    %2961 = vmatprep.subr.mxu0 0.0
    %2962 = vmatpush1.msra.mxu0 0.0
    %2963 = vmatprep.subr.mxu0 0.0
    %2964 = vmatpush1.msra.mxu0 0.0
    %2965 = vmatprep.subr.mxu0 0.0
    %2966 = vmatpush1.msra.mxu0 0.0
    %2967 = vmatprep.subr.mxu0 0.0
    %2968 = vmatpush1.msra.mxu0 0.0
    %2969 = vmatprep.subr.mxu0 0.0
    %2970 = vmatpush1.msra.mxu0 0.0
    %2971 = vmatprep.subr.mxu0 0.0
    %2972 = vmatpush1.msra.mxu0 0.0
    %2973 = vmatprep.subr.mxu0 0.0
    %2974 = vmatpush1.msra.mxu0 0.0
    %2975 = vmatprep.subr.mxu0 0.0
    %2976 = vmatpush1.msra.mxu0 0.0
    %2977 = vmatprep.subr.mxu0 0.0
    %2978 = vmatpush1.msra.mxu0 0.0
    %2979 = vmatprep.subr.mxu0 0.0
    %2980 = vmatpush1.msra.mxu0 0.0
    %2981 = vmatprep.subr.mxu0 0.0
    %2982 = vmatpush1.msra.mxu0 0.0
    %2983 = vmatprep.subr.mxu0 0.0
    %2984 = vmatpush1.msra.mxu0 0.0
    %2985 = vmatprep.subr.mxu0 0.0
    %2986 = vmatpush1.msra.mxu0 0.0
    %2987 = vmatprep.subr.mxu0 0.0
    %2988 = vmatpush1.msra.mxu0 %v2956
    %2989 = vmatprep.subr.mxu0 0.0
    %2990 = vmatpush2.msra.mxu0 0.0
    %2991 = vmatprep.subr.mxu0 0.0
    %2992 = vmatpush2.msra.mxu0 0.0
    %2993 = vmatprep.subr.mxu0 0.0
    %2994 = vmatpush2.msra.mxu0 0.0
    %2995 = vmatprep.subr.mxu0 0.0
    %2996 = vmatpush2.msra.mxu0 0.0
    %2997 = vmatprep.subr.mxu0 0.0
    %2998 = vmatpush2.msra.mxu0 0.0
    %2999 = vmatprep.subr.mxu0 0.0
    %3000 = vmatpush2.msra.mxu0 0.0
    %3001 = vmatprep.subr.mxu0 0.0
    %3002 = vmatpush2.msra.mxu0 0.0
    %3003 = vmatprep.subr.mxu0 0.0
    %3004 = vmatpush2.msra.mxu0 0.0
    %3005 = vmatprep.subr.mxu0 0.0
    %3006 = vmatpush2.msra.mxu0 0.0
    %3007 = vmatprep.subr.mxu0 0.0
    %3008 = vmatpush2.msra.mxu0 0.0
    %3009 = vmatprep.subr.mxu0 0.0
    %3010 = vmatpush2.msra.mxu0 0.0
    %3011 = vmatprep.subr.mxu0 0.0
    %3012 = vmatpush2.msra.mxu0 0.0
    %3013 = vmatprep.subr.mxu0 0.0
    %3014 = vmatpush2.msra.mxu0 0.0
    %3015 = vmatprep.subr.mxu0 0.0
    %3016 = vmatpush2.msra.mxu0 0.0
    %3017 = vmatprep.subr.mxu0 0.0
    %3018 = vmatpush2.msra.mxu0 0.0
    %3019 = vmatprep.subr.mxu0 0.0
    %3020 = vmatpush2.msra.mxu0 0.0
    %3021 = vmatprep.mubr.f32.mxu0 0.0
    %3022 = vmatmul.mubr.f32.gmra.mxu0 %v2162
    %v3023 = vpop.f32.mrf.mxu0
    %v3024 = vadd.f32 0.0, %v3023
    %v3025 = vpop.f32.mrf.mxu0
    %3026 = vdwg.mxu0
    %v3027 = vadd.f32 %v1593, %v3024
    %v3028 = vadd.f32 %v3027, %v2238
    %v3029 = vrot.slane %v1729, 4
    %v3030 = vadd.f32 %v1729, %v3029
    %v3031 = vrot.slane %v3030, 2
    %v3032 = vadd.f32 %v3030, %v3031
    %v3033 = vrot.slane %v3032, 1
    %v3034 = vadd.f32 %v3032, %v3033
    %v3035 = vmul.f32 %v3034, %v71
    %v3036 = vmul.f32 %v1729, %v1729
    %v3037 = vrot.slane %v3036, 4
    %v3038 = vadd.f32 %v3036, %v3037
    %v3039 = vrot.slane %v3038, 2
    %v3040 = vadd.f32 %v3038, %v3039
    %v3041 = vrot.slane %v3040, 1
    %v3042 = vadd.f32 %v3040, %v3041
    %v3043 = vmul.f32 %v3042, %v71
    %v3044 = vmul.f32 %v3035, %v3035
    %v3045 = vsub.f32 %v3043, %v3044
    %v3046 = vsub.f32 %v1729, %v3035
    %v3047 = vadd.f32 %v3045, 1e-05
    %v3048 = vrsqrt.pop %v3047
    %v3049 = vmul.f32 %v3046, %v3048
    %v3050 = vmul.f32 %v3049, %v2034
    %v3051 = vadd.f32 %v3050, %v2040
    %3052 = vmatprep.subr.mxu0 0.0
    %3053 = vmatpush1.msra.mxu0 0.0
    %3054 = vmatprep.subr.mxu0 0.0
    %3055 = vmatpush1.msra.mxu0 0.0
    %3056 = vmatprep.subr.mxu0 0.0
    %3057 = vmatpush1.msra.mxu0 0.0
    %3058 = vmatprep.subr.mxu0 0.0
    %3059 = vmatpush1.msra.mxu0 0.0
    %3060 = vmatprep.subr.mxu0 0.0
    %3061 = vmatpush1.msra.mxu0 0.0
    %3062 = vmatprep.subr.mxu0 0.0
    %3063 = vmatpush1.msra.mxu0 0.0
    %3064 = vmatprep.subr.mxu0 0.0
    %3065 = vmatpush1.msra.mxu0 0.0
    %3066 = vmatprep.subr.mxu0 0.0
    %3067 = vmatpush1.msra.mxu0 0.0
    %3068 = vmatprep.subr.mxu0 0.0
    %3069 = vmatpush1.msra.mxu0 0.0
    %3070 = vmatprep.subr.mxu0 0.0
    %3071 = vmatpush1.msra.mxu0 0.0
    %3072 = vmatprep.subr.mxu0 0.0
    %3073 = vmatpush1.msra.mxu0 0.0
    %3074 = vmatprep.subr.mxu0 0.0
    %3075 = vmatpush1.msra.mxu0 0.0
    %3076 = vmatprep.subr.mxu0 0.0
    %3077 = vmatpush1.msra.mxu0 0.0
    %3078 = vmatprep.subr.mxu0 0.0
    %3079 = vmatpush1.msra.mxu0 0.0
    %3080 = vmatprep.subr.mxu0 0.0
    %3081 = vmatpush1.msra.mxu0 0.0
    %3082 = vmatprep.subr.mxu0 0.0
    %3083 = vmatpush1.msra.mxu0 %v3051
    %3084 = vmatprep.subr.mxu0 0.0
    %3085 = vmatpush2.msra.mxu0 0.0
    %3086 = vmatprep.subr.mxu0 0.0
    %3087 = vmatpush2.msra.mxu0 0.0
    %3088 = vmatprep.subr.mxu0 0.0
    %3089 = vmatpush2.msra.mxu0 0.0
    %3090 = vmatprep.subr.mxu0 0.0
    %3091 = vmatpush2.msra.mxu0 0.0
    %3092 = vmatprep.subr.mxu0 0.0
    %3093 = vmatpush2.msra.mxu0 0.0
    %3094 = vmatprep.subr.mxu0 0.0
    %3095 = vmatpush2.msra.mxu0 0.0
    %3096 = vmatprep.subr.mxu0 0.0
    %3097 = vmatpush2.msra.mxu0 0.0
    %3098 = vmatprep.subr.mxu0 0.0
    %3099 = vmatpush2.msra.mxu0 0.0
    %3100 = vmatprep.subr.mxu0 0.0
    %3101 = vmatpush2.msra.mxu0 0.0
    %3102 = vmatprep.subr.mxu0 0.0
    %3103 = vmatpush2.msra.mxu0 0.0
    %3104 = vmatprep.subr.mxu0 0.0
    %3105 = vmatpush2.msra.mxu0 0.0
    %3106 = vmatprep.subr.mxu0 0.0
    %3107 = vmatpush2.msra.mxu0 0.0
    %3108 = vmatprep.subr.mxu0 0.0
    %3109 = vmatpush2.msra.mxu0 0.0
    %3110 = vmatprep.subr.mxu0 0.0
    %3111 = vmatpush2.msra.mxu0 0.0
    %3112 = vmatprep.subr.mxu0 0.0
    %3113 = vmatpush2.msra.mxu0 0.0
    %3114 = vmatprep.subr.mxu0 0.0
    %3115 = vmatpush2.msra.mxu0 0.0
    %3116 = vmatprep.mubr.f32.mxu0 0.0
    %3117 = vmatmul.mubr.f32.gmra.mxu0 %v2054
    %v3118 = vpop.f32.mrf.mxu0
    %v3119 = vadd.f32 %v2046, %v3118
    %v3120 = vpop.f32.mrf.mxu0
    %3121 = vmatprep.mubr.f32.mxu0 0.0
    %3122 = vmatmul.mubr.f32.gmra.mxu0 %v2057
    %v3123 = vpop.f32.mrf.mxu0
    %v3124 = vadd.f32 %v2051, %v3123
    %v3125 = vpop.f32.mrf.mxu0
    %3126 = vdwg.mxu0
    %v3127 = vmul.f32 %v3124, 0.5
    %v3128 = vmul.f32 %v3124, 0.70710677
    %vm3129 = vcmp.ge.f32.partialorder %v3128, 0.0
    %v3130 = vsel %vm3129, 1.0, -1.0
    %v3131 = vand.u32 2147483647, %v3128
    %v3132 = vmul.f32 %v3131, 0.3275911
    %v3133 = vadd.f32 %v3132, 1.0
    %v3134 = vrcp.pop %v3133
    %v3135 = vmul.f32 %v3134, 1.0614054
    %v3136 = vadd.f32 %v3135, -1.4531521
    %v3137 = vmul.f32 %v3136, %v3134
    %v3138 = vadd.f32 %v3137, 1.4214138
    %v3139 = vmul.f32 %v3138, %v3134
    %v3140 = vadd.f32 %v3139, -0.28449672
    %v3141 = vmul.f32 %v3140, %v3134
    %v3142 = vadd.f32 %v3141, 0.2548296
    %v3143 = vmul.f32 %v3142, %v3134
    %v3144 = vsub.f32 0.0, %v3131
    %v3145 = vmul.f32 %v3144, %v3131
    %v3146 = vmul.f32 %v3145, 1.442695
    %v3147 = vpow.pop %v3146
    %v3148 = vmul.f32 %v3143, %v3147
    %v3149 = vsub.f32 1.0, %v3148
    %v3150 = vmul.f32 %v3130, %v3149
    %v3151 = vadd.f32 %v3150, 1.0
    %v3152 = vmul.f32 %v3127, %v3151
    %v3153 = vmul.f32 %v3152, %v3119
    %3154 = vmatprep.subr.mxu0 0.0
    %3155 = vmatpush1.msra.mxu0 0.0
    %3156 = vmatprep.subr.mxu0 0.0
    %3157 = vmatpush1.msra.mxu0 0.0
    %3158 = vmatprep.subr.mxu0 0.0
    %3159 = vmatpush1.msra.mxu0 0.0
    %3160 = vmatprep.subr.mxu0 0.0
    %3161 = vmatpush1.msra.mxu0 0.0
    %3162 = vmatprep.subr.mxu0 0.0
    %3163 = vmatpush1.msra.mxu0 0.0
    %3164 = vmatprep.subr.mxu0 0.0
    %3165 = vmatpush1.msra.mxu0 0.0
    %3166 = vmatprep.subr.mxu0 0.0
    %3167 = vmatpush1.msra.mxu0 0.0
    %3168 = vmatprep.subr.mxu0 0.0
    %3169 = vmatpush1.msra.mxu0 0.0
    %3170 = vmatprep.subr.mxu0 0.0
    %3171 = vmatpush1.msra.mxu0 0.0
    %3172 = vmatprep.subr.mxu0 0.0
    %3173 = vmatpush1.msra.mxu0 0.0
    %3174 = vmatprep.subr.mxu0 0.0
    %3175 = vmatpush1.msra.mxu0 0.0
    %3176 = vmatprep.subr.mxu0 0.0
    %3177 = vmatpush1.msra.mxu0 0.0
    %3178 = vmatprep.subr.mxu0 0.0
    %3179 = vmatpush1.msra.mxu0 0.0
    %3180 = vmatprep.subr.mxu0 0.0
    %3181 = vmatpush1.msra.mxu0 0.0
    %3182 = vmatprep.subr.mxu0 0.0
    %3183 = vmatpush1.msra.mxu0 0.0
    %3184 = vmatprep.subr.mxu0 0.0
    %3185 = vmatpush1.msra.mxu0 %v3153
    %3186 = vmatprep.subr.mxu0 0.0
    %3187 = vmatpush2.msra.mxu0 0.0
    %3188 = vmatprep.subr.mxu0 0.0
    %3189 = vmatpush2.msra.mxu0 0.0
    %3190 = vmatprep.subr.mxu0 0.0
    %3191 = vmatpush2.msra.mxu0 0.0
    %3192 = vmatprep.subr.mxu0 0.0
    %3193 = vmatpush2.msra.mxu0 0.0
    %3194 = vmatprep.subr.mxu0 0.0
    %3195 = vmatpush2.msra.mxu0 0.0
    %3196 = vmatprep.subr.mxu0 0.0
    %3197 = vmatpush2.msra.mxu0 0.0
    %3198 = vmatprep.subr.mxu0 0.0
    %3199 = vmatpush2.msra.mxu0 0.0
    %3200 = vmatprep.subr.mxu0 0.0
    %3201 = vmatpush2.msra.mxu0 0.0
    %3202 = vmatprep.subr.mxu0 0.0
    %3203 = vmatpush2.msra.mxu0 0.0
    %3204 = vmatprep.subr.mxu0 0.0
    %3205 = vmatpush2.msra.mxu0 0.0
    %3206 = vmatprep.subr.mxu0 0.0
    %3207 = vmatpush2.msra.mxu0 0.0
    %3208 = vmatprep.subr.mxu0 0.0
    %3209 = vmatpush2.msra.mxu0 0.0
    %3210 = vmatprep.subr.mxu0 0.0
    %3211 = vmatpush2.msra.mxu0 0.0
    %3212 = vmatprep.subr.mxu0 0.0
    %3213 = vmatpush2.msra.mxu0 0.0
    %3214 = vmatprep.subr.mxu0 0.0
    %3215 = vmatpush2.msra.mxu0 0.0
    %3216 = vmatprep.subr.mxu0 0.0
    %3217 = vmatpush2.msra.mxu0 0.0
    %3218 = vmatprep.mubr.f32.mxu0 0.0
    %3219 = vmatmul.mubr.f32.gmra.mxu0 %v2162
    %v3220 = vpop.f32.mrf.mxu0
    %v3221 = vadd.f32 0.0, %v3220
    %v3222 = vpop.f32.mrf.mxu0
    %3223 = vdwg.mxu0
    %v3224 = vadd.f32 %v1729, %v3221
    %v3225 = vadd.f32 %v3224, %v2238
    %v3226 = vrot.slane %v1865, 4
    %v3227 = vadd.f32 %v1865, %v3226
    %v3228 = vrot.slane %v3227, 2
    %v3229 = vadd.f32 %v3227, %v3228
    %v3230 = vrot.slane %v3229, 1
    %v3231 = vadd.f32 %v3229, %v3230
    %v3232 = vmul.f32 %v3231, %v71
    %v3233 = vmul.f32 %v1865, %v1865
    %v3234 = vrot.slane %v3233, 4
    %v3235 = vadd.f32 %v3233, %v3234
    %v3236 = vrot.slane %v3235, 2
    %v3237 = vadd.f32 %v3235, %v3236
    %v3238 = vrot.slane %v3237, 1
    %v3239 = vadd.f32 %v3237, %v3238
    %v3240 = vmul.f32 %v3239, %v71
    %v3241 = vmul.f32 %v3232, %v3232
    %v3242 = vsub.f32 %v3240, %v3241
    %v3243 = vsub.f32 %v1865, %v3232
    %v3244 = vadd.f32 %v3242, 1e-05
    %v3245 = vrsqrt.pop %v3244
    %v3246 = vmul.f32 %v3243, %v3245
    %v3247 = vmul.f32 %v3246, %v2034
    %v3248 = vadd.f32 %v3247, %v2040
    %3249 = vmatprep.subr.mxu0 0.0
    %3250 = vmatpush1.msra.mxu0 0.0
    %3251 = vmatprep.subr.mxu0 0.0
    %3252 = vmatpush1.msra.mxu0 0.0
    %3253 = vmatprep.subr.mxu0 0.0
    %3254 = vmatpush1.msra.mxu0 0.0
    %3255 = vmatprep.subr.mxu0 0.0
    %3256 = vmatpush1.msra.mxu0 0.0
    %3257 = vmatprep.subr.mxu0 0.0
    %3258 = vmatpush1.msra.mxu0 0.0
    %3259 = vmatprep.subr.mxu0 0.0
    %3260 = vmatpush1.msra.mxu0 0.0
    %3261 = vmatprep.subr.mxu0 0.0
    %3262 = vmatpush1.msra.mxu0 0.0
    %3263 = vmatprep.subr.mxu0 0.0
    %3264 = vmatpush1.msra.mxu0 0.0
    %3265 = vmatprep.subr.mxu0 0.0
    %3266 = vmatpush1.msra.mxu0 0.0
    %3267 = vmatprep.subr.mxu0 0.0
    %3268 = vmatpush1.msra.mxu0 0.0
    %3269 = vmatprep.subr.mxu0 0.0
    %3270 = vmatpush1.msra.mxu0 0.0
    %3271 = vmatprep.subr.mxu0 0.0
    %3272 = vmatpush1.msra.mxu0 0.0
    %3273 = vmatprep.subr.mxu0 0.0
    %3274 = vmatpush1.msra.mxu0 0.0
    %3275 = vmatprep.subr.mxu0 0.0
    %3276 = vmatpush1.msra.mxu0 0.0
    %3277 = vmatprep.subr.mxu0 0.0
    %3278 = vmatpush1.msra.mxu0 0.0
    %3279 = vmatprep.subr.mxu0 0.0
    %3280 = vmatpush1.msra.mxu0 %v3248
    %3281 = vmatprep.subr.mxu0 0.0
    %3282 = vmatpush2.msra.mxu0 0.0
    %3283 = vmatprep.subr.mxu0 0.0
    %3284 = vmatpush2.msra.mxu0 0.0
    %3285 = vmatprep.subr.mxu0 0.0
    %3286 = vmatpush2.msra.mxu0 0.0
    %3287 = vmatprep.subr.mxu0 0.0
    %3288 = vmatpush2.msra.mxu0 0.0
    %3289 = vmatprep.subr.mxu0 0.0
    %3290 = vmatpush2.msra.mxu0 0.0
    %3291 = vmatprep.subr.mxu0 0.0
    %3292 = vmatpush2.msra.mxu0 0.0
    %3293 = vmatprep.subr.mxu0 0.0
    %3294 = vmatpush2.msra.mxu0 0.0
    %3295 = vmatprep.subr.mxu0 0.0
    %3296 = vmatpush2.msra.mxu0 0.0
    %3297 = vmatprep.subr.mxu0 0.0
    %3298 = vmatpush2.msra.mxu0 0.0
    %3299 = vmatprep.subr.mxu0 0.0
    %3300 = vmatpush2.msra.mxu0 0.0
    %3301 = vmatprep.subr.mxu0 0.0
    %3302 = vmatpush2.msra.mxu0 0.0
    %3303 = vmatprep.subr.mxu0 0.0
    %3304 = vmatpush2.msra.mxu0 0.0
    %3305 = vmatprep.subr.mxu0 0.0
    %3306 = vmatpush2.msra.mxu0 0.0
    %3307 = vmatprep.subr.mxu0 0.0
    %3308 = vmatpush2.msra.mxu0 0.0
    %3309 = vmatprep.subr.mxu0 0.0
    %3310 = vmatpush2.msra.mxu0 0.0
    %3311 = vmatprep.subr.mxu0 0.0
    %3312 = vmatpush2.msra.mxu0 0.0
    %3313 = vmatprep.mubr.f32.mxu0 0.0
    %3314 = vmatmul.mubr.f32.gmra.mxu0 %v2054
    %v3315 = vpop.f32.mrf.mxu0
    %v3316 = vadd.f32 %v2046, %v3315
    %v3317 = vpop.f32.mrf.mxu0
    %3318 = vmatprep.mubr.f32.mxu0 0.0
    %3319 = vmatmul.mubr.f32.gmra.mxu0 %v2057
    %v3320 = vpop.f32.mrf.mxu0
    %v3321 = vadd.f32 %v2051, %v3320
    %v3322 = vpop.f32.mrf.mxu0
    %3323 = vdwg.mxu0
    %v3324 = vmul.f32 %v3321, 0.5
    %v3325 = vmul.f32 %v3321, 0.70710677
    %vm3326 = vcmp.ge.f32.partialorder %v3325, 0.0
    %v3327 = vsel %vm3326, 1.0, -1.0
    %v3328 = vand.u32 2147483647, %v3325
    %v3329 = vmul.f32 %v3328, 0.3275911
    %v3330 = vadd.f32 %v3329, 1.0
    %v3331 = vrcp.pop %v3330
    %v3332 = vmul.f32 %v3331, 1.0614054
    %v3333 = vadd.f32 %v3332, -1.4531521
    %v3334 = vmul.f32 %v3333, %v3331
    %v3335 = vadd.f32 %v3334, 1.4214138
    %v3336 = vmul.f32 %v3335, %v3331
    %v3337 = vadd.f32 %v3336, -0.28449672
    %v3338 = vmul.f32 %v3337, %v3331
    %v3339 = vadd.f32 %v3338, 0.2548296
    %v3340 = vmul.f32 %v3339, %v3331
    %v3341 = vsub.f32 0.0, %v3328
    %v3342 = vmul.f32 %v3341, %v3328
    %v3343 = vmul.f32 %v3342, 1.442695
    %v3344 = vpow.pop %v3343
    %v3345 = vmul.f32 %v3340, %v3344
    %v3346 = vsub.f32 1.0, %v3345
    %v3347 = vmul.f32 %v3327, %v3346
    %v3348 = vadd.f32 %v3347, 1.0
    %v3349 = vmul.f32 %v3324, %v3348
    %v3350 = vmul.f32 %v3349, %v3316
    %3351 = vmatprep.subr.mxu0 0.0
    %3352 = vmatpush1.msra.mxu0 0.0
    %3353 = vmatprep.subr.mxu0 0.0
    %3354 = vmatpush1.msra.mxu0 0.0
    %3355 = vmatprep.subr.mxu0 0.0
    %3356 = vmatpush1.msra.mxu0 0.0
    %3357 = vmatprep.subr.mxu0 0.0
    %3358 = vmatpush1.msra.mxu0 0.0
    %3359 = vmatprep.subr.mxu0 0.0
    %3360 = vmatpush1.msra.mxu0 0.0
    %3361 = vmatprep.subr.mxu0 0.0
    %3362 = vmatpush1.msra.mxu0 0.0
    %3363 = vmatprep.subr.mxu0 0.0
    %3364 = vmatpush1.msra.mxu0 0.0
    %3365 = vmatprep.subr.mxu0 0.0
    %3366 = vmatpush1.msra.mxu0 0.0
    %3367 = vmatprep.subr.mxu0 0.0
    %3368 = vmatpush1.msra.mxu0 0.0
    %3369 = vmatprep.subr.mxu0 0.0
    %3370 = vmatpush1.msra.mxu0 0.0
    %3371 = vmatprep.subr.mxu0 0.0
    %3372 = vmatpush1.msra.mxu0 0.0
    %3373 = vmatprep.subr.mxu0 0.0
    %3374 = vmatpush1.msra.mxu0 0.0
    %3375 = vmatprep.subr.mxu0 0.0
    %3376 = vmatpush1.msra.mxu0 0.0
    %3377 = vmatprep.subr.mxu0 0.0
    %3378 = vmatpush1.msra.mxu0 0.0
    %3379 = vmatprep.subr.mxu0 0.0
    %3380 = vmatpush1.msra.mxu0 0.0
    %3381 = vmatprep.subr.mxu0 0.0
    %3382 = vmatpush1.msra.mxu0 %v3350
    %3383 = vmatprep.subr.mxu0 0.0
    %3384 = vmatpush2.msra.mxu0 0.0
    %3385 = vmatprep.subr.mxu0 0.0
    %3386 = vmatpush2.msra.mxu0 0.0
    %3387 = vmatprep.subr.mxu0 0.0
    %3388 = vmatpush2.msra.mxu0 0.0
    %3389 = vmatprep.subr.mxu0 0.0
    %3390 = vmatpush2.msra.mxu0 0.0
    %3391 = vmatprep.subr.mxu0 0.0
    %3392 = vmatpush2.msra.mxu0 0.0
    %3393 = vmatprep.subr.mxu0 0.0
    %3394 = vmatpush2.msra.mxu0 0.0
    %3395 = vmatprep.subr.mxu0 0.0
    %3396 = vmatpush2.msra.mxu0 0.0
    %3397 = vmatprep.subr.mxu0 0.0
    %3398 = vmatpush2.msra.mxu0 0.0
    %3399 = vmatprep.subr.mxu0 0.0
    %3400 = vmatpush2.msra.mxu0 0.0
    %3401 = vmatprep.subr.mxu0 0.0
    %3402 = vmatpush2.msra.mxu0 0.0
    %3403 = vmatprep.subr.mxu0 0.0
    %3404 = vmatpush2.msra.mxu0 0.0
    %3405 = vmatprep.subr.mxu0 0.0
    %3406 = vmatpush2.msra.mxu0 0.0
    %3407 = vmatprep.subr.mxu0 0.0
    %3408 = vmatpush2.msra.mxu0 0.0
    %3409 = vmatprep.subr.mxu0 0.0
    %3410 = vmatpush2.msra.mxu0 0.0
    %3411 = vmatprep.subr.mxu0 0.0
    %3412 = vmatpush2.msra.mxu0 0.0
    %3413 = vmatprep.subr.mxu0 0.0
    %3414 = vmatpush2.msra.mxu0 0.0
    %3415 = vmatprep.mubr.f32.mxu0 0.0
    %3416 = vmatmul.mubr.f32.gmra.mxu0 %v2162
    %v3417 = vpop.f32.mrf.mxu0
    %v3418 = vadd.f32 0.0, %v3417
    %v3419 = vpop.f32.mrf.mxu0
    %3420 = vdwg.mxu0
    %v3421 = vadd.f32 %v1865, %v3418
    %v3422 = vadd.f32 %v3421, %v2238
    %v3423 = vrot.slane %v2001, 4
    %v3424 = vadd.f32 %v2001, %v3423
    %v3425 = vrot.slane %v3424, 2
    %v3426 = vadd.f32 %v3424, %v3425
    %v3427 = vrot.slane %v3426, 1
    %v3428 = vadd.f32 %v3426, %v3427
    %v3429 = vmul.f32 %v3428, %v71
    %v3430 = vmul.f32 %v2001, %v2001
    %v3431 = vrot.slane %v3430, 4
    %v3432 = vadd.f32 %v3430, %v3431
    %v3433 = vrot.slane %v3432, 2
    %v3434 = vadd.f32 %v3432, %v3433
    %v3435 = vrot.slane %v3434, 1
    %v3436 = vadd.f32 %v3434, %v3435
    %v3437 = vmul.f32 %v3436, %v71
    %v3438 = vmul.f32 %v3429, %v3429
    %v3439 = vsub.f32 %v3437, %v3438
    %v3440 = vsub.f32 %v2001, %v3429
    %v3441 = vadd.f32 %v3439, 1e-05
    %v3442 = vrsqrt.pop %v3441
    %v3443 = vmul.f32 %v3440, %v3442
    %v3444 = vmul.f32 %v3443, %v2034
    %v3445 = vadd.f32 %v3444, %v2040
    %3446 = vmatprep.subr.mxu0 0.0
    %3447 = vmatpush1.msra.mxu0 0.0
    %3448 = vmatprep.subr.mxu0 0.0
    %3449 = vmatpush1.msra.mxu0 0.0
    %3450 = vmatprep.subr.mxu0 0.0
    %3451 = vmatpush1.msra.mxu0 0.0
    %3452 = vmatprep.subr.mxu0 0.0
    %3453 = vmatpush1.msra.mxu0 0.0
    %3454 = vmatprep.subr.mxu0 0.0
    %3455 = vmatpush1.msra.mxu0 0.0
    %3456 = vmatprep.subr.mxu0 0.0
    %3457 = vmatpush1.msra.mxu0 0.0
    %3458 = vmatprep.subr.mxu0 0.0
    %3459 = vmatpush1.msra.mxu0 0.0
    %3460 = vmatprep.subr.mxu0 0.0
    %3461 = vmatpush1.msra.mxu0 0.0
    %3462 = vmatprep.subr.mxu0 0.0
    %3463 = vmatpush1.msra.mxu0 0.0
    %3464 = vmatprep.subr.mxu0 0.0
    %3465 = vmatpush1.msra.mxu0 0.0
    %3466 = vmatprep.subr.mxu0 0.0
    %3467 = vmatpush1.msra.mxu0 0.0
    %3468 = vmatprep.subr.mxu0 0.0
    %3469 = vmatpush1.msra.mxu0 0.0
    %3470 = vmatprep.subr.mxu0 0.0
    %3471 = vmatpush1.msra.mxu0 0.0
    %3472 = vmatprep.subr.mxu0 0.0
    %3473 = vmatpush1.msra.mxu0 0.0
    %3474 = vmatprep.subr.mxu0 0.0
    %3475 = vmatpush1.msra.mxu0 0.0
    %3476 = vmatprep.subr.mxu0 0.0
    %3477 = vmatpush1.msra.mxu0 %v3445
    %3478 = vmatprep.subr.mxu0 0.0
    %3479 = vmatpush2.msra.mxu0 0.0
    %3480 = vmatprep.subr.mxu0 0.0
    %3481 = vmatpush2.msra.mxu0 0.0
    %3482 = vmatprep.subr.mxu0 0.0
    %3483 = vmatpush2.msra.mxu0 0.0
    %3484 = vmatprep.subr.mxu0 0.0
    %3485 = vmatpush2.msra.mxu0 0.0
    %3486 = vmatprep.subr.mxu0 0.0
    %3487 = vmatpush2.msra.mxu0 0.0
    %3488 = vmatprep.subr.mxu0 0.0
    %3489 = vmatpush2.msra.mxu0 0.0
    %3490 = vmatprep.subr.mxu0 0.0
    %3491 = vmatpush2.msra.mxu0 0.0
    %3492 = vmatprep.subr.mxu0 0.0
    %3493 = vmatpush2.msra.mxu0 0.0
    %3494 = vmatprep.subr.mxu0 0.0
    %3495 = vmatpush2.msra.mxu0 0.0
    %3496 = vmatprep.subr.mxu0 0.0
    %3497 = vmatpush2.msra.mxu0 0.0
    %3498 = vmatprep.subr.mxu0 0.0
    %3499 = vmatpush2.msra.mxu0 0.0
    %3500 = vmatprep.subr.mxu0 0.0
    %3501 = vmatpush2.msra.mxu0 0.0
    %3502 = vmatprep.subr.mxu0 0.0
    %3503 = vmatpush2.msra.mxu0 0.0
    %3504 = vmatprep.subr.mxu0 0.0
    %3505 = vmatpush2.msra.mxu0 0.0
    %3506 = vmatprep.subr.mxu0 0.0
    %3507 = vmatpush2.msra.mxu0 0.0
    %3508 = vmatprep.subr.mxu0 0.0
    %3509 = vmatpush2.msra.mxu0 0.0
    %3510 = vmatprep.mubr.f32.mxu0 0.0
    %3511 = vmatmul.mubr.f32.gmra.mxu0 %v2054
    %v3512 = vpop.f32.mrf.mxu0
    %v3513 = vadd.f32 %v2046, %v3512
    %v3514 = vpop.f32.mrf.mxu0
    %3515 = vmatprep.mubr.f32.mxu0 0.0
    %3516 = vmatmul.mubr.f32.gmra.mxu0 %v2057
    %v3517 = vpop.f32.mrf.mxu0
    %v3518 = vadd.f32 %v2051, %v3517
    %v3519 = vpop.f32.mrf.mxu0
    %3520 = vdwg.mxu0
    %v3521 = vmul.f32 %v3518, 0.5
    %v3522 = vmul.f32 %v3518, 0.70710677
    %vm3523 = vcmp.ge.f32.partialorder %v3522, 0.0
    %v3524 = vsel %vm3523, 1.0, -1.0
    %v3525 = vand.u32 2147483647, %v3522
    %v3526 = vmul.f32 %v3525, 0.3275911
    %v3527 = vadd.f32 %v3526, 1.0
    %v3528 = vrcp.pop %v3527
    %v3529 = vmul.f32 %v3528, 1.0614054
    %v3530 = vadd.f32 %v3529, -1.4531521
    %v3531 = vmul.f32 %v3530, %v3528
    %v3532 = vadd.f32 %v3531, 1.4214138
    %v3533 = vmul.f32 %v3532, %v3528
    %v3534 = vadd.f32 %v3533, -0.28449672
    %v3535 = vmul.f32 %v3534, %v3528
    %v3536 = vadd.f32 %v3535, 0.2548296
    %v3537 = vmul.f32 %v3536, %v3528
    %v3538 = vsub.f32 0.0, %v3525
    %v3539 = vmul.f32 %v3538, %v3525
    %v3540 = vmul.f32 %v3539, 1.442695
    %v3541 = vpow.pop %v3540
    %v3542 = vmul.f32 %v3537, %v3541
    %v3543 = vsub.f32 1.0, %v3542
    %v3544 = vmul.f32 %v3524, %v3543
    %v3545 = vadd.f32 %v3544, 1.0
    %v3546 = vmul.f32 %v3521, %v3545
    %v3547 = vmul.f32 %v3546, %v3513
    %3548 = vmatprep.subr.mxu0 0.0
    %3549 = vmatpush1.msra.mxu0 0.0
    %3550 = vmatprep.subr.mxu0 0.0
    %3551 = vmatpush1.msra.mxu0 0.0
    %3552 = vmatprep.subr.mxu0 0.0
    %3553 = vmatpush1.msra.mxu0 0.0
    %3554 = vmatprep.subr.mxu0 0.0
    %3555 = vmatpush1.msra.mxu0 0.0
    %3556 = vmatprep.subr.mxu0 0.0
    %3557 = vmatpush1.msra.mxu0 0.0
    %3558 = vmatprep.subr.mxu0 0.0
    %3559 = vmatpush1.msra.mxu0 0.0
    %3560 = vmatprep.subr.mxu0 0.0
    %3561 = vmatpush1.msra.mxu0 0.0
    %3562 = vmatprep.subr.mxu0 0.0
    %3563 = vmatpush1.msra.mxu0 0.0
    %3564 = vmatprep.subr.mxu0 0.0
    %3565 = vmatpush1.msra.mxu0 0.0
    %3566 = vmatprep.subr.mxu0 0.0
    %3567 = vmatpush1.msra.mxu0 0.0
    %3568 = vmatprep.subr.mxu0 0.0
    %3569 = vmatpush1.msra.mxu0 0.0
    %3570 = vmatprep.subr.mxu0 0.0
    %3571 = vmatpush1.msra.mxu0 0.0
    %3572 = vmatprep.subr.mxu0 0.0
    %3573 = vmatpush1.msra.mxu0 0.0
    %3574 = vmatprep.subr.mxu0 0.0
    %3575 = vmatpush1.msra.mxu0 0.0
    %3576 = vmatprep.subr.mxu0 0.0
    %3577 = vmatpush1.msra.mxu0 0.0
    %3578 = vmatprep.subr.mxu0 0.0
    %3579 = vmatpush1.msra.mxu0 %v3547
    %3580 = vmatprep.subr.mxu0 0.0
    %3581 = vmatpush2.msra.mxu0 0.0
    %3582 = vmatprep.subr.mxu0 0.0
    %3583 = vmatpush2.msra.mxu0 0.0
    %3584 = vmatprep.subr.mxu0 0.0
    %3585 = vmatpush2.msra.mxu0 0.0
    %3586 = vmatprep.subr.mxu0 0.0
    %3587 = vmatpush2.msra.mxu0 0.0
    %3588 = vmatprep.subr.mxu0 0.0
    %3589 = vmatpush2.msra.mxu0 0.0
    %3590 = vmatprep.subr.mxu0 0.0
    %3591 = vmatpush2.msra.mxu0 0.0
    %3592 = vmatprep.subr.mxu0 0.0
    %3593 = vmatpush2.msra.mxu0 0.0
    %3594 = vmatprep.subr.mxu0 0.0
    %3595 = vmatpush2.msra.mxu0 0.0
    %3596 = vmatprep.subr.mxu0 0.0
    %3597 = vmatpush2.msra.mxu0 0.0
    %3598 = vmatprep.subr.mxu0 0.0
    %3599 = vmatpush2.msra.mxu0 0.0
    %3600 = vmatprep.subr.mxu0 0.0
    %3601 = vmatpush2.msra.mxu0 0.0
    %3602 = vmatprep.subr.mxu0 0.0
    %3603 = vmatpush2.msra.mxu0 0.0
    %3604 = vmatprep.subr.mxu0 0.0
    %3605 = vmatpush2.msra.mxu0 0.0
    %3606 = vmatprep.subr.mxu0 0.0
    %3607 = vmatpush2.msra.mxu0 0.0
    %3608 = vmatprep.subr.mxu0 0.0
    %3609 = vmatpush2.msra.mxu0 0.0
    %3610 = vmatprep.subr.mxu0 0.0
    %3611 = vmatpush2.msra.mxu0 0.0
    %3612 = vmatprep.mubr.f32.mxu0 0.0
    %3613 = vmatmul.mubr.f32.gmra.mxu0 %v2162
    %v3614 = vpop.f32.mrf.mxu0
    %v3615 = vadd.f32 0.0, %v3614
    %v3616 = vpop.f32.mrf.mxu0
    %3617 = vdwg.mxu0
    %v3618 = vadd.f32 %v2001, %v3615
    %v3619 = vadd.f32 %v3618, %v2238
    %v3620 = vld [vmem:[%s11] sm:$0xff]
    %v3621 = vld [vmem:[%s11 + $0x8] sm:$0xff]
    %s3622 = scalar_lea.vmem %s11, 16
    %v3623 = vld [vmem:[%s3622] sm:$0xff]
    %v3624 = vld [vmem:[%s3622 + $0x8] sm:$0xff]
    %v3626 = vsel %vm99, %v3623, 0
    %v3629 = vsel %vm99, %v3624, 0
    %3631 = vmatprep.subr.mxu0 0.0
    %3632 = vmatpush1.msra.mxu0 0.0
    %3633 = vmatprep.subr.mxu0 0.0
    %3634 = vmatpush1.msra.mxu0 0.0
    %3635 = vmatprep.subr.mxu0 0.0
    %3636 = vmatpush1.msra.mxu0 0.0
    %3637 = vmatprep.subr.mxu0 0.0
    %3638 = vmatpush1.msra.mxu0 0.0
    %3639 = vmatprep.subr.mxu0 0.0
    %3640 = vmatpush1.msra.mxu0 0.0
    %3641 = vmatprep.subr.mxu0 0.0
    %3642 = vmatpush1.msra.mxu0 0.0
    %3643 = vmatprep.subr.mxu0 0.0
    %3644 = vmatpush1.msra.mxu0 0.0
    %3645 = vmatprep.subr.mxu0 0.0
    %3646 = vmatpush1.msra.mxu0 0.0
    %3647 = vmatprep.subr.mxu0 0.0
    %3648 = vmatpush1.msra.mxu0 0.0
    %3649 = vmatprep.subr.mxu0 0.0
    %3650 = vmatpush1.msra.mxu0 0.0
    %3651 = vmatprep.subr.mxu0 0.0
    %3652 = vmatpush1.msra.mxu0 0.0
    %3653 = vmatprep.subr.mxu0 0.0
    %3654 = vmatpush1.msra.mxu0 0.0
    %3655 = vmatprep.subr.mxu0 0.0
    %3656 = vmatpush1.msra.mxu0 0.0
    %3657 = vmatprep.subr.mxu0 0.0
    %3658 = vmatpush1.msra.mxu0 0.0
    %3659 = vmatprep.subr.mxu0 0.0
    %3660 = vmatpush1.msra.mxu0 0.0
    %3661 = vmatprep.subr.mxu0 0.0
    %3662 = vmatpush1.msra.mxu0 %v2437
    %3663 = vmatprep.subr.mxu0 0.0
    %3664 = vmatpush2.msra.mxu0 0.0
    %3665 = vmatprep.subr.mxu0 0.0
    %3666 = vmatpush2.msra.mxu0 0.0
    %3667 = vmatprep.subr.mxu0 0.0
    %3668 = vmatpush2.msra.mxu0 0.0
    %3669 = vmatprep.subr.mxu0 0.0
    %3670 = vmatpush2.msra.mxu0 0.0
    %3671 = vmatprep.subr.mxu0 0.0
    %3672 = vmatpush2.msra.mxu0 0.0
    %3673 = vmatprep.subr.mxu0 0.0
    %3674 = vmatpush2.msra.mxu0 0.0
    %3675 = vmatprep.subr.mxu0 0.0
    %3676 = vmatpush2.msra.mxu0 0.0
    %3677 = vmatprep.subr.mxu0 0.0
    %3678 = vmatpush2.msra.mxu0 0.0
    %3679 = vmatprep.subr.mxu0 0.0
    %3680 = vmatpush2.msra.mxu0 0.0
    %3681 = vmatprep.subr.mxu0 0.0
    %3682 = vmatpush2.msra.mxu0 0.0
    %3683 = vmatprep.subr.mxu0 0.0
    %3684 = vmatpush2.msra.mxu0 0.0
    %3685 = vmatprep.subr.mxu0 0.0
    %3686 = vmatpush2.msra.mxu0 0.0
    %3687 = vmatprep.subr.mxu0 0.0
    %3688 = vmatpush2.msra.mxu0 0.0
    %3689 = vmatprep.subr.mxu0 0.0
    %3690 = vmatpush2.msra.mxu0 0.0
    %3691 = vmatprep.subr.mxu0 0.0
    %3692 = vmatpush2.msra.mxu0 0.0
    %3693 = vmatprep.subr.mxu0 0.0
    %3694 = vmatpush2.msra.mxu0 0.0
    %3695 = vmatprep.mubr.f32.mxu0 0.0
    %3696 = vmatmul.mubr.f32.gmra.mxu0 %v3626
    %v3697 = vpop.f32.mrf.mxu0
    %v3698 = vadd.f32 0.0, %v3697
    %v3699 = vpop.f32.mrf.mxu0
    %3700 = vmatprep.mubr.f32.mxu0 0.0
    %3701 = vmatmul.mubr.f32.gmra.mxu0 %v3629
    %v3702 = vpop.f32.mrf.mxu0
    %v3703 = vadd.f32 0.0, %v3702
    %v3704 = vpop.f32.mrf.mxu0
    %3705 = vdwg.mxu0
    %v3707 = vsel %vm99, %v3620, 0
    %v3710 = vsel %vm99, %v3621, 0
    %3712 = vmatprep.subr.mxu0 0.0
    %3713 = vmatpush1.msra.mxu0 0.0
    %3714 = vmatprep.subr.mxu0 0.0
    %3715 = vmatpush1.msra.mxu0 0.0
    %3716 = vmatprep.subr.mxu0 0.0
    %3717 = vmatpush1.msra.mxu0 0.0
    %3718 = vmatprep.subr.mxu0 0.0
    %3719 = vmatpush1.msra.mxu0 0.0
    %3720 = vmatprep.subr.mxu0 0.0
    %3721 = vmatpush1.msra.mxu0 0.0
    %3722 = vmatprep.subr.mxu0 0.0
    %3723 = vmatpush1.msra.mxu0 0.0
    %3724 = vmatprep.subr.mxu0 0.0
    %3725 = vmatpush1.msra.mxu0 0.0
    %3726 = vmatprep.subr.mxu0 0.0
    %3727 = vmatpush1.msra.mxu0 0.0
    %3728 = vmatprep.subr.mxu0 0.0
    %3729 = vmatpush1.msra.mxu0 0.0
    %3730 = vmatprep.subr.mxu0 0.0
    %3731 = vmatpush1.msra.mxu0 0.0
    %3732 = vmatprep.subr.mxu0 0.0
    %3733 = vmatpush1.msra.mxu0 0.0
    %3734 = vmatprep.subr.mxu0 0.0
    %3735 = vmatpush1.msra.mxu0 0.0
    %3736 = vmatprep.subr.mxu0 0.0
    %3737 = vmatpush1.msra.mxu0 0.0
    %3738 = vmatprep.subr.mxu0 0.0
    %3739 = vmatpush1.msra.mxu0 0.0
    %3740 = vmatprep.subr.mxu0 0.0
    %3741 = vmatpush1.msra.mxu0 0.0
    %3742 = vmatprep.subr.mxu0 0.0
    %3743 = vmatpush1.msra.mxu0 %v2240
    %3744 = vmatprep.subr.mxu0 0.0
    %3745 = vmatpush2.msra.mxu0 0.0
    %3746 = vmatprep.subr.mxu0 0.0
    %3747 = vmatpush2.msra.mxu0 0.0
    %3748 = vmatprep.subr.mxu0 0.0
    %3749 = vmatpush2.msra.mxu0 0.0
    %3750 = vmatprep.subr.mxu0 0.0
    %3751 = vmatpush2.msra.mxu0 0.0
    %3752 = vmatprep.subr.mxu0 0.0
    %3753 = vmatpush2.msra.mxu0 0.0
    %3754 = vmatprep.subr.mxu0 0.0
    %3755 = vmatpush2.msra.mxu0 0.0
    %3756 = vmatprep.subr.mxu0 0.0
    %3757 = vmatpush2.msra.mxu0 0.0
    %3758 = vmatprep.subr.mxu0 0.0
    %3759 = vmatpush2.msra.mxu0 0.0
    %3760 = vmatprep.subr.mxu0 0.0
    %3761 = vmatpush2.msra.mxu0 0.0
    %3762 = vmatprep.subr.mxu0 0.0
    %3763 = vmatpush2.msra.mxu0 0.0
    %3764 = vmatprep.subr.mxu0 0.0
    %3765 = vmatpush2.msra.mxu0 0.0
    %3766 = vmatprep.subr.mxu0 0.0
    %3767 = vmatpush2.msra.mxu0 0.0
    %3768 = vmatprep.subr.mxu0 0.0
    %3769 = vmatpush2.msra.mxu0 0.0
    %3770 = vmatprep.subr.mxu0 0.0
    %3771 = vmatpush2.msra.mxu0 0.0
    %3772 = vmatprep.subr.mxu0 0.0
    %3773 = vmatpush2.msra.mxu0 0.0
    %3774 = vmatprep.subr.mxu0 0.0
    %3775 = vmatpush2.msra.mxu0 0.0
    %3776 = vmatprep.mubr.f32.mxu0 0.0
    %3777 = vmatmul.mubr.f32.gmra.mxu0 %v3707
    %v3778 = vpop.f32.mrf.mxu0
    %v3779 = vadd.f32 %v3698, %v3778
    %v3780 = vpop.f32.mrf.mxu0
    %3781 = vmatprep.mubr.f32.mxu0 0.0
    %3782 = vmatmul.mubr.f32.gmra.mxu0 %v3710
    %v3783 = vpop.f32.mrf.mxu0
    %v3784 = vadd.f32 %v3703, %v3783
    %v3785 = vpop.f32.mrf.mxu0
    %3786 = vdwg.mxu0
    %s3787 = scalar_lea.vmem %s11, 32
    %v3788 = vld [vmem:[%s3787] sm:$0xff]
    %v3789 = vld [vmem:[%s3787 + $0x8] sm:$0xff]
    %v3791 = vsel %vm99, %v3788, 0
    %v3794 = vsel %vm99, %v3789, 0
    %3796 = vmatprep.subr.mxu0 0.0
    %3797 = vmatpush1.msra.mxu0 0.0
    %3798 = vmatprep.subr.mxu0 0.0
    %3799 = vmatpush1.msra.mxu0 0.0
    %3800 = vmatprep.subr.mxu0 0.0
    %3801 = vmatpush1.msra.mxu0 0.0
    %3802 = vmatprep.subr.mxu0 0.0
    %3803 = vmatpush1.msra.mxu0 0.0
    %3804 = vmatprep.subr.mxu0 0.0
    %3805 = vmatpush1.msra.mxu0 0.0
    %3806 = vmatprep.subr.mxu0 0.0
    %3807 = vmatpush1.msra.mxu0 0.0
    %3808 = vmatprep.subr.mxu0 0.0
    %3809 = vmatpush1.msra.mxu0 0.0
    %3810 = vmatprep.subr.mxu0 0.0
    %3811 = vmatpush1.msra.mxu0 0.0
    %3812 = vmatprep.subr.mxu0 0.0
    %3813 = vmatpush1.msra.mxu0 0.0
    %3814 = vmatprep.subr.mxu0 0.0
    %3815 = vmatpush1.msra.mxu0 0.0
    %3816 = vmatprep.subr.mxu0 0.0
    %3817 = vmatpush1.msra.mxu0 0.0
    %3818 = vmatprep.subr.mxu0 0.0
    %3819 = vmatpush1.msra.mxu0 0.0
    %3820 = vmatprep.subr.mxu0 0.0
    %3821 = vmatpush1.msra.mxu0 0.0
    %3822 = vmatprep.subr.mxu0 0.0
    %3823 = vmatpush1.msra.mxu0 0.0
    %3824 = vmatprep.subr.mxu0 0.0
    %3825 = vmatpush1.msra.mxu0 0.0
    %3826 = vmatprep.subr.mxu0 0.0
    %3827 = vmatpush1.msra.mxu0 %v2634
    %3828 = vmatprep.subr.mxu0 0.0
    %3829 = vmatpush2.msra.mxu0 0.0
    %3830 = vmatprep.subr.mxu0 0.0
    %3831 = vmatpush2.msra.mxu0 0.0
    %3832 = vmatprep.subr.mxu0 0.0
    %3833 = vmatpush2.msra.mxu0 0.0
    %3834 = vmatprep.subr.mxu0 0.0
    %3835 = vmatpush2.msra.mxu0 0.0
    %3836 = vmatprep.subr.mxu0 0.0
    %3837 = vmatpush2.msra.mxu0 0.0
    %3838 = vmatprep.subr.mxu0 0.0
    %3839 = vmatpush2.msra.mxu0 0.0
    %3840 = vmatprep.subr.mxu0 0.0
    %3841 = vmatpush2.msra.mxu0 0.0
    %3842 = vmatprep.subr.mxu0 0.0
    %3843 = vmatpush2.msra.mxu0 0.0
    %3844 = vmatprep.subr.mxu0 0.0
    %3845 = vmatpush2.msra.mxu0 0.0
    %3846 = vmatprep.subr.mxu0 0.0
    %3847 = vmatpush2.msra.mxu0 0.0
    %3848 = vmatprep.subr.mxu0 0.0
    %3849 = vmatpush2.msra.mxu0 0.0
    %3850 = vmatprep.subr.mxu0 0.0
    %3851 = vmatpush2.msra.mxu0 0.0
    %3852 = vmatprep.subr.mxu0 0.0
    %3853 = vmatpush2.msra.mxu0 0.0
    %3854 = vmatprep.subr.mxu0 0.0
    %3855 = vmatpush2.msra.mxu0 0.0
    %3856 = vmatprep.subr.mxu0 0.0
    %3857 = vmatpush2.msra.mxu0 0.0
    %3858 = vmatprep.subr.mxu0 0.0
    %3859 = vmatpush2.msra.mxu0 0.0
    %3860 = vmatprep.mubr.f32.mxu0 0.0
    %3861 = vmatmul.mubr.f32.gmra.mxu0 %v3791
    %v3862 = vpop.f32.mrf.mxu0
    %v3863 = vadd.f32 0.0, %v3862
    %v3864 = vpop.f32.mrf.mxu0
    %3865 = vmatprep.mubr.f32.mxu0 0.0
    %3866 = vmatmul.mubr.f32.gmra.mxu0 %v3794
    %v3867 = vpop.f32.mrf.mxu0
    %v3868 = vadd.f32 0.0, %v3867
    %v3869 = vpop.f32.mrf.mxu0
    %3870 = vdwg.mxu0
    %v3871 = vadd.f32 %v3779, %v3863
    %v3872 = vadd.f32 %v3784, %v3868
    %s3873 = scalar_lea.vmem %s11, 48
    %v3874 = vld [vmem:[%s3873] sm:$0xff]
    %v3875 = vld [vmem:[%s3873 + $0x8] sm:$0xff]
    %v3877 = vsel %vm99, %v3874, 0
    %v3880 = vsel %vm99, %v3875, 0
    %3882 = vmatprep.subr.mxu0 0.0
    %3883 = vmatpush1.msra.mxu0 0.0
    %3884 = vmatprep.subr.mxu0 0.0
    %3885 = vmatpush1.msra.mxu0 0.0
    %3886 = vmatprep.subr.mxu0 0.0
    %3887 = vmatpush1.msra.mxu0 0.0
    %3888 = vmatprep.subr.mxu0 0.0
    %3889 = vmatpush1.msra.mxu0 0.0
    %3890 = vmatprep.subr.mxu0 0.0
    %3891 = vmatpush1.msra.mxu0 0.0
    %3892 = vmatprep.subr.mxu0 0.0
    %3893 = vmatpush1.msra.mxu0 0.0
    %3894 = vmatprep.subr.mxu0 0.0
    %3895 = vmatpush1.msra.mxu0 0.0
    %3896 = vmatprep.subr.mxu0 0.0
    %3897 = vmatpush1.msra.mxu0 0.0
    %3898 = vmatprep.subr.mxu0 0.0
    %3899 = vmatpush1.msra.mxu0 0.0
    %3900 = vmatprep.subr.mxu0 0.0
    %3901 = vmatpush1.msra.mxu0 0.0
    %3902 = vmatprep.subr.mxu0 0.0
    %3903 = vmatpush1.msra.mxu0 0.0
    %3904 = vmatprep.subr.mxu0 0.0
    %3905 = vmatpush1.msra.mxu0 0.0
    %3906 = vmatprep.subr.mxu0 0.0
    %3907 = vmatpush1.msra.mxu0 0.0
    %3908 = vmatprep.subr.mxu0 0.0
    %3909 = vmatpush1.msra.mxu0 0.0
    %3910 = vmatprep.subr.mxu0 0.0
    %3911 = vmatpush1.msra.mxu0 0.0
    %3912 = vmatprep.subr.mxu0 0.0
    %3913 = vmatpush1.msra.mxu0 %v2831
    %3914 = vmatprep.subr.mxu0 0.0
    %3915 = vmatpush2.msra.mxu0 0.0
    %3916 = vmatprep.subr.mxu0 0.0
    %3917 = vmatpush2.msra.mxu0 0.0
    %3918 = vmatprep.subr.mxu0 0.0
    %3919 = vmatpush2.msra.mxu0 0.0
    %3920 = vmatprep.subr.mxu0 0.0
    %3921 = vmatpush2.msra.mxu0 0.0
    %3922 = vmatprep.subr.mxu0 0.0
    %3923 = vmatpush2.msra.mxu0 0.0
    %3924 = vmatprep.subr.mxu0 0.0
    %3925 = vmatpush2.msra.mxu0 0.0
    %3926 = vmatprep.subr.mxu0 0.0
    %3927 = vmatpush2.msra.mxu0 0.0
    %3928 = vmatprep.subr.mxu0 0.0
    %3929 = vmatpush2.msra.mxu0 0.0
    %3930 = vmatprep.subr.mxu0 0.0
    %3931 = vmatpush2.msra.mxu0 0.0
    %3932 = vmatprep.subr.mxu0 0.0
    %3933 = vmatpush2.msra.mxu0 0.0
    %3934 = vmatprep.subr.mxu0 0.0
    %3935 = vmatpush2.msra.mxu0 0.0
    %3936 = vmatprep.subr.mxu0 0.0
    %3937 = vmatpush2.msra.mxu0 0.0
    %3938 = vmatprep.subr.mxu0 0.0
    %3939 = vmatpush2.msra.mxu0 0.0
    %3940 = vmatprep.subr.mxu0 0.0
    %3941 = vmatpush2.msra.mxu0 0.0
    %3942 = vmatprep.subr.mxu0 0.0
    %3943 = vmatpush2.msra.mxu0 0.0
    %3944 = vmatprep.subr.mxu0 0.0
    %3945 = vmatpush2.msra.mxu0 0.0
    %3946 = vmatprep.mubr.f32.mxu0 0.0
    %3947 = vmatmul.mubr.f32.gmra.mxu0 %v3877
    %v3948 = vpop.f32.mrf.mxu0
    %v3949 = vadd.f32 0.0, %v3948
    %v3950 = vpop.f32.mrf.mxu0
    %3951 = vmatprep.mubr.f32.mxu0 0.0
    %3952 = vmatmul.mubr.f32.gmra.mxu0 %v3880
    %v3953 = vpop.f32.mrf.mxu0
    %v3954 = vadd.f32 0.0, %v3953
    %v3955 = vpop.f32.mrf.mxu0
    %3956 = vdwg.mxu0
    %v3957 = vadd.f32 %v3871, %v3949
    %v3958 = vadd.f32 %v3872, %v3954
    %s3959 = scalar_lea.vmem %s11, 64
    %v3960 = vld [vmem:[%s3959] sm:$0xff]
    %v3961 = vld [vmem:[%s3959 + $0x8] sm:$0xff]
    %v3963 = vsel %vm99, %v3960, 0
    %v3966 = vsel %vm99, %v3961, 0
    %3968 = vmatprep.subr.mxu0 0.0
    %3969 = vmatpush1.msra.mxu0 0.0
    %3970 = vmatprep.subr.mxu0 0.0
    %3971 = vmatpush1.msra.mxu0 0.0
    %3972 = vmatprep.subr.mxu0 0.0
    %3973 = vmatpush1.msra.mxu0 0.0
    %3974 = vmatprep.subr.mxu0 0.0
    %3975 = vmatpush1.msra.mxu0 0.0
    %3976 = vmatprep.subr.mxu0 0.0
    %3977 = vmatpush1.msra.mxu0 0.0
    %3978 = vmatprep.subr.mxu0 0.0
    %3979 = vmatpush1.msra.mxu0 0.0
    %3980 = vmatprep.subr.mxu0 0.0
    %3981 = vmatpush1.msra.mxu0 0.0
    %3982 = vmatprep.subr.mxu0 0.0
    %3983 = vmatpush1.msra.mxu0 0.0
    %3984 = vmatprep.subr.mxu0 0.0
    %3985 = vmatpush1.msra.mxu0 0.0
    %3986 = vmatprep.subr.mxu0 0.0
    %3987 = vmatpush1.msra.mxu0 0.0
    %3988 = vmatprep.subr.mxu0 0.0
    %3989 = vmatpush1.msra.mxu0 0.0
    %3990 = vmatprep.subr.mxu0 0.0
    %3991 = vmatpush1.msra.mxu0 0.0
    %3992 = vmatprep.subr.mxu0 0.0
    %3993 = vmatpush1.msra.mxu0 0.0
    %3994 = vmatprep.subr.mxu0 0.0
    %3995 = vmatpush1.msra.mxu0 0.0
    %3996 = vmatprep.subr.mxu0 0.0
    %3997 = vmatpush1.msra.mxu0 0.0
    %3998 = vmatprep.subr.mxu0 0.0
    %3999 = vmatpush1.msra.mxu0 %v3028
    %4000 = vmatprep.subr.mxu0 0.0
    %4001 = vmatpush2.msra.mxu0 0.0
    %4002 = vmatprep.subr.mxu0 0.0
    %4003 = vmatpush2.msra.mxu0 0.0
    %4004 = vmatprep.subr.mxu0 0.0
    %4005 = vmatpush2.msra.mxu0 0.0
    %4006 = vmatprep.subr.mxu0 0.0
    %4007 = vmatpush2.msra.mxu0 0.0
    %4008 = vmatprep.subr.mxu0 0.0
    %4009 = vmatpush2.msra.mxu0 0.0
    %4010 = vmatprep.subr.mxu0 0.0
    %4011 = vmatpush2.msra.mxu0 0.0
    %4012 = vmatprep.subr.mxu0 0.0
    %4013 = vmatpush2.msra.mxu0 0.0
    %4014 = vmatprep.subr.mxu0 0.0
    %4015 = vmatpush2.msra.mxu0 0.0
    %4016 = vmatprep.subr.mxu0 0.0
    %4017 = vmatpush2.msra.mxu0 0.0
    %4018 = vmatprep.subr.mxu0 0.0
    %4019 = vmatpush2.msra.mxu0 0.0
    %4020 = vmatprep.subr.mxu0 0.0
    %4021 = vmatpush2.msra.mxu0 0.0
    %4022 = vmatprep.subr.mxu0 0.0
    %4023 = vmatpush2.msra.mxu0 0.0
    %4024 = vmatprep.subr.mxu0 0.0
    %4025 = vmatpush2.msra.mxu0 0.0
    %4026 = vmatprep.subr.mxu0 0.0
    %4027 = vmatpush2.msra.mxu0 0.0
    %4028 = vmatprep.subr.mxu0 0.0
    %4029 = vmatpush2.msra.mxu0 0.0
    %4030 = vmatprep.subr.mxu0 0.0
    %4031 = vmatpush2.msra.mxu0 0.0
    %4032 = vmatprep.mubr.f32.mxu0 0.0
    %4033 = vmatmul.mubr.f32.gmra.mxu0 %v3963
    %v4034 = vpop.f32.mrf.mxu0
    %v4035 = vadd.f32 0.0, %v4034
    %v4036 = vpop.f32.mrf.mxu0
    %4037 = vmatprep.mubr.f32.mxu0 0.0
    %4038 = vmatmul.mubr.f32.gmra.mxu0 %v3966
    %v4039 = vpop.f32.mrf.mxu0
    %v4040 = vadd.f32 0.0, %v4039
    %v4041 = vpop.f32.mrf.mxu0
    %4042 = vdwg.mxu0
    %v4043 = vadd.f32 %v3957, %v4035
    %v4044 = vadd.f32 %v3958, %v4040
    %s4045 = scalar_lea.vmem %s11, 80
    %v4046 = vld [vmem:[%s4045] sm:$0xff]
    %v4047 = vld [vmem:[%s4045 + $0x8] sm:$0xff]
    %v4049 = vsel %vm99, %v4046, 0
    %v4052 = vsel %vm99, %v4047, 0
    %4054 = vmatprep.subr.mxu0 0.0
    %4055 = vmatpush1.msra.mxu0 0.0
    %4056 = vmatprep.subr.mxu0 0.0
    %4057 = vmatpush1.msra.mxu0 0.0
    %4058 = vmatprep.subr.mxu0 0.0
    %4059 = vmatpush1.msra.mxu0 0.0
    %4060 = vmatprep.subr.mxu0 0.0
    %4061 = vmatpush1.msra.mxu0 0.0
    %4062 = vmatprep.subr.mxu0 0.0
    %4063 = vmatpush1.msra.mxu0 0.0
    %4064 = vmatprep.subr.mxu0 0.0
    %4065 = vmatpush1.msra.mxu0 0.0
    %4066 = vmatprep.subr.mxu0 0.0
    %4067 = vmatpush1.msra.mxu0 0.0
    %4068 = vmatprep.subr.mxu0 0.0
    %4069 = vmatpush1.msra.mxu0 0.0
    %4070 = vmatprep.subr.mxu0 0.0
    %4071 = vmatpush1.msra.mxu0 0.0
    %4072 = vmatprep.subr.mxu0 0.0
    %4073 = vmatpush1.msra.mxu0 0.0
    %4074 = vmatprep.subr.mxu0 0.0
    %4075 = vmatpush1.msra.mxu0 0.0
    %4076 = vmatprep.subr.mxu0 0.0
    %4077 = vmatpush1.msra.mxu0 0.0
    %4078 = vmatprep.subr.mxu0 0.0
    %4079 = vmatpush1.msra.mxu0 0.0
    %4080 = vmatprep.subr.mxu0 0.0
    %4081 = vmatpush1.msra.mxu0 0.0
    %4082 = vmatprep.subr.mxu0 0.0
    %4083 = vmatpush1.msra.mxu0 0.0
    %4084 = vmatprep.subr.mxu0 0.0
    %4085 = vmatpush1.msra.mxu0 %v3225
    %4086 = vmatprep.subr.mxu0 0.0
    %4087 = vmatpush2.msra.mxu0 0.0
    %4088 = vmatprep.subr.mxu0 0.0
    %4089 = vmatpush2.msra.mxu0 0.0
    %4090 = vmatprep.subr.mxu0 0.0
    %4091 = vmatpush2.msra.mxu0 0.0
    %4092 = vmatprep.subr.mxu0 0.0
    %4093 = vmatpush2.msra.mxu0 0.0
    %4094 = vmatprep.subr.mxu0 0.0
    %4095 = vmatpush2.msra.mxu0 0.0
    %4096 = vmatprep.subr.mxu0 0.0
    %4097 = vmatpush2.msra.mxu0 0.0
    %4098 = vmatprep.subr.mxu0 0.0
    %4099 = vmatpush2.msra.mxu0 0.0
    %4100 = vmatprep.subr.mxu0 0.0
    %4101 = vmatpush2.msra.mxu0 0.0
    %4102 = vmatprep.subr.mxu0 0.0
    %4103 = vmatpush2.msra.mxu0 0.0
    %4104 = vmatprep.subr.mxu0 0.0
    %4105 = vmatpush2.msra.mxu0 0.0
    %4106 = vmatprep.subr.mxu0 0.0
    %4107 = vmatpush2.msra.mxu0 0.0
    %4108 = vmatprep.subr.mxu0 0.0
    %4109 = vmatpush2.msra.mxu0 0.0
    %4110 = vmatprep.subr.mxu0 0.0
    %4111 = vmatpush2.msra.mxu0 0.0
    %4112 = vmatprep.subr.mxu0 0.0
    %4113 = vmatpush2.msra.mxu0 0.0
    %4114 = vmatprep.subr.mxu0 0.0
    %4115 = vmatpush2.msra.mxu0 0.0
    %4116 = vmatprep.subr.mxu0 0.0
    %4117 = vmatpush2.msra.mxu0 0.0
    %4118 = vmatprep.mubr.f32.mxu0 0.0
    %4119 = vmatmul.mubr.f32.gmra.mxu0 %v4049
    %v4120 = vpop.f32.mrf.mxu0
    %v4121 = vadd.f32 0.0, %v4120
    %v4122 = vpop.f32.mrf.mxu0
    %4123 = vmatprep.mubr.f32.mxu0 0.0
    %4124 = vmatmul.mubr.f32.gmra.mxu0 %v4052
    %v4125 = vpop.f32.mrf.mxu0
    %v4126 = vadd.f32 0.0, %v4125
    %v4127 = vpop.f32.mrf.mxu0
    %4128 = vdwg.mxu0
    %v4129 = vadd.f32 %v4043, %v4121
    %v4130 = vadd.f32 %v4044, %v4126
    %s4131 = scalar_lea.vmem %s11, 96
    %v4132 = vld [vmem:[%s4131] sm:$0xff]
    %v4133 = vld [vmem:[%s4131 + $0x8] sm:$0xff]
    %v4135 = vsel %vm99, %v4132, 0
    %v4138 = vsel %vm99, %v4133, 0
    %4140 = vmatprep.subr.mxu0 0.0
    %4141 = vmatpush1.msra.mxu0 0.0
    %4142 = vmatprep.subr.mxu0 0.0
    %4143 = vmatpush1.msra.mxu0 0.0
    %4144 = vmatprep.subr.mxu0 0.0
    %4145 = vmatpush1.msra.mxu0 0.0
    %4146 = vmatprep.subr.mxu0 0.0
    %4147 = vmatpush1.msra.mxu0 0.0
    %4148 = vmatprep.subr.mxu0 0.0
    %4149 = vmatpush1.msra.mxu0 0.0
    %4150 = vmatprep.subr.mxu0 0.0
    %4151 = vmatpush1.msra.mxu0 0.0
    %4152 = vmatprep.subr.mxu0 0.0
    %4153 = vmatpush1.msra.mxu0 0.0
    %4154 = vmatprep.subr.mxu0 0.0
    %4155 = vmatpush1.msra.mxu0 0.0
    %4156 = vmatprep.subr.mxu0 0.0
    %4157 = vmatpush1.msra.mxu0 0.0
    %4158 = vmatprep.subr.mxu0 0.0
    %4159 = vmatpush1.msra.mxu0 0.0
    %4160 = vmatprep.subr.mxu0 0.0
    %4161 = vmatpush1.msra.mxu0 0.0
    %4162 = vmatprep.subr.mxu0 0.0
    %4163 = vmatpush1.msra.mxu0 0.0
    %4164 = vmatprep.subr.mxu0 0.0
    %4165 = vmatpush1.msra.mxu0 0.0
    %4166 = vmatprep.subr.mxu0 0.0
    %4167 = vmatpush1.msra.mxu0 0.0
    %4168 = vmatprep.subr.mxu0 0.0
    %4169 = vmatpush1.msra.mxu0 0.0
    %4170 = vmatprep.subr.mxu0 0.0
    %4171 = vmatpush1.msra.mxu0 %v3422
    %4172 = vmatprep.subr.mxu0 0.0
    %4173 = vmatpush2.msra.mxu0 0.0
    %4174 = vmatprep.subr.mxu0 0.0
    %4175 = vmatpush2.msra.mxu0 0.0
    %4176 = vmatprep.subr.mxu0 0.0
    %4177 = vmatpush2.msra.mxu0 0.0
    %4178 = vmatprep.subr.mxu0 0.0
    %4179 = vmatpush2.msra.mxu0 0.0
    %4180 = vmatprep.subr.mxu0 0.0
    %4181 = vmatpush2.msra.mxu0 0.0
    %4182 = vmatprep.subr.mxu0 0.0
    %4183 = vmatpush2.msra.mxu0 0.0
    %4184 = vmatprep.subr.mxu0 0.0
    %4185 = vmatpush2.msra.mxu0 0.0
    %4186 = vmatprep.subr.mxu0 0.0
    %4187 = vmatpush2.msra.mxu0 0.0
    %4188 = vmatprep.subr.mxu0 0.0
    %4189 = vmatpush2.msra.mxu0 0.0
    %4190 = vmatprep.subr.mxu0 0.0
    %4191 = vmatpush2.msra.mxu0 0.0
    %4192 = vmatprep.subr.mxu0 0.0
    %4193 = vmatpush2.msra.mxu0 0.0
    %4194 = vmatprep.subr.mxu0 0.0
    %4195 = vmatpush2.msra.mxu0 0.0
    %4196 = vmatprep.subr.mxu0 0.0
    %4197 = vmatpush2.msra.mxu0 0.0
    %4198 = vmatprep.subr.mxu0 0.0
    %4199 = vmatpush2.msra.mxu0 0.0
    %4200 = vmatprep.subr.mxu0 0.0
    %4201 = vmatpush2.msra.mxu0 0.0
    %4202 = vmatprep.subr.mxu0 0.0
    %4203 = vmatpush2.msra.mxu0 0.0
    %4204 = vmatprep.mubr.f32.mxu0 0.0
    %4205 = vmatmul.mubr.f32.gmra.mxu0 %v4135
    %v4206 = vpop.f32.mrf.mxu0
    %v4207 = vadd.f32 0.0, %v4206
    %v4208 = vpop.f32.mrf.mxu0
    %4209 = vmatprep.mubr.f32.mxu0 0.0
    %4210 = vmatmul.mubr.f32.gmra.mxu0 %v4138
    %v4211 = vpop.f32.mrf.mxu0
    %v4212 = vadd.f32 0.0, %v4211
    %v4213 = vpop.f32.mrf.mxu0
    %4214 = vdwg.mxu0
    %v4215 = vadd.f32 %v4129, %v4207
    %v4216 = vadd.f32 %v4130, %v4212
    %s4217 = scalar_lea.vmem %s11, 112
    %v4218 = vld [vmem:[%s4217] sm:$0xff]
    %v4219 = vld [vmem:[%s4217 + $0x8] sm:$0xff]
    %v4221 = vsel %vm99, %v4218, 0
    %v4224 = vsel %vm99, %v4219, 0
    %4226 = vmatprep.subr.mxu0 0.0
    %4227 = vmatpush1.msra.mxu0 0.0
    %4228 = vmatprep.subr.mxu0 0.0
    %4229 = vmatpush1.msra.mxu0 0.0
    %4230 = vmatprep.subr.mxu0 0.0
    %4231 = vmatpush1.msra.mxu0 0.0
    %4232 = vmatprep.subr.mxu0 0.0
    %4233 = vmatpush1.msra.mxu0 0.0
    %4234 = vmatprep.subr.mxu0 0.0
    %4235 = vmatpush1.msra.mxu0 0.0
    %4236 = vmatprep.subr.mxu0 0.0
    %4237 = vmatpush1.msra.mxu0 0.0
    %4238 = vmatprep.subr.mxu0 0.0
    %4239 = vmatpush1.msra.mxu0 0.0
    %4240 = vmatprep.subr.mxu0 0.0
    %4241 = vmatpush1.msra.mxu0 0.0
    %4242 = vmatprep.subr.mxu0 0.0
    %4243 = vmatpush1.msra.mxu0 0.0
    %4244 = vmatprep.subr.mxu0 0.0
    %4245 = vmatpush1.msra.mxu0 0.0
    %4246 = vmatprep.subr.mxu0 0.0
    %4247 = vmatpush1.msra.mxu0 0.0
    %4248 = vmatprep.subr.mxu0 0.0
    %4249 = vmatpush1.msra.mxu0 0.0
    %4250 = vmatprep.subr.mxu0 0.0
    %4251 = vmatpush1.msra.mxu0 0.0
    %4252 = vmatprep.subr.mxu0 0.0
    %4253 = vmatpush1.msra.mxu0 0.0
    %4254 = vmatprep.subr.mxu0 0.0
    %4255 = vmatpush1.msra.mxu0 0.0
    %4256 = vmatprep.subr.mxu0 0.0
    %4257 = vmatpush1.msra.mxu0 %v3619
    %4258 = vmatprep.subr.mxu0 0.0
    %4259 = vmatpush2.msra.mxu0 0.0
    %4260 = vmatprep.subr.mxu0 0.0
    %4261 = vmatpush2.msra.mxu0 0.0
    %4262 = vmatprep.subr.mxu0 0.0
    %4263 = vmatpush2.msra.mxu0 0.0
    %4264 = vmatprep.subr.mxu0 0.0
    %4265 = vmatpush2.msra.mxu0 0.0
    %4266 = vmatprep.subr.mxu0 0.0
    %4267 = vmatpush2.msra.mxu0 0.0
    %4268 = vmatprep.subr.mxu0 0.0
    %4269 = vmatpush2.msra.mxu0 0.0
    %4270 = vmatprep.subr.mxu0 0.0
    %4271 = vmatpush2.msra.mxu0 0.0
    %4272 = vmatprep.subr.mxu0 0.0
    %4273 = vmatpush2.msra.mxu0 0.0
    %4274 = vmatprep.subr.mxu0 0.0
    %4275 = vmatpush2.msra.mxu0 0.0
    %4276 = vmatprep.subr.mxu0 0.0
    %4277 = vmatpush2.msra.mxu0 0.0
    %4278 = vmatprep.subr.mxu0 0.0
    %4279 = vmatpush2.msra.mxu0 0.0
    %4280 = vmatprep.subr.mxu0 0.0
    %4281 = vmatpush2.msra.mxu0 0.0
    %4282 = vmatprep.subr.mxu0 0.0
    %4283 = vmatpush2.msra.mxu0 0.0
    %4284 = vmatprep.subr.mxu0 0.0
    %4285 = vmatpush2.msra.mxu0 0.0
    %4286 = vmatprep.subr.mxu0 0.0
    %4287 = vmatpush2.msra.mxu0 0.0
    %4288 = vmatprep.subr.mxu0 0.0
    %4289 = vmatpush2.msra.mxu0 0.0
    %4290 = vmatprep.mubr.f32.mxu0 0.0
    %4291 = vmatmul.mubr.f32.gmra.mxu0 %v4221
    %v4292 = vpop.f32.mrf.mxu0
    %v4293 = vadd.f32 0.0, %v4292
    %v4294 = vpop.f32.mrf.mxu0
    %4295 = vmatprep.mubr.f32.mxu0 0.0
    %4296 = vmatmul.mubr.f32.gmra.mxu0 %v4224
    %v4297 = vpop.f32.mrf.mxu0
    %v4298 = vadd.f32 0.0, %v4297
    %v4299 = vpop.f32.mrf.mxu0
    %4300 = vdwg.mxu0
    %v4301 = vadd.f32 %v4215, %v4293
    %v4302 = vadd.f32 %v4216, %v4298
    %v4303 = vld [vmem:[%s12] sm:$0xff]
    %v4304 = vld [vmem:[%s12 + $0x8] sm:$0xff]
    %4306 = vset.pattern.permute.xlu0 0
    %4307 = vperm.xlu0 %4306, %v4303
    %v4308 = vpop.permute.xlu0 %4307
    %4311 = vset.pattern.permute.xlu0 0
    %4312 = vperm.xlu0 %4311, %v4304
    %v4313 = vpop.permute.xlu0 %4312
    %v4315 = vadd.f32 %v4301, %v4308
    %v4316 = vadd.f32 %v4302, %v4313
    %4317 = vst [vmem:[#allocation2] sm:$0xff] %v4315
    %4318 = vst [vmem:[#allocation2 + $0x8] sm:$0xff] %v4316
    // Predicated region
    $region54: #{tpu_custom_call.1} parent=1 // pred_check
      _
    $region55: #{tpu_custom_call.1} parent=1 // pred_check_branch
      %4320 = sbr.rel (0) target = $region57
    $region56: #{tpu_custom_call.1} parent=1 // pred_region
      %s4322 = ssub.s32 256, 256
      %4323 = vsyncadd [#allocation3], %s4322
      %s4324 = sshll.u32 [#allocation2], 4
      %s4325 = int_to_ptr.vmem [resolvable:$true] %s4324
      %4330 = dma.vmem_to_hbm [thread:$0]  %s4325, 256, %s13, [#allocation3], 128, 128, 8
    $region57: #{tpu_custom_call.1} parent=1 // pred_fallthru
      _
    // Predicated region
    $region58: #{tpu_custom_call.1} parent=1 // pred_check
      _
    $region59: #{tpu_custom_call.1} parent=1 // pred_check_branch
      %4332 = sbr.rel (0) target = $region61
    $region60: #{tpu_custom_call.1} parent=1 // pred_region
      %4333 = dma.done [#allocation3], 256
    $region61: #{tpu_custom_call.1} parent=1 // pred_fallthru
      _
    %4334 = vsyncpa [#allocation3], 1

</llo_original>
